<compile_context>
chip_gen: v6e
topology: v6e:2x2x1
jax: 0.10.0
libtpu: 0.0.40
codegen_flags: <defaults>
</compile_context>

<pallas_src>
import functools
import math

import jax
import jax.numpy as jnp
from jax.experimental import pallas as pl
from jax.experimental.pallas import tpu as pltpu  # noqa: F401  (kept for TPU-specific knobs)

# Small synthetic config (PyTorch default TransformerEncoderLayer semantics).
S, N, E, H, FF = 8, 2, 32, 4, 64
NUM_LAYERS = 2
DH = E // H
LN_EPS = 1e-5


def _layer_norm(x, w, b):
    mu = jnp.mean(x, axis=-1, keepdims=True)
    var = jnp.mean((x - mu) ** 2, axis=-1, keepdims=True)
    return (x - mu) * jax.lax.rsqrt(var + LN_EPS) * w + b


def _encoder_stack_kernel(x_ref, wqkv_ref, bqkv_ref, wo_ref, bo_ref,
                          ln1w_ref, ln1b_ref, w1_ref, b1_ref,
                          w2_ref, b2_ref, ln2w_ref, ln2b_ref,
                          nw_ref, nb_ref, out_ref, *,
                          num_layers, num_heads, use_final_norm):
    s_len, n_batch, e_dim = x_ref.shape
    tok = s_len * n_batch
    dh = e_dim // num_heads
    scale = 1.0 / math.sqrt(dh)

    # Token-major slab: row index = s * N + n (free leading-dim collapse, no transpose).
    x = x_ref[...].reshape(tok, e_dim)

    def to_heads(u):
        # (S*N, E) -> (N*H, S, DH) head-batched layout for the attention matmuls.
        u = u.reshape(s_len, n_batch, num_heads, dh)
        u = jnp.transpose(u, (1, 2, 0, 3))
        return u.reshape(n_batch * num_heads, s_len, dh)

    for layer in range(num_layers):  # static unroll; all weights stay pinned in VMEM
        # QKV projection (weights pre-transposed to (E, 3E) by the wrapper).
        qkv = jnp.dot(x, wqkv_ref[layer],
                      preferred_element_type=jnp.float32) + bqkv_ref[layer]
        q = qkv[:, :e_dim] * scale
        k = qkv[:, e_dim:2 * e_dim]
        v = qkv[:, 2 * e_dim:]

        qb, kb, vb = to_heads(q), to_heads(k), to_heads(v)

        # Batched multi-head scaled-dot-product attention.
        s = jnp.einsum("bqd,bkd->bqk", qb, kb, preferred_element_type=jnp.float32)
        s = s - jnp.max(s, axis=-1, keepdims=True)
        p = jnp.exp(s)
        p = p * pl.reciprocal(jnp.sum(p, axis=-1, keepdims=True), approx=True)
        ctx = jnp.einsum("bqk,bkd->bqd", p, vb, preferred_element_type=jnp.float32)

        # (N*H, S, DH) -> (S*N, E)
        ctx = ctx.reshape(n_batch, num_heads, s_len, dh)
        ctx = jnp.transpose(ctx, (2, 0, 1, 3)).reshape(tok, e_dim)

        attn = jnp.dot(ctx, wo_ref[layer],
                       preferred_element_type=jnp.float32) + bo_ref[layer]

        # Post-norm block 1 (dropout == identity).
        y = _layer_norm(x + attn, ln1w_ref[layer], ln1b_ref[layer])

        # Feed-forward: relu(y @ W1 + b1) @ W2 + b2   (W1, W2 pre-transposed).
        hdn = jnp.dot(y, w1_ref[layer],
                      preferred_element_type=jnp.float32) + b1_ref[layer]
        hdn = jnp.maximum(hdn, 0.0)
        f = jnp.dot(hdn, w2_ref[layer],
                    preferred_element_type=jnp.float32) + b2_ref[layer]

        # Post-norm block 2.
        x = _layer_norm(y + f, ln2w_ref[layer], ln2b_ref[layer])

    if use_final_norm:
        x = _layer_norm(x, nw_ref[...], nb_ref[...])

    out_ref[...] = x.reshape(s_len, n_batch, e_dim)


def _prepare_params(layer_params, norm_params, e_dim):
    """Pre-transpose weights to (in, out) and stack all layers along a leading axis."""
    f32 = lambda a: jnp.asarray(a, jnp.float32)
    stack = lambda key: jnp.stack([f32(p[key]) for p in layer_params])
    stack_t = lambda key: jnp.stack([f32(p[key]).T for p in layer_params])
    wqkv = stack_t("wqkv")   # (L, E, 3E)
    wo = stack_t("wo")       # (L, E, E)
    w1 = stack_t("w1")       # (L, E, FF)
    w2 = stack_t("w2")       # (L, FF, E)
    if norm_params is not None:
        nw, nb = f32(norm_params["w"]), f32(norm_params["b"])
    else:
        nw = jnp.ones((1, e_dim), jnp.float32)
        nb = jnp.zeros((1, e_dim), jnp.float32)
    return [wqkv, stack("bqkv"), wo, stack("bo"),
            stack("ln1w"), stack("ln1b"), w1, stack("b1"),
            w2, stack("b2"), stack("ln2w"), stack("ln2b"), nw, nb]


def transformer_encoder(src_sne, layer_params, norm_params=None,
                        mask=None, src_key_padding_mask=None, num_heads=H):
    """src_sne: (S, N, E) float32 — same convention as the PyTorch module."""
    if mask is not None or src_key_padding_mask is not None:
        # TODO(synk): attention masks / key-padding-mask output zeroing not implemented (None path only).
        raise NotImplementedError("masks not supported in this synthetic kernel")
    s_len, n_batch, e_dim = src_sne.shape
    assert e_dim % num_heads == 0
    args = _prepare_params(layer_params, norm_params, e_dim)
    kernel = functools.partial(
        _encoder_stack_kernel,
        num_layers=len(layer_params),
        num_heads=num_heads,
        use_final_norm=norm_params is not None,
    )
    # Single-step kernel: no grid, full arrays resident in VMEM (few tens of KB total).
    return pl.pallas_call(
        kernel,
        out_shape=jax.ShapeDtypeStruct((s_len, n_batch, e_dim), jnp.float32),
    )(jnp.asarray(src_sne, jnp.float32), *args)


# ------------------------- deterministic param init -------------------------
def init_layer_params(key):
    ks = jax.random.split(key, 6)
    sc = 0.05
    return dict(
        wqkv=jax.random.normal(ks[0], (3 * E, E), jnp.float32) * sc,
        bqkv=jax.random.normal(ks[1], (1, 3 * E), jnp.float32) * sc,
        wo=jax.random.normal(ks[2], (E, E), jnp.float32) * sc,
        bo=jax.random.normal(ks[3], (1, E), jnp.float32) * sc,
        ln1w=jnp.ones((1, E), jnp.float32),
        ln1b=jnp.zeros((1, E), jnp.float32),
        w1=jax.random.normal(ks[4], (FF, E), jnp.float32) * sc,
        b1=jnp.zeros((1, FF), jnp.float32),
        w2=jax.random.normal(ks[5], (E, FF), jnp.float32) * sc,
        b2=jnp.zeros((1, E), jnp.float32),
        ln2w=jnp.ones((1, E), jnp.float32),
        ln2b=jnp.zeros((1, E), jnp.float32),
    )


# ----------------------------- pure-JAX reference ----------------------------
def _ln_ref(x, w, b):
    mu = x.mean(-1, keepdims=True)
    var = ((x - mu) ** 2).mean(-1, keepdims=True)
    return (x - mu) / jnp.sqrt(var + LN_EPS) * w + b


def ref_encoder_layer(x, p):  # x: (N, S, E)
    qkv = x @ p["wqkv"].T + p["bqkv"][0]
    q, k, v = jnp.split(qkv, 3, axis=-1)
    split = lambda t: t.reshape(N, S, H, DH).transpose(0, 2, 1, 3)
    q, k, v = split(q) / math.sqrt(DH), split(k), split(v)
    s = jnp.einsum("nhsd,nhtd->nhst", q, k)
    a = jax.nn.softmax(s, axis=-1)
    ctx = jnp.einsum("nhst,nhtd->nhsd", a, v).transpose(0, 2, 1, 3).reshape(N, S, E)
    attn = ctx @ p["wo"].T + p["bo"][0]
    y = _ln_ref(x + attn, p["ln1w"][0], p["ln1b"][0])
    f = jax.nn.relu(y @ p["w1"].T + p["b1"][0]) @ p["w2"].T + p["b2"][0]
    return _ln_ref(y + f, p["ln2w"][0], p["ln2b"][0])


if __name__ == "__main__":
    key = jax.random.PRNGKey(0)
    k_src, k_layers = jax.random.split(key)
    src = jax.random.normal(k_src, (S, N, E), jnp.float32)

    layer_keys = jax.random.split(k_layers, NUM_LAYERS)
    layer_params = [init_layer_params(k) for k in layer_keys]
    norm_params = {"w": jnp.ones((1, E), jnp.float32),
                   "b": jnp.zeros((1, E), jnp.float32)}

    out = transformer_encoder(src, layer_params, norm_params)
    out = jax.block_until_ready(out)
    assert out.shape == (S, N, E)

    # Sanity check against a pure-JAX reference.  Tolerance accounts for (a) the XLA
    # reference einsums running at the TPU's default (bf16-pass) matmul precision vs the
    # kernel's MXU accumulation order, and (b) the approx EUP reciprocal in the softmax.
    xr = jnp.transpose(src, (1, 0, 2))
    for p in layer_params:
        xr = ref_encoder_layer(xr, p)
    xr = _ln_ref(xr, norm_params["w"][0], norm_params["b"][0])
    ref = jnp.transpose(xr, (1, 0, 2))
    err = float(jnp.max(jnp.abs(out - ref)))
    assert jnp.allclose(out, ref, atol=1e-2, rtol=1e-2), f"max abs err {err}"

    print("KERNEL_OK")
</pallas_src>

<mosaic_0001>
module attributes {stable_mosaic.version = 11 : i64} {
  func.func @_encoder_stack_kernel(%arg0: memref<8x2x32xf32, #tpu.memory_space<vmem>>, %arg1: memref<2x32x96xf32, #tpu.memory_space<vmem>>, %arg2: memref<2x1x96xf32, #tpu.memory_space<vmem>>, %arg3: memref<2x32x32xf32, #tpu.memory_space<vmem>>, %arg4: memref<2x1x32xf32, #tpu.memory_space<vmem>>, %arg5: memref<2x1x32xf32, #tpu.memory_space<vmem>>, %arg6: memref<2x1x32xf32, #tpu.memory_space<vmem>>, %arg7: memref<2x32x64xf32, #tpu.memory_space<vmem>>, %arg8: memref<2x1x64xf32, #tpu.memory_space<vmem>>, %arg9: memref<2x64x32xf32, #tpu.memory_space<vmem>>, %arg10: memref<2x1x32xf32, #tpu.memory_space<vmem>>, %arg11: memref<2x1x32xf32, #tpu.memory_space<vmem>>, %arg12: memref<2x1x32xf32, #tpu.memory_space<vmem>>, %arg13: memref<1x32xf32, #tpu.memory_space<vmem>>, %arg14: memref<1x32xf32, #tpu.memory_space<vmem>>, %arg15: memref<8x2x32xf32, #tpu.memory_space<vmem>>) attributes {dimension_semantics = [], scalar_prefetch = 0 : i64, scratch_operands = 0 : i64, tpu.core_type = #tpu.core_type<tc>} {
    %c0 = arith.constant 0 : index
    %c0_0 = arith.constant 0 : index
    %c0_1 = arith.constant 0 : index
    %0 = vector.load %arg0[%c0, %c0_0, %c0_1] : memref<8x2x32xf32, #tpu.memory_space<vmem>>, vector<8x2x32xf32>
    %1 = vector.shape_cast %0 : vector<8x2x32xf32> to vector<16x32xf32>
    %c0_2 = arith.constant 0 : index
    %c0_3 = arith.constant 0 : index
    %c0_4 = arith.constant 0 : index
    %2 = vector.load %arg1[%c0_2, %c0_3, %c0_4] : memref<2x32x96xf32, #tpu.memory_space<vmem>>, vector<1x32x96xf32>
    %3 = vector.shape_cast %2 : vector<1x32x96xf32> to vector<32x96xf32>
    %cst = arith.constant dense<0.000000e+00> : vector<16x96xf32>
    %4 = tpu.matmul %1, %3, %cst {dimension_numbers = #tpu.dot_dimension_numbers<[1], [0], [0], [1], [0, 0, 1, 1], [], []>} : vector<16x32xf32>, vector<32x96xf32>, vector<16x96xf32> -> vector<16x96xf32>
    %c0_5 = arith.constant 0 : index
    %c0_6 = arith.constant 0 : index
    %c0_7 = arith.constant 0 : index
    %5 = vector.load %arg2[%c0_5, %c0_6, %c0_7] : memref<2x1x96xf32, #tpu.memory_space<vmem>>, vector<1x1x96xf32>
    %6 = vector.shape_cast %5 : vector<1x1x96xf32> to vector<1x96xf32>
    %7 = vector.broadcast %6 : vector<1x96xf32> to vector<16x96xf32>
    %8 = arith.addf %4, %7 : vector<16x96xf32>
    %9 = vector.extract_strided_slice %8 {offsets = [0, 0], sizes = [16, 32], strides = [1, 1]} : vector<16x96xf32> to vector<16x32xf32>
    %cst_8 = arith.constant 0.353553385 : f32
    %10 = vector.broadcast %cst_8 : f32 to vector<16x32xf32>
    %11 = arith.mulf %9, %10 : vector<16x32xf32>
    %12 = vector.extract_strided_slice %8 {offsets = [0, 32], sizes = [16, 32], strides = [1, 1]} : vector<16x96xf32> to vector<16x32xf32>
    %13 = vector.extract_strided_slice %8 {offsets = [0, 64], sizes = [16, 32], strides = [1, 1]} : vector<16x96xf32> to vector<16x32xf32>
    %14 = vector.shape_cast %11 : vector<16x32xf32> to vector<8x2x4x8xf32>
    %15 = tpu.transpose %14, [1, 2, 0, 3] : vector<8x2x4x8xf32> -> vector<2x4x8x8xf32>
    %16 = vector.shape_cast %15 : vector<2x4x8x8xf32> to vector<8x8x8xf32>
    %17 = vector.shape_cast %12 : vector<16x32xf32> to vector<8x2x4x8xf32>
    %18 = tpu.transpose %17, [1, 2, 0, 3] : vector<8x2x4x8xf32> -> vector<2x4x8x8xf32>
    %19 = vector.shape_cast %18 : vector<2x4x8x8xf32> to vector<8x8x8xf32>
    %20 = vector.shape_cast %13 : vector<16x32xf32> to vector<8x2x4x8xf32>
    %21 = tpu.transpose %20, [1, 2, 0, 3] : vector<8x2x4x8xf32> -> vector<2x4x8x8xf32>
    %22 = vector.shape_cast %21 : vector<2x4x8x8xf32> to vector<8x8x8xf32>
    "tpu.trace_start"() <{level = 10 : i32, message = "bqd,bkd->bqk"}> : () -> ()
    %cst_9 = arith.constant dense<0.000000e+00> : vector<8x8x8xf32>
    %23 = tpu.matmul %16, %19, %cst_9 {dimension_numbers = #tpu.dot_dimension_numbers<[2], [2], [1], [1], [0, 0, 0, 1, 1, 1], [0], [0]>} : vector<8x8x8xf32>, vector<8x8x8xf32>, vector<8x8x8xf32> -> vector<8x8x8xf32>
    "tpu.trace_stop"() : () -> ()
    %cst_10 = arith.constant dense<0xFF800000> : vector<8x8xf32>
    %24 = vector.multi_reduction <maximumf>, %23, %cst_10 [2] : vector<8x8x8xf32> to vector<8x8xf32>
    %25 = vector.shape_cast %24 : vector<8x8xf32> to vector<8x8x1xf32>
    %26 = vector.broadcast %25 : vector<8x8x1xf32> to vector<8x8x8xf32>
    %27 = arith.subf %23, %26 : vector<8x8x8xf32>
    %28 = math.exp %27 : vector<8x8x8xf32>
    %cst_11 = arith.constant dense<0.000000e+00> : vector<8x8xf32>
    %29 = vector.multi_reduction <add>, %28, %cst_11 [2] : vector<8x8x8xf32> to vector<8x8xf32>
    %30 = vector.shape_cast %29 : vector<8x8xf32> to vector<8x8x1xf32>
    %31 = tpu.reciprocal %30 {approx = true} : vector<8x8x1xf32> -> vector<8x8x1xf32>
    %32 = vector.broadcast %31 : vector<8x8x1xf32> to vector<8x8x8xf32>
    %33 = arith.mulf %28, %32 : vector<8x8x8xf32>
    "tpu.trace_start"() <{level = 10 : i32, message = "bqk,bkd->bqd"}> : () -> ()
    %cst_12 = arith.constant dense<0.000000e+00> : vector<8x8x8xf32>
    %34 = tpu.matmul %33, %22, %cst_12 {dimension_numbers = #tpu.dot_dimension_numbers<[2], [1], [1], [2], [0, 0, 0, 1, 1, 2], [0], [0]>} : vector<8x8x8xf32>, vector<8x8x8xf32>, vector<8x8x8xf32> -> vector<8x8x8xf32>
    "tpu.trace_stop"() : () -> ()
    %35 = vector.shape_cast %34 : vector<8x8x8xf32> to vector<2x4x8x8xf32>
    %36 = tpu.transpose %35, [2, 0, 1, 3] : vector<2x4x8x8xf32> -> vector<8x2x4x8xf32>
    %37 = vector.shape_cast %36 : vector<8x2x4x8xf32> to vector<16x32xf32>
    %c0_13 = arith.constant 0 : index
    %c0_14 = arith.constant 0 : index
    %c0_15 = arith.constant 0 : index
    %38 = vector.load %arg3[%c0_13, %c0_14, %c0_15] : memref<2x32x32xf32, #tpu.memory_space<vmem>>, vector<1x32x32xf32>
    %39 = vector.shape_cast %38 : vector<1x32x32xf32> to vector<32x32xf32>
    %cst_16 = arith.constant dense<0.000000e+00> : vector<16x32xf32>
    %40 = tpu.matmul %37, %39, %cst_16 {dimension_numbers = #tpu.dot_dimension_numbers<[1], [0], [0], [1], [0, 0, 1, 1], [], []>} : vector<16x32xf32>, vector<32x32xf32>, vector<16x32xf32> -> vector<16x32xf32>
    %c0_17 = arith.constant 0 : index
    %c0_18 = arith.constant 0 : index
    %c0_19 = arith.constant 0 : index
    %41 = vector.load %arg4[%c0_17, %c0_18, %c0_19] : memref<2x1x32xf32, #tpu.memory_space<vmem>>, vector<1x1x32xf32>
    %42 = vector.shape_cast %41 : vector<1x1x32xf32> to vector<1x32xf32>
    %43 = vector.broadcast %42 : vector<1x32xf32> to vector<16x32xf32>
    %44 = arith.addf %40, %43 : vector<16x32xf32>
    %45 = arith.addf %1, %44 : vector<16x32xf32>
    %c0_20 = arith.constant 0 : index
    %c0_21 = arith.constant 0 : index
    %c0_22 = arith.constant 0 : index
    %46 = vector.load %arg5[%c0_20, %c0_21, %c0_22] : memref<2x1x32xf32, #tpu.memory_space<vmem>>, vector<1x1x32xf32>
    %47 = vector.shape_cast %46 : vector<1x1x32xf32> to vector<1x32xf32>
    %c0_23 = arith.constant 0 : index
    %c0_24 = arith.constant 0 : index
    %c0_25 = arith.constant 0 : index
    %48 = vector.load %arg6[%c0_23, %c0_24, %c0_25] : memref<2x1x32xf32, #tpu.memory_space<vmem>>, vector<1x1x32xf32>
    %49 = vector.shape_cast %48 : vector<1x1x32xf32> to vector<1x32xf32>
    %cst_26 = arith.constant dense<0.000000e+00> : vector<16xf32>
    %50 = vector.multi_reduction <add>, %45, %cst_26 [1] : vector<16x32xf32> to vector<16xf32>
    %51 = vector.shape_cast %50 : vector<16xf32> to vector<16x1xf32>
    %cst_27 = arith.constant 3.200000e+01 : f32
    %52 = vector.broadcast %cst_27 : f32 to vector<16x1xf32>
    %53 = arith.divf %51, %52 : vector<16x1xf32>
    %54 = vector.broadcast %53 : vector<16x1xf32> to vector<16x32xf32>
    %55 = arith.subf %45, %54 : vector<16x32xf32>
    %56 = arith.mulf %55, %55 : vector<16x32xf32>
    %cst_28 = arith.constant dense<0.000000e+00> : vector<16xf32>
    %57 = vector.multi_reduction <add>, %56, %cst_28 [1] : vector<16x32xf32> to vector<16xf32>
    %58 = vector.shape_cast %57 : vector<16xf32> to vector<16x1xf32>
    %cst_29 = arith.constant 3.200000e+01 : f32
    %59 = vector.broadcast %cst_29 : f32 to vector<16x1xf32>
    %60 = arith.divf %58, %59 : vector<16x1xf32>
    %61 = vector.broadcast %53 : vector<16x1xf32> to vector<16x32xf32>
    %62 = arith.subf %45, %61 : vector<16x32xf32>
    %cst_30 = arith.constant 9.99999974E-6 : f32
    %63 = vector.broadcast %cst_30 : f32 to vector<16x1xf32>
    %64 = arith.addf %60, %63 : vector<16x1xf32>
    %65 = math.rsqrt %64 : vector<16x1xf32>
    %66 = vector.broadcast %65 : vector<16x1xf32> to vector<16x32xf32>
    %67 = arith.mulf %62, %66 : vector<16x32xf32>
    %68 = vector.broadcast %47 : vector<1x32xf32> to vector<16x32xf32>
    %69 = arith.mulf %67, %68 : vector<16x32xf32>
    %70 = vector.broadcast %49 : vector<1x32xf32> to vector<16x32xf32>
    %71 = arith.addf %69, %70 : vector<16x32xf32>
    %c0_31 = arith.constant 0 : index
    %c0_32 = arith.constant 0 : index
    %c0_33 = arith.constant 0 : index
    %72 = vector.load %arg7[%c0_31, %c0_32, %c0_33] : memref<2x32x64xf32, #tpu.memory_space<vmem>>, vector<1x32x64xf32>
    %73 = vector.shape_cast %72 : vector<1x32x64xf32> to vector<32x64xf32>
    %cst_34 = arith.constant dense<0.000000e+00> : vector<16x64xf32>
    %74 = tpu.matmul %71, %73, %cst_34 {dimension_numbers = #tpu.dot_dimension_numbers<[1], [0], [0], [1], [0, 0, 1, 1], [], []>} : vector<16x32xf32>, vector<32x64xf32>, vector<16x64xf32> -> vector<16x64xf32>
    %c0_35 = arith.constant 0 : index
    %c0_36 = arith.constant 0 : index
    %c0_37 = arith.constant 0 : index
    %75 = vector.load %arg8[%c0_35, %c0_36, %c0_37] : memref<2x1x64xf32, #tpu.memory_space<vmem>>, vector<1x1x64xf32>
    %76 = vector.shape_cast %75 : vector<1x1x64xf32> to vector<1x64xf32>
    %77 = vector.broadcast %76 : vector<1x64xf32> to vector<16x64xf32>
    %78 = arith.addf %74, %77 : vector<16x64xf32>
    %cst_38 = arith.constant 0.000000e+00 : f32
    %79 = vector.broadcast %cst_38 : f32 to vector<16x64xf32>
    %80 = arith.maximumf %78, %79 : vector<16x64xf32>
    %c0_39 = arith.constant 0 : index
    %c0_40 = arith.constant 0 : index
    %c0_41 = arith.constant 0 : index
    %81 = vector.load %arg9[%c0_39, %c0_40, %c0_41] : memref<2x64x32xf32, #tpu.memory_space<vmem>>, vector<1x64x32xf32>
    %82 = vector.shape_cast %81 : vector<1x64x32xf32> to vector<64x32xf32>
    %cst_42 = arith.constant dense<0.000000e+00> : vector<16x32xf32>
    %83 = tpu.matmul %80, %82, %cst_42 {dimension_numbers = #tpu.dot_dimension_numbers<[1], [0], [0], [1], [0, 0, 1, 1], [], []>} : vector<16x64xf32>, vector<64x32xf32>, vector<16x32xf32> -> vector<16x32xf32>
    %c0_43 = arith.constant 0 : index
    %c0_44 = arith.constant 0 : index
    %c0_45 = arith.constant 0 : index
    %84 = vector.load %arg10[%c0_43, %c0_44, %c0_45] : memref<2x1x32xf32, #tpu.memory_space<vmem>>, vector<1x1x32xf32>
    %85 = vector.shape_cast %84 : vector<1x1x32xf32> to vector<1x32xf32>
    %86 = vector.broadcast %85 : vector<1x32xf32> to vector<16x32xf32>
    %87 = arith.addf %83, %86 : vector<16x32xf32>
    %88 = arith.addf %71, %87 : vector<16x32xf32>
    %c0_46 = arith.constant 0 : index
    %c0_47 = arith.constant 0 : index
    %c0_48 = arith.constant 0 : index
    %89 = vector.load %arg11[%c0_46, %c0_47, %c0_48] : memref<2x1x32xf32, #tpu.memory_space<vmem>>, vector<1x1x32xf32>
    %90 = vector.shape_cast %89 : vector<1x1x32xf32> to vector<1x32xf32>
    %c0_49 = arith.constant 0 : index
    %c0_50 = arith.constant 0 : index
    %c0_51 = arith.constant 0 : index
    %91 = vector.load %arg12[%c0_49, %c0_50, %c0_51] : memref<2x1x32xf32, #tpu.memory_space<vmem>>, vector<1x1x32xf32>
    %92 = vector.shape_cast %91 : vector<1x1x32xf32> to vector<1x32xf32>
    %cst_52 = arith.constant dense<0.000000e+00> : vector<16xf32>
    %93 = vector.multi_reduction <add>, %88, %cst_52 [1] : vector<16x32xf32> to vector<16xf32>
    %94 = vector.shape_cast %93 : vector<16xf32> to vector<16x1xf32>
    %cst_53 = arith.constant 3.200000e+01 : f32
    %95 = vector.broadcast %cst_53 : f32 to vector<16x1xf32>
    %96 = arith.divf %94, %95 : vector<16x1xf32>
    %97 = vector.broadcast %96 : vector<16x1xf32> to vector<16x32xf32>
    %98 = arith.subf %88, %97 : vector<16x32xf32>
    %99 = arith.mulf %98, %98 : vector<16x32xf32>
    %cst_54 = arith.constant dense<0.000000e+00> : vector<16xf32>
    %100 = vector.multi_reduction <add>, %99, %cst_54 [1] : vector<16x32xf32> to vector<16xf32>
    %101 = vector.shape_cast %100 : vector<16xf32> to vector<16x1xf32>
    %cst_55 = arith.constant 3.200000e+01 : f32
    %102 = vector.broadcast %cst_55 : f32 to vector<16x1xf32>
    %103 = arith.divf %101, %102 : vector<16x1xf32>
    %104 = vector.broadcast %96 : vector<16x1xf32> to vector<16x32xf32>
    %105 = arith.subf %88, %104 : vector<16x32xf32>
    %cst_56 = arith.constant 9.99999974E-6 : f32
    %106 = vector.broadcast %cst_56 : f32 to vector<16x1xf32>
    %107 = arith.addf %103, %106 : vector<16x1xf32>
    %108 = math.rsqrt %107 : vector<16x1xf32>
    %109 = vector.broadcast %108 : vector<16x1xf32> to vector<16x32xf32>
    %110 = arith.mulf %105, %109 : vector<16x32xf32>
    %111 = vector.broadcast %90 : vector<1x32xf32> to vector<16x32xf32>
    %112 = arith.mulf %110, %111 : vector<16x32xf32>
    %113 = vector.broadcast %92 : vector<1x32xf32> to vector<16x32xf32>
    %114 = arith.addf %112, %113 : vector<16x32xf32>
    %c1 = arith.constant 1 : index
    %c0_57 = arith.constant 0 : index
    %c0_58 = arith.constant 0 : index
    %115 = vector.load %arg1[%c1, %c0_57, %c0_58] : memref<2x32x96xf32, #tpu.memory_space<vmem>>, vector<1x32x96xf32>
    %116 = vector.shape_cast %115 : vector<1x32x96xf32> to vector<32x96xf32>
    %cst_59 = arith.constant dense<0.000000e+00> : vector<16x96xf32>
    %117 = tpu.matmul %114, %116, %cst_59 {dimension_numbers = #tpu.dot_dimension_numbers<[1], [0], [0], [1], [0, 0, 1, 1], [], []>} : vector<16x32xf32>, vector<32x96xf32>, vector<16x96xf32> -> vector<16x96xf32>
    %c1_60 = arith.constant 1 : index
    %c0_61 = arith.constant 0 : index
    %c0_62 = arith.constant 0 : index
    %118 = vector.load %arg2[%c1_60, %c0_61, %c0_62] : memref<2x1x96xf32, #tpu.memory_space<vmem>>, vector<1x1x96xf32>
    %119 = vector.shape_cast %118 : vector<1x1x96xf32> to vector<1x96xf32>
    %120 = vector.broadcast %119 : vector<1x96xf32> to vector<16x96xf32>
    %121 = arith.addf %117, %120 : vector<16x96xf32>
    %122 = vector.extract_strided_slice %121 {offsets = [0, 0], sizes = [16, 32], strides = [1, 1]} : vector<16x96xf32> to vector<16x32xf32>
    %cst_63 = arith.constant 0.353553385 : f32
    %123 = vector.broadcast %cst_63 : f32 to vector<16x32xf32>
    %124 = arith.mulf %122, %123 : vector<16x32xf32>
    %125 = vector.extract_strided_slice %121 {offsets = [0, 32], sizes = [16, 32], strides = [1, 1]} : vector<16x96xf32> to vector<16x32xf32>
    %126 = vector.extract_strided_slice %121 {offsets = [0, 64], sizes = [16, 32], strides = [1, 1]} : vector<16x96xf32> to vector<16x32xf32>
    %127 = vector.shape_cast %124 : vector<16x32xf32> to vector<8x2x4x8xf32>
    %128 = tpu.transpose %127, [1, 2, 0, 3] : vector<8x2x4x8xf32> -> vector<2x4x8x8xf32>
    %129 = vector.shape_cast %128 : vector<2x4x8x8xf32> to vector<8x8x8xf32>
    %130 = vector.shape_cast %125 : vector<16x32xf32> to vector<8x2x4x8xf32>
    %131 = tpu.transpose %130, [1, 2, 0, 3] : vector<8x2x4x8xf32> -> vector<2x4x8x8xf32>
    %132 = vector.shape_cast %131 : vector<2x4x8x8xf32> to vector<8x8x8xf32>
    %133 = vector.shape_cast %126 : vector<16x32xf32> to vector<8x2x4x8xf32>
    %134 = tpu.transpose %133, [1, 2, 0, 3] : vector<8x2x4x8xf32> -> vector<2x4x8x8xf32>
    %135 = vector.shape_cast %134 : vector<2x4x8x8xf32> to vector<8x8x8xf32>
    "tpu.trace_start"() <{level = 10 : i32, message = "bqd,bkd->bqk"}> : () -> ()
    %cst_64 = arith.constant dense<0.000000e+00> : vector<8x8x8xf32>
    %136 = tpu.matmul %129, %132, %cst_64 {dimension_numbers = #tpu.dot_dimension_numbers<[2], [2], [1], [1], [0, 0, 0, 1, 1, 1], [0], [0]>} : vector<8x8x8xf32>, vector<8x8x8xf32>, vector<8x8x8xf32> -> vector<8x8x8xf32>
    "tpu.trace_stop"() : () -> ()
    %cst_65 = arith.constant dense<0xFF800000> : vector<8x8xf32>
    %137 = vector.multi_reduction <maximumf>, %136, %cst_65 [2] : vector<8x8x8xf32> to vector<8x8xf32>
    %138 = vector.shape_cast %137 : vector<8x8xf32> to vector<8x8x1xf32>
    %139 = vector.broadcast %138 : vector<8x8x1xf32> to vector<8x8x8xf32>
    %140 = arith.subf %136, %139 : vector<8x8x8xf32>
    %141 = math.exp %140 : vector<8x8x8xf32>
    %cst_66 = arith.constant dense<0.000000e+00> : vector<8x8xf32>
    %142 = vector.multi_reduction <add>, %141, %cst_66 [2] : vector<8x8x8xf32> to vector<8x8xf32>
    %143 = vector.shape_cast %142 : vector<8x8xf32> to vector<8x8x1xf32>
    %144 = tpu.reciprocal %143 {approx = true} : vector<8x8x1xf32> -> vector<8x8x1xf32>
    %145 = vector.broadcast %144 : vector<8x8x1xf32> to vector<8x8x8xf32>
    %146 = arith.mulf %141, %145 : vector<8x8x8xf32>
    "tpu.trace_start"() <{level = 10 : i32, message = "bqk,bkd->bqd"}> : () -> ()
    %cst_67 = arith.constant dense<0.000000e+00> : vector<8x8x8xf32>
    %147 = tpu.matmul %146, %135, %cst_67 {dimension_numbers = #tpu.dot_dimension_numbers<[2], [1], [1], [2], [0, 0, 0, 1, 1, 2], [0], [0]>} : vector<8x8x8xf32>, vector<8x8x8xf32>, vector<8x8x8xf32> -> vector<8x8x8xf32>
    "tpu.trace_stop"() : () -> ()
    %148 = vector.shape_cast %147 : vector<8x8x8xf32> to vector<2x4x8x8xf32>
    %149 = tpu.transpose %148, [2, 0, 1, 3] : vector<2x4x8x8xf32> -> vector<8x2x4x8xf32>
    %150 = vector.shape_cast %149 : vector<8x2x4x8xf32> to vector<16x32xf32>
    %c1_68 = arith.constant 1 : index
    %c0_69 = arith.constant 0 : index
    %c0_70 = arith.constant 0 : index
    %151 = vector.load %arg3[%c1_68, %c0_69, %c0_70] : memref<2x32x32xf32, #tpu.memory_space<vmem>>, vector<1x32x32xf32>
    %152 = vector.shape_cast %151 : vector<1x32x32xf32> to vector<32x32xf32>
    %cst_71 = arith.constant dense<0.000000e+00> : vector<16x32xf32>
    %153 = tpu.matmul %150, %152, %cst_71 {dimension_numbers = #tpu.dot_dimension_numbers<[1], [0], [0], [1], [0, 0, 1, 1], [], []>} : vector<16x32xf32>, vector<32x32xf32>, vector<16x32xf32> -> vector<16x32xf32>
    %c1_72 = arith.constant 1 : index
    %c0_73 = arith.constant 0 : index
    %c0_74 = arith.constant 0 : index
    %154 = vector.load %arg4[%c1_72, %c0_73, %c0_74] : memref<2x1x32xf32, #tpu.memory_space<vmem>>, vector<1x1x32xf32>
    %155 = vector.shape_cast %154 : vector<1x1x32xf32> to vector<1x32xf32>
    %156 = vector.broadcast %155 : vector<1x32xf32> to vector<16x32xf32>
    %157 = arith.addf %153, %156 : vector<16x32xf32>
    %158 = arith.addf %114, %157 : vector<16x32xf32>
    %c1_75 = arith.constant 1 : index
    %c0_76 = arith.constant 0 : index
    %c0_77 = arith.constant 0 : index
    %159 = vector.load %arg5[%c1_75, %c0_76, %c0_77] : memref<2x1x32xf32, #tpu.memory_space<vmem>>, vector<1x1x32xf32>
    %160 = vector.shape_cast %159 : vector<1x1x32xf32> to vector<1x32xf32>
    %c1_78 = arith.constant 1 : index
    %c0_79 = arith.constant 0 : index
    %c0_80 = arith.constant 0 : index
    %161 = vector.load %arg6[%c1_78, %c0_79, %c0_80] : memref<2x1x32xf32, #tpu.memory_space<vmem>>, vector<1x1x32xf32>
    %162 = vector.shape_cast %161 : vector<1x1x32xf32> to vector<1x32xf32>
    %cst_81 = arith.constant dense<0.000000e+00> : vector<16xf32>
    %163 = vector.multi_reduction <add>, %158, %cst_81 [1] : vector<16x32xf32> to vector<16xf32>
    %164 = vector.shape_cast %163 : vector<16xf32> to vector<16x1xf32>
    %cst_82 = arith.constant 3.200000e+01 : f32
    %165 = vector.broadcast %cst_82 : f32 to vector<16x1xf32>
    %166 = arith.divf %164, %165 : vector<16x1xf32>
    %167 = vector.broadcast %166 : vector<16x1xf32> to vector<16x32xf32>
    %168 = arith.subf %158, %167 : vector<16x32xf32>
    %169 = arith.mulf %168, %168 : vector<16x32xf32>
    %cst_83 = arith.constant dense<0.000000e+00> : vector<16xf32>
    %170 = vector.multi_reduction <add>, %169, %cst_83 [1] : vector<16x32xf32> to vector<16xf32>
    %171 = vector.shape_cast %170 : vector<16xf32> to vector<16x1xf32>
    %cst_84 = arith.constant 3.200000e+01 : f32
    %172 = vector.broadcast %cst_84 : f32 to vector<16x1xf32>
    %173 = arith.divf %171, %172 : vector<16x1xf32>
    %174 = vector.broadcast %166 : vector<16x1xf32> to vector<16x32xf32>
    %175 = arith.subf %158, %174 : vector<16x32xf32>
    %cst_85 = arith.constant 9.99999974E-6 : f32
    %176 = vector.broadcast %cst_85 : f32 to vector<16x1xf32>
    %177 = arith.addf %173, %176 : vector<16x1xf32>
    %178 = math.rsqrt %177 : vector<16x1xf32>
    %179 = vector.broadcast %178 : vector<16x1xf32> to vector<16x32xf32>
    %180 = arith.mulf %175, %179 : vector<16x32xf32>
    %181 = vector.broadcast %160 : vector<1x32xf32> to vector<16x32xf32>
    %182 = arith.mulf %180, %181 : vector<16x32xf32>
    %183 = vector.broadcast %162 : vector<1x32xf32> to vector<16x32xf32>
    %184 = arith.addf %182, %183 : vector<16x32xf32>
    %c1_86 = arith.constant 1 : index
    %c0_87 = arith.constant 0 : index
    %c0_88 = arith.constant 0 : index
    %185 = vector.load %arg7[%c1_86, %c0_87, %c0_88] : memref<2x32x64xf32, #tpu.memory_space<vmem>>, vector<1x32x64xf32>
    %186 = vector.shape_cast %185 : vector<1x32x64xf32> to vector<32x64xf32>
    %cst_89 = arith.constant dense<0.000000e+00> : vector<16x64xf32>
    %187 = tpu.matmul %184, %186, %cst_89 {dimension_numbers = #tpu.dot_dimension_numbers<[1], [0], [0], [1], [0, 0, 1, 1], [], []>} : vector<16x32xf32>, vector<32x64xf32>, vector<16x64xf32> -> vector<16x64xf32>
    %c1_90 = arith.constant 1 : index
    %c0_91 = arith.constant 0 : index
    %c0_92 = arith.constant 0 : index
    %188 = vector.load %arg8[%c1_90, %c0_91, %c0_92] : memref<2x1x64xf32, #tpu.memory_space<vmem>>, vector<1x1x64xf32>
    %189 = vector.shape_cast %188 : vector<1x1x64xf32> to vector<1x64xf32>
    %190 = vector.broadcast %189 : vector<1x64xf32> to vector<16x64xf32>
    %191 = arith.addf %187, %190 : vector<16x64xf32>
    %cst_93 = arith.constant 0.000000e+00 : f32
    %192 = vector.broadcast %cst_93 : f32 to vector<16x64xf32>
    %193 = arith.maximumf %191, %192 : vector<16x64xf32>
    %c1_94 = arith.constant 1 : index
    %c0_95 = arith.constant 0 : index
    %c0_96 = arith.constant 0 : index
    %194 = vector.load %arg9[%c1_94, %c0_95, %c0_96] : memref<2x64x32xf32, #tpu.memory_space<vmem>>, vector<1x64x32xf32>
    %195 = vector.shape_cast %194 : vector<1x64x32xf32> to vector<64x32xf32>
    %cst_97 = arith.constant dense<0.000000e+00> : vector<16x32xf32>
    %196 = tpu.matmul %193, %195, %cst_97 {dimension_numbers = #tpu.dot_dimension_numbers<[1], [0], [0], [1], [0, 0, 1, 1], [], []>} : vector<16x64xf32>, vector<64x32xf32>, vector<16x32xf32> -> vector<16x32xf32>
    %c1_98 = arith.constant 1 : index
    %c0_99 = arith.constant 0 : index
    %c0_100 = arith.constant 0 : index
    %197 = vector.load %arg10[%c1_98, %c0_99, %c0_100] : memref<2x1x32xf32, #tpu.memory_space<vmem>>, vector<1x1x32xf32>
    %198 = vector.shape_cast %197 : vector<1x1x32xf32> to vector<1x32xf32>
    %199 = vector.broadcast %198 : vector<1x32xf32> to vector<16x32xf32>
    %200 = arith.addf %196, %199 : vector<16x32xf32>
    %201 = arith.addf %184, %200 : vector<16x32xf32>
    %c1_101 = arith.constant 1 : index
    %c0_102 = arith.constant 0 : index
    %c0_103 = arith.constant 0 : index
    %202 = vector.load %arg11[%c1_101, %c0_102, %c0_103] : memref<2x1x32xf32, #tpu.memory_space<vmem>>, vector<1x1x32xf32>
    %203 = vector.shape_cast %202 : vector<1x1x32xf32> to vector<1x32xf32>
    %c1_104 = arith.constant 1 : index
    %c0_105 = arith.constant 0 : index
    %c0_106 = arith.constant 0 : index
    %204 = vector.load %arg12[%c1_104, %c0_105, %c0_106] : memref<2x1x32xf32, #tpu.memory_space<vmem>>, vector<1x1x32xf32>
    %205 = vector.shape_cast %204 : vector<1x1x32xf32> to vector<1x32xf32>
    %cst_107 = arith.constant dense<0.000000e+00> : vector<16xf32>
    %206 = vector.multi_reduction <add>, %201, %cst_107 [1] : vector<16x32xf32> to vector<16xf32>
    %207 = vector.shape_cast %206 : vector<16xf32> to vector<16x1xf32>
    %cst_108 = arith.constant 3.200000e+01 : f32
    %208 = vector.broadcast %cst_108 : f32 to vector<16x1xf32>
    %209 = arith.divf %207, %208 : vector<16x1xf32>
    %210 = vector.broadcast %209 : vector<16x1xf32> to vector<16x32xf32>
    %211 = arith.subf %201, %210 : vector<16x32xf32>
    %212 = arith.mulf %211, %211 : vector<16x32xf32>
    %cst_109 = arith.constant dense<0.000000e+00> : vector<16xf32>
    %213 = vector.multi_reduction <add>, %212, %cst_109 [1] : vector<16x32xf32> to vector<16xf32>
    %214 = vector.shape_cast %213 : vector<16xf32> to vector<16x1xf32>
    %cst_110 = arith.constant 3.200000e+01 : f32
    %215 = vector.broadcast %cst_110 : f32 to vector<16x1xf32>
    %216 = arith.divf %214, %215 : vector<16x1xf32>
    %217 = vector.broadcast %209 : vector<16x1xf32> to vector<16x32xf32>
    %218 = arith.subf %201, %217 : vector<16x32xf32>
    %cst_111 = arith.constant 9.99999974E-6 : f32
    %219 = vector.broadcast %cst_111 : f32 to vector<16x1xf32>
    %220 = arith.addf %216, %219 : vector<16x1xf32>
    %221 = math.rsqrt %220 : vector<16x1xf32>
    %222 = vector.broadcast %221 : vector<16x1xf32> to vector<16x32xf32>
    %223 = arith.mulf %218, %222 : vector<16x32xf32>
    %224 = vector.broadcast %203 : vector<1x32xf32> to vector<16x32xf32>
    %225 = arith.mulf %223, %224 : vector<16x32xf32>
    %226 = vector.broadcast %205 : vector<1x32xf32> to vector<16x32xf32>
    %227 = arith.addf %225, %226 : vector<16x32xf32>
    %c0_112 = arith.constant 0 : index
    %c0_113 = arith.constant 0 : index
    %228 = vector.load %arg13[%c0_112, %c0_113] : memref<1x32xf32, #tpu.memory_space<vmem>>, vector<1x32xf32>
    %c0_114 = arith.constant 0 : index
    %c0_115 = arith.constant 0 : index
    %229 = vector.load %arg14[%c0_114, %c0_115] : memref<1x32xf32, #tpu.memory_space<vmem>>, vector<1x32xf32>
    %cst_116 = arith.constant dense<0.000000e+00> : vector<16xf32>
    %230 = vector.multi_reduction <add>, %227, %cst_116 [1] : vector<16x32xf32> to vector<16xf32>
    %231 = vector.shape_cast %230 : vector<16xf32> to vector<16x1xf32>
    %cst_117 = arith.constant 3.200000e+01 : f32
    %232 = vector.broadcast %cst_117 : f32 to vector<16x1xf32>
    %233 = arith.divf %231, %232 : vector<16x1xf32>
    %234 = vector.broadcast %233 : vector<16x1xf32> to vector<16x32xf32>
    %235 = arith.subf %227, %234 : vector<16x32xf32>
    %236 = arith.mulf %235, %235 : vector<16x32xf32>
    %cst_118 = arith.constant dense<0.000000e+00> : vector<16xf32>
    %237 = vector.multi_reduction <add>, %236, %cst_118 [1] : vector<16x32xf32> to vector<16xf32>
    %238 = vector.shape_cast %237 : vector<16xf32> to vector<16x1xf32>
    %cst_119 = arith.constant 3.200000e+01 : f32
    %239 = vector.broadcast %cst_119 : f32 to vector<16x1xf32>
    %240 = arith.divf %238, %239 : vector<16x1xf32>
    %241 = vector.broadcast %233 : vector<16x1xf32> to vector<16x32xf32>
    %242 = arith.subf %227, %241 : vector<16x32xf32>
    %cst_120 = arith.constant 9.99999974E-6 : f32
    %243 = vector.broadcast %cst_120 : f32 to vector<16x1xf32>
    %244 = arith.addf %240, %243 : vector<16x1xf32>
    %245 = math.rsqrt %244 : vector<16x1xf32>
    %246 = vector.broadcast %245 : vector<16x1xf32> to vector<16x32xf32>
    %247 = arith.mulf %242, %246 : vector<16x32xf32>
    %248 = vector.broadcast %228 : vector<1x32xf32> to vector<16x32xf32>
    %249 = arith.mulf %247, %248 : vector<16x32xf32>
    %250 = vector.broadcast %229 : vector<1x32xf32> to vector<16x32xf32>
    %251 = arith.addf %249, %250 : vector<16x32xf32>
    %252 = vector.shape_cast %251 : vector<16x32xf32> to vector<8x2x32xf32>
    %c0_121 = arith.constant 0 : index
    %c0_122 = arith.constant 0 : index
    %c0_123 = arith.constant 0 : index
    %253 = vector.load %arg15[%c0_121, %c0_122, %c0_123] : memref<8x2x32xf32, #tpu.memory_space<vmem>>, vector<8x2x32xf32>
    tpu.vector_store %arg15[%c0_121, %c0_122, %c0_123], %252 {strides = array<i32>} : memref<8x2x32xf32, #tpu.memory_space<vmem>>, vector<8x2x32xf32>,
    return
  }
}

</mosaic_0001>

<llo_original>
// kernel: tpu_custom_call.1
$region0: #{tpu_custom_call.1}
  #allocation0 [shape = 'u32[]', space=smem, size = 0x4, offset = 0x4, fixed_abs, tag = 'smem constant byte address 0x4 - core index']
  #allocation1 [shape = 'u32[144,128]{1,0:T(1,128)}', space=vmem, size = 0x12000, scoped, tag = 'internal scratch']
  %s0 = inlined_call_operand.hbm [shape: f32[8,2,32], index: 0, kind: input, shape index: {}]
  %s1 = inlined_call_operand.vmem [shape: f32[2,32,96], index: 1, kind: input, shape index: {}]
  %s2 = inlined_call_operand.vmem [shape: f32[2,1,96], index: 2, kind: input, shape index: {}]
  %s3 = inlined_call_operand.vmem [shape: f32[2,32,32], index: 3, kind: input, shape index: {}]
  %s4 = inlined_call_operand.vmem [shape: f32[2,1,32], index: 4, kind: input, shape index: {}]
  %s5 = inlined_call_operand.vmem [shape: f32[2,1,32], index: 5, kind: input, shape index: {}]
  %s6 = inlined_call_operand.vmem [shape: f32[2,1,32], index: 6, kind: input, shape index: {}]
  %s7 = inlined_call_operand.vmem [shape: f32[2,32,64], index: 7, kind: input, shape index: {}]
  %s8 = inlined_call_operand.vmem [shape: f32[2,1,64], index: 8, kind: input, shape index: {}]
  %s9 = inlined_call_operand.vmem [shape: f32[2,64,32], index: 9, kind: input, shape index: {}]
  %s10 = inlined_call_operand.vmem [shape: f32[2,1,32], index: 10, kind: input, shape index: {}]
  %s11 = inlined_call_operand.vmem [shape: f32[2,1,32], index: 11, kind: input, shape index: {}]
  %s12 = inlined_call_operand.vmem [shape: f32[2,1,32], index: 12, kind: input, shape index: {}]
  %s13 = inlined_call_operand.vmem [shape: f32[1,32], index: 13, kind: input, shape index: {}]
  %s14 = inlined_call_operand.vmem [shape: f32[1,32], index: 14, kind: input, shape index: {}]
  %s15 = inlined_call_operand.hbm [shape: f32[8,2,32], index: 15, kind: output, shape index: {}]
  %s16 = sld [smem:[#allocation0]]
  $region74: #{tpu_custom_call.1} parent=0
    _
  %s18 = ssub.s32 1, %s16
  %s19 = scalar_select 0, %s18, %s16
  $region1: #{tpu_custom_call.1} parent=0
    #allocation2 [shape = 'u8[8192]{0}', space=vmem, size = 0x2000, scoped, tag = 'input window, operand 0, single buffered']
    #allocation3 [shape = 's32[1]{0}', space=sflag, size = 0x4, scoped, tag = 'scoped memory for tpu_custom_call.1']
    #allocation4 [shape = 's32[1]{0}', space=sflag, size = 0x4, scoped, tag = 'scoped memory for tpu_custom_call.1']
    #allocation5 [shape = 'u8[8192]{0}', space=vmem, size = 0x2000, scoped, tag = 'output window, operand 0, single buffered']
    %20 = vsyncpa [#allocation3], 0
    %21 = vsyncpa [#allocation4], 0
    // Predicated region
    $region2: #{tpu_custom_call.1} parent=1 // pred_check
      _
    $region3: #{tpu_custom_call.1} parent=1 // pred_check_branch
      %23 = sbr.rel (0) target = $region5
    $region4: #{tpu_custom_call.1} parent=1 // pred_region
      %s25 = ssub.s32 256, 256
      %26 = vsyncadd [#allocation3], %s25
      %s27 = sshll.u32 [#allocation2], 4
      %s28 = int_to_ptr.vmem [resolvable:$true] %s27
      %33 = dma.hbm_to_vmem [thread:$0]  %s0, 256, %s28, [#allocation3], 32, 32, 2
    $region5: #{tpu_custom_call.1} parent=1 // pred_fallthru
      _
    // Predicated region
    $region6: #{tpu_custom_call.1} parent=1 // pred_check
      _
    $region7: #{tpu_custom_call.1} parent=1 // pred_check_branch
      %35 = sbr.rel (0) target = $region9
    $region8: #{tpu_custom_call.1} parent=1 // pred_region
      _
    $region9: #{tpu_custom_call.1} parent=1 // pred_fallthru
      _
    // Predicated region
    $region10: #{tpu_custom_call.1} parent=1 // pred_check
      _
    $region11: #{tpu_custom_call.1} parent=1 // pred_check_branch
      %37 = sbr.rel (0) target = $region13
    $region12: #{tpu_custom_call.1} parent=1 // pred_region
      _
    $region13: #{tpu_custom_call.1} parent=1 // pred_fallthru
      _
    // Predicated region
    $region14: #{tpu_custom_call.1} parent=1 // pred_check
      _
    $region15: #{tpu_custom_call.1} parent=1 // pred_check_branch
      %39 = sbr.rel (0) target = $region17
    $region16: #{tpu_custom_call.1} parent=1 // pred_region
      _
    $region17: #{tpu_custom_call.1} parent=1 // pred_fallthru
      _
    // Predicated region
    $region18: #{tpu_custom_call.1} parent=1 // pred_check
      _
    $region19: #{tpu_custom_call.1} parent=1 // pred_check_branch
      %41 = sbr.rel (0) target = $region21
    $region20: #{tpu_custom_call.1} parent=1 // pred_region
      _
    $region21: #{tpu_custom_call.1} parent=1 // pred_fallthru
      _
    // Predicated region
    $region22: #{tpu_custom_call.1} parent=1 // pred_check
      _
    $region23: #{tpu_custom_call.1} parent=1 // pred_check_branch
      %43 = sbr.rel (0) target = $region25
    $region24: #{tpu_custom_call.1} parent=1 // pred_region
      _
    $region25: #{tpu_custom_call.1} parent=1 // pred_fallthru
      _
    // Predicated region
    $region26: #{tpu_custom_call.1} parent=1 // pred_check
      _
    $region27: #{tpu_custom_call.1} parent=1 // pred_check_branch
      %45 = sbr.rel (0) target = $region29
    $region28: #{tpu_custom_call.1} parent=1 // pred_region
      _
    $region29: #{tpu_custom_call.1} parent=1 // pred_fallthru
      _
    // Predicated region
    $region30: #{tpu_custom_call.1} parent=1 // pred_check
      _
    $region31: #{tpu_custom_call.1} parent=1 // pred_check_branch
      %47 = sbr.rel (0) target = $region33
    $region32: #{tpu_custom_call.1} parent=1 // pred_region
      _
    $region33: #{tpu_custom_call.1} parent=1 // pred_fallthru
      _
    // Predicated region
    $region34: #{tpu_custom_call.1} parent=1 // pred_check
      _
    $region35: #{tpu_custom_call.1} parent=1 // pred_check_branch
      %49 = sbr.rel (0) target = $region37
    $region36: #{tpu_custom_call.1} parent=1 // pred_region
      _
    $region37: #{tpu_custom_call.1} parent=1 // pred_fallthru
      _
    // Predicated region
    $region38: #{tpu_custom_call.1} parent=1 // pred_check
      _
    $region39: #{tpu_custom_call.1} parent=1 // pred_check_branch
      %51 = sbr.rel (0) target = $region41
    $region40: #{tpu_custom_call.1} parent=1 // pred_region
      _
    $region41: #{tpu_custom_call.1} parent=1 // pred_fallthru
      _
    // Predicated region
    $region42: #{tpu_custom_call.1} parent=1 // pred_check
      _
    $region43: #{tpu_custom_call.1} parent=1 // pred_check_branch
      %53 = sbr.rel (0) target = $region45
    $region44: #{tpu_custom_call.1} parent=1 // pred_region
      _
    $region45: #{tpu_custom_call.1} parent=1 // pred_fallthru
      _
    // Predicated region
    $region46: #{tpu_custom_call.1} parent=1 // pred_check
      _
    $region47: #{tpu_custom_call.1} parent=1 // pred_check_branch
      %55 = sbr.rel (0) target = $region49
    $region48: #{tpu_custom_call.1} parent=1 // pred_region
      _
    $region49: #{tpu_custom_call.1} parent=1 // pred_fallthru
      _
    // Predicated region
    $region50: #{tpu_custom_call.1} parent=1 // pred_check
      _
    $region51: #{tpu_custom_call.1} parent=1 // pred_check_branch
      %57 = sbr.rel (0) target = $region53
    $region52: #{tpu_custom_call.1} parent=1 // pred_region
      _
    $region53: #{tpu_custom_call.1} parent=1 // pred_fallthru
      _
    // Predicated region
    $region54: #{tpu_custom_call.1} parent=1 // pred_check
      _
    $region55: #{tpu_custom_call.1} parent=1 // pred_check_branch
      %59 = sbr.rel (0) target = $region57
    $region56: #{tpu_custom_call.1} parent=1 // pred_region
      _
    $region57: #{tpu_custom_call.1} parent=1 // pred_fallthru
      _
    // Predicated region
    $region58: #{tpu_custom_call.1} parent=1 // pred_check
      _
    $region59: #{tpu_custom_call.1} parent=1 // pred_check_branch
      %61 = sbr.rel (0) target = $region61
    $region60: #{tpu_custom_call.1} parent=1 // pred_region
      _
    $region61: #{tpu_custom_call.1} parent=1 // pred_fallthru
      _
    // Predicated region
    $region62: #{tpu_custom_call.1} parent=1 // pred_check
      _
    $region63: #{tpu_custom_call.1} parent=1 // pred_check_branch
      %63 = sbr.rel (0) target = $region65
    $region64: #{tpu_custom_call.1} parent=1 // pred_region
      %64 = dma.done [#allocation3], 256
    $region65: #{tpu_custom_call.1} parent=1 // pred_fallthru
      _
    %v65 = vld [vmem:[#allocation2] sm:$0x3]
    %v66 = vld [vmem:[#allocation2 + $0x2] sm:$0x3]
    %v67 = vld [vmem:[#allocation2 + $0x4] sm:$0x3]
    %v68 = vld [vmem:[#allocation2 + $0x6] sm:$0x3]
    %v69 = vld [vmem:[#allocation2 + $0x8] sm:$0x3]
    %v70 = vld [vmem:[#allocation2 + $0xa] sm:$0x3]
    %v71 = vld [vmem:[#allocation2 + $0xc] sm:$0x3]
    %v72 = vld [vmem:[#allocation2 + $0xe] sm:$0x3]
    %v73 = vld [vmem:[%s1] sm:$0xff]
    %v74 = vld [vmem:[%s1 + $0x8] sm:$0xff]
    %v75 = vld [vmem:[%s1 + $0x10] sm:$0xff]
    %v76 = vld [vmem:[%s1 + $0x18] sm:$0xff]
    %v77 = vld [vmem:[%s2] sm:$0x1]
    %v79 = vlaneseq
    %v80 = vshrl.u32 %v79, 7
    %v81 = vsub.s32 0, %v80
    %v82 = vrot.slane %v77, %v81
    %v92 = vcombine.low %v65, %v66
    %v93 = vcombine.low %v67, %v68
    %v95 = vunpack.c.l.s4 1983009808
    %v96 = vunpack.c.0.s8 %v95
    %v97 = vlaneseq
    %v98 = vshrl.u32 %v97, 7
    %v99 = vsub.s32 %v96, %v98
    %v100 = vrot.slane %v92, %v99
    %v102 = vunpack.c.l.s4 1983009808
    %v103 = vunpack.c.0.s8 %v102
    %v104 = vlaneseq
    %v105 = vshrl.u32 %v104, 7
    %v106 = vsub.s32 %v103, %v105
    %v107 = vrot.slane %v93, %v106
    %v108 = vcombine.low %v100, %v107
    %v109 = vcombine.low %v69, %v70
    %v110 = vcombine.low %v71, %v72
    %v112 = vunpack.c.l.s4 1983009808
    %v113 = vunpack.c.0.s8 %v112
    %v114 = vlaneseq
    %v115 = vshrl.u32 %v114, 7
    %v116 = vsub.s32 %v113, %v115
    %v117 = vrot.slane %v109, %v116
    %v119 = vunpack.c.l.s4 1983009808
    %v120 = vunpack.c.0.s8 %v119
    %v121 = vlaneseq
    %v122 = vshrl.u32 %v121, 7
    %v123 = vsub.s32 %v120, %v122
    %v124 = vrot.slane %v110, %v123
    %v125 = vcombine.low %v117, %v124
    %vm126 = vcmask 261120
    %v127 = vsel %vm126, %v108, 0
    %v129 = vsel %vm126, %v125, 0
    %131 = vmatprep.subr.mxu0 0.0
    %132 = vmatpush1.msra.mxu0 0.0
    %133 = vmatprep.subr.mxu0 0.0
    %134 = vmatpush1.msra.mxu0 0.0
    %135 = vmatprep.subr.mxu0 0.0
    %136 = vmatpush1.msra.mxu0 0.0
    %137 = vmatprep.subr.mxu0 0.0
    %138 = vmatpush1.msra.mxu0 0.0
    %139 = vmatprep.subr.mxu0 0.0
    %140 = vmatpush1.msra.mxu0 0.0
    %141 = vmatprep.subr.mxu0 0.0
    %142 = vmatpush1.msra.mxu0 0.0
    %143 = vmatprep.subr.mxu0 0.0
    %144 = vmatpush1.msra.mxu0 0.0
    %145 = vmatprep.subr.mxu0 0.0
    %146 = vmatpush1.msra.mxu0 0.0
    %147 = vmatprep.subr.mxu0 0.0
    %148 = vmatpush1.msra.mxu0 0.0
    %149 = vmatprep.subr.mxu0 0.0
    %150 = vmatpush1.msra.mxu0 0.0
    %151 = vmatprep.subr.mxu0 0.0
    %152 = vmatpush1.msra.mxu0 0.0
    %153 = vmatprep.subr.mxu0 0.0
    %154 = vmatpush1.msra.mxu0 0.0
    %155 = vmatprep.subr.mxu0 0.0
    %156 = vmatpush1.msra.mxu0 %v76
    %157 = vmatprep.subr.mxu0 0.0
    %158 = vmatpush1.msra.mxu0 %v75
    %159 = vmatprep.subr.mxu0 0.0
    %160 = vmatpush1.msra.mxu0 %v74
    %161 = vmatprep.subr.mxu0 0.0
    %162 = vmatpush1.msra.mxu0 %v73
    %163 = vmatprep.subr.mxu0 0.0
    %164 = vmatpush2.msra.mxu0 0.0
    %165 = vmatprep.subr.mxu0 0.0
    %166 = vmatpush2.msra.mxu0 0.0
    %167 = vmatprep.subr.mxu0 0.0
    %168 = vmatpush2.msra.mxu0 0.0
    %169 = vmatprep.subr.mxu0 0.0
    %170 = vmatpush2.msra.mxu0 0.0
    %171 = vmatprep.subr.mxu0 0.0
    %172 = vmatpush2.msra.mxu0 0.0
    %173 = vmatprep.subr.mxu0 0.0
    %174 = vmatpush2.msra.mxu0 0.0
    %175 = vmatprep.subr.mxu0 0.0
    %176 = vmatpush2.msra.mxu0 0.0
    %177 = vmatprep.subr.mxu0 0.0
    %178 = vmatpush2.msra.mxu0 0.0
    %179 = vmatprep.subr.mxu0 0.0
    %180 = vmatpush2.msra.mxu0 0.0
    %181 = vmatprep.subr.mxu0 0.0
    %182 = vmatpush2.msra.mxu0 0.0
    %183 = vmatprep.subr.mxu0 0.0
    %184 = vmatpush2.msra.mxu0 0.0
    %185 = vmatprep.subr.mxu0 0.0
    %186 = vmatpush2.msra.mxu0 0.0
    %187 = vmatprep.subr.mxu0 0.0
    %188 = vmatpush2.msra.mxu0 0.0
    %189 = vmatprep.subr.mxu0 0.0
    %190 = vmatpush2.msra.mxu0 0.0
    %191 = vmatprep.subr.mxu0 0.0
    %192 = vmatpush2.msra.mxu0 0.0
    %193 = vmatprep.subr.mxu0 0.0
    %194 = vmatpush2.msra.mxu0 0.0
    %195 = vmatprep.mubr.f32.mxu0 0.0
    %196 = vmatmul.mubr.f32.gmra.mxu0 %v127
    %v197 = vpop.f32.mrf.mxu0
    %v198 = vadd.f32 %v82, %v197
    %v199 = vpop.f32.mrf.mxu0
    %200 = vmatprep.mubr.f32.mxu0 0.0
    %201 = vmatmul.mubr.f32.gmra.mxu0 %v129
    %v202 = vpop.f32.mrf.mxu0
    %v203 = vadd.f32 %v82, %v202
    %v204 = vpop.f32.mrf.mxu0
    %205 = vdwg.mxu0
    %v206 = vmul.f32 %v198, 0.35355338
    %v207 = vmul.f32 %v203, 0.35355338
    %210 = vrot.lane.b32.xlu0 %v206, 120
    %v211 = vpop.permute.xlu0 %210
    %212 = vrot.lane.b32.xlu0 %v207, 120
    %v213 = vpop.permute.xlu0 %212
    %216 = vrot.lane.b32.xlu0 %v206, 112
    %v217 = vpop.permute.xlu0 %216
    %218 = vrot.lane.b32.xlu0 %v207, 112
    %v219 = vpop.permute.xlu0 %218
    %222 = vrot.lane.b32.xlu0 %v206, 104
    %v223 = vpop.permute.xlu0 %222
    %224 = vrot.lane.b32.xlu0 %v207, 104
    %v225 = vpop.permute.xlu0 %224
    %v228 = vcombine.low %v206, %v217
    %v229 = vcombine.high %v206, %v217
    %v231 = vunpack.c.l.s4 1983009808
    %v232 = vunpack.c.0.s8 %v231
    %v233 = vlaneseq
    %v234 = vshrl.u32 %v233, 7
    %v235 = vsub.s32 %v232, %v234
    %v236 = vrot.slane %v228, %v235
    %v238 = vunpack.c.l.s4 1983009808
    %v239 = vunpack.c.0.s8 %v238
    %v240 = vlaneseq
    %v241 = vshrl.u32 %v240, 7
    %v242 = vsub.s32 %v239, %v241
    %v243 = vrot.slane %v229, %v242
    %v244 = vcombine.low %v211, %v223
    %v245 = vcombine.high %v211, %v223
    %v247 = vunpack.c.l.s4 1983009808
    %v248 = vunpack.c.0.s8 %v247
    %v249 = vlaneseq
    %v250 = vshrl.u32 %v249, 7
    %v251 = vsub.s32 %v248, %v250
    %v252 = vrot.slane %v244, %v251
    %v254 = vunpack.c.l.s4 1983009808
    %v255 = vunpack.c.0.s8 %v254
    %v256 = vlaneseq
    %v257 = vshrl.u32 %v256, 7
    %v258 = vsub.s32 %v255, %v257
    %v259 = vrot.slane %v245, %v258
    %v260 = vcombine.low %v236, %v252
    %v261 = vcombine.high %v236, %v252
    %v263 = vunpack.c.l.s4 1934713408
    %v264 = vunpack.c.0.s8 %v263
    %v265 = vlaneseq
    %v266 = vshrl.u32 %v265, 7
    %v267 = vsub.s32 %v264, %v266
    %v268 = vrot.slane %v260, %v267
    %v270 = vunpack.c.l.s4 1934713408
    %v271 = vunpack.c.0.s8 %v270
    %v272 = vlaneseq
    %v273 = vshrl.u32 %v272, 7
    %v274 = vsub.s32 %v271, %v273
    %v275 = vrot.slane %v261, %v274
    %v276 = vcombine.low %v243, %v259
    %v277 = vcombine.high %v243, %v259
    %v279 = vunpack.c.l.s4 1934713408
    %v280 = vunpack.c.0.s8 %v279
    %v281 = vlaneseq
    %v282 = vshrl.u32 %v281, 7
    %v283 = vsub.s32 %v280, %v282
    %v284 = vrot.slane %v276, %v283
    %v286 = vunpack.c.l.s4 1934713408
    %v287 = vunpack.c.0.s8 %v286
    %v288 = vlaneseq
    %v289 = vshrl.u32 %v288, 7
    %v290 = vsub.s32 %v287, %v289
    %v291 = vrot.slane %v277, %v290
    %v292 = vcombine.high %v268, 0.0
    %v293 = vcombine.high %v275, 0.0
    %v294 = vcombine.high %v284, 0.0
    %v295 = vcombine.high %v291, 0.0
    %v296 = vcombine.low %v207, %v219
    %v297 = vcombine.high %v207, %v219
    %v299 = vunpack.c.l.s4 1983009808
    %v300 = vunpack.c.0.s8 %v299
    %v301 = vlaneseq
    %v302 = vshrl.u32 %v301, 7
    %v303 = vsub.s32 %v300, %v302
    %v304 = vrot.slane %v296, %v303
    %v306 = vunpack.c.l.s4 1983009808
    %v307 = vunpack.c.0.s8 %v306
    %v308 = vlaneseq
    %v309 = vshrl.u32 %v308, 7
    %v310 = vsub.s32 %v307, %v309
    %v311 = vrot.slane %v297, %v310
    %v312 = vcombine.low %v213, %v225
    %v313 = vcombine.high %v213, %v225
    %v315 = vunpack.c.l.s4 1983009808
    %v316 = vunpack.c.0.s8 %v315
    %v317 = vlaneseq
    %v318 = vshrl.u32 %v317, 7
    %v319 = vsub.s32 %v316, %v318
    %v320 = vrot.slane %v312, %v319
    %v322 = vunpack.c.l.s4 1983009808
    %v323 = vunpack.c.0.s8 %v322
    %v324 = vlaneseq
    %v325 = vshrl.u32 %v324, 7
    %v326 = vsub.s32 %v323, %v325
    %v327 = vrot.slane %v313, %v326
    %v328 = vcombine.low %v304, %v320
    %v329 = vcombine.high %v304, %v320
    %v331 = vunpack.c.l.s4 1934713408
    %v332 = vunpack.c.0.s8 %v331
    %v333 = vlaneseq
    %v334 = vshrl.u32 %v333, 7
    %v335 = vsub.s32 %v332, %v334
    %v336 = vrot.slane %v328, %v335
    %v338 = vunpack.c.l.s4 1934713408
    %v339 = vunpack.c.0.s8 %v338
    %v340 = vlaneseq
    %v341 = vshrl.u32 %v340, 7
    %v342 = vsub.s32 %v339, %v341
    %v343 = vrot.slane %v329, %v342
    %v344 = vcombine.low %v311, %v327
    %v345 = vcombine.high %v311, %v327
    %v347 = vunpack.c.l.s4 1934713408
    %v348 = vunpack.c.0.s8 %v347
    %v349 = vlaneseq
    %v350 = vshrl.u32 %v349, 7
    %v351 = vsub.s32 %v348, %v350
    %v352 = vrot.slane %v344, %v351
    %v354 = vunpack.c.l.s4 1934713408
    %v355 = vunpack.c.0.s8 %v354
    %v356 = vlaneseq
    %v357 = vshrl.u32 %v356, 7
    %v358 = vsub.s32 %v355, %v357
    %v359 = vrot.slane %v345, %v358
    %v360 = vcombine.high %v336, 0.0
    %v361 = vcombine.high %v343, 0.0
    %v362 = vcombine.high %v352, 0.0
    %v363 = vcombine.high %v359, 0.0
    %v364 = vcombine.low %v268, %v284
    %v366 = vunpack.c.l.s4 1983009808
    %v367 = vunpack.c.0.s8 %v366
    %v368 = vlaneseq
    %v369 = vshrl.u32 %v368, 7
    %v370 = vsub.s32 %v367, %v369
    %v371 = vrot.slane %v364, %v370
    %v372 = vcombine.low %v275, %v291
    %v374 = vunpack.c.l.s4 1983009808
    %v375 = vunpack.c.0.s8 %v374
    %v376 = vlaneseq
    %v377 = vshrl.u32 %v376, 7
    %v378 = vsub.s32 %v375, %v377
    %v379 = vrot.slane %v372, %v378
    %v380 = vcombine.low %v336, %v352
    %v382 = vunpack.c.l.s4 1983009808
    %v383 = vunpack.c.0.s8 %v382
    %v384 = vlaneseq
    %v385 = vshrl.u32 %v384, 7
    %v386 = vsub.s32 %v383, %v385
    %v387 = vrot.slane %v380, %v386
    %v388 = vcombine.low %v343, %v359
    %v390 = vunpack.c.l.s4 1983009808
    %v391 = vunpack.c.0.s8 %v390
    %v392 = vlaneseq
    %v393 = vshrl.u32 %v392, 7
    %v394 = vsub.s32 %v391, %v393
    %v395 = vrot.slane %v388, %v394
    %v396 = vcombine.low %v371, %v379
    %v397 = vcombine.high %v371, %v379
    %v399 = vunpack.c.l.s4 1934713408
    %v400 = vunpack.c.0.s8 %v399
    %v401 = vlaneseq
    %v402 = vshrl.u32 %v401, 7
    %v403 = vsub.s32 %v400, %v402
    %v404 = vrot.slane %v396, %v403
    %v406 = vunpack.c.l.s4 1934713408
    %v407 = vunpack.c.0.s8 %v406
    %v408 = vlaneseq
    %v409 = vshrl.u32 %v408, 7
    %v410 = vsub.s32 %v407, %v409
    %v411 = vrot.slane %v397, %v410
    %v412 = vcombine.low %v387, %v395
    %v413 = vcombine.high %v387, %v395
    %v415 = vunpack.c.l.s4 1934713408
    %v416 = vunpack.c.0.s8 %v415
    %v417 = vlaneseq
    %v418 = vshrl.u32 %v417, 7
    %v419 = vsub.s32 %v416, %v418
    %v420 = vrot.slane %v412, %v419
    %v422 = vunpack.c.l.s4 1934713408
    %v423 = vunpack.c.0.s8 %v422
    %v424 = vlaneseq
    %v425 = vshrl.u32 %v424, 7
    %v426 = vsub.s32 %v423, %v425
    %v427 = vrot.slane %v413, %v426
    %v428 = vcombine.low %v404, %v420
    %v429 = vcombine.high %v404, %v420
    %v430 = vcombine.low %v411, %v427
    %v431 = vcombine.high %v411, %v427
    %v432 = vcombine.low %v292, %v294
    %v434 = vunpack.c.l.s4 1983009808
    %v435 = vunpack.c.0.s8 %v434
    %v436 = vlaneseq
    %v437 = vshrl.u32 %v436, 7
    %v438 = vsub.s32 %v435, %v437
    %v439 = vrot.slane %v432, %v438
    %v440 = vcombine.low %v293, %v295
    %v442 = vunpack.c.l.s4 1983009808
    %v443 = vunpack.c.0.s8 %v442
    %v444 = vlaneseq
    %v445 = vshrl.u32 %v444, 7
    %v446 = vsub.s32 %v443, %v445
    %v447 = vrot.slane %v440, %v446
    %v448 = vcombine.low %v360, %v362
    %v450 = vunpack.c.l.s4 1983009808
    %v451 = vunpack.c.0.s8 %v450
    %v452 = vlaneseq
    %v453 = vshrl.u32 %v452, 7
    %v454 = vsub.s32 %v451, %v453
    %v455 = vrot.slane %v448, %v454
    %v456 = vcombine.low %v361, %v363
    %v458 = vunpack.c.l.s4 1983009808
    %v459 = vunpack.c.0.s8 %v458
    %v460 = vlaneseq
    %v461 = vshrl.u32 %v460, 7
    %v462 = vsub.s32 %v459, %v461
    %v463 = vrot.slane %v456, %v462
    %v464 = vcombine.low %v439, %v447
    %v465 = vcombine.high %v439, %v447
    %v467 = vunpack.c.l.s4 1934713408
    %v468 = vunpack.c.0.s8 %v467
    %v469 = vlaneseq
    %v470 = vshrl.u32 %v469, 7
    %v471 = vsub.s32 %v468, %v470
    %v472 = vrot.slane %v464, %v471
    %v474 = vunpack.c.l.s4 1934713408
    %v475 = vunpack.c.0.s8 %v474
    %v476 = vlaneseq
    %v477 = vshrl.u32 %v476, 7
    %v478 = vsub.s32 %v475, %v477
    %v479 = vrot.slane %v465, %v478
    %v480 = vcombine.low %v455, %v463
    %v481 = vcombine.high %v455, %v463
    %v483 = vunpack.c.l.s4 1934713408
    %v484 = vunpack.c.0.s8 %v483
    %v485 = vlaneseq
    %v486 = vshrl.u32 %v485, 7
    %v487 = vsub.s32 %v484, %v486
    %v488 = vrot.slane %v480, %v487
    %v490 = vunpack.c.l.s4 1934713408
    %v491 = vunpack.c.0.s8 %v490
    %v492 = vlaneseq
    %v493 = vshrl.u32 %v492, 7
    %v494 = vsub.s32 %v491, %v493
    %v495 = vrot.slane %v481, %v494
    %v496 = vcombine.low %v472, %v488
    %v497 = vcombine.high %v472, %v488
    %v498 = vcombine.low %v479, %v495
    %v499 = vcombine.high %v479, %v495
    %502 = vrot.lane.b32.xlu0 %v198, 120
    %v503 = vpop.permute.xlu0 %502
    %504 = vrot.lane.b32.xlu0 %v203, 120
    %v505 = vpop.permute.xlu0 %504
    %506 = vrot.lane.b32.xlu0 %v198, 112
    %v507 = vpop.permute.xlu0 %506
    %508 = vrot.lane.b32.xlu0 %v203, 112
    %v509 = vpop.permute.xlu0 %508
    %510 = vrot.lane.b32.xlu0 %v198, 104
    %v511 = vpop.permute.xlu0 %510
    %512 = vrot.lane.b32.xlu0 %v203, 104
    %v513 = vpop.permute.xlu0 %512
    %514 = vrot.lane.b32.xlu0 %v198, 96
    %v515 = vpop.permute.xlu0 %514
    %516 = vrot.lane.b32.xlu0 %v203, 96
    %v517 = vpop.permute.xlu0 %516
    %518 = vrot.lane.b32.xlu0 %v503, 96
    %v519 = vpop.permute.xlu0 %518
    %520 = vrot.lane.b32.xlu0 %v505, 96
    %v521 = vpop.permute.xlu0 %520
    %522 = vrot.lane.b32.xlu0 %v507, 96
    %v523 = vpop.permute.xlu0 %522
    %524 = vrot.lane.b32.xlu0 %v509, 96
    %v525 = vpop.permute.xlu0 %524
    %526 = vrot.lane.b32.xlu0 %v511, 96
    %v527 = vpop.permute.xlu0 %526
    %528 = vrot.lane.b32.xlu0 %v513, 96
    %v529 = vpop.permute.xlu0 %528
    %v538 = vcombine.low %v515, %v523
    %v539 = vcombine.high %v515, %v523
    %v541 = vunpack.c.l.s4 1983009808
    %v542 = vunpack.c.0.s8 %v541
    %v543 = vlaneseq
    %v544 = vshrl.u32 %v543, 7
    %v545 = vsub.s32 %v542, %v544
    %v546 = vrot.slane %v538, %v545
    %v548 = vunpack.c.l.s4 1983009808
    %v549 = vunpack.c.0.s8 %v548
    %v550 = vlaneseq
    %v551 = vshrl.u32 %v550, 7
    %v552 = vsub.s32 %v549, %v551
    %v553 = vrot.slane %v539, %v552
    %v554 = vcombine.low %v519, %v527
    %v555 = vcombine.high %v519, %v527
    %v557 = vunpack.c.l.s4 1983009808
    %v558 = vunpack.c.0.s8 %v557
    %v559 = vlaneseq
    %v560 = vshrl.u32 %v559, 7
    %v561 = vsub.s32 %v558, %v560
    %v562 = vrot.slane %v554, %v561
    %v564 = vunpack.c.l.s4 1983009808
    %v565 = vunpack.c.0.s8 %v564
    %v566 = vlaneseq
    %v567 = vshrl.u32 %v566, 7
    %v568 = vsub.s32 %v565, %v567
    %v569 = vrot.slane %v555, %v568
    %v570 = vcombine.low %v546, %v562
    %v571 = vcombine.high %v546, %v562
    %v573 = vunpack.c.l.s4 1934713408
    %v574 = vunpack.c.0.s8 %v573
    %v575 = vlaneseq
    %v576 = vshrl.u32 %v575, 7
    %v577 = vsub.s32 %v574, %v576
    %v578 = vrot.slane %v570, %v577
    %v580 = vunpack.c.l.s4 1934713408
    %v581 = vunpack.c.0.s8 %v580
    %v582 = vlaneseq
    %v583 = vshrl.u32 %v582, 7
    %v584 = vsub.s32 %v581, %v583
    %v585 = vrot.slane %v571, %v584
    %v586 = vcombine.low %v553, %v569
    %v587 = vcombine.high %v553, %v569
    %v589 = vunpack.c.l.s4 1934713408
    %v590 = vunpack.c.0.s8 %v589
    %v591 = vlaneseq
    %v592 = vshrl.u32 %v591, 7
    %v593 = vsub.s32 %v590, %v592
    %v594 = vrot.slane %v586, %v593
    %v596 = vunpack.c.l.s4 1934713408
    %v597 = vunpack.c.0.s8 %v596
    %v598 = vlaneseq
    %v599 = vshrl.u32 %v598, 7
    %v600 = vsub.s32 %v597, %v599
    %v601 = vrot.slane %v587, %v600
    %v602 = vcombine.high %v578, 0.0
    %v603 = vcombine.high %v585, 0.0
    %v604 = vcombine.high %v594, 0.0
    %v605 = vcombine.high %v601, 0.0
    %v606 = vcombine.low %v517, %v525
    %v607 = vcombine.high %v517, %v525
    %v609 = vunpack.c.l.s4 1983009808
    %v610 = vunpack.c.0.s8 %v609
    %v611 = vlaneseq
    %v612 = vshrl.u32 %v611, 7
    %v613 = vsub.s32 %v610, %v612
    %v614 = vrot.slane %v606, %v613
    %v616 = vunpack.c.l.s4 1983009808
    %v617 = vunpack.c.0.s8 %v616
    %v618 = vlaneseq
    %v619 = vshrl.u32 %v618, 7
    %v620 = vsub.s32 %v617, %v619
    %v621 = vrot.slane %v607, %v620
    %v622 = vcombine.low %v521, %v529
    %v623 = vcombine.high %v521, %v529
    %v625 = vunpack.c.l.s4 1983009808
    %v626 = vunpack.c.0.s8 %v625
    %v627 = vlaneseq
    %v628 = vshrl.u32 %v627, 7
    %v629 = vsub.s32 %v626, %v628
    %v630 = vrot.slane %v622, %v629
    %v632 = vunpack.c.l.s4 1983009808
    %v633 = vunpack.c.0.s8 %v632
    %v634 = vlaneseq
    %v635 = vshrl.u32 %v634, 7
    %v636 = vsub.s32 %v633, %v635
    %v637 = vrot.slane %v623, %v636
    %v638 = vcombine.low %v614, %v630
    %v639 = vcombine.high %v614, %v630
    %v641 = vunpack.c.l.s4 1934713408
    %v642 = vunpack.c.0.s8 %v641
    %v643 = vlaneseq
    %v644 = vshrl.u32 %v643, 7
    %v645 = vsub.s32 %v642, %v644
    %v646 = vrot.slane %v638, %v645
    %v648 = vunpack.c.l.s4 1934713408
    %v649 = vunpack.c.0.s8 %v648
    %v650 = vlaneseq
    %v651 = vshrl.u32 %v650, 7
    %v652 = vsub.s32 %v649, %v651
    %v653 = vrot.slane %v639, %v652
    %v654 = vcombine.low %v621, %v637
    %v655 = vcombine.high %v621, %v637
    %v657 = vunpack.c.l.s4 1934713408
    %v658 = vunpack.c.0.s8 %v657
    %v659 = vlaneseq
    %v660 = vshrl.u32 %v659, 7
    %v661 = vsub.s32 %v658, %v660
    %v662 = vrot.slane %v654, %v661
    %v664 = vunpack.c.l.s4 1934713408
    %v665 = vunpack.c.0.s8 %v664
    %v666 = vlaneseq
    %v667 = vshrl.u32 %v666, 7
    %v668 = vsub.s32 %v665, %v667
    %v669 = vrot.slane %v655, %v668
    %v670 = vcombine.high %v646, 0.0
    %v671 = vcombine.high %v653, 0.0
    %v672 = vcombine.high %v662, 0.0
    %v673 = vcombine.high %v669, 0.0
    %v674 = vcombine.low %v578, %v594
    %v676 = vunpack.c.l.s4 1983009808
    %v677 = vunpack.c.0.s8 %v676
    %v678 = vlaneseq
    %v679 = vshrl.u32 %v678, 7
    %v680 = vsub.s32 %v677, %v679
    %v681 = vrot.slane %v674, %v680
    %v682 = vcombine.low %v585, %v601
    %v684 = vunpack.c.l.s4 1983009808
    %v685 = vunpack.c.0.s8 %v684
    %v686 = vlaneseq
    %v687 = vshrl.u32 %v686, 7
    %v688 = vsub.s32 %v685, %v687
    %v689 = vrot.slane %v682, %v688
    %v690 = vcombine.low %v646, %v662
    %v692 = vunpack.c.l.s4 1983009808
    %v693 = vunpack.c.0.s8 %v692
    %v694 = vlaneseq
    %v695 = vshrl.u32 %v694, 7
    %v696 = vsub.s32 %v693, %v695
    %v697 = vrot.slane %v690, %v696
    %v698 = vcombine.low %v653, %v669
    %v700 = vunpack.c.l.s4 1983009808
    %v701 = vunpack.c.0.s8 %v700
    %v702 = vlaneseq
    %v703 = vshrl.u32 %v702, 7
    %v704 = vsub.s32 %v701, %v703
    %v705 = vrot.slane %v698, %v704
    %v706 = vcombine.low %v681, %v689
    %v707 = vcombine.high %v681, %v689
    %v709 = vunpack.c.l.s4 1934713408
    %v710 = vunpack.c.0.s8 %v709
    %v711 = vlaneseq
    %v712 = vshrl.u32 %v711, 7
    %v713 = vsub.s32 %v710, %v712
    %v714 = vrot.slane %v706, %v713
    %v716 = vunpack.c.l.s4 1934713408
    %v717 = vunpack.c.0.s8 %v716
    %v718 = vlaneseq
    %v719 = vshrl.u32 %v718, 7
    %v720 = vsub.s32 %v717, %v719
    %v721 = vrot.slane %v707, %v720
    %v722 = vcombine.low %v697, %v705
    %v723 = vcombine.high %v697, %v705
    %v725 = vunpack.c.l.s4 1934713408
    %v726 = vunpack.c.0.s8 %v725
    %v727 = vlaneseq
    %v728 = vshrl.u32 %v727, 7
    %v729 = vsub.s32 %v726, %v728
    %v730 = vrot.slane %v722, %v729
    %v732 = vunpack.c.l.s4 1934713408
    %v733 = vunpack.c.0.s8 %v732
    %v734 = vlaneseq
    %v735 = vshrl.u32 %v734, 7
    %v736 = vsub.s32 %v733, %v735
    %v737 = vrot.slane %v723, %v736
    %v738 = vcombine.low %v714, %v730
    %v739 = vcombine.high %v714, %v730
    %v740 = vcombine.low %v721, %v737
    %v741 = vcombine.high %v721, %v737
    %v742 = vcombine.low %v602, %v604
    %v744 = vunpack.c.l.s4 1983009808
    %v745 = vunpack.c.0.s8 %v744
    %v746 = vlaneseq
    %v747 = vshrl.u32 %v746, 7
    %v748 = vsub.s32 %v745, %v747
    %v749 = vrot.slane %v742, %v748
    %v750 = vcombine.low %v603, %v605
    %v752 = vunpack.c.l.s4 1983009808
    %v753 = vunpack.c.0.s8 %v752
    %v754 = vlaneseq
    %v755 = vshrl.u32 %v754, 7
    %v756 = vsub.s32 %v753, %v755
    %v757 = vrot.slane %v750, %v756
    %v758 = vcombine.low %v670, %v672
    %v760 = vunpack.c.l.s4 1983009808
    %v761 = vunpack.c.0.s8 %v760
    %v762 = vlaneseq
    %v763 = vshrl.u32 %v762, 7
    %v764 = vsub.s32 %v761, %v763
    %v765 = vrot.slane %v758, %v764
    %v766 = vcombine.low %v671, %v673
    %v768 = vunpack.c.l.s4 1983009808
    %v769 = vunpack.c.0.s8 %v768
    %v770 = vlaneseq
    %v771 = vshrl.u32 %v770, 7
    %v772 = vsub.s32 %v769, %v771
    %v773 = vrot.slane %v766, %v772
    %v774 = vcombine.low %v749, %v757
    %v775 = vcombine.high %v749, %v757
    %v777 = vunpack.c.l.s4 1934713408
    %v778 = vunpack.c.0.s8 %v777
    %v779 = vlaneseq
    %v780 = vshrl.u32 %v779, 7
    %v781 = vsub.s32 %v778, %v780
    %v782 = vrot.slane %v774, %v781
    %v784 = vunpack.c.l.s4 1934713408
    %v785 = vunpack.c.0.s8 %v784
    %v786 = vlaneseq
    %v787 = vshrl.u32 %v786, 7
    %v788 = vsub.s32 %v785, %v787
    %v789 = vrot.slane %v775, %v788
    %v790 = vcombine.low %v765, %v773
    %v791 = vcombine.high %v765, %v773
    %v793 = vunpack.c.l.s4 1934713408
    %v794 = vunpack.c.0.s8 %v793
    %v795 = vlaneseq
    %v796 = vshrl.u32 %v795, 7
    %v797 = vsub.s32 %v794, %v796
    %v798 = vrot.slane %v790, %v797
    %v800 = vunpack.c.l.s4 1934713408
    %v801 = vunpack.c.0.s8 %v800
    %v802 = vlaneseq
    %v803 = vshrl.u32 %v802, 7
    %v804 = vsub.s32 %v801, %v803
    %v805 = vrot.slane %v791, %v804
    %v806 = vcombine.low %v782, %v798
    %v807 = vcombine.high %v782, %v798
    %v808 = vcombine.low %v789, %v805
    %v809 = vcombine.high %v789, %v805
    %810 = vrot.lane.b32.xlu0 %v198, 64
    %v811 = vpop.permute.xlu0 %810
    %812 = vrot.lane.b32.xlu0 %v203, 64
    %v813 = vpop.permute.xlu0 %812
    %814 = vrot.lane.b32.xlu0 %v503, 64
    %v815 = vpop.permute.xlu0 %814
    %816 = vrot.lane.b32.xlu0 %v505, 64
    %v817 = vpop.permute.xlu0 %816
    %818 = vrot.lane.b32.xlu0 %v507, 64
    %v819 = vpop.permute.xlu0 %818
    %820 = vrot.lane.b32.xlu0 %v509, 64
    %v821 = vpop.permute.xlu0 %820
    %822 = vrot.lane.b32.xlu0 %v511, 64
    %v823 = vpop.permute.xlu0 %822
    %824 = vrot.lane.b32.xlu0 %v513, 64
    %v825 = vpop.permute.xlu0 %824
    %v834 = vcombine.low %v811, %v819
    %v835 = vcombine.high %v811, %v819
    %v837 = vunpack.c.l.s4 1983009808
    %v838 = vunpack.c.0.s8 %v837
    %v839 = vlaneseq
    %v840 = vshrl.u32 %v839, 7
    %v841 = vsub.s32 %v838, %v840
    %v842 = vrot.slane %v834, %v841
    %v844 = vunpack.c.l.s4 1983009808
    %v845 = vunpack.c.0.s8 %v844
    %v846 = vlaneseq
    %v847 = vshrl.u32 %v846, 7
    %v848 = vsub.s32 %v845, %v847
    %v849 = vrot.slane %v835, %v848
    %v850 = vcombine.low %v815, %v823
    %v851 = vcombine.high %v815, %v823
    %v853 = vunpack.c.l.s4 1983009808
    %v854 = vunpack.c.0.s8 %v853
    %v855 = vlaneseq
    %v856 = vshrl.u32 %v855, 7
    %v857 = vsub.s32 %v854, %v856
    %v858 = vrot.slane %v850, %v857
    %v860 = vunpack.c.l.s4 1983009808
    %v861 = vunpack.c.0.s8 %v860
    %v862 = vlaneseq
    %v863 = vshrl.u32 %v862, 7
    %v864 = vsub.s32 %v861, %v863
    %v865 = vrot.slane %v851, %v864
    %v866 = vcombine.low %v842, %v858
    %v867 = vcombine.high %v842, %v858
    %v869 = vunpack.c.l.s4 1934713408
    %v870 = vunpack.c.0.s8 %v869
    %v871 = vlaneseq
    %v872 = vshrl.u32 %v871, 7
    %v873 = vsub.s32 %v870, %v872
    %v874 = vrot.slane %v866, %v873
    %v876 = vunpack.c.l.s4 1934713408
    %v877 = vunpack.c.0.s8 %v876
    %v878 = vlaneseq
    %v879 = vshrl.u32 %v878, 7
    %v880 = vsub.s32 %v877, %v879
    %v881 = vrot.slane %v867, %v880
    %v882 = vcombine.low %v849, %v865
    %v883 = vcombine.high %v849, %v865
    %v885 = vunpack.c.l.s4 1934713408
    %v886 = vunpack.c.0.s8 %v885
    %v887 = vlaneseq
    %v888 = vshrl.u32 %v887, 7
    %v889 = vsub.s32 %v886, %v888
    %v890 = vrot.slane %v882, %v889
    %v892 = vunpack.c.l.s4 1934713408
    %v893 = vunpack.c.0.s8 %v892
    %v894 = vlaneseq
    %v895 = vshrl.u32 %v894, 7
    %v896 = vsub.s32 %v893, %v895
    %v897 = vrot.slane %v883, %v896
    %v898 = vcombine.high %v874, 0.0
    %v899 = vcombine.high %v881, 0.0
    %v900 = vcombine.high %v890, 0.0
    %v901 = vcombine.high %v897, 0.0
    %v902 = vcombine.low %v813, %v821
    %v903 = vcombine.high %v813, %v821
    %v905 = vunpack.c.l.s4 1983009808
    %v906 = vunpack.c.0.s8 %v905
    %v907 = vlaneseq
    %v908 = vshrl.u32 %v907, 7
    %v909 = vsub.s32 %v906, %v908
    %v910 = vrot.slane %v902, %v909
    %v912 = vunpack.c.l.s4 1983009808
    %v913 = vunpack.c.0.s8 %v912
    %v914 = vlaneseq
    %v915 = vshrl.u32 %v914, 7
    %v916 = vsub.s32 %v913, %v915
    %v917 = vrot.slane %v903, %v916
    %v918 = vcombine.low %v817, %v825
    %v919 = vcombine.high %v817, %v825
    %v921 = vunpack.c.l.s4 1983009808
    %v922 = vunpack.c.0.s8 %v921
    %v923 = vlaneseq
    %v924 = vshrl.u32 %v923, 7
    %v925 = vsub.s32 %v922, %v924
    %v926 = vrot.slane %v918, %v925
    %v928 = vunpack.c.l.s4 1983009808
    %v929 = vunpack.c.0.s8 %v928
    %v930 = vlaneseq
    %v931 = vshrl.u32 %v930, 7
    %v932 = vsub.s32 %v929, %v931
    %v933 = vrot.slane %v919, %v932
    %v934 = vcombine.low %v910, %v926
    %v935 = vcombine.high %v910, %v926
    %v937 = vunpack.c.l.s4 1934713408
    %v938 = vunpack.c.0.s8 %v937
    %v939 = vlaneseq
    %v940 = vshrl.u32 %v939, 7
    %v941 = vsub.s32 %v938, %v940
    %v942 = vrot.slane %v934, %v941
    %v944 = vunpack.c.l.s4 1934713408
    %v945 = vunpack.c.0.s8 %v944
    %v946 = vlaneseq
    %v947 = vshrl.u32 %v946, 7
    %v948 = vsub.s32 %v945, %v947
    %v949 = vrot.slane %v935, %v948
    %v950 = vcombine.low %v917, %v933
    %v951 = vcombine.high %v917, %v933
    %v953 = vunpack.c.l.s4 1934713408
    %v954 = vunpack.c.0.s8 %v953
    %v955 = vlaneseq
    %v956 = vshrl.u32 %v955, 7
    %v957 = vsub.s32 %v954, %v956
    %v958 = vrot.slane %v950, %v957
    %v960 = vunpack.c.l.s4 1934713408
    %v961 = vunpack.c.0.s8 %v960
    %v962 = vlaneseq
    %v963 = vshrl.u32 %v962, 7
    %v964 = vsub.s32 %v961, %v963
    %v965 = vrot.slane %v951, %v964
    %v966 = vcombine.high %v942, 0.0
    %v967 = vcombine.high %v949, 0.0
    %v968 = vcombine.high %v958, 0.0
    %v969 = vcombine.high %v965, 0.0
    %v970 = vcombine.low %v874, %v890
    %v972 = vunpack.c.l.s4 1983009808
    %v973 = vunpack.c.0.s8 %v972
    %v974 = vlaneseq
    %v975 = vshrl.u32 %v974, 7
    %v976 = vsub.s32 %v973, %v975
    %v977 = vrot.slane %v970, %v976
    %v978 = vcombine.low %v881, %v897
    %v980 = vunpack.c.l.s4 1983009808
    %v981 = vunpack.c.0.s8 %v980
    %v982 = vlaneseq
    %v983 = vshrl.u32 %v982, 7
    %v984 = vsub.s32 %v981, %v983
    %v985 = vrot.slane %v978, %v984
    %v986 = vcombine.low %v942, %v958
    %v988 = vunpack.c.l.s4 1983009808
    %v989 = vunpack.c.0.s8 %v988
    %v990 = vlaneseq
    %v991 = vshrl.u32 %v990, 7
    %v992 = vsub.s32 %v989, %v991
    %v993 = vrot.slane %v986, %v992
    %v994 = vcombine.low %v949, %v965
    %v996 = vunpack.c.l.s4 1983009808
    %v997 = vunpack.c.0.s8 %v996
    %v998 = vlaneseq
    %v999 = vshrl.u32 %v998, 7
    %v1000 = vsub.s32 %v997, %v999
    %v1001 = vrot.slane %v994, %v1000
    %v1002 = vcombine.low %v977, %v985
    %v1003 = vcombine.high %v977, %v985
    %v1005 = vunpack.c.l.s4 1934713408
    %v1006 = vunpack.c.0.s8 %v1005
    %v1007 = vlaneseq
    %v1008 = vshrl.u32 %v1007, 7
    %v1009 = vsub.s32 %v1006, %v1008
    %v1010 = vrot.slane %v1002, %v1009
    %v1012 = vunpack.c.l.s4 1934713408
    %v1013 = vunpack.c.0.s8 %v1012
    %v1014 = vlaneseq
    %v1015 = vshrl.u32 %v1014, 7
    %v1016 = vsub.s32 %v1013, %v1015
    %v1017 = vrot.slane %v1003, %v1016
    %v1018 = vcombine.low %v993, %v1001
    %v1019 = vcombine.high %v993, %v1001
    %v1021 = vunpack.c.l.s4 1934713408
    %v1022 = vunpack.c.0.s8 %v1021
    %v1023 = vlaneseq
    %v1024 = vshrl.u32 %v1023, 7
    %v1025 = vsub.s32 %v1022, %v1024
    %v1026 = vrot.slane %v1018, %v1025
    %v1028 = vunpack.c.l.s4 1934713408
    %v1029 = vunpack.c.0.s8 %v1028
    %v1030 = vlaneseq
    %v1031 = vshrl.u32 %v1030, 7
    %v1032 = vsub.s32 %v1029, %v1031
    %v1033 = vrot.slane %v1019, %v1032
    %v1034 = vcombine.low %v1010, %v1026
    %v1035 = vcombine.high %v1010, %v1026
    %v1036 = vcombine.low %v1017, %v1033
    %v1037 = vcombine.high %v1017, %v1033
    %v1038 = vcombine.low %v898, %v900
    %v1040 = vunpack.c.l.s4 1983009808
    %v1041 = vunpack.c.0.s8 %v1040
    %v1042 = vlaneseq
    %v1043 = vshrl.u32 %v1042, 7
    %v1044 = vsub.s32 %v1041, %v1043
    %v1045 = vrot.slane %v1038, %v1044
    %v1046 = vcombine.low %v899, %v901
    %v1048 = vunpack.c.l.s4 1983009808
    %v1049 = vunpack.c.0.s8 %v1048
    %v1050 = vlaneseq
    %v1051 = vshrl.u32 %v1050, 7
    %v1052 = vsub.s32 %v1049, %v1051
    %v1053 = vrot.slane %v1046, %v1052
    %v1054 = vcombine.low %v966, %v968
    %v1056 = vunpack.c.l.s4 1983009808
    %v1057 = vunpack.c.0.s8 %v1056
    %v1058 = vlaneseq
    %v1059 = vshrl.u32 %v1058, 7
    %v1060 = vsub.s32 %v1057, %v1059
    %v1061 = vrot.slane %v1054, %v1060
    %v1062 = vcombine.low %v967, %v969
    %v1064 = vunpack.c.l.s4 1983009808
    %v1065 = vunpack.c.0.s8 %v1064
    %v1066 = vlaneseq
    %v1067 = vshrl.u32 %v1066, 7
    %v1068 = vsub.s32 %v1065, %v1067
    %v1069 = vrot.slane %v1062, %v1068
    %v1070 = vcombine.low %v1045, %v1053
    %v1071 = vcombine.high %v1045, %v1053
    %v1073 = vunpack.c.l.s4 1934713408
    %v1074 = vunpack.c.0.s8 %v1073
    %v1075 = vlaneseq
    %v1076 = vshrl.u32 %v1075, 7
    %v1077 = vsub.s32 %v1074, %v1076
    %v1078 = vrot.slane %v1070, %v1077
    %v1080 = vunpack.c.l.s4 1934713408
    %v1081 = vunpack.c.0.s8 %v1080
    %v1082 = vlaneseq
    %v1083 = vshrl.u32 %v1082, 7
    %v1084 = vsub.s32 %v1081, %v1083
    %v1085 = vrot.slane %v1071, %v1084
    %v1086 = vcombine.low %v1061, %v1069
    %v1087 = vcombine.high %v1061, %v1069
    %v1089 = vunpack.c.l.s4 1934713408
    %v1090 = vunpack.c.0.s8 %v1089
    %v1091 = vlaneseq
    %v1092 = vshrl.u32 %v1091, 7
    %v1093 = vsub.s32 %v1090, %v1092
    %v1094 = vrot.slane %v1086, %v1093
    %v1096 = vunpack.c.l.s4 1934713408
    %v1097 = vunpack.c.0.s8 %v1096
    %v1098 = vlaneseq
    %v1099 = vshrl.u32 %v1098, 7
    %v1100 = vsub.s32 %v1097, %v1099
    %v1101 = vrot.slane %v1087, %v1100
    %v1102 = vcombine.low %v1078, %v1094
    %v1103 = vcombine.high %v1078, %v1094
    %v1104 = vcombine.low %v1085, %v1101
    %v1105 = vcombine.high %v1085, %v1101
    %vm1106 = vcmask 64512
    %v1108 = vsel %vm1106, %v428, 0
    %v1111 = vsel %vm1106, %v738, 0
    %1113 = vmatprep.subr.mxu0 0.0
    %1114 = vmatpush1.xpose.msra.mxu0 0.0
    %1115 = vmatprep.subr.mxu0 0.0
    %1116 = vmatpush1.xpose.msra.mxu0 0.0
    %1117 = vmatprep.subr.mxu0 0.0
    %1118 = vmatpush1.xpose.msra.mxu0 0.0
    %1119 = vmatprep.subr.mxu0 0.0
    %1120 = vmatpush1.xpose.msra.mxu0 0.0
    %1121 = vmatprep.subr.mxu0 0.0
    %1122 = vmatpush1.xpose.msra.mxu0 0.0
    %1123 = vmatprep.subr.mxu0 0.0
    %1124 = vmatpush1.xpose.msra.mxu0 0.0
    %1125 = vmatprep.subr.mxu0 0.0
    %1126 = vmatpush1.xpose.msra.mxu0 0.0
    %1127 = vmatprep.subr.mxu0 0.0
    %1128 = vmatpush1.xpose.msra.mxu0 0.0
    %1129 = vmatprep.subr.mxu0 0.0
    %1130 = vmatpush1.xpose.msra.mxu0 0.0
    %1131 = vmatprep.subr.mxu0 0.0
    %1132 = vmatpush1.xpose.msra.mxu0 0.0
    %1133 = vmatprep.subr.mxu0 0.0
    %1134 = vmatpush1.xpose.msra.mxu0 0.0
    %1135 = vmatprep.subr.mxu0 0.0
    %1136 = vmatpush1.xpose.msra.mxu0 0.0
    %1137 = vmatprep.subr.mxu0 0.0
    %1138 = vmatpush1.xpose.msra.mxu0 0.0
    %1139 = vmatprep.subr.mxu0 0.0
    %1140 = vmatpush1.xpose.msra.mxu0 0.0
    %1141 = vmatprep.subr.mxu0 0.0
    %1142 = vmatpush1.xpose.msra.mxu0 0.0
    %1143 = vmatprep.subr.mxu0 0.0
    %1144 = vmatpush1.xpose.msra.mxu0 %v1111
    %1145 = vmatprep.subr.mxu0 0.0
    %1146 = vmatpush2.xpose.msra.mxu0 0.0
    %1147 = vmatprep.subr.mxu0 0.0
    %1148 = vmatpush2.xpose.msra.mxu0 0.0
    %1149 = vmatprep.subr.mxu0 0.0
    %1150 = vmatpush2.xpose.msra.mxu0 0.0
    %1151 = vmatprep.subr.mxu0 0.0
    %1152 = vmatpush2.xpose.msra.mxu0 0.0
    %1153 = vmatprep.subr.mxu0 0.0
    %1154 = vmatpush2.xpose.msra.mxu0 0.0
    %1155 = vmatprep.subr.mxu0 0.0
    %1156 = vmatpush2.xpose.msra.mxu0 0.0
    %1157 = vmatprep.subr.mxu0 0.0
    %1158 = vmatpush2.xpose.msra.mxu0 0.0
    %1159 = vmatprep.subr.mxu0 0.0
    %1160 = vmatpush2.xpose.msra.mxu0 0.0
    %1161 = vmatprep.subr.mxu0 0.0
    %1162 = vmatpush2.xpose.msra.mxu0 0.0
    %1163 = vmatprep.subr.mxu0 0.0
    %1164 = vmatpush2.xpose.msra.mxu0 0.0
    %1165 = vmatprep.subr.mxu0 0.0
    %1166 = vmatpush2.xpose.msra.mxu0 0.0
    %1167 = vmatprep.subr.mxu0 0.0
    %1168 = vmatpush2.xpose.msra.mxu0 0.0
    %1169 = vmatprep.subr.mxu0 0.0
    %1170 = vmatpush2.xpose.msra.mxu0 0.0
    %1171 = vmatprep.subr.mxu0 0.0
    %1172 = vmatpush2.xpose.msra.mxu0 0.0
    %1173 = vmatprep.subr.mxu0 0.0
    %1174 = vmatpush2.xpose.msra.mxu0 0.0
    %1175 = vmatprep.subr.mxu0 0.0
    %1176 = vmatpush2.xpose.msra.mxu0 0.0
    %1177 = vmatprep.mubr.f32.mxu0 0.0
    %1178 = vmatmul.mubr.f32.gmra.mxu0 %v1108
    %v1179 = vpop.f32.mrf.mxu0
    %v1180 = vadd.f32 0.0, %v1179
    %v1181 = vpop.f32.mrf.mxu0
    %1182 = vdwg.mxu0
    %v1184 = vsel %vm1106, %v429, 0
    %v1187 = vsel %vm1106, %v739, 0
    %1189 = vmatprep.subr.mxu0 0.0
    %1190 = vmatpush1.xpose.msra.mxu0 0.0
    %1191 = vmatprep.subr.mxu0 0.0
    %1192 = vmatpush1.xpose.msra.mxu0 0.0
    %1193 = vmatprep.subr.mxu0 0.0
    %1194 = vmatpush1.xpose.msra.mxu0 0.0
    %1195 = vmatprep.subr.mxu0 0.0
    %1196 = vmatpush1.xpose.msra.mxu0 0.0
    %1197 = vmatprep.subr.mxu0 0.0
    %1198 = vmatpush1.xpose.msra.mxu0 0.0
    %1199 = vmatprep.subr.mxu0 0.0
    %1200 = vmatpush1.xpose.msra.mxu0 0.0
    %1201 = vmatprep.subr.mxu0 0.0
    %1202 = vmatpush1.xpose.msra.mxu0 0.0
    %1203 = vmatprep.subr.mxu0 0.0
    %1204 = vmatpush1.xpose.msra.mxu0 0.0
    %1205 = vmatprep.subr.mxu0 0.0
    %1206 = vmatpush1.xpose.msra.mxu0 0.0
    %1207 = vmatprep.subr.mxu0 0.0
    %1208 = vmatpush1.xpose.msra.mxu0 0.0
    %1209 = vmatprep.subr.mxu0 0.0
    %1210 = vmatpush1.xpose.msra.mxu0 0.0
    %1211 = vmatprep.subr.mxu0 0.0
    %1212 = vmatpush1.xpose.msra.mxu0 0.0
    %1213 = vmatprep.subr.mxu0 0.0
    %1214 = vmatpush1.xpose.msra.mxu0 0.0
    %1215 = vmatprep.subr.mxu0 0.0
    %1216 = vmatpush1.xpose.msra.mxu0 0.0
    %1217 = vmatprep.subr.mxu0 0.0
    %1218 = vmatpush1.xpose.msra.mxu0 0.0
    %1219 = vmatprep.subr.mxu0 0.0
    %1220 = vmatpush1.xpose.msra.mxu0 %v1187
    %1221 = vmatprep.subr.mxu0 0.0
    %1222 = vmatpush2.xpose.msra.mxu0 0.0
    %1223 = vmatprep.subr.mxu0 0.0
    %1224 = vmatpush2.xpose.msra.mxu0 0.0
    %1225 = vmatprep.subr.mxu0 0.0
    %1226 = vmatpush2.xpose.msra.mxu0 0.0
    %1227 = vmatprep.subr.mxu0 0.0
    %1228 = vmatpush2.xpose.msra.mxu0 0.0
    %1229 = vmatprep.subr.mxu0 0.0
    %1230 = vmatpush2.xpose.msra.mxu0 0.0
    %1231 = vmatprep.subr.mxu0 0.0
    %1232 = vmatpush2.xpose.msra.mxu0 0.0
    %1233 = vmatprep.subr.mxu0 0.0
    %1234 = vmatpush2.xpose.msra.mxu0 0.0
    %1235 = vmatprep.subr.mxu0 0.0
    %1236 = vmatpush2.xpose.msra.mxu0 0.0
    %1237 = vmatprep.subr.mxu0 0.0
    %1238 = vmatpush2.xpose.msra.mxu0 0.0
    %1239 = vmatprep.subr.mxu0 0.0
    %1240 = vmatpush2.xpose.msra.mxu0 0.0
    %1241 = vmatprep.subr.mxu0 0.0
    %1242 = vmatpush2.xpose.msra.mxu0 0.0
    %1243 = vmatprep.subr.mxu0 0.0
    %1244 = vmatpush2.xpose.msra.mxu0 0.0
    %1245 = vmatprep.subr.mxu0 0.0
    %1246 = vmatpush2.xpose.msra.mxu0 0.0
    %1247 = vmatprep.subr.mxu0 0.0
    %1248 = vmatpush2.xpose.msra.mxu0 0.0
    %1249 = vmatprep.subr.mxu0 0.0
    %1250 = vmatpush2.xpose.msra.mxu0 0.0
    %1251 = vmatprep.subr.mxu0 0.0
    %1252 = vmatpush2.xpose.msra.mxu0 0.0
    %1253 = vmatprep.mubr.f32.mxu0 0.0
    %1254 = vmatmul.mubr.f32.gmra.mxu0 %v1184
    %v1255 = vpop.f32.mrf.mxu0
    %v1256 = vadd.f32 0.0, %v1255
    %v1257 = vpop.f32.mrf.mxu0
    %1258 = vdwg.mxu0
    %v1260 = vsel %vm1106, %v430, 0
    %v1263 = vsel %vm1106, %v740, 0
    %1265 = vmatprep.subr.mxu0 0.0
    %1266 = vmatpush1.xpose.msra.mxu0 0.0
    %1267 = vmatprep.subr.mxu0 0.0
    %1268 = vmatpush1.xpose.msra.mxu0 0.0
    %1269 = vmatprep.subr.mxu0 0.0
    %1270 = vmatpush1.xpose.msra.mxu0 0.0
    %1271 = vmatprep.subr.mxu0 0.0
    %1272 = vmatpush1.xpose.msra.mxu0 0.0
    %1273 = vmatprep.subr.mxu0 0.0
    %1274 = vmatpush1.xpose.msra.mxu0 0.0
    %1275 = vmatprep.subr.mxu0 0.0
    %1276 = vmatpush1.xpose.msra.mxu0 0.0
    %1277 = vmatprep.subr.mxu0 0.0
    %1278 = vmatpush1.xpose.msra.mxu0 0.0
    %1279 = vmatprep.subr.mxu0 0.0
    %1280 = vmatpush1.xpose.msra.mxu0 0.0
    %1281 = vmatprep.subr.mxu0 0.0
    %1282 = vmatpush1.xpose.msra.mxu0 0.0
    %1283 = vmatprep.subr.mxu0 0.0
    %1284 = vmatpush1.xpose.msra.mxu0 0.0
    %1285 = vmatprep.subr.mxu0 0.0
    %1286 = vmatpush1.xpose.msra.mxu0 0.0
    %1287 = vmatprep.subr.mxu0 0.0
    %1288 = vmatpush1.xpose.msra.mxu0 0.0
    %1289 = vmatprep.subr.mxu0 0.0
    %1290 = vmatpush1.xpose.msra.mxu0 0.0
    %1291 = vmatprep.subr.mxu0 0.0
    %1292 = vmatpush1.xpose.msra.mxu0 0.0
    %1293 = vmatprep.subr.mxu0 0.0
    %1294 = vmatpush1.xpose.msra.mxu0 0.0
    %1295 = vmatprep.subr.mxu0 0.0
    %1296 = vmatpush1.xpose.msra.mxu0 %v1263
    %1297 = vmatprep.subr.mxu0 0.0
    %1298 = vmatpush2.xpose.msra.mxu0 0.0
    %1299 = vmatprep.subr.mxu0 0.0
    %1300 = vmatpush2.xpose.msra.mxu0 0.0
    %1301 = vmatprep.subr.mxu0 0.0
    %1302 = vmatpush2.xpose.msra.mxu0 0.0
    %1303 = vmatprep.subr.mxu0 0.0
    %1304 = vmatpush2.xpose.msra.mxu0 0.0
    %1305 = vmatprep.subr.mxu0 0.0
    %1306 = vmatpush2.xpose.msra.mxu0 0.0
    %1307 = vmatprep.subr.mxu0 0.0
    %1308 = vmatpush2.xpose.msra.mxu0 0.0
    %1309 = vmatprep.subr.mxu0 0.0
    %1310 = vmatpush2.xpose.msra.mxu0 0.0
    %1311 = vmatprep.subr.mxu0 0.0
    %1312 = vmatpush2.xpose.msra.mxu0 0.0
    %1313 = vmatprep.subr.mxu0 0.0
    %1314 = vmatpush2.xpose.msra.mxu0 0.0
    %1315 = vmatprep.subr.mxu0 0.0
    %1316 = vmatpush2.xpose.msra.mxu0 0.0
    %1317 = vmatprep.subr.mxu0 0.0
    %1318 = vmatpush2.xpose.msra.mxu0 0.0
    %1319 = vmatprep.subr.mxu0 0.0
    %1320 = vmatpush2.xpose.msra.mxu0 0.0
    %1321 = vmatprep.subr.mxu0 0.0
    %1322 = vmatpush2.xpose.msra.mxu0 0.0
    %1323 = vmatprep.subr.mxu0 0.0
    %1324 = vmatpush2.xpose.msra.mxu0 0.0
    %1325 = vmatprep.subr.mxu0 0.0
    %1326 = vmatpush2.xpose.msra.mxu0 0.0
    %1327 = vmatprep.subr.mxu0 0.0
    %1328 = vmatpush2.xpose.msra.mxu0 0.0
    %1329 = vmatprep.mubr.f32.mxu0 0.0
    %1330 = vmatmul.mubr.f32.gmra.mxu0 %v1260
    %v1331 = vpop.f32.mrf.mxu0
    %v1332 = vadd.f32 0.0, %v1331
    %v1333 = vpop.f32.mrf.mxu0
    %1334 = vdwg.mxu0
    %v1336 = vsel %vm1106, %v431, 0
    %v1339 = vsel %vm1106, %v741, 0
    %1341 = vmatprep.subr.mxu0 0.0
    %1342 = vmatpush1.xpose.msra.mxu0 0.0
    %1343 = vmatprep.subr.mxu0 0.0
    %1344 = vmatpush1.xpose.msra.mxu0 0.0
    %1345 = vmatprep.subr.mxu0 0.0
    %1346 = vmatpush1.xpose.msra.mxu0 0.0
    %1347 = vmatprep.subr.mxu0 0.0
    %1348 = vmatpush1.xpose.msra.mxu0 0.0
    %1349 = vmatprep.subr.mxu0 0.0
    %1350 = vmatpush1.xpose.msra.mxu0 0.0
    %1351 = vmatprep.subr.mxu0 0.0
    %1352 = vmatpush1.xpose.msra.mxu0 0.0
    %1353 = vmatprep.subr.mxu0 0.0
    %1354 = vmatpush1.xpose.msra.mxu0 0.0
    %1355 = vmatprep.subr.mxu0 0.0
    %1356 = vmatpush1.xpose.msra.mxu0 0.0
    %1357 = vmatprep.subr.mxu0 0.0
    %1358 = vmatpush1.xpose.msra.mxu0 0.0
    %1359 = vmatprep.subr.mxu0 0.0
    %1360 = vmatpush1.xpose.msra.mxu0 0.0
    %1361 = vmatprep.subr.mxu0 0.0
    %1362 = vmatpush1.xpose.msra.mxu0 0.0
    %1363 = vmatprep.subr.mxu0 0.0
    %1364 = vmatpush1.xpose.msra.mxu0 0.0
    %1365 = vmatprep.subr.mxu0 0.0
    %1366 = vmatpush1.xpose.msra.mxu0 0.0
    %1367 = vmatprep.subr.mxu0 0.0
    %1368 = vmatpush1.xpose.msra.mxu0 0.0
    %1369 = vmatprep.subr.mxu0 0.0
    %1370 = vmatpush1.xpose.msra.mxu0 0.0
    %1371 = vmatprep.subr.mxu0 0.0
    %1372 = vmatpush1.xpose.msra.mxu0 %v1339
    %1373 = vmatprep.subr.mxu0 0.0
    %1374 = vmatpush2.xpose.msra.mxu0 0.0
    %1375 = vmatprep.subr.mxu0 0.0
    %1376 = vmatpush2.xpose.msra.mxu0 0.0
    %1377 = vmatprep.subr.mxu0 0.0
    %1378 = vmatpush2.xpose.msra.mxu0 0.0
    %1379 = vmatprep.subr.mxu0 0.0
    %1380 = vmatpush2.xpose.msra.mxu0 0.0
    %1381 = vmatprep.subr.mxu0 0.0
    %1382 = vmatpush2.xpose.msra.mxu0 0.0
    %1383 = vmatprep.subr.mxu0 0.0
    %1384 = vmatpush2.xpose.msra.mxu0 0.0
    %1385 = vmatprep.subr.mxu0 0.0
    %1386 = vmatpush2.xpose.msra.mxu0 0.0
    %1387 = vmatprep.subr.mxu0 0.0
    %1388 = vmatpush2.xpose.msra.mxu0 0.0
    %1389 = vmatprep.subr.mxu0 0.0
    %1390 = vmatpush2.xpose.msra.mxu0 0.0
    %1391 = vmatprep.subr.mxu0 0.0
    %1392 = vmatpush2.xpose.msra.mxu0 0.0
    %1393 = vmatprep.subr.mxu0 0.0
    %1394 = vmatpush2.xpose.msra.mxu0 0.0
    %1395 = vmatprep.subr.mxu0 0.0
    %1396 = vmatpush2.xpose.msra.mxu0 0.0
    %1397 = vmatprep.subr.mxu0 0.0
    %1398 = vmatpush2.xpose.msra.mxu0 0.0
    %1399 = vmatprep.subr.mxu0 0.0
    %1400 = vmatpush2.xpose.msra.mxu0 0.0
    %1401 = vmatprep.subr.mxu0 0.0
    %1402 = vmatpush2.xpose.msra.mxu0 0.0
    %1403 = vmatprep.subr.mxu0 0.0
    %1404 = vmatpush2.xpose.msra.mxu0 0.0
    %1405 = vmatprep.mubr.f32.mxu0 0.0
    %1406 = vmatmul.mubr.f32.gmra.mxu0 %v1336
    %v1407 = vpop.f32.mrf.mxu0
    %v1408 = vadd.f32 0.0, %v1407
    %v1409 = vpop.f32.mrf.mxu0
    %1410 = vdwg.mxu0
    %v1412 = vsel %vm1106, %v496, 0
    %v1415 = vsel %vm1106, %v806, 0
    %1417 = vmatprep.subr.mxu0 0.0
    %1418 = vmatpush1.xpose.msra.mxu0 0.0
    %1419 = vmatprep.subr.mxu0 0.0
    %1420 = vmatpush1.xpose.msra.mxu0 0.0
    %1421 = vmatprep.subr.mxu0 0.0
    %1422 = vmatpush1.xpose.msra.mxu0 0.0
    %1423 = vmatprep.subr.mxu0 0.0
    %1424 = vmatpush1.xpose.msra.mxu0 0.0
    %1425 = vmatprep.subr.mxu0 0.0
    %1426 = vmatpush1.xpose.msra.mxu0 0.0
    %1427 = vmatprep.subr.mxu0 0.0
    %1428 = vmatpush1.xpose.msra.mxu0 0.0
    %1429 = vmatprep.subr.mxu0 0.0
    %1430 = vmatpush1.xpose.msra.mxu0 0.0
    %1431 = vmatprep.subr.mxu0 0.0
    %1432 = vmatpush1.xpose.msra.mxu0 0.0
    %1433 = vmatprep.subr.mxu0 0.0
    %1434 = vmatpush1.xpose.msra.mxu0 0.0
    %1435 = vmatprep.subr.mxu0 0.0
    %1436 = vmatpush1.xpose.msra.mxu0 0.0
    %1437 = vmatprep.subr.mxu0 0.0
    %1438 = vmatpush1.xpose.msra.mxu0 0.0
    %1439 = vmatprep.subr.mxu0 0.0
    %1440 = vmatpush1.xpose.msra.mxu0 0.0
    %1441 = vmatprep.subr.mxu0 0.0
    %1442 = vmatpush1.xpose.msra.mxu0 0.0
    %1443 = vmatprep.subr.mxu0 0.0
    %1444 = vmatpush1.xpose.msra.mxu0 0.0
    %1445 = vmatprep.subr.mxu0 0.0
    %1446 = vmatpush1.xpose.msra.mxu0 0.0
    %1447 = vmatprep.subr.mxu0 0.0
    %1448 = vmatpush1.xpose.msra.mxu0 %v1415
    %1449 = vmatprep.subr.mxu0 0.0
    %1450 = vmatpush2.xpose.msra.mxu0 0.0
    %1451 = vmatprep.subr.mxu0 0.0
    %1452 = vmatpush2.xpose.msra.mxu0 0.0
    %1453 = vmatprep.subr.mxu0 0.0
    %1454 = vmatpush2.xpose.msra.mxu0 0.0
    %1455 = vmatprep.subr.mxu0 0.0
    %1456 = vmatpush2.xpose.msra.mxu0 0.0
    %1457 = vmatprep.subr.mxu0 0.0
    %1458 = vmatpush2.xpose.msra.mxu0 0.0
    %1459 = vmatprep.subr.mxu0 0.0
    %1460 = vmatpush2.xpose.msra.mxu0 0.0
    %1461 = vmatprep.subr.mxu0 0.0
    %1462 = vmatpush2.xpose.msra.mxu0 0.0
    %1463 = vmatprep.subr.mxu0 0.0
    %1464 = vmatpush2.xpose.msra.mxu0 0.0
    %1465 = vmatprep.subr.mxu0 0.0
    %1466 = vmatpush2.xpose.msra.mxu0 0.0
    %1467 = vmatprep.subr.mxu0 0.0
    %1468 = vmatpush2.xpose.msra.mxu0 0.0
    %1469 = vmatprep.subr.mxu0 0.0
    %1470 = vmatpush2.xpose.msra.mxu0 0.0
    %1471 = vmatprep.subr.mxu0 0.0
    %1472 = vmatpush2.xpose.msra.mxu0 0.0
    %1473 = vmatprep.subr.mxu0 0.0
    %1474 = vmatpush2.xpose.msra.mxu0 0.0
    %1475 = vmatprep.subr.mxu0 0.0
    %1476 = vmatpush2.xpose.msra.mxu0 0.0
    %1477 = vmatprep.subr.mxu0 0.0
    %1478 = vmatpush2.xpose.msra.mxu0 0.0
    %1479 = vmatprep.subr.mxu0 0.0
    %1480 = vmatpush2.xpose.msra.mxu0 0.0
    %1481 = vmatprep.mubr.f32.mxu0 0.0
    %1482 = vmatmul.mubr.f32.gmra.mxu0 %v1412
    %v1483 = vpop.f32.mrf.mxu0
    %v1484 = vadd.f32 0.0, %v1483
    %v1485 = vpop.f32.mrf.mxu0
    %1486 = vdwg.mxu0
    %v1488 = vsel %vm1106, %v497, 0
    %v1491 = vsel %vm1106, %v807, 0
    %1493 = vmatprep.subr.mxu0 0.0
    %1494 = vmatpush1.xpose.msra.mxu0 0.0
    %1495 = vmatprep.subr.mxu0 0.0
    %1496 = vmatpush1.xpose.msra.mxu0 0.0
    %1497 = vmatprep.subr.mxu0 0.0
    %1498 = vmatpush1.xpose.msra.mxu0 0.0
    %1499 = vmatprep.subr.mxu0 0.0
    %1500 = vmatpush1.xpose.msra.mxu0 0.0
    %1501 = vmatprep.subr.mxu0 0.0
    %1502 = vmatpush1.xpose.msra.mxu0 0.0
    %1503 = vmatprep.subr.mxu0 0.0
    %1504 = vmatpush1.xpose.msra.mxu0 0.0
    %1505 = vmatprep.subr.mxu0 0.0
    %1506 = vmatpush1.xpose.msra.mxu0 0.0
    %1507 = vmatprep.subr.mxu0 0.0
    %1508 = vmatpush1.xpose.msra.mxu0 0.0
    %1509 = vmatprep.subr.mxu0 0.0
    %1510 = vmatpush1.xpose.msra.mxu0 0.0
    %1511 = vmatprep.subr.mxu0 0.0
    %1512 = vmatpush1.xpose.msra.mxu0 0.0
    %1513 = vmatprep.subr.mxu0 0.0
    %1514 = vmatpush1.xpose.msra.mxu0 0.0
    %1515 = vmatprep.subr.mxu0 0.0
    %1516 = vmatpush1.xpose.msra.mxu0 0.0
    %1517 = vmatprep.subr.mxu0 0.0
    %1518 = vmatpush1.xpose.msra.mxu0 0.0
    %1519 = vmatprep.subr.mxu0 0.0
    %1520 = vmatpush1.xpose.msra.mxu0 0.0
    %1521 = vmatprep.subr.mxu0 0.0
    %1522 = vmatpush1.xpose.msra.mxu0 0.0
    %1523 = vmatprep.subr.mxu0 0.0
    %1524 = vmatpush1.xpose.msra.mxu0 %v1491
    %1525 = vmatprep.subr.mxu0 0.0
    %1526 = vmatpush2.xpose.msra.mxu0 0.0
    %1527 = vmatprep.subr.mxu0 0.0
    %1528 = vmatpush2.xpose.msra.mxu0 0.0
    %1529 = vmatprep.subr.mxu0 0.0
    %1530 = vmatpush2.xpose.msra.mxu0 0.0
    %1531 = vmatprep.subr.mxu0 0.0
    %1532 = vmatpush2.xpose.msra.mxu0 0.0
    %1533 = vmatprep.subr.mxu0 0.0
    %1534 = vmatpush2.xpose.msra.mxu0 0.0
    %1535 = vmatprep.subr.mxu0 0.0
    %1536 = vmatpush2.xpose.msra.mxu0 0.0
    %1537 = vmatprep.subr.mxu0 0.0
    %1538 = vmatpush2.xpose.msra.mxu0 0.0
    %1539 = vmatprep.subr.mxu0 0.0
    %1540 = vmatpush2.xpose.msra.mxu0 0.0
    %1541 = vmatprep.subr.mxu0 0.0
    %1542 = vmatpush2.xpose.msra.mxu0 0.0
    %1543 = vmatprep.subr.mxu0 0.0
    %1544 = vmatpush2.xpose.msra.mxu0 0.0
    %1545 = vmatprep.subr.mxu0 0.0
    %1546 = vmatpush2.xpose.msra.mxu0 0.0
    %1547 = vmatprep.subr.mxu0 0.0
    %1548 = vmatpush2.xpose.msra.mxu0 0.0
    %1549 = vmatprep.subr.mxu0 0.0
    %1550 = vmatpush2.xpose.msra.mxu0 0.0
    %1551 = vmatprep.subr.mxu0 0.0
    %1552 = vmatpush2.xpose.msra.mxu0 0.0
    %1553 = vmatprep.subr.mxu0 0.0
    %1554 = vmatpush2.xpose.msra.mxu0 0.0
    %1555 = vmatprep.subr.mxu0 0.0
    %1556 = vmatpush2.xpose.msra.mxu0 0.0
    %1557 = vmatprep.mubr.f32.mxu0 0.0
    %1558 = vmatmul.mubr.f32.gmra.mxu0 %v1488
    %v1559 = vpop.f32.mrf.mxu0
    %v1560 = vadd.f32 0.0, %v1559
    %v1561 = vpop.f32.mrf.mxu0
    %1562 = vdwg.mxu0
    %v1564 = vsel %vm1106, %v498, 0
    %v1567 = vsel %vm1106, %v808, 0
    %1569 = vmatprep.subr.mxu0 0.0
    %1570 = vmatpush1.xpose.msra.mxu0 0.0
    %1571 = vmatprep.subr.mxu0 0.0
    %1572 = vmatpush1.xpose.msra.mxu0 0.0
    %1573 = vmatprep.subr.mxu0 0.0
    %1574 = vmatpush1.xpose.msra.mxu0 0.0
    %1575 = vmatprep.subr.mxu0 0.0
    %1576 = vmatpush1.xpose.msra.mxu0 0.0
    %1577 = vmatprep.subr.mxu0 0.0
    %1578 = vmatpush1.xpose.msra.mxu0 0.0
    %1579 = vmatprep.subr.mxu0 0.0
    %1580 = vmatpush1.xpose.msra.mxu0 0.0
    %1581 = vmatprep.subr.mxu0 0.0
    %1582 = vmatpush1.xpose.msra.mxu0 0.0
    %1583 = vmatprep.subr.mxu0 0.0
    %1584 = vmatpush1.xpose.msra.mxu0 0.0
    %1585 = vmatprep.subr.mxu0 0.0
    %1586 = vmatpush1.xpose.msra.mxu0 0.0
    %1587 = vmatprep.subr.mxu0 0.0
    %1588 = vmatpush1.xpose.msra.mxu0 0.0
    %1589 = vmatprep.subr.mxu0 0.0
    %1590 = vmatpush1.xpose.msra.mxu0 0.0
    %1591 = vmatprep.subr.mxu0 0.0
    %1592 = vmatpush1.xpose.msra.mxu0 0.0
    %1593 = vmatprep.subr.mxu0 0.0
    %1594 = vmatpush1.xpose.msra.mxu0 0.0
    %1595 = vmatprep.subr.mxu0 0.0
    %1596 = vmatpush1.xpose.msra.mxu0 0.0
    %1597 = vmatprep.subr.mxu0 0.0
    %1598 = vmatpush1.xpose.msra.mxu0 0.0
    %1599 = vmatprep.subr.mxu0 0.0
    %1600 = vmatpush1.xpose.msra.mxu0 %v1567
    %1601 = vmatprep.subr.mxu0 0.0
    %1602 = vmatpush2.xpose.msra.mxu0 0.0
    %1603 = vmatprep.subr.mxu0 0.0
    %1604 = vmatpush2.xpose.msra.mxu0 0.0
    %1605 = vmatprep.subr.mxu0 0.0
    %1606 = vmatpush2.xpose.msra.mxu0 0.0
    %1607 = vmatprep.subr.mxu0 0.0
    %1608 = vmatpush2.xpose.msra.mxu0 0.0
    %1609 = vmatprep.subr.mxu0 0.0
    %1610 = vmatpush2.xpose.msra.mxu0 0.0
    %1611 = vmatprep.subr.mxu0 0.0
    %1612 = vmatpush2.xpose.msra.mxu0 0.0
    %1613 = vmatprep.subr.mxu0 0.0
    %1614 = vmatpush2.xpose.msra.mxu0 0.0
    %1615 = vmatprep.subr.mxu0 0.0
    %1616 = vmatpush2.xpose.msra.mxu0 0.0
    %1617 = vmatprep.subr.mxu0 0.0
    %1618 = vmatpush2.xpose.msra.mxu0 0.0
    %1619 = vmatprep.subr.mxu0 0.0
    %1620 = vmatpush2.xpose.msra.mxu0 0.0
    %1621 = vmatprep.subr.mxu0 0.0
    %1622 = vmatpush2.xpose.msra.mxu0 0.0
    %1623 = vmatprep.subr.mxu0 0.0
    %1624 = vmatpush2.xpose.msra.mxu0 0.0
    %1625 = vmatprep.subr.mxu0 0.0
    %1626 = vmatpush2.xpose.msra.mxu0 0.0
    %1627 = vmatprep.subr.mxu0 0.0
    %1628 = vmatpush2.xpose.msra.mxu0 0.0
    %1629 = vmatprep.subr.mxu0 0.0
    %1630 = vmatpush2.xpose.msra.mxu0 0.0
    %1631 = vmatprep.subr.mxu0 0.0
    %1632 = vmatpush2.xpose.msra.mxu0 0.0
    %1633 = vmatprep.mubr.f32.mxu0 0.0
    %1634 = vmatmul.mubr.f32.gmra.mxu0 %v1564
    %v1635 = vpop.f32.mrf.mxu0
    %v1636 = vadd.f32 0.0, %v1635
    %v1637 = vpop.f32.mrf.mxu0
    %1638 = vdwg.mxu0
    %v1640 = vsel %vm1106, %v499, 0
    %v1643 = vsel %vm1106, %v809, 0
    %1645 = vmatprep.subr.mxu0 0.0
    %1646 = vmatpush1.xpose.msra.mxu0 0.0
    %1647 = vmatprep.subr.mxu0 0.0
    %1648 = vmatpush1.xpose.msra.mxu0 0.0
    %1649 = vmatprep.subr.mxu0 0.0
    %1650 = vmatpush1.xpose.msra.mxu0 0.0
    %1651 = vmatprep.subr.mxu0 0.0
    %1652 = vmatpush1.xpose.msra.mxu0 0.0
    %1653 = vmatprep.subr.mxu0 0.0
    %1654 = vmatpush1.xpose.msra.mxu0 0.0
    %1655 = vmatprep.subr.mxu0 0.0
    %1656 = vmatpush1.xpose.msra.mxu0 0.0
    %1657 = vmatprep.subr.mxu0 0.0
    %1658 = vmatpush1.xpose.msra.mxu0 0.0
    %1659 = vmatprep.subr.mxu0 0.0
    %1660 = vmatpush1.xpose.msra.mxu0 0.0
    %1661 = vmatprep.subr.mxu0 0.0
    %1662 = vmatpush1.xpose.msra.mxu0 0.0
    %1663 = vmatprep.subr.mxu0 0.0
    %1664 = vmatpush1.xpose.msra.mxu0 0.0
    %1665 = vmatprep.subr.mxu0 0.0
    %1666 = vmatpush1.xpose.msra.mxu0 0.0
    %1667 = vmatprep.subr.mxu0 0.0
    %1668 = vmatpush1.xpose.msra.mxu0 0.0
    %1669 = vmatprep.subr.mxu0 0.0
    %1670 = vmatpush1.xpose.msra.mxu0 0.0
    %1671 = vmatprep.subr.mxu0 0.0
    %1672 = vmatpush1.xpose.msra.mxu0 0.0
    %1673 = vmatprep.subr.mxu0 0.0
    %1674 = vmatpush1.xpose.msra.mxu0 0.0
    %1675 = vmatprep.subr.mxu0 0.0
    %1676 = vmatpush1.xpose.msra.mxu0 %v1643
    %1677 = vmatprep.subr.mxu0 0.0
    %1678 = vmatpush2.xpose.msra.mxu0 0.0
    %1679 = vmatprep.subr.mxu0 0.0
    %1680 = vmatpush2.xpose.msra.mxu0 0.0
    %1681 = vmatprep.subr.mxu0 0.0
    %1682 = vmatpush2.xpose.msra.mxu0 0.0
    %1683 = vmatprep.subr.mxu0 0.0
    %1684 = vmatpush2.xpose.msra.mxu0 0.0
    %1685 = vmatprep.subr.mxu0 0.0
    %1686 = vmatpush2.xpose.msra.mxu0 0.0
    %1687 = vmatprep.subr.mxu0 0.0
    %1688 = vmatpush2.xpose.msra.mxu0 0.0
    %1689 = vmatprep.subr.mxu0 0.0
    %1690 = vmatpush2.xpose.msra.mxu0 0.0
    %1691 = vmatprep.subr.mxu0 0.0
    %1692 = vmatpush2.xpose.msra.mxu0 0.0
    %1693 = vmatprep.subr.mxu0 0.0
    %1694 = vmatpush2.xpose.msra.mxu0 0.0
    %1695 = vmatprep.subr.mxu0 0.0
    %1696 = vmatpush2.xpose.msra.mxu0 0.0
    %1697 = vmatprep.subr.mxu0 0.0
    %1698 = vmatpush2.xpose.msra.mxu0 0.0
    %1699 = vmatprep.subr.mxu0 0.0
    %1700 = vmatpush2.xpose.msra.mxu0 0.0
    %1701 = vmatprep.subr.mxu0 0.0
    %1702 = vmatpush2.xpose.msra.mxu0 0.0
    %1703 = vmatprep.subr.mxu0 0.0
    %1704 = vmatpush2.xpose.msra.mxu0 0.0
    %1705 = vmatprep.subr.mxu0 0.0
    %1706 = vmatpush2.xpose.msra.mxu0 0.0
    %1707 = vmatprep.subr.mxu0 0.0
    %1708 = vmatpush2.xpose.msra.mxu0 0.0
    %1709 = vmatprep.mubr.f32.mxu0 0.0
    %1710 = vmatmul.mubr.f32.gmra.mxu0 %v1640
    %v1711 = vpop.f32.mrf.mxu0
    %v1712 = vadd.f32 0.0, %v1711
    %v1713 = vpop.f32.mrf.mxu0
    %1714 = vdwg.mxu0
    %v1715 = vsel %vm1106, %v1180, -inf
    %1716 = vmax.xlane.f32.xlu0 %v1715
    %v1717 = vpop.xlane.xlu0 %1716
    %v1718 = vsel %vm1106, %v1256, -inf
    %1719 = vmax.xlane.f32.xlu0 %v1718
    %v1720 = vpop.xlane.xlu0 %1719
    %v1721 = vsel %vm1106, %v1332, -inf
    %1722 = vmax.xlane.f32.xlu0 %v1721
    %v1723 = vpop.xlane.xlu0 %1722
    %v1724 = vsel %vm1106, %v1408, -inf
    %1725 = vmax.xlane.f32.xlu0 %v1724
    %v1726 = vpop.xlane.xlu0 %1725
    %v1727 = vsel %vm1106, %v1484, -inf
    %1728 = vmax.xlane.f32.xlu0 %v1727
    %v1729 = vpop.xlane.xlu0 %1728
    %v1730 = vsel %vm1106, %v1560, -inf
    %1731 = vmax.xlane.f32.xlu0 %v1730
    %v1732 = vpop.xlane.xlu0 %1731
    %v1733 = vsel %vm1106, %v1636, -inf
    %1734 = vmax.xlane.f32.xlu0 %v1733
    %v1735 = vpop.xlane.xlu0 %1734
    %v1736 = vsel %vm1106, %v1712, -inf
    %1737 = vmax.xlane.f32.xlu0 %v1736
    %v1738 = vpop.xlane.xlu0 %1737
    %v1739 = vsub.f32 %v1180, %v1717
    %v1740 = vsub.f32 %v1256, %v1720
    %v1741 = vsub.f32 %v1332, %v1723
    %v1742 = vsub.f32 %v1408, %v1726
    %v1743 = vsub.f32 %v1484, %v1729
    %v1744 = vsub.f32 %v1560, %v1732
    %v1745 = vsub.f32 %v1636, %v1735
    %v1746 = vsub.f32 %v1712, %v1738
    %v1747 = vmul.f32 %v1739, 1.442695
    %v1748 = vpow.pop %v1747
    %v1749 = vmul.f32 %v1740, 1.442695
    %v1750 = vpow.pop %v1749
    %v1751 = vmul.f32 %v1741, 1.442695
    %v1752 = vpow.pop %v1751
    %v1753 = vmul.f32 %v1742, 1.442695
    %v1754 = vpow.pop %v1753
    %v1755 = vmul.f32 %v1743, 1.442695
    %v1756 = vpow.pop %v1755
    %v1757 = vmul.f32 %v1744, 1.442695
    %v1758 = vpow.pop %v1757
    %v1759 = vmul.f32 %v1745, 1.442695
    %v1760 = vpow.pop %v1759
    %v1761 = vmul.f32 %v1746, 1.442695
    %v1762 = vpow.pop %v1761
    %v1763 = vsel %vm1106, %v1748, 0.0
    %1764 = vadd.xlane.f32.xlu0 %v1763
    %v1765 = vpop.xlane.xlu0 %1764
    %v1766 = vsel %vm1106, %v1750, 0.0
    %1767 = vadd.xlane.f32.xlu0 %v1766
    %v1768 = vpop.xlane.xlu0 %1767
    %v1769 = vsel %vm1106, %v1752, 0.0
    %1770 = vadd.xlane.f32.xlu0 %v1769
    %v1771 = vpop.xlane.xlu0 %1770
    %v1772 = vsel %vm1106, %v1754, 0.0
    %1773 = vadd.xlane.f32.xlu0 %v1772
    %v1774 = vpop.xlane.xlu0 %1773
    %v1775 = vsel %vm1106, %v1756, 0.0
    %1776 = vadd.xlane.f32.xlu0 %v1775
    %v1777 = vpop.xlane.xlu0 %1776
    %v1778 = vsel %vm1106, %v1758, 0.0
    %1779 = vadd.xlane.f32.xlu0 %v1778
    %v1780 = vpop.xlane.xlu0 %1779
    %v1781 = vsel %vm1106, %v1760, 0.0
    %1782 = vadd.xlane.f32.xlu0 %v1781
    %v1783 = vpop.xlane.xlu0 %1782
    %v1784 = vsel %vm1106, %v1762, 0.0
    %1785 = vadd.xlane.f32.xlu0 %v1784
    %v1786 = vpop.xlane.xlu0 %1785
    %v1787 = vrcp.pop %v1765
    %v1788 = vrcp.pop %v1768
    %v1789 = vrcp.pop %v1771
    %v1790 = vrcp.pop %v1774
    %v1791 = vrcp.pop %v1777
    %v1792 = vrcp.pop %v1780
    %v1793 = vrcp.pop %v1783
    %v1794 = vrcp.pop %v1786
    %v1795 = vmul.f32 %v1748, %v1787
    %v1796 = vmul.f32 %v1750, %v1788
    %v1797 = vmul.f32 %v1752, %v1789
    %v1798 = vmul.f32 %v1754, %v1790
    %v1799 = vmul.f32 %v1756, %v1791
    %v1800 = vmul.f32 %v1758, %v1792
    %v1801 = vmul.f32 %v1760, %v1793
    %v1802 = vmul.f32 %v1762, %v1794
    %v1804 = vsel %vm1106, %v1795, 0
    %1806 = vmatprep.subr.mxu0 0.0
    %1807 = vmatpush1.msra.mxu0 0.0
    %1808 = vmatprep.subr.mxu0 0.0
    %1809 = vmatpush1.msra.mxu0 0.0
    %1810 = vmatprep.subr.mxu0 0.0
    %1811 = vmatpush1.msra.mxu0 0.0
    %1812 = vmatprep.subr.mxu0 0.0
    %1813 = vmatpush1.msra.mxu0 0.0
    %1814 = vmatprep.subr.mxu0 0.0
    %1815 = vmatpush1.msra.mxu0 0.0
    %1816 = vmatprep.subr.mxu0 0.0
    %1817 = vmatpush1.msra.mxu0 0.0
    %1818 = vmatprep.subr.mxu0 0.0
    %1819 = vmatpush1.msra.mxu0 0.0
    %1820 = vmatprep.subr.mxu0 0.0
    %1821 = vmatpush1.msra.mxu0 0.0
    %1822 = vmatprep.subr.mxu0 0.0
    %1823 = vmatpush1.msra.mxu0 0.0
    %1824 = vmatprep.subr.mxu0 0.0
    %1825 = vmatpush1.msra.mxu0 0.0
    %1826 = vmatprep.subr.mxu0 0.0
    %1827 = vmatpush1.msra.mxu0 0.0
    %1828 = vmatprep.subr.mxu0 0.0
    %1829 = vmatpush1.msra.mxu0 0.0
    %1830 = vmatprep.subr.mxu0 0.0
    %1831 = vmatpush1.msra.mxu0 0.0
    %1832 = vmatprep.subr.mxu0 0.0
    %1833 = vmatpush1.msra.mxu0 0.0
    %1834 = vmatprep.subr.mxu0 0.0
    %1835 = vmatpush1.msra.mxu0 0.0
    %1836 = vmatprep.subr.mxu0 0.0
    %1837 = vmatpush1.msra.mxu0 %v1034
    %1838 = vmatprep.subr.mxu0 0.0
    %1839 = vmatpush2.msra.mxu0 0.0
    %1840 = vmatprep.subr.mxu0 0.0
    %1841 = vmatpush2.msra.mxu0 0.0
    %1842 = vmatprep.subr.mxu0 0.0
    %1843 = vmatpush2.msra.mxu0 0.0
    %1844 = vmatprep.subr.mxu0 0.0
    %1845 = vmatpush2.msra.mxu0 0.0
    %1846 = vmatprep.subr.mxu0 0.0
    %1847 = vmatpush2.msra.mxu0 0.0
    %1848 = vmatprep.subr.mxu0 0.0
    %1849 = vmatpush2.msra.mxu0 0.0
    %1850 = vmatprep.subr.mxu0 0.0
    %1851 = vmatpush2.msra.mxu0 0.0
    %1852 = vmatprep.subr.mxu0 0.0
    %1853 = vmatpush2.msra.mxu0 0.0
    %1854 = vmatprep.subr.mxu0 0.0
    %1855 = vmatpush2.msra.mxu0 0.0
    %1856 = vmatprep.subr.mxu0 0.0
    %1857 = vmatpush2.msra.mxu0 0.0
    %1858 = vmatprep.subr.mxu0 0.0
    %1859 = vmatpush2.msra.mxu0 0.0
    %1860 = vmatprep.subr.mxu0 0.0
    %1861 = vmatpush2.msra.mxu0 0.0
    %1862 = vmatprep.subr.mxu0 0.0
    %1863 = vmatpush2.msra.mxu0 0.0
    %1864 = vmatprep.subr.mxu0 0.0
    %1865 = vmatpush2.msra.mxu0 0.0
    %1866 = vmatprep.subr.mxu0 0.0
    %1867 = vmatpush2.msra.mxu0 0.0
    %1868 = vmatprep.subr.mxu0 0.0
    %1869 = vmatpush2.msra.mxu0 0.0
    %1870 = vmatprep.mubr.f32.mxu0 0.0
    %1871 = vmatmul.mubr.f32.gmra.mxu0 %v1804
    %v1872 = vpop.f32.mrf.mxu0
    %v1873 = vadd.f32 0.0, %v1872
    %v1874 = vpop.f32.mrf.mxu0
    %1875 = vdwg.mxu0
    %v1877 = vsel %vm1106, %v1796, 0
    %1879 = vmatprep.subr.mxu0 0.0
    %1880 = vmatpush1.msra.mxu0 0.0
    %1881 = vmatprep.subr.mxu0 0.0
    %1882 = vmatpush1.msra.mxu0 0.0
    %1883 = vmatprep.subr.mxu0 0.0
    %1884 = vmatpush1.msra.mxu0 0.0
    %1885 = vmatprep.subr.mxu0 0.0
    %1886 = vmatpush1.msra.mxu0 0.0
    %1887 = vmatprep.subr.mxu0 0.0
    %1888 = vmatpush1.msra.mxu0 0.0
    %1889 = vmatprep.subr.mxu0 0.0
    %1890 = vmatpush1.msra.mxu0 0.0
    %1891 = vmatprep.subr.mxu0 0.0
    %1892 = vmatpush1.msra.mxu0 0.0
    %1893 = vmatprep.subr.mxu0 0.0
    %1894 = vmatpush1.msra.mxu0 0.0
    %1895 = vmatprep.subr.mxu0 0.0
    %1896 = vmatpush1.msra.mxu0 0.0
    %1897 = vmatprep.subr.mxu0 0.0
    %1898 = vmatpush1.msra.mxu0 0.0
    %1899 = vmatprep.subr.mxu0 0.0
    %1900 = vmatpush1.msra.mxu0 0.0
    %1901 = vmatprep.subr.mxu0 0.0
    %1902 = vmatpush1.msra.mxu0 0.0
    %1903 = vmatprep.subr.mxu0 0.0
    %1904 = vmatpush1.msra.mxu0 0.0
    %1905 = vmatprep.subr.mxu0 0.0
    %1906 = vmatpush1.msra.mxu0 0.0
    %1907 = vmatprep.subr.mxu0 0.0
    %1908 = vmatpush1.msra.mxu0 0.0
    %1909 = vmatprep.subr.mxu0 0.0
    %1910 = vmatpush1.msra.mxu0 %v1035
    %1911 = vmatprep.subr.mxu0 0.0
    %1912 = vmatpush2.msra.mxu0 0.0
    %1913 = vmatprep.subr.mxu0 0.0
    %1914 = vmatpush2.msra.mxu0 0.0
    %1915 = vmatprep.subr.mxu0 0.0
    %1916 = vmatpush2.msra.mxu0 0.0
    %1917 = vmatprep.subr.mxu0 0.0
    %1918 = vmatpush2.msra.mxu0 0.0
    %1919 = vmatprep.subr.mxu0 0.0
    %1920 = vmatpush2.msra.mxu0 0.0
    %1921 = vmatprep.subr.mxu0 0.0
    %1922 = vmatpush2.msra.mxu0 0.0
    %1923 = vmatprep.subr.mxu0 0.0
    %1924 = vmatpush2.msra.mxu0 0.0
    %1925 = vmatprep.subr.mxu0 0.0
    %1926 = vmatpush2.msra.mxu0 0.0
    %1927 = vmatprep.subr.mxu0 0.0
    %1928 = vmatpush2.msra.mxu0 0.0
    %1929 = vmatprep.subr.mxu0 0.0
    %1930 = vmatpush2.msra.mxu0 0.0
    %1931 = vmatprep.subr.mxu0 0.0
    %1932 = vmatpush2.msra.mxu0 0.0
    %1933 = vmatprep.subr.mxu0 0.0
    %1934 = vmatpush2.msra.mxu0 0.0
    %1935 = vmatprep.subr.mxu0 0.0
    %1936 = vmatpush2.msra.mxu0 0.0
    %1937 = vmatprep.subr.mxu0 0.0
    %1938 = vmatpush2.msra.mxu0 0.0
    %1939 = vmatprep.subr.mxu0 0.0
    %1940 = vmatpush2.msra.mxu0 0.0
    %1941 = vmatprep.subr.mxu0 0.0
    %1942 = vmatpush2.msra.mxu0 0.0
    %1943 = vmatprep.mubr.f32.mxu0 0.0
    %1944 = vmatmul.mubr.f32.gmra.mxu0 %v1877
    %v1945 = vpop.f32.mrf.mxu0
    %v1946 = vadd.f32 0.0, %v1945
    %v1947 = vpop.f32.mrf.mxu0
    %1948 = vdwg.mxu0
    %v1950 = vsel %vm1106, %v1797, 0
    %1952 = vmatprep.subr.mxu0 0.0
    %1953 = vmatpush1.msra.mxu0 0.0
    %1954 = vmatprep.subr.mxu0 0.0
    %1955 = vmatpush1.msra.mxu0 0.0
    %1956 = vmatprep.subr.mxu0 0.0
    %1957 = vmatpush1.msra.mxu0 0.0
    %1958 = vmatprep.subr.mxu0 0.0
    %1959 = vmatpush1.msra.mxu0 0.0
    %1960 = vmatprep.subr.mxu0 0.0
    %1961 = vmatpush1.msra.mxu0 0.0
    %1962 = vmatprep.subr.mxu0 0.0
    %1963 = vmatpush1.msra.mxu0 0.0
    %1964 = vmatprep.subr.mxu0 0.0
    %1965 = vmatpush1.msra.mxu0 0.0
    %1966 = vmatprep.subr.mxu0 0.0
    %1967 = vmatpush1.msra.mxu0 0.0
    %1968 = vmatprep.subr.mxu0 0.0
    %1969 = vmatpush1.msra.mxu0 0.0
    %1970 = vmatprep.subr.mxu0 0.0
    %1971 = vmatpush1.msra.mxu0 0.0
    %1972 = vmatprep.subr.mxu0 0.0
    %1973 = vmatpush1.msra.mxu0 0.0
    %1974 = vmatprep.subr.mxu0 0.0
    %1975 = vmatpush1.msra.mxu0 0.0
    %1976 = vmatprep.subr.mxu0 0.0
    %1977 = vmatpush1.msra.mxu0 0.0
    %1978 = vmatprep.subr.mxu0 0.0
    %1979 = vmatpush1.msra.mxu0 0.0
    %1980 = vmatprep.subr.mxu0 0.0
    %1981 = vmatpush1.msra.mxu0 0.0
    %1982 = vmatprep.subr.mxu0 0.0
    %1983 = vmatpush1.msra.mxu0 %v1036
    %1984 = vmatprep.subr.mxu0 0.0
    %1985 = vmatpush2.msra.mxu0 0.0
    %1986 = vmatprep.subr.mxu0 0.0
    %1987 = vmatpush2.msra.mxu0 0.0
    %1988 = vmatprep.subr.mxu0 0.0
    %1989 = vmatpush2.msra.mxu0 0.0
    %1990 = vmatprep.subr.mxu0 0.0
    %1991 = vmatpush2.msra.mxu0 0.0
    %1992 = vmatprep.subr.mxu0 0.0
    %1993 = vmatpush2.msra.mxu0 0.0
    %1994 = vmatprep.subr.mxu0 0.0
    %1995 = vmatpush2.msra.mxu0 0.0
    %1996 = vmatprep.subr.mxu0 0.0
    %1997 = vmatpush2.msra.mxu0 0.0
    %1998 = vmatprep.subr.mxu0 0.0
    %1999 = vmatpush2.msra.mxu0 0.0
    %2000 = vmatprep.subr.mxu0 0.0
    %2001 = vmatpush2.msra.mxu0 0.0
    %2002 = vmatprep.subr.mxu0 0.0
    %2003 = vmatpush2.msra.mxu0 0.0
    %2004 = vmatprep.subr.mxu0 0.0
    %2005 = vmatpush2.msra.mxu0 0.0
    %2006 = vmatprep.subr.mxu0 0.0
    %2007 = vmatpush2.msra.mxu0 0.0
    %2008 = vmatprep.subr.mxu0 0.0
    %2009 = vmatpush2.msra.mxu0 0.0
    %2010 = vmatprep.subr.mxu0 0.0
    %2011 = vmatpush2.msra.mxu0 0.0
    %2012 = vmatprep.subr.mxu0 0.0
    %2013 = vmatpush2.msra.mxu0 0.0
    %2014 = vmatprep.subr.mxu0 0.0
    %2015 = vmatpush2.msra.mxu0 0.0
    %2016 = vmatprep.mubr.f32.mxu0 0.0
    %2017 = vmatmul.mubr.f32.gmra.mxu0 %v1950
    %v2018 = vpop.f32.mrf.mxu0
    %v2019 = vadd.f32 0.0, %v2018
    %v2020 = vpop.f32.mrf.mxu0
    %2021 = vdwg.mxu0
    %v2023 = vsel %vm1106, %v1798, 0
    %2025 = vmatprep.subr.mxu0 0.0
    %2026 = vmatpush1.msra.mxu0 0.0
    %2027 = vmatprep.subr.mxu0 0.0
    %2028 = vmatpush1.msra.mxu0 0.0
    %2029 = vmatprep.subr.mxu0 0.0
    %2030 = vmatpush1.msra.mxu0 0.0
    %2031 = vmatprep.subr.mxu0 0.0
    %2032 = vmatpush1.msra.mxu0 0.0
    %2033 = vmatprep.subr.mxu0 0.0
    %2034 = vmatpush1.msra.mxu0 0.0
    %2035 = vmatprep.subr.mxu0 0.0
    %2036 = vmatpush1.msra.mxu0 0.0
    %2037 = vmatprep.subr.mxu0 0.0
    %2038 = vmatpush1.msra.mxu0 0.0
    %2039 = vmatprep.subr.mxu0 0.0
    %2040 = vmatpush1.msra.mxu0 0.0
    %2041 = vmatprep.subr.mxu0 0.0
    %2042 = vmatpush1.msra.mxu0 0.0
    %2043 = vmatprep.subr.mxu0 0.0
    %2044 = vmatpush1.msra.mxu0 0.0
    %2045 = vmatprep.subr.mxu0 0.0
    %2046 = vmatpush1.msra.mxu0 0.0
    %2047 = vmatprep.subr.mxu0 0.0
    %2048 = vmatpush1.msra.mxu0 0.0
    %2049 = vmatprep.subr.mxu0 0.0
    %2050 = vmatpush1.msra.mxu0 0.0
    %2051 = vmatprep.subr.mxu0 0.0
    %2052 = vmatpush1.msra.mxu0 0.0
    %2053 = vmatprep.subr.mxu0 0.0
    %2054 = vmatpush1.msra.mxu0 0.0
    %2055 = vmatprep.subr.mxu0 0.0
    %2056 = vmatpush1.msra.mxu0 %v1037
    %2057 = vmatprep.subr.mxu0 0.0
    %2058 = vmatpush2.msra.mxu0 0.0
    %2059 = vmatprep.subr.mxu0 0.0
    %2060 = vmatpush2.msra.mxu0 0.0
    %2061 = vmatprep.subr.mxu0 0.0
    %2062 = vmatpush2.msra.mxu0 0.0
    %2063 = vmatprep.subr.mxu0 0.0
    %2064 = vmatpush2.msra.mxu0 0.0
    %2065 = vmatprep.subr.mxu0 0.0
    %2066 = vmatpush2.msra.mxu0 0.0
    %2067 = vmatprep.subr.mxu0 0.0
    %2068 = vmatpush2.msra.mxu0 0.0
    %2069 = vmatprep.subr.mxu0 0.0
    %2070 = vmatpush2.msra.mxu0 0.0
    %2071 = vmatprep.subr.mxu0 0.0
    %2072 = vmatpush2.msra.mxu0 0.0
    %2073 = vmatprep.subr.mxu0 0.0
    %2074 = vmatpush2.msra.mxu0 0.0
    %2075 = vmatprep.subr.mxu0 0.0
    %2076 = vmatpush2.msra.mxu0 0.0
    %2077 = vmatprep.subr.mxu0 0.0
    %2078 = vmatpush2.msra.mxu0 0.0
    %2079 = vmatprep.subr.mxu0 0.0
    %2080 = vmatpush2.msra.mxu0 0.0
    %2081 = vmatprep.subr.mxu0 0.0
    %2082 = vmatpush2.msra.mxu0 0.0
    %2083 = vmatprep.subr.mxu0 0.0
    %2084 = vmatpush2.msra.mxu0 0.0
    %2085 = vmatprep.subr.mxu0 0.0
    %2086 = vmatpush2.msra.mxu0 0.0
    %2087 = vmatprep.subr.mxu0 0.0
    %2088 = vmatpush2.msra.mxu0 0.0
    %2089 = vmatprep.mubr.f32.mxu0 0.0
    %2090 = vmatmul.mubr.f32.gmra.mxu0 %v2023
    %v2091 = vpop.f32.mrf.mxu0
    %v2092 = vadd.f32 0.0, %v2091
    %v2093 = vpop.f32.mrf.mxu0
    %2094 = vdwg.mxu0
    %v2096 = vsel %vm1106, %v1799, 0
    %2098 = vmatprep.subr.mxu0 0.0
    %2099 = vmatpush1.msra.mxu0 0.0
    %2100 = vmatprep.subr.mxu0 0.0
    %2101 = vmatpush1.msra.mxu0 0.0
    %2102 = vmatprep.subr.mxu0 0.0
    %2103 = vmatpush1.msra.mxu0 0.0
    %2104 = vmatprep.subr.mxu0 0.0
    %2105 = vmatpush1.msra.mxu0 0.0
    %2106 = vmatprep.subr.mxu0 0.0
    %2107 = vmatpush1.msra.mxu0 0.0
    %2108 = vmatprep.subr.mxu0 0.0
    %2109 = vmatpush1.msra.mxu0 0.0
    %2110 = vmatprep.subr.mxu0 0.0
    %2111 = vmatpush1.msra.mxu0 0.0
    %2112 = vmatprep.subr.mxu0 0.0
    %2113 = vmatpush1.msra.mxu0 0.0
    %2114 = vmatprep.subr.mxu0 0.0
    %2115 = vmatpush1.msra.mxu0 0.0
    %2116 = vmatprep.subr.mxu0 0.0
    %2117 = vmatpush1.msra.mxu0 0.0
    %2118 = vmatprep.subr.mxu0 0.0
    %2119 = vmatpush1.msra.mxu0 0.0
    %2120 = vmatprep.subr.mxu0 0.0
    %2121 = vmatpush1.msra.mxu0 0.0
    %2122 = vmatprep.subr.mxu0 0.0
    %2123 = vmatpush1.msra.mxu0 0.0
    %2124 = vmatprep.subr.mxu0 0.0
    %2125 = vmatpush1.msra.mxu0 0.0
    %2126 = vmatprep.subr.mxu0 0.0
    %2127 = vmatpush1.msra.mxu0 0.0
    %2128 = vmatprep.subr.mxu0 0.0
    %2129 = vmatpush1.msra.mxu0 %v1102
    %2130 = vmatprep.subr.mxu0 0.0
    %2131 = vmatpush2.msra.mxu0 0.0
    %2132 = vmatprep.subr.mxu0 0.0
    %2133 = vmatpush2.msra.mxu0 0.0
    %2134 = vmatprep.subr.mxu0 0.0
    %2135 = vmatpush2.msra.mxu0 0.0
    %2136 = vmatprep.subr.mxu0 0.0
    %2137 = vmatpush2.msra.mxu0 0.0
    %2138 = vmatprep.subr.mxu0 0.0
    %2139 = vmatpush2.msra.mxu0 0.0
    %2140 = vmatprep.subr.mxu0 0.0
    %2141 = vmatpush2.msra.mxu0 0.0
    %2142 = vmatprep.subr.mxu0 0.0
    %2143 = vmatpush2.msra.mxu0 0.0
    %2144 = vmatprep.subr.mxu0 0.0
    %2145 = vmatpush2.msra.mxu0 0.0
    %2146 = vmatprep.subr.mxu0 0.0
    %2147 = vmatpush2.msra.mxu0 0.0
    %2148 = vmatprep.subr.mxu0 0.0
    %2149 = vmatpush2.msra.mxu0 0.0
    %2150 = vmatprep.subr.mxu0 0.0
    %2151 = vmatpush2.msra.mxu0 0.0
    %2152 = vmatprep.subr.mxu0 0.0
    %2153 = vmatpush2.msra.mxu0 0.0
    %2154 = vmatprep.subr.mxu0 0.0
    %2155 = vmatpush2.msra.mxu0 0.0
    %2156 = vmatprep.subr.mxu0 0.0
    %2157 = vmatpush2.msra.mxu0 0.0
    %2158 = vmatprep.subr.mxu0 0.0
    %2159 = vmatpush2.msra.mxu0 0.0
    %2160 = vmatprep.subr.mxu0 0.0
    %2161 = vmatpush2.msra.mxu0 0.0
    %2162 = vmatprep.mubr.f32.mxu0 0.0
    %2163 = vmatmul.mubr.f32.gmra.mxu0 %v2096
    %v2164 = vpop.f32.mrf.mxu0
    %v2165 = vadd.f32 0.0, %v2164
    %v2166 = vpop.f32.mrf.mxu0
    %2167 = vdwg.mxu0
    %v2169 = vsel %vm1106, %v1800, 0
    %2171 = vmatprep.subr.mxu0 0.0
    %2172 = vmatpush1.msra.mxu0 0.0
    %2173 = vmatprep.subr.mxu0 0.0
    %2174 = vmatpush1.msra.mxu0 0.0
    %2175 = vmatprep.subr.mxu0 0.0
    %2176 = vmatpush1.msra.mxu0 0.0
    %2177 = vmatprep.subr.mxu0 0.0
    %2178 = vmatpush1.msra.mxu0 0.0
    %2179 = vmatprep.subr.mxu0 0.0
    %2180 = vmatpush1.msra.mxu0 0.0
    %2181 = vmatprep.subr.mxu0 0.0
    %2182 = vmatpush1.msra.mxu0 0.0
    %2183 = vmatprep.subr.mxu0 0.0
    %2184 = vmatpush1.msra.mxu0 0.0
    %2185 = vmatprep.subr.mxu0 0.0
    %2186 = vmatpush1.msra.mxu0 0.0
    %2187 = vmatprep.subr.mxu0 0.0
    %2188 = vmatpush1.msra.mxu0 0.0
    %2189 = vmatprep.subr.mxu0 0.0
    %2190 = vmatpush1.msra.mxu0 0.0
    %2191 = vmatprep.subr.mxu0 0.0
    %2192 = vmatpush1.msra.mxu0 0.0
    %2193 = vmatprep.subr.mxu0 0.0
    %2194 = vmatpush1.msra.mxu0 0.0
    %2195 = vmatprep.subr.mxu0 0.0
    %2196 = vmatpush1.msra.mxu0 0.0
    %2197 = vmatprep.subr.mxu0 0.0
    %2198 = vmatpush1.msra.mxu0 0.0
    %2199 = vmatprep.subr.mxu0 0.0
    %2200 = vmatpush1.msra.mxu0 0.0
    %2201 = vmatprep.subr.mxu0 0.0
    %2202 = vmatpush1.msra.mxu0 %v1103
    %2203 = vmatprep.subr.mxu0 0.0
    %2204 = vmatpush2.msra.mxu0 0.0
    %2205 = vmatprep.subr.mxu0 0.0
    %2206 = vmatpush2.msra.mxu0 0.0
    %2207 = vmatprep.subr.mxu0 0.0
    %2208 = vmatpush2.msra.mxu0 0.0
    %2209 = vmatprep.subr.mxu0 0.0
    %2210 = vmatpush2.msra.mxu0 0.0
    %2211 = vmatprep.subr.mxu0 0.0
    %2212 = vmatpush2.msra.mxu0 0.0
    %2213 = vmatprep.subr.mxu0 0.0
    %2214 = vmatpush2.msra.mxu0 0.0
    %2215 = vmatprep.subr.mxu0 0.0
    %2216 = vmatpush2.msra.mxu0 0.0
    %2217 = vmatprep.subr.mxu0 0.0
    %2218 = vmatpush2.msra.mxu0 0.0
    %2219 = vmatprep.subr.mxu0 0.0
    %2220 = vmatpush2.msra.mxu0 0.0
    %2221 = vmatprep.subr.mxu0 0.0
    %2222 = vmatpush2.msra.mxu0 0.0
    %2223 = vmatprep.subr.mxu0 0.0
    %2224 = vmatpush2.msra.mxu0 0.0
    %2225 = vmatprep.subr.mxu0 0.0
    %2226 = vmatpush2.msra.mxu0 0.0
    %2227 = vmatprep.subr.mxu0 0.0
    %2228 = vmatpush2.msra.mxu0 0.0
    %2229 = vmatprep.subr.mxu0 0.0
    %2230 = vmatpush2.msra.mxu0 0.0
    %2231 = vmatprep.subr.mxu0 0.0
    %2232 = vmatpush2.msra.mxu0 0.0
    %2233 = vmatprep.subr.mxu0 0.0
    %2234 = vmatpush2.msra.mxu0 0.0
    %2235 = vmatprep.mubr.f32.mxu0 0.0
    %2236 = vmatmul.mubr.f32.gmra.mxu0 %v2169
    %v2237 = vpop.f32.mrf.mxu0
    %v2238 = vadd.f32 0.0, %v2237
    %v2239 = vpop.f32.mrf.mxu0
    %2240 = vdwg.mxu0
    %v2242 = vsel %vm1106, %v1801, 0
    %2244 = vmatprep.subr.mxu0 0.0
    %2245 = vmatpush1.msra.mxu0 0.0
    %2246 = vmatprep.subr.mxu0 0.0
    %2247 = vmatpush1.msra.mxu0 0.0
    %2248 = vmatprep.subr.mxu0 0.0
    %2249 = vmatpush1.msra.mxu0 0.0
    %2250 = vmatprep.subr.mxu0 0.0
    %2251 = vmatpush1.msra.mxu0 0.0
    %2252 = vmatprep.subr.mxu0 0.0
    %2253 = vmatpush1.msra.mxu0 0.0
    %2254 = vmatprep.subr.mxu0 0.0
    %2255 = vmatpush1.msra.mxu0 0.0
    %2256 = vmatprep.subr.mxu0 0.0
    %2257 = vmatpush1.msra.mxu0 0.0
    %2258 = vmatprep.subr.mxu0 0.0
    %2259 = vmatpush1.msra.mxu0 0.0
    %2260 = vmatprep.subr.mxu0 0.0
    %2261 = vmatpush1.msra.mxu0 0.0
    %2262 = vmatprep.subr.mxu0 0.0
    %2263 = vmatpush1.msra.mxu0 0.0
    %2264 = vmatprep.subr.mxu0 0.0
    %2265 = vmatpush1.msra.mxu0 0.0
    %2266 = vmatprep.subr.mxu0 0.0
    %2267 = vmatpush1.msra.mxu0 0.0
    %2268 = vmatprep.subr.mxu0 0.0
    %2269 = vmatpush1.msra.mxu0 0.0
    %2270 = vmatprep.subr.mxu0 0.0
    %2271 = vmatpush1.msra.mxu0 0.0
    %2272 = vmatprep.subr.mxu0 0.0
    %2273 = vmatpush1.msra.mxu0 0.0
    %2274 = vmatprep.subr.mxu0 0.0
    %2275 = vmatpush1.msra.mxu0 %v1104
    %2276 = vmatprep.subr.mxu0 0.0
    %2277 = vmatpush2.msra.mxu0 0.0
    %2278 = vmatprep.subr.mxu0 0.0
    %2279 = vmatpush2.msra.mxu0 0.0
    %2280 = vmatprep.subr.mxu0 0.0
    %2281 = vmatpush2.msra.mxu0 0.0
    %2282 = vmatprep.subr.mxu0 0.0
    %2283 = vmatpush2.msra.mxu0 0.0
    %2284 = vmatprep.subr.mxu0 0.0
    %2285 = vmatpush2.msra.mxu0 0.0
    %2286 = vmatprep.subr.mxu0 0.0
    %2287 = vmatpush2.msra.mxu0 0.0
    %2288 = vmatprep.subr.mxu0 0.0
    %2289 = vmatpush2.msra.mxu0 0.0
    %2290 = vmatprep.subr.mxu0 0.0
    %2291 = vmatpush2.msra.mxu0 0.0
    %2292 = vmatprep.subr.mxu0 0.0
    %2293 = vmatpush2.msra.mxu0 0.0
    %2294 = vmatprep.subr.mxu0 0.0
    %2295 = vmatpush2.msra.mxu0 0.0
    %2296 = vmatprep.subr.mxu0 0.0
    %2297 = vmatpush2.msra.mxu0 0.0
    %2298 = vmatprep.subr.mxu0 0.0
    %2299 = vmatpush2.msra.mxu0 0.0
    %2300 = vmatprep.subr.mxu0 0.0
    %2301 = vmatpush2.msra.mxu0 0.0
    %2302 = vmatprep.subr.mxu0 0.0
    %2303 = vmatpush2.msra.mxu0 0.0
    %2304 = vmatprep.subr.mxu0 0.0
    %2305 = vmatpush2.msra.mxu0 0.0
    %2306 = vmatprep.subr.mxu0 0.0
    %2307 = vmatpush2.msra.mxu0 0.0
    %2308 = vmatprep.mubr.f32.mxu0 0.0
    %2309 = vmatmul.mubr.f32.gmra.mxu0 %v2242
    %v2310 = vpop.f32.mrf.mxu0
    %v2311 = vadd.f32 0.0, %v2310
    %v2312 = vpop.f32.mrf.mxu0
    %2313 = vdwg.mxu0
    %v2315 = vsel %vm1106, %v1802, 0
    %2317 = vmatprep.subr.mxu0 0.0
    %2318 = vmatpush1.msra.mxu0 0.0
    %2319 = vmatprep.subr.mxu0 0.0
    %2320 = vmatpush1.msra.mxu0 0.0
    %2321 = vmatprep.subr.mxu0 0.0
    %2322 = vmatpush1.msra.mxu0 0.0
    %2323 = vmatprep.subr.mxu0 0.0
    %2324 = vmatpush1.msra.mxu0 0.0
    %2325 = vmatprep.subr.mxu0 0.0
    %2326 = vmatpush1.msra.mxu0 0.0
    %2327 = vmatprep.subr.mxu0 0.0
    %2328 = vmatpush1.msra.mxu0 0.0
    %2329 = vmatprep.subr.mxu0 0.0
    %2330 = vmatpush1.msra.mxu0 0.0
    %2331 = vmatprep.subr.mxu0 0.0
    %2332 = vmatpush1.msra.mxu0 0.0
    %2333 = vmatprep.subr.mxu0 0.0
    %2334 = vmatpush1.msra.mxu0 0.0
    %2335 = vmatprep.subr.mxu0 0.0
    %2336 = vmatpush1.msra.mxu0 0.0
    %2337 = vmatprep.subr.mxu0 0.0
    %2338 = vmatpush1.msra.mxu0 0.0
    %2339 = vmatprep.subr.mxu0 0.0
    %2340 = vmatpush1.msra.mxu0 0.0
    %2341 = vmatprep.subr.mxu0 0.0
    %2342 = vmatpush1.msra.mxu0 0.0
    %2343 = vmatprep.subr.mxu0 0.0
    %2344 = vmatpush1.msra.mxu0 0.0
    %2345 = vmatprep.subr.mxu0 0.0
    %2346 = vmatpush1.msra.mxu0 0.0
    %2347 = vmatprep.subr.mxu0 0.0
    %2348 = vmatpush1.msra.mxu0 %v1105
    %2349 = vmatprep.subr.mxu0 0.0
    %2350 = vmatpush2.msra.mxu0 0.0
    %2351 = vmatprep.subr.mxu0 0.0
    %2352 = vmatpush2.msra.mxu0 0.0
    %2353 = vmatprep.subr.mxu0 0.0
    %2354 = vmatpush2.msra.mxu0 0.0
    %2355 = vmatprep.subr.mxu0 0.0
    %2356 = vmatpush2.msra.mxu0 0.0
    %2357 = vmatprep.subr.mxu0 0.0
    %2358 = vmatpush2.msra.mxu0 0.0
    %2359 = vmatprep.subr.mxu0 0.0
    %2360 = vmatpush2.msra.mxu0 0.0
    %2361 = vmatprep.subr.mxu0 0.0
    %2362 = vmatpush2.msra.mxu0 0.0
    %2363 = vmatprep.subr.mxu0 0.0
    %2364 = vmatpush2.msra.mxu0 0.0
    %2365 = vmatprep.subr.mxu0 0.0
    %2366 = vmatpush2.msra.mxu0 0.0
    %2367 = vmatprep.subr.mxu0 0.0
    %2368 = vmatpush2.msra.mxu0 0.0
    %2369 = vmatprep.subr.mxu0 0.0
    %2370 = vmatpush2.msra.mxu0 0.0
    %2371 = vmatprep.subr.mxu0 0.0
    %2372 = vmatpush2.msra.mxu0 0.0
    %2373 = vmatprep.subr.mxu0 0.0
    %2374 = vmatpush2.msra.mxu0 0.0
    %2375 = vmatprep.subr.mxu0 0.0
    %2376 = vmatpush2.msra.mxu0 0.0
    %2377 = vmatprep.subr.mxu0 0.0
    %2378 = vmatpush2.msra.mxu0 0.0
    %2379 = vmatprep.subr.mxu0 0.0
    %2380 = vmatpush2.msra.mxu0 0.0
    %2381 = vmatprep.mubr.f32.mxu0 0.0
    %2382 = vmatmul.mubr.f32.gmra.mxu0 %v2315
    %v2383 = vpop.f32.mrf.mxu0
    %v2384 = vadd.f32 0.0, %v2383
    %v2385 = vpop.f32.mrf.mxu0
    %2386 = vdwg.mxu0
    %v2387 = vcombine.low %v1873, %v2019
    %v2388 = vcombine.high %v1873, %v2019
    %v2390 = vunpack.c.l.s4 1983009808
    %v2391 = vunpack.c.0.s8 %v2390
    %v2392 = vlaneseq
    %v2393 = vshrl.u32 %v2392, 7
    %v2394 = vsub.s32 %v2391, %v2393
    %v2395 = vrot.slane %v2387, %v2394
    %v2397 = vunpack.c.l.s4 1983009808
    %v2398 = vunpack.c.0.s8 %v2397
    %v2399 = vlaneseq
    %v2400 = vshrl.u32 %v2399, 7
    %v2401 = vsub.s32 %v2398, %v2400
    %v2402 = vrot.slane %v2388, %v2401
    %v2403 = vcombine.low %v1946, %v2092
    %v2404 = vcombine.high %v1946, %v2092
    %v2406 = vunpack.c.l.s4 1983009808
    %v2407 = vunpack.c.0.s8 %v2406
    %v2408 = vlaneseq
    %v2409 = vshrl.u32 %v2408, 7
    %v2410 = vsub.s32 %v2407, %v2409
    %v2411 = vrot.slane %v2403, %v2410
    %v2413 = vunpack.c.l.s4 1983009808
    %v2414 = vunpack.c.0.s8 %v2413
    %v2415 = vlaneseq
    %v2416 = vshrl.u32 %v2415, 7
    %v2417 = vsub.s32 %v2414, %v2416
    %v2418 = vrot.slane %v2404, %v2417
    %v2419 = vcombine.low %v2395, %v2411
    %v2420 = vcombine.high %v2395, %v2411
    %v2422 = vunpack.c.l.s4 1934713408
    %v2423 = vunpack.c.0.s8 %v2422
    %v2424 = vlaneseq
    %v2425 = vshrl.u32 %v2424, 7
    %v2426 = vsub.s32 %v2423, %v2425
    %v2427 = vrot.slane %v2419, %v2426
    %v2429 = vunpack.c.l.s4 1934713408
    %v2430 = vunpack.c.0.s8 %v2429
    %v2431 = vlaneseq
    %v2432 = vshrl.u32 %v2431, 7
    %v2433 = vsub.s32 %v2430, %v2432
    %v2434 = vrot.slane %v2420, %v2433
    %v2435 = vcombine.low %v2402, %v2418
    %v2436 = vcombine.high %v2402, %v2418
    %v2438 = vunpack.c.l.s4 1934713408
    %v2439 = vunpack.c.0.s8 %v2438
    %v2440 = vlaneseq
    %v2441 = vshrl.u32 %v2440, 7
    %v2442 = vsub.s32 %v2439, %v2441
    %v2443 = vrot.slane %v2435, %v2442
    %v2445 = vunpack.c.l.s4 1934713408
    %v2446 = vunpack.c.0.s8 %v2445
    %v2447 = vlaneseq
    %v2448 = vshrl.u32 %v2447, 7
    %v2449 = vsub.s32 %v2446, %v2448
    %v2450 = vrot.slane %v2436, %v2449
    %v2451 = vcombine.high %v2427, 0.0
    %v2452 = vcombine.high %v2434, 0.0
    %v2453 = vcombine.high %v2443, 0.0
    %v2454 = vcombine.high %v2450, 0.0
    %v2455 = vcombine.low %v2165, %v2311
    %v2456 = vcombine.high %v2165, %v2311
    %v2458 = vunpack.c.l.s4 1983009808
    %v2459 = vunpack.c.0.s8 %v2458
    %v2460 = vlaneseq
    %v2461 = vshrl.u32 %v2460, 7
    %v2462 = vsub.s32 %v2459, %v2461
    %v2463 = vrot.slane %v2455, %v2462
    %v2465 = vunpack.c.l.s4 1983009808
    %v2466 = vunpack.c.0.s8 %v2465
    %v2467 = vlaneseq
    %v2468 = vshrl.u32 %v2467, 7
    %v2469 = vsub.s32 %v2466, %v2468
    %v2470 = vrot.slane %v2456, %v2469
    %v2471 = vcombine.low %v2238, %v2384
    %v2472 = vcombine.high %v2238, %v2384
    %v2474 = vunpack.c.l.s4 1983009808
    %v2475 = vunpack.c.0.s8 %v2474
    %v2476 = vlaneseq
    %v2477 = vshrl.u32 %v2476, 7
    %v2478 = vsub.s32 %v2475, %v2477
    %v2479 = vrot.slane %v2471, %v2478
    %v2481 = vunpack.c.l.s4 1983009808
    %v2482 = vunpack.c.0.s8 %v2481
    %v2483 = vlaneseq
    %v2484 = vshrl.u32 %v2483, 7
    %v2485 = vsub.s32 %v2482, %v2484
    %v2486 = vrot.slane %v2472, %v2485
    %v2487 = vcombine.low %v2463, %v2479
    %v2488 = vcombine.high %v2463, %v2479
    %v2490 = vunpack.c.l.s4 1934713408
    %v2491 = vunpack.c.0.s8 %v2490
    %v2492 = vlaneseq
    %v2493 = vshrl.u32 %v2492, 7
    %v2494 = vsub.s32 %v2491, %v2493
    %v2495 = vrot.slane %v2487, %v2494
    %v2497 = vunpack.c.l.s4 1934713408
    %v2498 = vunpack.c.0.s8 %v2497
    %v2499 = vlaneseq
    %v2500 = vshrl.u32 %v2499, 7
    %v2501 = vsub.s32 %v2498, %v2500
    %v2502 = vrot.slane %v2488, %v2501
    %v2503 = vcombine.low %v2470, %v2486
    %v2504 = vcombine.high %v2470, %v2486
    %v2506 = vunpack.c.l.s4 1934713408
    %v2507 = vunpack.c.0.s8 %v2506
    %v2508 = vlaneseq
    %v2509 = vshrl.u32 %v2508, 7
    %v2510 = vsub.s32 %v2507, %v2509
    %v2511 = vrot.slane %v2503, %v2510
    %v2513 = vunpack.c.l.s4 1934713408
    %v2514 = vunpack.c.0.s8 %v2513
    %v2515 = vlaneseq
    %v2516 = vshrl.u32 %v2515, 7
    %v2517 = vsub.s32 %v2514, %v2516
    %v2518 = vrot.slane %v2504, %v2517
    %v2519 = vcombine.high %v2495, 0.0
    %v2520 = vcombine.high %v2502, 0.0
    %v2521 = vcombine.high %v2511, 0.0
    %v2522 = vcombine.high %v2518, 0.0
    %v2523 = vcombine.low %v2427, %v2451
    %v2525 = vunpack.c.l.s4 1983009808
    %v2526 = vunpack.c.0.s8 %v2525
    %v2527 = vlaneseq
    %v2528 = vshrl.u32 %v2527, 7
    %v2529 = vsub.s32 %v2526, %v2528
    %v2530 = vrot.slane %v2523, %v2529
    %v2531 = vcombine.low %v2495, %v2519
    %v2533 = vunpack.c.l.s4 1983009808
    %v2534 = vunpack.c.0.s8 %v2533
    %v2535 = vlaneseq
    %v2536 = vshrl.u32 %v2535, 7
    %v2537 = vsub.s32 %v2534, %v2536
    %v2538 = vrot.slane %v2531, %v2537
    %v2539 = vcombine.low %v2434, %v2452
    %v2541 = vunpack.c.l.s4 1983009808
    %v2542 = vunpack.c.0.s8 %v2541
    %v2543 = vlaneseq
    %v2544 = vshrl.u32 %v2543, 7
    %v2545 = vsub.s32 %v2542, %v2544
    %v2546 = vrot.slane %v2539, %v2545
    %v2547 = vcombine.low %v2502, %v2520
    %v2549 = vunpack.c.l.s4 1983009808
    %v2550 = vunpack.c.0.s8 %v2549
    %v2551 = vlaneseq
    %v2552 = vshrl.u32 %v2551, 7
    %v2553 = vsub.s32 %v2550, %v2552
    %v2554 = vrot.slane %v2547, %v2553
    %v2555 = vcombine.low %v2530, %v2538
    %v2556 = vcombine.high %v2530, %v2538
    %v2558 = vunpack.c.l.s4 1934713408
    %v2559 = vunpack.c.0.s8 %v2558
    %v2560 = vlaneseq
    %v2561 = vshrl.u32 %v2560, 7
    %v2562 = vsub.s32 %v2559, %v2561
    %v2563 = vrot.slane %v2555, %v2562
    %v2565 = vunpack.c.l.s4 1934713408
    %v2566 = vunpack.c.0.s8 %v2565
    %v2567 = vlaneseq
    %v2568 = vshrl.u32 %v2567, 7
    %v2569 = vsub.s32 %v2566, %v2568
    %v2570 = vrot.slane %v2556, %v2569
    %v2571 = vcombine.low %v2546, %v2554
    %v2572 = vcombine.high %v2546, %v2554
    %v2574 = vunpack.c.l.s4 1934713408
    %v2575 = vunpack.c.0.s8 %v2574
    %v2576 = vlaneseq
    %v2577 = vshrl.u32 %v2576, 7
    %v2578 = vsub.s32 %v2575, %v2577
    %v2579 = vrot.slane %v2571, %v2578
    %v2581 = vunpack.c.l.s4 1934713408
    %v2582 = vunpack.c.0.s8 %v2581
    %v2583 = vlaneseq
    %v2584 = vshrl.u32 %v2583, 7
    %v2585 = vsub.s32 %v2582, %v2584
    %v2586 = vrot.slane %v2572, %v2585
    %v2587 = vcombine.low %v2563, %v2579
    %v2588 = vcombine.high %v2563, %v2579
    %v2589 = vcombine.low %v2570, %v2586
    %v2590 = vcombine.high %v2570, %v2586
    %v2591 = vcombine.low %v2443, %v2453
    %v2593 = vunpack.c.l.s4 1983009808
    %v2594 = vunpack.c.0.s8 %v2593
    %v2595 = vlaneseq
    %v2596 = vshrl.u32 %v2595, 7
    %v2597 = vsub.s32 %v2594, %v2596
    %v2598 = vrot.slane %v2591, %v2597
    %v2599 = vcombine.low %v2511, %v2521
    %v2601 = vunpack.c.l.s4 1983009808
    %v2602 = vunpack.c.0.s8 %v2601
    %v2603 = vlaneseq
    %v2604 = vshrl.u32 %v2603, 7
    %v2605 = vsub.s32 %v2602, %v2604
    %v2606 = vrot.slane %v2599, %v2605
    %v2607 = vcombine.low %v2450, %v2454
    %v2609 = vunpack.c.l.s4 1983009808
    %v2610 = vunpack.c.0.s8 %v2609
    %v2611 = vlaneseq
    %v2612 = vshrl.u32 %v2611, 7
    %v2613 = vsub.s32 %v2610, %v2612
    %v2614 = vrot.slane %v2607, %v2613
    %v2615 = vcombine.low %v2518, %v2522
    %v2617 = vunpack.c.l.s4 1983009808
    %v2618 = vunpack.c.0.s8 %v2617
    %v2619 = vlaneseq
    %v2620 = vshrl.u32 %v2619, 7
    %v2621 = vsub.s32 %v2618, %v2620
    %v2622 = vrot.slane %v2615, %v2621
    %v2623 = vcombine.low %v2598, %v2606
    %v2624 = vcombine.high %v2598, %v2606
    %v2626 = vunpack.c.l.s4 1934713408
    %v2627 = vunpack.c.0.s8 %v2626
    %v2628 = vlaneseq
    %v2629 = vshrl.u32 %v2628, 7
    %v2630 = vsub.s32 %v2627, %v2629
    %v2631 = vrot.slane %v2623, %v2630
    %v2633 = vunpack.c.l.s4 1934713408
    %v2634 = vunpack.c.0.s8 %v2633
    %v2635 = vlaneseq
    %v2636 = vshrl.u32 %v2635, 7
    %v2637 = vsub.s32 %v2634, %v2636
    %v2638 = vrot.slane %v2624, %v2637
    %v2639 = vcombine.low %v2614, %v2622
    %v2640 = vcombine.high %v2614, %v2622
    %v2642 = vunpack.c.l.s4 1934713408
    %v2643 = vunpack.c.0.s8 %v2642
    %v2644 = vlaneseq
    %v2645 = vshrl.u32 %v2644, 7
    %v2646 = vsub.s32 %v2643, %v2645
    %v2647 = vrot.slane %v2639, %v2646
    %v2649 = vunpack.c.l.s4 1934713408
    %v2650 = vunpack.c.0.s8 %v2649
    %v2651 = vlaneseq
    %v2652 = vshrl.u32 %v2651, 7
    %v2653 = vsub.s32 %v2650, %v2652
    %v2654 = vrot.slane %v2640, %v2653
    %v2655 = vcombine.low %v2631, %v2647
    %v2656 = vcombine.high %v2631, %v2647
    %v2657 = vcombine.low %v2638, %v2654
    %v2658 = vcombine.high %v2638, %v2654
    %2661 = vrot.lane.b32.xlu0 %v2588, 8
    %v2662 = vpop.permute.xlu0 %2661
    %2663 = vrot.lane.b32.xlu0 %v2656, 8
    %v2664 = vpop.permute.xlu0 %2663
    %2669 = vrot.lane.b32.xlu0 %v2589, 16
    %v2670 = vpop.permute.xlu0 %2669
    %2671 = vrot.lane.b32.xlu0 %v2657, 16
    %v2672 = vpop.permute.xlu0 %2671
    %2677 = vrot.lane.b32.xlu0 %v2590, 24
    %v2678 = vpop.permute.xlu0 %2677
    %2679 = vrot.lane.b32.xlu0 %v2658, 24
    %v2680 = vpop.permute.xlu0 %2679
    %v2683 = vsel %vm1106, %v2587, %v2662
    %v2684 = vsel %vm1106, %v2655, %v2664
    %vm2685 = vcmask 130048
    %v2686 = vsel %vm2685, %v2683, %v2670
    %v2687 = vsel %vm2685, %v2684, %v2672
    %vm2688 = vcmask 195584
    %v2689 = vsel %vm2688, %v2686, %v2678
    %v2690 = vsel %vm2688, %v2687, %v2680
    %v2691 = vld [vmem:[%s3] sm:$0xff]
    %v2692 = vld [vmem:[%s3 + $0x8] sm:$0xff]
    %v2693 = vld [vmem:[%s3 + $0x10] sm:$0xff]
    %v2694 = vld [vmem:[%s3 + $0x18] sm:$0xff]
    %v2695 = vld [vmem:[%s4] sm:$0x1]
    %v2697 = vlaneseq
    %v2698 = vshrl.u32 %v2697, 7
    %v2699 = vsub.s32 0, %v2698
    %v2700 = vrot.slane %v2695, %v2699
    %v2703 = vsel %vm126, %v2689, 0
    %v2706 = vsel %vm126, %v2690, 0
    %2708 = vmatprep.subr.mxu0 0.0
    %2709 = vmatpush1.msra.mxu0 0.0
    %2710 = vmatprep.subr.mxu0 0.0
    %2711 = vmatpush1.msra.mxu0 0.0
    %2712 = vmatprep.subr.mxu0 0.0
    %2713 = vmatpush1.msra.mxu0 0.0
    %2714 = vmatprep.subr.mxu0 0.0
    %2715 = vmatpush1.msra.mxu0 0.0
    %2716 = vmatprep.subr.mxu0 0.0
    %2717 = vmatpush1.msra.mxu0 0.0
    %2718 = vmatprep.subr.mxu0 0.0
    %2719 = vmatpush1.msra.mxu0 0.0
    %2720 = vmatprep.subr.mxu0 0.0
    %2721 = vmatpush1.msra.mxu0 0.0
    %2722 = vmatprep.subr.mxu0 0.0
    %2723 = vmatpush1.msra.mxu0 0.0
    %2724 = vmatprep.subr.mxu0 0.0
    %2725 = vmatpush1.msra.mxu0 0.0
    %2726 = vmatprep.subr.mxu0 0.0
    %2727 = vmatpush1.msra.mxu0 0.0
    %2728 = vmatprep.subr.mxu0 0.0
    %2729 = vmatpush1.msra.mxu0 0.0
    %2730 = vmatprep.subr.mxu0 0.0
    %2731 = vmatpush1.msra.mxu0 0.0
    %2732 = vmatprep.subr.mxu0 0.0
    %2733 = vmatpush1.msra.mxu0 %v2694
    %2734 = vmatprep.subr.mxu0 0.0
    %2735 = vmatpush1.msra.mxu0 %v2693
    %2736 = vmatprep.subr.mxu0 0.0
    %2737 = vmatpush1.msra.mxu0 %v2692
    %2738 = vmatprep.subr.mxu0 0.0
    %2739 = vmatpush1.msra.mxu0 %v2691
    %2740 = vmatprep.subr.mxu0 0.0
    %2741 = vmatpush2.msra.mxu0 0.0
    %2742 = vmatprep.subr.mxu0 0.0
    %2743 = vmatpush2.msra.mxu0 0.0
    %2744 = vmatprep.subr.mxu0 0.0
    %2745 = vmatpush2.msra.mxu0 0.0
    %2746 = vmatprep.subr.mxu0 0.0
    %2747 = vmatpush2.msra.mxu0 0.0
    %2748 = vmatprep.subr.mxu0 0.0
    %2749 = vmatpush2.msra.mxu0 0.0
    %2750 = vmatprep.subr.mxu0 0.0
    %2751 = vmatpush2.msra.mxu0 0.0
    %2752 = vmatprep.subr.mxu0 0.0
    %2753 = vmatpush2.msra.mxu0 0.0
    %2754 = vmatprep.subr.mxu0 0.0
    %2755 = vmatpush2.msra.mxu0 0.0
    %2756 = vmatprep.subr.mxu0 0.0
    %2757 = vmatpush2.msra.mxu0 0.0
    %2758 = vmatprep.subr.mxu0 0.0
    %2759 = vmatpush2.msra.mxu0 0.0
    %2760 = vmatprep.subr.mxu0 0.0
    %2761 = vmatpush2.msra.mxu0 0.0
    %2762 = vmatprep.subr.mxu0 0.0
    %2763 = vmatpush2.msra.mxu0 0.0
    %2764 = vmatprep.subr.mxu0 0.0
    %2765 = vmatpush2.msra.mxu0 0.0
    %2766 = vmatprep.subr.mxu0 0.0
    %2767 = vmatpush2.msra.mxu0 0.0
    %2768 = vmatprep.subr.mxu0 0.0
    %2769 = vmatpush2.msra.mxu0 0.0
    %2770 = vmatprep.subr.mxu0 0.0
    %2771 = vmatpush2.msra.mxu0 0.0
    %2772 = vmatprep.mubr.f32.mxu0 0.0
    %2773 = vmatmul.mubr.f32.gmra.mxu0 %v2703
    %v2774 = vpop.f32.mrf.mxu0
    %v2775 = vadd.f32 %v2700, %v2774
    %v2776 = vpop.f32.mrf.mxu0
    %2777 = vmatprep.mubr.f32.mxu0 0.0
    %2778 = vmatmul.mubr.f32.gmra.mxu0 %v2706
    %v2779 = vpop.f32.mrf.mxu0
    %v2780 = vadd.f32 %v2700, %v2779
    %v2781 = vpop.f32.mrf.mxu0
    %2782 = vdwg.mxu0
    %v2785 = vcombine.high %v2775, %v2775
    %v2787 = vunpack.c.l.s4 1983009808
    %v2788 = vunpack.c.0.s8 %v2787
    %v2789 = vlaneseq
    %v2790 = vshrl.u32 %v2789, 7
    %v2791 = vsub.s32 %v2788, %v2790
    %v2792 = vrot.slane %v2775, %v2791
    %v2794 = vunpack.c.l.s4 1983009808
    %v2795 = vunpack.c.0.s8 %v2794
    %v2796 = vlaneseq
    %v2797 = vshrl.u32 %v2796, 7
    %v2798 = vsub.s32 %v2795, %v2797
    %v2799 = vrot.slane %v2785, %v2798
    %v2800 = vcombine.high %v2792, %v2792
    %v2801 = vcombine.high %v2799, %v2799
    %v2802 = vcombine.high %v2780, %v2780
    %v2804 = vunpack.c.l.s4 1983009808
    %v2805 = vunpack.c.0.s8 %v2804
    %v2806 = vlaneseq
    %v2807 = vshrl.u32 %v2806, 7
    %v2808 = vsub.s32 %v2805, %v2807
    %v2809 = vrot.slane %v2780, %v2808
    %v2811 = vunpack.c.l.s4 1983009808
    %v2812 = vunpack.c.0.s8 %v2811
    %v2813 = vlaneseq
    %v2814 = vshrl.u32 %v2813, 7
    %v2815 = vsub.s32 %v2812, %v2814
    %v2816 = vrot.slane %v2802, %v2815
    %v2817 = vcombine.high %v2809, %v2809
    %v2818 = vcombine.high %v2816, %v2816
    %v2827 = vadd.f32 %v65, %v2792
    %v2828 = vadd.f32 %v66, %v2800
    %v2829 = vadd.f32 %v67, %v2799
    %v2830 = vadd.f32 %v68, %v2801
    %v2831 = vadd.f32 %v69, %v2809
    %v2832 = vadd.f32 %v70, %v2817
    %v2833 = vadd.f32 %v71, %v2816
    %v2834 = vadd.f32 %v72, %v2818
    %v2835 = vld [vmem:[%s5] sm:$0x1]
    %v2836 = vld [vmem:[%s6] sm:$0x1]
    %v2845 = vcombine.low %v2827, %v2828
    %v2846 = vcombine.low %v2829, %v2830
    %v2848 = vunpack.c.l.s4 1983009808
    %v2849 = vunpack.c.0.s8 %v2848
    %v2850 = vlaneseq
    %v2851 = vshrl.u32 %v2850, 7
    %v2852 = vsub.s32 %v2849, %v2851
    %v2853 = vrot.slane %v2845, %v2852
    %v2855 = vunpack.c.l.s4 1983009808
    %v2856 = vunpack.c.0.s8 %v2855
    %v2857 = vlaneseq
    %v2858 = vshrl.u32 %v2857, 7
    %v2859 = vsub.s32 %v2856, %v2858
    %v2860 = vrot.slane %v2846, %v2859
    %v2861 = vcombine.low %v2853, %v2860
    %v2862 = vcombine.low %v2831, %v2832
    %v2863 = vcombine.low %v2833, %v2834
    %v2865 = vunpack.c.l.s4 1983009808
    %v2866 = vunpack.c.0.s8 %v2865
    %v2867 = vlaneseq
    %v2868 = vshrl.u32 %v2867, 7
    %v2869 = vsub.s32 %v2866, %v2868
    %v2870 = vrot.slane %v2862, %v2869
    %v2872 = vunpack.c.l.s4 1983009808
    %v2873 = vunpack.c.0.s8 %v2872
    %v2874 = vlaneseq
    %v2875 = vshrl.u32 %v2874, 7
    %v2876 = vsub.s32 %v2873, %v2875
    %v2877 = vrot.slane %v2863, %v2876
    %v2878 = vcombine.low %v2870, %v2877
    %v2881 = vsel %vm126, %v2861, 0.0
    %2882 = vadd.xlane.f32.xlu0 %v2881
    %v2883 = vpop.xlane.xlu0 %2882
    %v2884 = vsel %vm126, %v2878, 0.0
    %2885 = vadd.xlane.f32.xlu0 %v2884
    %v2886 = vpop.xlane.xlu0 %2885
    %v2887 = vrcp.pop 32.0
    %v2888 = vmul.f32 %v2883, %v2887
    %v2889 = vmul.f32 %v2886, %v2887
    %v2893 = vunpack.c.l.s4 269488144
    %v2894 = vunpack.c.0.s8 %v2893
    %v2895 = vlaneseq
    %v2896 = vshrl.u32 %v2895, 7
    %v2897 = vsub.s32 %v2894, %v2896
    %v2898 = vrot.slane %v2888, %v2897
    %v2900 = vunpack.c.l.s4 842150450
    %v2901 = vunpack.c.0.s8 %v2900
    %v2902 = vlaneseq
    %v2903 = vshrl.u32 %v2902, 7
    %v2904 = vsub.s32 %v2901, %v2903
    %v2905 = vrot.slane %v2888, %v2904
    %v2907 = vunpack.c.l.s4 1414812756
    %v2908 = vunpack.c.0.s8 %v2907
    %v2909 = vlaneseq
    %v2910 = vshrl.u32 %v2909, 7
    %v2911 = vsub.s32 %v2908, %v2910
    %v2912 = vrot.slane %v2888, %v2911
    %v2914 = vunpack.c.l.s4 1987475062
    %v2915 = vunpack.c.0.s8 %v2914
    %v2916 = vlaneseq
    %v2917 = vshrl.u32 %v2916, 7
    %v2918 = vsub.s32 %v2915, %v2917
    %v2919 = vrot.slane %v2888, %v2918
    %v2921 = vunpack.c.l.s4 269488144
    %v2922 = vunpack.c.0.s8 %v2921
    %v2923 = vlaneseq
    %v2924 = vshrl.u32 %v2923, 7
    %v2925 = vsub.s32 %v2922, %v2924
    %v2926 = vrot.slane %v2889, %v2925
    %v2928 = vunpack.c.l.s4 842150450
    %v2929 = vunpack.c.0.s8 %v2928
    %v2930 = vlaneseq
    %v2931 = vshrl.u32 %v2930, 7
    %v2932 = vsub.s32 %v2929, %v2931
    %v2933 = vrot.slane %v2889, %v2932
    %v2935 = vunpack.c.l.s4 1414812756
    %v2936 = vunpack.c.0.s8 %v2935
    %v2937 = vlaneseq
    %v2938 = vshrl.u32 %v2937, 7
    %v2939 = vsub.s32 %v2936, %v2938
    %v2940 = vrot.slane %v2889, %v2939
    %v2942 = vunpack.c.l.s4 1987475062
    %v2943 = vunpack.c.0.s8 %v2942
    %v2944 = vlaneseq
    %v2945 = vshrl.u32 %v2944, 7
    %v2946 = vsub.s32 %v2943, %v2945
    %v2947 = vrot.slane %v2889, %v2946
    %v2956 = vsub.f32 %v2827, %v2898
    %v2957 = vsub.f32 %v2828, %v2905
    %v2958 = vsub.f32 %v2829, %v2912
    %v2959 = vsub.f32 %v2830, %v2919
    %v2960 = vsub.f32 %v2831, %v2926
    %v2961 = vsub.f32 %v2832, %v2933
    %v2962 = vsub.f32 %v2833, %v2940
    %v2963 = vsub.f32 %v2834, %v2947
    %v2964 = vmul.f32 %v2956, %v2956
    %v2965 = vmul.f32 %v2957, %v2957
    %v2966 = vmul.f32 %v2958, %v2958
    %v2967 = vmul.f32 %v2959, %v2959
    %v2968 = vmul.f32 %v2960, %v2960
    %v2969 = vmul.f32 %v2961, %v2961
    %v2970 = vmul.f32 %v2962, %v2962
    %v2971 = vmul.f32 %v2963, %v2963
    %v2980 = vcombine.low %v2964, %v2965
    %v2981 = vcombine.low %v2966, %v2967
    %v2983 = vunpack.c.l.s4 1983009808
    %v2984 = vunpack.c.0.s8 %v2983
    %v2985 = vlaneseq
    %v2986 = vshrl.u32 %v2985, 7
    %v2987 = vsub.s32 %v2984, %v2986
    %v2988 = vrot.slane %v2980, %v2987
    %v2990 = vunpack.c.l.s4 1983009808
    %v2991 = vunpack.c.0.s8 %v2990
    %v2992 = vlaneseq
    %v2993 = vshrl.u32 %v2992, 7
    %v2994 = vsub.s32 %v2991, %v2993
    %v2995 = vrot.slane %v2981, %v2994
    %v2996 = vcombine.low %v2988, %v2995
    %v2997 = vcombine.low %v2968, %v2969
    %v2998 = vcombine.low %v2970, %v2971
    %v3000 = vunpack.c.l.s4 1983009808
    %v3001 = vunpack.c.0.s8 %v3000
    %v3002 = vlaneseq
    %v3003 = vshrl.u32 %v3002, 7
    %v3004 = vsub.s32 %v3001, %v3003
    %v3005 = vrot.slane %v2997, %v3004
    %v3007 = vunpack.c.l.s4 1983009808
    %v3008 = vunpack.c.0.s8 %v3007
    %v3009 = vlaneseq
    %v3010 = vshrl.u32 %v3009, 7
    %v3011 = vsub.s32 %v3008, %v3010
    %v3012 = vrot.slane %v2998, %v3011
    %v3013 = vcombine.low %v3005, %v3012
    %v3016 = vsel %vm126, %v2996, 0.0
    %3017 = vadd.xlane.f32.xlu0 %v3016
    %v3018 = vpop.xlane.xlu0 %3017
    %v3019 = vsel %vm126, %v3013, 0.0
    %3020 = vadd.xlane.f32.xlu0 %v3019
    %v3021 = vpop.xlane.xlu0 %3020
    %v3022 = vmul.f32 %v3018, %v2887
    %v3023 = vmul.f32 %v3021, %v2887
    %v3024 = vadd.f32 %v3022, 1e-05
    %v3025 = vadd.f32 %v3023, 1e-05
    %v3026 = vrsqrt.pop %v3024
    %v3027 = vrsqrt.pop %v3025
    %v3031 = vunpack.c.l.s4 269488144
    %v3032 = vunpack.c.0.s8 %v3031
    %v3033 = vlaneseq
    %v3034 = vshrl.u32 %v3033, 7
    %v3035 = vsub.s32 %v3032, %v3034
    %v3036 = vrot.slane %v3026, %v3035
    %v3038 = vunpack.c.l.s4 842150450
    %v3039 = vunpack.c.0.s8 %v3038
    %v3040 = vlaneseq
    %v3041 = vshrl.u32 %v3040, 7
    %v3042 = vsub.s32 %v3039, %v3041
    %v3043 = vrot.slane %v3026, %v3042
    %v3045 = vunpack.c.l.s4 1414812756
    %v3046 = vunpack.c.0.s8 %v3045
    %v3047 = vlaneseq
    %v3048 = vshrl.u32 %v3047, 7
    %v3049 = vsub.s32 %v3046, %v3048
    %v3050 = vrot.slane %v3026, %v3049
    %v3052 = vunpack.c.l.s4 1987475062
    %v3053 = vunpack.c.0.s8 %v3052
    %v3054 = vlaneseq
    %v3055 = vshrl.u32 %v3054, 7
    %v3056 = vsub.s32 %v3053, %v3055
    %v3057 = vrot.slane %v3026, %v3056
    %v3059 = vunpack.c.l.s4 269488144
    %v3060 = vunpack.c.0.s8 %v3059
    %v3061 = vlaneseq
    %v3062 = vshrl.u32 %v3061, 7
    %v3063 = vsub.s32 %v3060, %v3062
    %v3064 = vrot.slane %v3027, %v3063
    %v3066 = vunpack.c.l.s4 842150450
    %v3067 = vunpack.c.0.s8 %v3066
    %v3068 = vlaneseq
    %v3069 = vshrl.u32 %v3068, 7
    %v3070 = vsub.s32 %v3067, %v3069
    %v3071 = vrot.slane %v3027, %v3070
    %v3073 = vunpack.c.l.s4 1414812756
    %v3074 = vunpack.c.0.s8 %v3073
    %v3075 = vlaneseq
    %v3076 = vshrl.u32 %v3075, 7
    %v3077 = vsub.s32 %v3074, %v3076
    %v3078 = vrot.slane %v3027, %v3077
    %v3080 = vunpack.c.l.s4 1987475062
    %v3081 = vunpack.c.0.s8 %v3080
    %v3082 = vlaneseq
    %v3083 = vshrl.u32 %v3082, 7
    %v3084 = vsub.s32 %v3081, %v3083
    %v3085 = vrot.slane %v3027, %v3084
    %v3094 = vmul.f32 %v2956, %v3036
    %v3095 = vmul.f32 %v2957, %v3043
    %v3096 = vmul.f32 %v2958, %v3050
    %v3097 = vmul.f32 %v2959, %v3057
    %v3098 = vmul.f32 %v2960, %v3064
    %v3099 = vmul.f32 %v2961, %v3071
    %v3100 = vmul.f32 %v2962, %v3078
    %v3101 = vmul.f32 %v2963, %v3085
    %v3103 = vlaneseq
    %v3104 = vshrl.u32 %v3103, 7
    %v3105 = vsub.s32 0, %v3104
    %v3106 = vrot.slane %v2835, %v3105
    %v3107 = vcombine.high %v3106, %v3106
    %v3109 = vunpack.c.l.s4 1983009808
    %v3110 = vunpack.c.0.s8 %v3109
    %v3111 = vlaneseq
    %v3112 = vshrl.u32 %v3111, 7
    %v3113 = vsub.s32 %v3110, %v3112
    %v3114 = vrot.slane %v3106, %v3113
    %v3116 = vunpack.c.l.s4 1983009808
    %v3117 = vunpack.c.0.s8 %v3116
    %v3118 = vlaneseq
    %v3119 = vshrl.u32 %v3118, 7
    %v3120 = vsub.s32 %v3117, %v3119
    %v3121 = vrot.slane %v3107, %v3120
    %v3122 = vcombine.high %v3114, %v3114
    %v3123 = vcombine.high %v3121, %v3121
    %v3128 = vmul.f32 %v3094, %v3114
    %v3129 = vmul.f32 %v3095, %v3122
    %v3130 = vmul.f32 %v3096, %v3121
    %v3131 = vmul.f32 %v3097, %v3123
    %v3132 = vmul.f32 %v3098, %v3114
    %v3133 = vmul.f32 %v3099, %v3122
    %v3134 = vmul.f32 %v3100, %v3121
    %v3135 = vmul.f32 %v3101, %v3123
    %v3137 = vlaneseq
    %v3138 = vshrl.u32 %v3137, 7
    %v3139 = vsub.s32 0, %v3138
    %v3140 = vrot.slane %v2836, %v3139
    %v3141 = vcombine.high %v3140, %v3140
    %v3143 = vunpack.c.l.s4 1983009808
    %v3144 = vunpack.c.0.s8 %v3143
    %v3145 = vlaneseq
    %v3146 = vshrl.u32 %v3145, 7
    %v3147 = vsub.s32 %v3144, %v3146
    %v3148 = vrot.slane %v3140, %v3147
    %v3150 = vunpack.c.l.s4 1983009808
    %v3151 = vunpack.c.0.s8 %v3150
    %v3152 = vlaneseq
    %v3153 = vshrl.u32 %v3152, 7
    %v3154 = vsub.s32 %v3151, %v3153
    %v3155 = vrot.slane %v3141, %v3154
    %v3156 = vcombine.high %v3148, %v3148
    %v3157 = vcombine.high %v3155, %v3155
    %v3162 = vadd.f32 %v3128, %v3148
    %v3163 = vadd.f32 %v3129, %v3156
    %v3164 = vadd.f32 %v3130, %v3155
    %v3165 = vadd.f32 %v3131, %v3157
    %v3166 = vadd.f32 %v3132, %v3148
    %v3167 = vadd.f32 %v3133, %v3156
    %v3168 = vadd.f32 %v3134, %v3155
    %v3169 = vadd.f32 %v3135, %v3157
    %v3170 = vld [vmem:[%s7] sm:$0xff]
    %v3171 = vld [vmem:[%s7 + $0x8] sm:$0xff]
    %v3172 = vld [vmem:[%s7 + $0x10] sm:$0xff]
    %v3173 = vld [vmem:[%s7 + $0x18] sm:$0xff]
    %v3174 = vld [vmem:[%s8] sm:$0x1]
    %v3176 = vlaneseq
    %v3177 = vshrl.u32 %v3176, 7
    %v3178 = vsub.s32 0, %v3177
    %v3179 = vrot.slane %v3174, %v3178
    %v3189 = vcombine.low %v3162, %v3163
    %v3190 = vcombine.low %v3164, %v3165
    %v3192 = vunpack.c.l.s4 1983009808
    %v3193 = vunpack.c.0.s8 %v3192
    %v3194 = vlaneseq
    %v3195 = vshrl.u32 %v3194, 7
    %v3196 = vsub.s32 %v3193, %v3195
    %v3197 = vrot.slane %v3189, %v3196
    %v3199 = vunpack.c.l.s4 1983009808
    %v3200 = vunpack.c.0.s8 %v3199
    %v3201 = vlaneseq
    %v3202 = vshrl.u32 %v3201, 7
    %v3203 = vsub.s32 %v3200, %v3202
    %v3204 = vrot.slane %v3190, %v3203
    %v3205 = vcombine.low %v3197, %v3204
    %v3206 = vcombine.low %v3166, %v3167
    %v3207 = vcombine.low %v3168, %v3169
    %v3209 = vunpack.c.l.s4 1983009808
    %v3210 = vunpack.c.0.s8 %v3209
    %v3211 = vlaneseq
    %v3212 = vshrl.u32 %v3211, 7
    %v3213 = vsub.s32 %v3210, %v3212
    %v3214 = vrot.slane %v3206, %v3213
    %v3216 = vunpack.c.l.s4 1983009808
    %v3217 = vunpack.c.0.s8 %v3216
    %v3218 = vlaneseq
    %v3219 = vshrl.u32 %v3218, 7
    %v3220 = vsub.s32 %v3217, %v3219
    %v3221 = vrot.slane %v3207, %v3220
    %v3222 = vcombine.low %v3214, %v3221
    %v3223 = vsel %vm126, %v3205, 0
    %v3225 = vsel %vm126, %v3222, 0
    %3227 = vmatprep.subr.mxu0 0.0
    %3228 = vmatpush1.msra.mxu0 0.0
    %3229 = vmatprep.subr.mxu0 0.0
    %3230 = vmatpush1.msra.mxu0 0.0
    %3231 = vmatprep.subr.mxu0 0.0
    %3232 = vmatpush1.msra.mxu0 0.0
    %3233 = vmatprep.subr.mxu0 0.0
    %3234 = vmatpush1.msra.mxu0 0.0
    %3235 = vmatprep.subr.mxu0 0.0
    %3236 = vmatpush1.msra.mxu0 0.0
    %3237 = vmatprep.subr.mxu0 0.0
    %3238 = vmatpush1.msra.mxu0 0.0
    %3239 = vmatprep.subr.mxu0 0.0
    %3240 = vmatpush1.msra.mxu0 0.0
    %3241 = vmatprep.subr.mxu0 0.0
    %3242 = vmatpush1.msra.mxu0 0.0
    %3243 = vmatprep.subr.mxu0 0.0
    %3244 = vmatpush1.msra.mxu0 0.0
    %3245 = vmatprep.subr.mxu0 0.0
    %3246 = vmatpush1.msra.mxu0 0.0
    %3247 = vmatprep.subr.mxu0 0.0
    %3248 = vmatpush1.msra.mxu0 0.0
    %3249 = vmatprep.subr.mxu0 0.0
    %3250 = vmatpush1.msra.mxu0 0.0
    %3251 = vmatprep.subr.mxu0 0.0
    %3252 = vmatpush1.msra.mxu0 %v3173
    %3253 = vmatprep.subr.mxu0 0.0
    %3254 = vmatpush1.msra.mxu0 %v3172
    %3255 = vmatprep.subr.mxu0 0.0
    %3256 = vmatpush1.msra.mxu0 %v3171
    %3257 = vmatprep.subr.mxu0 0.0
    %3258 = vmatpush1.msra.mxu0 %v3170
    %3259 = vmatprep.subr.mxu0 0.0
    %3260 = vmatpush2.msra.mxu0 0.0
    %3261 = vmatprep.subr.mxu0 0.0
    %3262 = vmatpush2.msra.mxu0 0.0
    %3263 = vmatprep.subr.mxu0 0.0
    %3264 = vmatpush2.msra.mxu0 0.0
    %3265 = vmatprep.subr.mxu0 0.0
    %3266 = vmatpush2.msra.mxu0 0.0
    %3267 = vmatprep.subr.mxu0 0.0
    %3268 = vmatpush2.msra.mxu0 0.0
    %3269 = vmatprep.subr.mxu0 0.0
    %3270 = vmatpush2.msra.mxu0 0.0
    %3271 = vmatprep.subr.mxu0 0.0
    %3272 = vmatpush2.msra.mxu0 0.0
    %3273 = vmatprep.subr.mxu0 0.0
    %3274 = vmatpush2.msra.mxu0 0.0
    %3275 = vmatprep.subr.mxu0 0.0
    %3276 = vmatpush2.msra.mxu0 0.0
    %3277 = vmatprep.subr.mxu0 0.0
    %3278 = vmatpush2.msra.mxu0 0.0
    %3279 = vmatprep.subr.mxu0 0.0
    %3280 = vmatpush2.msra.mxu0 0.0
    %3281 = vmatprep.subr.mxu0 0.0
    %3282 = vmatpush2.msra.mxu0 0.0
    %3283 = vmatprep.subr.mxu0 0.0
    %3284 = vmatpush2.msra.mxu0 0.0
    %3285 = vmatprep.subr.mxu0 0.0
    %3286 = vmatpush2.msra.mxu0 0.0
    %3287 = vmatprep.subr.mxu0 0.0
    %3288 = vmatpush2.msra.mxu0 0.0
    %3289 = vmatprep.subr.mxu0 0.0
    %3290 = vmatpush2.msra.mxu0 0.0
    %3291 = vmatprep.mubr.f32.mxu0 0.0
    %3292 = vmatmul.mubr.f32.gmra.mxu0 %v3223
    %v3293 = vpop.f32.mrf.mxu0
    %v3294 = vadd.f32 %v3179, %v3293
    %v3295 = vpop.f32.mrf.mxu0
    %3296 = vmatprep.mubr.f32.mxu0 0.0
    %3297 = vmatmul.mubr.f32.gmra.mxu0 %v3225
    %v3298 = vpop.f32.mrf.mxu0
    %v3299 = vadd.f32 %v3179, %v3298
    %v3300 = vpop.f32.mrf.mxu0
    %3301 = vdwg.mxu0
    %v3302 = vmax.f32 %v3294, 0.0
    %v3303 = vmax.f32 %v3299, 0.0
    %v3304 = vld [vmem:[%s9] sm:$0xff]
    %v3305 = vld [vmem:[%s9 + $0x8] sm:$0xff]
    %v3306 = vld [vmem:[%s9 + $0x10] sm:$0xff]
    %v3307 = vld [vmem:[%s9 + $0x18] sm:$0xff]
    %v3308 = vld [vmem:[%s9 + $0x20] sm:$0xff]
    %v3309 = vld [vmem:[%s9 + $0x28] sm:$0xff]
    %v3310 = vld [vmem:[%s9 + $0x30] sm:$0xff]
    %v3311 = vld [vmem:[%s9 + $0x38] sm:$0xff]
    %v3312 = vld [vmem:[%s10] sm:$0x1]
    %v3314 = vlaneseq
    %v3315 = vshrl.u32 %v3314, 7
    %v3316 = vsub.s32 0, %v3315
    %v3317 = vrot.slane %v3312, %v3316
    %vm3319 = vcmask 523264
    %v3321 = vsel %vm3319, %v3302, 0
    %v3324 = vsel %vm3319, %v3303, 0
    %3326 = vmatprep.subr.mxu0 0.0
    %3327 = vmatpush1.msra.mxu0 0.0
    %3328 = vmatprep.subr.mxu0 0.0
    %3329 = vmatpush1.msra.mxu0 0.0
    %3330 = vmatprep.subr.mxu0 0.0
    %3331 = vmatpush1.msra.mxu0 0.0
    %3332 = vmatprep.subr.mxu0 0.0
    %3333 = vmatpush1.msra.mxu0 0.0
    %3334 = vmatprep.subr.mxu0 0.0
    %3335 = vmatpush1.msra.mxu0 0.0
    %3336 = vmatprep.subr.mxu0 0.0
    %3337 = vmatpush1.msra.mxu0 0.0
    %3338 = vmatprep.subr.mxu0 0.0
    %3339 = vmatpush1.msra.mxu0 0.0
    %3340 = vmatprep.subr.mxu0 0.0
    %3341 = vmatpush1.msra.mxu0 0.0
    %3342 = vmatprep.subr.mxu0 0.0
    %3343 = vmatpush1.msra.mxu0 %v3311
    %3344 = vmatprep.subr.mxu0 0.0
    %3345 = vmatpush1.msra.mxu0 %v3310
    %3346 = vmatprep.subr.mxu0 0.0
    %3347 = vmatpush1.msra.mxu0 %v3309
    %3348 = vmatprep.subr.mxu0 0.0
    %3349 = vmatpush1.msra.mxu0 %v3308
    %3350 = vmatprep.subr.mxu0 0.0
    %3351 = vmatpush1.msra.mxu0 %v3307
    %3352 = vmatprep.subr.mxu0 0.0
    %3353 = vmatpush1.msra.mxu0 %v3306
    %3354 = vmatprep.subr.mxu0 0.0
    %3355 = vmatpush1.msra.mxu0 %v3305
    %3356 = vmatprep.subr.mxu0 0.0
    %3357 = vmatpush1.msra.mxu0 %v3304
    %3358 = vmatprep.subr.mxu0 0.0
    %3359 = vmatpush2.msra.mxu0 0.0
    %3360 = vmatprep.subr.mxu0 0.0
    %3361 = vmatpush2.msra.mxu0 0.0
    %3362 = vmatprep.subr.mxu0 0.0
    %3363 = vmatpush2.msra.mxu0 0.0
    %3364 = vmatprep.subr.mxu0 0.0
    %3365 = vmatpush2.msra.mxu0 0.0
    %3366 = vmatprep.subr.mxu0 0.0
    %3367 = vmatpush2.msra.mxu0 0.0
    %3368 = vmatprep.subr.mxu0 0.0
    %3369 = vmatpush2.msra.mxu0 0.0
    %3370 = vmatprep.subr.mxu0 0.0
    %3371 = vmatpush2.msra.mxu0 0.0
    %3372 = vmatprep.subr.mxu0 0.0
    %3373 = vmatpush2.msra.mxu0 0.0
    %3374 = vmatprep.subr.mxu0 0.0
    %3375 = vmatpush2.msra.mxu0 0.0
    %3376 = vmatprep.subr.mxu0 0.0
    %3377 = vmatpush2.msra.mxu0 0.0
    %3378 = vmatprep.subr.mxu0 0.0
    %3379 = vmatpush2.msra.mxu0 0.0
    %3380 = vmatprep.subr.mxu0 0.0
    %3381 = vmatpush2.msra.mxu0 0.0
    %3382 = vmatprep.subr.mxu0 0.0
    %3383 = vmatpush2.msra.mxu0 0.0
    %3384 = vmatprep.subr.mxu0 0.0
    %3385 = vmatpush2.msra.mxu0 0.0
    %3386 = vmatprep.subr.mxu0 0.0
    %3387 = vmatpush2.msra.mxu0 0.0
    %3388 = vmatprep.subr.mxu0 0.0
    %3389 = vmatpush2.msra.mxu0 0.0
    %3390 = vmatprep.mubr.f32.mxu0 0.0
    %3391 = vmatmul.mubr.f32.gmra.mxu0 %v3321
    %v3392 = vpop.f32.mrf.mxu0
    %v3393 = vadd.f32 %v3317, %v3392
    %v3394 = vpop.f32.mrf.mxu0
    %3395 = vmatprep.mubr.f32.mxu0 0.0
    %3396 = vmatmul.mubr.f32.gmra.mxu0 %v3324
    %v3397 = vpop.f32.mrf.mxu0
    %v3398 = vadd.f32 %v3317, %v3397
    %v3399 = vpop.f32.mrf.mxu0
    %3400 = vdwg.mxu0
    %v3403 = vcombine.high %v3393, %v3393
    %v3405 = vunpack.c.l.s4 1983009808
    %v3406 = vunpack.c.0.s8 %v3405
    %v3407 = vlaneseq
    %v3408 = vshrl.u32 %v3407, 7
    %v3409 = vsub.s32 %v3406, %v3408
    %v3410 = vrot.slane %v3393, %v3409
    %v3412 = vunpack.c.l.s4 1983009808
    %v3413 = vunpack.c.0.s8 %v3412
    %v3414 = vlaneseq
    %v3415 = vshrl.u32 %v3414, 7
    %v3416 = vsub.s32 %v3413, %v3415
    %v3417 = vrot.slane %v3403, %v3416
    %v3418 = vcombine.high %v3410, %v3410
    %v3419 = vcombine.high %v3417, %v3417
    %v3420 = vcombine.high %v3398, %v3398
    %v3422 = vunpack.c.l.s4 1983009808
    %v3423 = vunpack.c.0.s8 %v3422
    %v3424 = vlaneseq
    %v3425 = vshrl.u32 %v3424, 7
    %v3426 = vsub.s32 %v3423, %v3425
    %v3427 = vrot.slane %v3398, %v3426
    %v3429 = vunpack.c.l.s4 1983009808
    %v3430 = vunpack.c.0.s8 %v3429
    %v3431 = vlaneseq
    %v3432 = vshrl.u32 %v3431, 7
    %v3433 = vsub.s32 %v3430, %v3432
    %v3434 = vrot.slane %v3420, %v3433
    %v3435 = vcombine.high %v3427, %v3427
    %v3436 = vcombine.high %v3434, %v3434
    %v3445 = vadd.f32 %v3162, %v3410
    %v3446 = vadd.f32 %v3163, %v3418
    %v3447 = vadd.f32 %v3164, %v3417
    %v3448 = vadd.f32 %v3165, %v3419
    %v3449 = vadd.f32 %v3166, %v3427
    %v3450 = vadd.f32 %v3167, %v3435
    %v3451 = vadd.f32 %v3168, %v3434
    %v3452 = vadd.f32 %v3169, %v3436
    %v3453 = vld [vmem:[%s11] sm:$0x1]
    %v3454 = vld [vmem:[%s12] sm:$0x1]
    %v3463 = vcombine.low %v3445, %v3446
    %v3464 = vcombine.low %v3447, %v3448
    %v3466 = vunpack.c.l.s4 1983009808
    %v3467 = vunpack.c.0.s8 %v3466
    %v3468 = vlaneseq
    %v3469 = vshrl.u32 %v3468, 7
    %v3470 = vsub.s32 %v3467, %v3469
    %v3471 = vrot.slane %v3463, %v3470
    %v3473 = vunpack.c.l.s4 1983009808
    %v3474 = vunpack.c.0.s8 %v3473
    %v3475 = vlaneseq
    %v3476 = vshrl.u32 %v3475, 7
    %v3477 = vsub.s32 %v3474, %v3476
    %v3478 = vrot.slane %v3464, %v3477
    %v3479 = vcombine.low %v3471, %v3478
    %v3480 = vcombine.low %v3449, %v3450
    %v3481 = vcombine.low %v3451, %v3452
    %v3483 = vunpack.c.l.s4 1983009808
    %v3484 = vunpack.c.0.s8 %v3483
    %v3485 = vlaneseq
    %v3486 = vshrl.u32 %v3485, 7
    %v3487 = vsub.s32 %v3484, %v3486
    %v3488 = vrot.slane %v3480, %v3487
    %v3490 = vunpack.c.l.s4 1983009808
    %v3491 = vunpack.c.0.s8 %v3490
    %v3492 = vlaneseq
    %v3493 = vshrl.u32 %v3492, 7
    %v3494 = vsub.s32 %v3491, %v3493
    %v3495 = vrot.slane %v3481, %v3494
    %v3496 = vcombine.low %v3488, %v3495
    %v3499 = vsel %vm126, %v3479, 0.0
    %3500 = vadd.xlane.f32.xlu0 %v3499
    %v3501 = vpop.xlane.xlu0 %3500
    %v3502 = vsel %vm126, %v3496, 0.0
    %3503 = vadd.xlane.f32.xlu0 %v3502
    %v3504 = vpop.xlane.xlu0 %3503
    %v3505 = vmul.f32 %v3501, %v2887
    %v3506 = vmul.f32 %v3504, %v2887
    %v3510 = vunpack.c.l.s4 269488144
    %v3511 = vunpack.c.0.s8 %v3510
    %v3512 = vlaneseq
    %v3513 = vshrl.u32 %v3512, 7
    %v3514 = vsub.s32 %v3511, %v3513
    %v3515 = vrot.slane %v3505, %v3514
    %v3517 = vunpack.c.l.s4 842150450
    %v3518 = vunpack.c.0.s8 %v3517
    %v3519 = vlaneseq
    %v3520 = vshrl.u32 %v3519, 7
    %v3521 = vsub.s32 %v3518, %v3520
    %v3522 = vrot.slane %v3505, %v3521
    %v3524 = vunpack.c.l.s4 1414812756
    %v3525 = vunpack.c.0.s8 %v3524
    %v3526 = vlaneseq
    %v3527 = vshrl.u32 %v3526, 7
    %v3528 = vsub.s32 %v3525, %v3527
    %v3529 = vrot.slane %v3505, %v3528
    %v3531 = vunpack.c.l.s4 1987475062
    %v3532 = vunpack.c.0.s8 %v3531
    %v3533 = vlaneseq
    %v3534 = vshrl.u32 %v3533, 7
    %v3535 = vsub.s32 %v3532, %v3534
    %v3536 = vrot.slane %v3505, %v3535
    %v3538 = vunpack.c.l.s4 269488144
    %v3539 = vunpack.c.0.s8 %v3538
    %v3540 = vlaneseq
    %v3541 = vshrl.u32 %v3540, 7
    %v3542 = vsub.s32 %v3539, %v3541
    %v3543 = vrot.slane %v3506, %v3542
    %v3545 = vunpack.c.l.s4 842150450
    %v3546 = vunpack.c.0.s8 %v3545
    %v3547 = vlaneseq
    %v3548 = vshrl.u32 %v3547, 7
    %v3549 = vsub.s32 %v3546, %v3548
    %v3550 = vrot.slane %v3506, %v3549
    %v3552 = vunpack.c.l.s4 1414812756
    %v3553 = vunpack.c.0.s8 %v3552
    %v3554 = vlaneseq
    %v3555 = vshrl.u32 %v3554, 7
    %v3556 = vsub.s32 %v3553, %v3555
    %v3557 = vrot.slane %v3506, %v3556
    %v3559 = vunpack.c.l.s4 1987475062
    %v3560 = vunpack.c.0.s8 %v3559
    %v3561 = vlaneseq
    %v3562 = vshrl.u32 %v3561, 7
    %v3563 = vsub.s32 %v3560, %v3562
    %v3564 = vrot.slane %v3506, %v3563
    %v3573 = vsub.f32 %v3445, %v3515
    %v3574 = vsub.f32 %v3446, %v3522
    %v3575 = vsub.f32 %v3447, %v3529
    %v3576 = vsub.f32 %v3448, %v3536
    %v3577 = vsub.f32 %v3449, %v3543
    %v3578 = vsub.f32 %v3450, %v3550
    %v3579 = vsub.f32 %v3451, %v3557
    %v3580 = vsub.f32 %v3452, %v3564
    %v3581 = vmul.f32 %v3573, %v3573
    %v3582 = vmul.f32 %v3574, %v3574
    %v3583 = vmul.f32 %v3575, %v3575
    %v3584 = vmul.f32 %v3576, %v3576
    %v3585 = vmul.f32 %v3577, %v3577
    %v3586 = vmul.f32 %v3578, %v3578
    %v3587 = vmul.f32 %v3579, %v3579
    %v3588 = vmul.f32 %v3580, %v3580
    %v3597 = vcombine.low %v3581, %v3582
    %v3598 = vcombine.low %v3583, %v3584
    %v3600 = vunpack.c.l.s4 1983009808
    %v3601 = vunpack.c.0.s8 %v3600
    %v3602 = vlaneseq
    %v3603 = vshrl.u32 %v3602, 7
    %v3604 = vsub.s32 %v3601, %v3603
    %v3605 = vrot.slane %v3597, %v3604
    %v3607 = vunpack.c.l.s4 1983009808
    %v3608 = vunpack.c.0.s8 %v3607
    %v3609 = vlaneseq
    %v3610 = vshrl.u32 %v3609, 7
    %v3611 = vsub.s32 %v3608, %v3610
    %v3612 = vrot.slane %v3598, %v3611
    %v3613 = vcombine.low %v3605, %v3612
    %v3614 = vcombine.low %v3585, %v3586
    %v3615 = vcombine.low %v3587, %v3588
    %v3617 = vunpack.c.l.s4 1983009808
    %v3618 = vunpack.c.0.s8 %v3617
    %v3619 = vlaneseq
    %v3620 = vshrl.u32 %v3619, 7
    %v3621 = vsub.s32 %v3618, %v3620
    %v3622 = vrot.slane %v3614, %v3621
    %v3624 = vunpack.c.l.s4 1983009808
    %v3625 = vunpack.c.0.s8 %v3624
    %v3626 = vlaneseq
    %v3627 = vshrl.u32 %v3626, 7
    %v3628 = vsub.s32 %v3625, %v3627
    %v3629 = vrot.slane %v3615, %v3628
    %v3630 = vcombine.low %v3622, %v3629
    %v3633 = vsel %vm126, %v3613, 0.0
    %3634 = vadd.xlane.f32.xlu0 %v3633
    %v3635 = vpop.xlane.xlu0 %3634
    %v3636 = vsel %vm126, %v3630, 0.0
    %3637 = vadd.xlane.f32.xlu0 %v3636
    %v3638 = vpop.xlane.xlu0 %3637
    %v3639 = vmul.f32 %v3635, %v2887
    %v3640 = vmul.f32 %v3638, %v2887
    %v3641 = vadd.f32 %v3639, 1e-05
    %v3642 = vadd.f32 %v3640, 1e-05
    %v3643 = vrsqrt.pop %v3641
    %v3644 = vrsqrt.pop %v3642
    %v3648 = vunpack.c.l.s4 269488144
    %v3649 = vunpack.c.0.s8 %v3648
    %v3650 = vlaneseq
    %v3651 = vshrl.u32 %v3650, 7
    %v3652 = vsub.s32 %v3649, %v3651
    %v3653 = vrot.slane %v3643, %v3652
    %v3655 = vunpack.c.l.s4 842150450
    %v3656 = vunpack.c.0.s8 %v3655
    %v3657 = vlaneseq
    %v3658 = vshrl.u32 %v3657, 7
    %v3659 = vsub.s32 %v3656, %v3658
    %v3660 = vrot.slane %v3643, %v3659
    %v3662 = vunpack.c.l.s4 1414812756
    %v3663 = vunpack.c.0.s8 %v3662
    %v3664 = vlaneseq
    %v3665 = vshrl.u32 %v3664, 7
    %v3666 = vsub.s32 %v3663, %v3665
    %v3667 = vrot.slane %v3643, %v3666
    %v3669 = vunpack.c.l.s4 1987475062
    %v3670 = vunpack.c.0.s8 %v3669
    %v3671 = vlaneseq
    %v3672 = vshrl.u32 %v3671, 7
    %v3673 = vsub.s32 %v3670, %v3672
    %v3674 = vrot.slane %v3643, %v3673
    %v3676 = vunpack.c.l.s4 269488144
    %v3677 = vunpack.c.0.s8 %v3676
    %v3678 = vlaneseq
    %v3679 = vshrl.u32 %v3678, 7
    %v3680 = vsub.s32 %v3677, %v3679
    %v3681 = vrot.slane %v3644, %v3680
    %v3683 = vunpack.c.l.s4 842150450
    %v3684 = vunpack.c.0.s8 %v3683
    %v3685 = vlaneseq
    %v3686 = vshrl.u32 %v3685, 7
    %v3687 = vsub.s32 %v3684, %v3686
    %v3688 = vrot.slane %v3644, %v3687
    %v3690 = vunpack.c.l.s4 1414812756
    %v3691 = vunpack.c.0.s8 %v3690
    %v3692 = vlaneseq
    %v3693 = vshrl.u32 %v3692, 7
    %v3694 = vsub.s32 %v3691, %v3693
    %v3695 = vrot.slane %v3644, %v3694
    %v3697 = vunpack.c.l.s4 1987475062
    %v3698 = vunpack.c.0.s8 %v3697
    %v3699 = vlaneseq
    %v3700 = vshrl.u32 %v3699, 7
    %v3701 = vsub.s32 %v3698, %v3700
    %v3702 = vrot.slane %v3644, %v3701
    %v3711 = vmul.f32 %v3573, %v3653
    %v3712 = vmul.f32 %v3574, %v3660
    %v3713 = vmul.f32 %v3575, %v3667
    %v3714 = vmul.f32 %v3576, %v3674
    %v3715 = vmul.f32 %v3577, %v3681
    %v3716 = vmul.f32 %v3578, %v3688
    %v3717 = vmul.f32 %v3579, %v3695
    %v3718 = vmul.f32 %v3580, %v3702
    %v3720 = vlaneseq
    %v3721 = vshrl.u32 %v3720, 7
    %v3722 = vsub.s32 0, %v3721
    %v3723 = vrot.slane %v3453, %v3722
    %v3724 = vcombine.high %v3723, %v3723
    %v3726 = vunpack.c.l.s4 1983009808
    %v3727 = vunpack.c.0.s8 %v3726
    %v3728 = vlaneseq
    %v3729 = vshrl.u32 %v3728, 7
    %v3730 = vsub.s32 %v3727, %v3729
    %v3731 = vrot.slane %v3723, %v3730
    %v3733 = vunpack.c.l.s4 1983009808
    %v3734 = vunpack.c.0.s8 %v3733
    %v3735 = vlaneseq
    %v3736 = vshrl.u32 %v3735, 7
    %v3737 = vsub.s32 %v3734, %v3736
    %v3738 = vrot.slane %v3724, %v3737
    %v3739 = vcombine.high %v3731, %v3731
    %v3740 = vcombine.high %v3738, %v3738
    %v3745 = vmul.f32 %v3711, %v3731
    %v3746 = vmul.f32 %v3712, %v3739
    %v3747 = vmul.f32 %v3713, %v3738
    %v3748 = vmul.f32 %v3714, %v3740
    %v3749 = vmul.f32 %v3715, %v3731
    %v3750 = vmul.f32 %v3716, %v3739
    %v3751 = vmul.f32 %v3717, %v3738
    %v3752 = vmul.f32 %v3718, %v3740
    %v3754 = vlaneseq
    %v3755 = vshrl.u32 %v3754, 7
    %v3756 = vsub.s32 0, %v3755
    %v3757 = vrot.slane %v3454, %v3756
    %v3758 = vcombine.high %v3757, %v3757
    %v3760 = vunpack.c.l.s4 1983009808
    %v3761 = vunpack.c.0.s8 %v3760
    %v3762 = vlaneseq
    %v3763 = vshrl.u32 %v3762, 7
    %v3764 = vsub.s32 %v3761, %v3763
    %v3765 = vrot.slane %v3757, %v3764
    %v3767 = vunpack.c.l.s4 1983009808
    %v3768 = vunpack.c.0.s8 %v3767
    %v3769 = vlaneseq
    %v3770 = vshrl.u32 %v3769, 7
    %v3771 = vsub.s32 %v3768, %v3770
    %v3772 = vrot.slane %v3758, %v3771
    %v3773 = vcombine.high %v3765, %v3765
    %v3774 = vcombine.high %v3772, %v3772
    %v3779 = vadd.f32 %v3745, %v3765
    %v3780 = vadd.f32 %v3746, %v3773
    %v3781 = vadd.f32 %v3747, %v3772
    %v3782 = vadd.f32 %v3748, %v3774
    %v3783 = vadd.f32 %v3749, %v3765
    %v3784 = vadd.f32 %v3750, %v3773
    %v3785 = vadd.f32 %v3751, %v3772
    %v3786 = vadd.f32 %v3752, %v3774
    %s3787 = scalar_lea.vmem %s1, 32
    %v3788 = vld [vmem:[%s3787] sm:$0xff]
    %v3789 = vld [vmem:[%s3787 + $0x8] sm:$0xff]
    %v3790 = vld [vmem:[%s3787 + $0x10] sm:$0xff]
    %v3791 = vld [vmem:[%s3787 + $0x18] sm:$0xff]
    %s3792 = scalar_lea.vmem %s2, 1
    %v3793 = vld [vmem:[%s3792] sm:$0x1]
    %v3795 = vlaneseq
    %v3796 = vshrl.u32 %v3795, 7
    %v3797 = vsub.s32 0, %v3796
    %v3798 = vrot.slane %v3793, %v3797
    %v3808 = vcombine.low %v3779, %v3780
    %v3809 = vcombine.low %v3781, %v3782
    %v3811 = vunpack.c.l.s4 1983009808
    %v3812 = vunpack.c.0.s8 %v3811
    %v3813 = vlaneseq
    %v3814 = vshrl.u32 %v3813, 7
    %v3815 = vsub.s32 %v3812, %v3814
    %v3816 = vrot.slane %v3808, %v3815
    %v3818 = vunpack.c.l.s4 1983009808
    %v3819 = vunpack.c.0.s8 %v3818
    %v3820 = vlaneseq
    %v3821 = vshrl.u32 %v3820, 7
    %v3822 = vsub.s32 %v3819, %v3821
    %v3823 = vrot.slane %v3809, %v3822
    %v3824 = vcombine.low %v3816, %v3823
    %v3825 = vcombine.low %v3783, %v3784
    %v3826 = vcombine.low %v3785, %v3786
    %v3828 = vunpack.c.l.s4 1983009808
    %v3829 = vunpack.c.0.s8 %v3828
    %v3830 = vlaneseq
    %v3831 = vshrl.u32 %v3830, 7
    %v3832 = vsub.s32 %v3829, %v3831
    %v3833 = vrot.slane %v3825, %v3832
    %v3835 = vunpack.c.l.s4 1983009808
    %v3836 = vunpack.c.0.s8 %v3835
    %v3837 = vlaneseq
    %v3838 = vshrl.u32 %v3837, 7
    %v3839 = vsub.s32 %v3836, %v3838
    %v3840 = vrot.slane %v3826, %v3839
    %v3841 = vcombine.low %v3833, %v3840
    %v3842 = vsel %vm126, %v3824, 0
    %v3844 = vsel %vm126, %v3841, 0
    %3846 = vmatprep.subr.mxu0 0.0
    %3847 = vmatpush1.msra.mxu0 0.0
    %3848 = vmatprep.subr.mxu0 0.0
    %3849 = vmatpush1.msra.mxu0 0.0
    %3850 = vmatprep.subr.mxu0 0.0
    %3851 = vmatpush1.msra.mxu0 0.0
    %3852 = vmatprep.subr.mxu0 0.0
    %3853 = vmatpush1.msra.mxu0 0.0
    %3854 = vmatprep.subr.mxu0 0.0
    %3855 = vmatpush1.msra.mxu0 0.0
    %3856 = vmatprep.subr.mxu0 0.0
    %3857 = vmatpush1.msra.mxu0 0.0
    %3858 = vmatprep.subr.mxu0 0.0
    %3859 = vmatpush1.msra.mxu0 0.0
    %3860 = vmatprep.subr.mxu0 0.0
    %3861 = vmatpush1.msra.mxu0 0.0
    %3862 = vmatprep.subr.mxu0 0.0
    %3863 = vmatpush1.msra.mxu0 0.0
    %3864 = vmatprep.subr.mxu0 0.0
    %3865 = vmatpush1.msra.mxu0 0.0
    %3866 = vmatprep.subr.mxu0 0.0
    %3867 = vmatpush1.msra.mxu0 0.0
    %3868 = vmatprep.subr.mxu0 0.0
    %3869 = vmatpush1.msra.mxu0 0.0
    %3870 = vmatprep.subr.mxu0 0.0
    %3871 = vmatpush1.msra.mxu0 %v3791
    %3872 = vmatprep.subr.mxu0 0.0
    %3873 = vmatpush1.msra.mxu0 %v3790
    %3874 = vmatprep.subr.mxu0 0.0
    %3875 = vmatpush1.msra.mxu0 %v3789
    %3876 = vmatprep.subr.mxu0 0.0
    %3877 = vmatpush1.msra.mxu0 %v3788
    %3878 = vmatprep.subr.mxu0 0.0
    %3879 = vmatpush2.msra.mxu0 0.0
    %3880 = vmatprep.subr.mxu0 0.0
    %3881 = vmatpush2.msra.mxu0 0.0
    %3882 = vmatprep.subr.mxu0 0.0
    %3883 = vmatpush2.msra.mxu0 0.0
    %3884 = vmatprep.subr.mxu0 0.0
    %3885 = vmatpush2.msra.mxu0 0.0
    %3886 = vmatprep.subr.mxu0 0.0
    %3887 = vmatpush2.msra.mxu0 0.0
    %3888 = vmatprep.subr.mxu0 0.0
    %3889 = vmatpush2.msra.mxu0 0.0
    %3890 = vmatprep.subr.mxu0 0.0
    %3891 = vmatpush2.msra.mxu0 0.0
    %3892 = vmatprep.subr.mxu0 0.0
    %3893 = vmatpush2.msra.mxu0 0.0
    %3894 = vmatprep.subr.mxu0 0.0
    %3895 = vmatpush2.msra.mxu0 0.0
    %3896 = vmatprep.subr.mxu0 0.0
    %3897 = vmatpush2.msra.mxu0 0.0
    %3898 = vmatprep.subr.mxu0 0.0
    %3899 = vmatpush2.msra.mxu0 0.0
    %3900 = vmatprep.subr.mxu0 0.0
    %3901 = vmatpush2.msra.mxu0 0.0
    %3902 = vmatprep.subr.mxu0 0.0
    %3903 = vmatpush2.msra.mxu0 0.0
    %3904 = vmatprep.subr.mxu0 0.0
    %3905 = vmatpush2.msra.mxu0 0.0
    %3906 = vmatprep.subr.mxu0 0.0
    %3907 = vmatpush2.msra.mxu0 0.0
    %3908 = vmatprep.subr.mxu0 0.0
    %3909 = vmatpush2.msra.mxu0 0.0
    %3910 = vmatprep.mubr.f32.mxu0 0.0
    %3911 = vmatmul.mubr.f32.gmra.mxu0 %v3842
    %v3912 = vpop.f32.mrf.mxu0
    %v3913 = vadd.f32 %v3798, %v3912
    %v3914 = vpop.f32.mrf.mxu0
    %3915 = vmatprep.mubr.f32.mxu0 0.0
    %3916 = vmatmul.mubr.f32.gmra.mxu0 %v3844
    %v3917 = vpop.f32.mrf.mxu0
    %v3918 = vadd.f32 %v3798, %v3917
    %v3919 = vpop.f32.mrf.mxu0
    %3920 = vdwg.mxu0
    %v3921 = vmul.f32 %v3913, 0.35355338
    %v3922 = vmul.f32 %v3918, 0.35355338
    %3925 = vrot.lane.b32.xlu0 %v3921, 120
    %v3926 = vpop.permute.xlu0 %3925
    %3927 = vrot.lane.b32.xlu0 %v3922, 120
    %v3928 = vpop.permute.xlu0 %3927
    %3931 = vrot.lane.b32.xlu0 %v3921, 112
    %v3932 = vpop.permute.xlu0 %3931
    %3933 = vrot.lane.b32.xlu0 %v3922, 112
    %v3934 = vpop.permute.xlu0 %3933
    %3937 = vrot.lane.b32.xlu0 %v3921, 104
    %v3938 = vpop.permute.xlu0 %3937
    %3939 = vrot.lane.b32.xlu0 %v3922, 104
    %v3940 = vpop.permute.xlu0 %3939
    %v3943 = vcombine.low %v3921, %v3932
    %v3944 = vcombine.high %v3921, %v3932
    %v3946 = vunpack.c.l.s4 1983009808
    %v3947 = vunpack.c.0.s8 %v3946
    %v3948 = vlaneseq
    %v3949 = vshrl.u32 %v3948, 7
    %v3950 = vsub.s32 %v3947, %v3949
    %v3951 = vrot.slane %v3943, %v3950
    %v3953 = vunpack.c.l.s4 1983009808
    %v3954 = vunpack.c.0.s8 %v3953
    %v3955 = vlaneseq
    %v3956 = vshrl.u32 %v3955, 7
    %v3957 = vsub.s32 %v3954, %v3956
    %v3958 = vrot.slane %v3944, %v3957
    %v3959 = vcombine.low %v3926, %v3938
    %v3960 = vcombine.high %v3926, %v3938
    %v3962 = vunpack.c.l.s4 1983009808
    %v3963 = vunpack.c.0.s8 %v3962
    %v3964 = vlaneseq
    %v3965 = vshrl.u32 %v3964, 7
    %v3966 = vsub.s32 %v3963, %v3965
    %v3967 = vrot.slane %v3959, %v3966
    %v3969 = vunpack.c.l.s4 1983009808
    %v3970 = vunpack.c.0.s8 %v3969
    %v3971 = vlaneseq
    %v3972 = vshrl.u32 %v3971, 7
    %v3973 = vsub.s32 %v3970, %v3972
    %v3974 = vrot.slane %v3960, %v3973
    %v3975 = vcombine.low %v3951, %v3967
    %v3976 = vcombine.high %v3951, %v3967
    %v3978 = vunpack.c.l.s4 1934713408
    %v3979 = vunpack.c.0.s8 %v3978
    %v3980 = vlaneseq
    %v3981 = vshrl.u32 %v3980, 7
    %v3982 = vsub.s32 %v3979, %v3981
    %v3983 = vrot.slane %v3975, %v3982
    %v3985 = vunpack.c.l.s4 1934713408
    %v3986 = vunpack.c.0.s8 %v3985
    %v3987 = vlaneseq
    %v3988 = vshrl.u32 %v3987, 7
    %v3989 = vsub.s32 %v3986, %v3988
    %v3990 = vrot.slane %v3976, %v3989
    %v3991 = vcombine.low %v3958, %v3974
    %v3992 = vcombine.high %v3958, %v3974
    %v3994 = vunpack.c.l.s4 1934713408
    %v3995 = vunpack.c.0.s8 %v3994
    %v3996 = vlaneseq
    %v3997 = vshrl.u32 %v3996, 7
    %v3998 = vsub.s32 %v3995, %v3997
    %v3999 = vrot.slane %v3991, %v3998
    %v4001 = vunpack.c.l.s4 1934713408
    %v4002 = vunpack.c.0.s8 %v4001
    %v4003 = vlaneseq
    %v4004 = vshrl.u32 %v4003, 7
    %v4005 = vsub.s32 %v4002, %v4004
    %v4006 = vrot.slane %v3992, %v4005
    %v4007 = vcombine.high %v3983, 0.0
    %v4008 = vcombine.high %v3990, 0.0
    %v4009 = vcombine.high %v3999, 0.0
    %v4010 = vcombine.high %v4006, 0.0
    %v4011 = vcombine.low %v3922, %v3934
    %v4012 = vcombine.high %v3922, %v3934
    %v4014 = vunpack.c.l.s4 1983009808
    %v4015 = vunpack.c.0.s8 %v4014
    %v4016 = vlaneseq
    %v4017 = vshrl.u32 %v4016, 7
    %v4018 = vsub.s32 %v4015, %v4017
    %v4019 = vrot.slane %v4011, %v4018
    %v4021 = vunpack.c.l.s4 1983009808
    %v4022 = vunpack.c.0.s8 %v4021
    %v4023 = vlaneseq
    %v4024 = vshrl.u32 %v4023, 7
    %v4025 = vsub.s32 %v4022, %v4024
    %v4026 = vrot.slane %v4012, %v4025
    %v4027 = vcombine.low %v3928, %v3940
    %v4028 = vcombine.high %v3928, %v3940
    %v4030 = vunpack.c.l.s4 1983009808
    %v4031 = vunpack.c.0.s8 %v4030
    %v4032 = vlaneseq
    %v4033 = vshrl.u32 %v4032, 7
    %v4034 = vsub.s32 %v4031, %v4033
    %v4035 = vrot.slane %v4027, %v4034
    %v4037 = vunpack.c.l.s4 1983009808
    %v4038 = vunpack.c.0.s8 %v4037
    %v4039 = vlaneseq
    %v4040 = vshrl.u32 %v4039, 7
    %v4041 = vsub.s32 %v4038, %v4040
    %v4042 = vrot.slane %v4028, %v4041
    %v4043 = vcombine.low %v4019, %v4035
    %v4044 = vcombine.high %v4019, %v4035
    %v4046 = vunpack.c.l.s4 1934713408
    %v4047 = vunpack.c.0.s8 %v4046
    %v4048 = vlaneseq
    %v4049 = vshrl.u32 %v4048, 7
    %v4050 = vsub.s32 %v4047, %v4049
    %v4051 = vrot.slane %v4043, %v4050
    %v4053 = vunpack.c.l.s4 1934713408
    %v4054 = vunpack.c.0.s8 %v4053
    %v4055 = vlaneseq
    %v4056 = vshrl.u32 %v4055, 7
    %v4057 = vsub.s32 %v4054, %v4056
    %v4058 = vrot.slane %v4044, %v4057
    %v4059 = vcombine.low %v4026, %v4042
    %v4060 = vcombine.high %v4026, %v4042
    %v4062 = vunpack.c.l.s4 1934713408
    %v4063 = vunpack.c.0.s8 %v4062
    %v4064 = vlaneseq
    %v4065 = vshrl.u32 %v4064, 7
    %v4066 = vsub.s32 %v4063, %v4065
    %v4067 = vrot.slane %v4059, %v4066
    %v4069 = vunpack.c.l.s4 1934713408
    %v4070 = vunpack.c.0.s8 %v4069
    %v4071 = vlaneseq
    %v4072 = vshrl.u32 %v4071, 7
    %v4073 = vsub.s32 %v4070, %v4072
    %v4074 = vrot.slane %v4060, %v4073
    %v4075 = vcombine.high %v4051, 0.0
    %v4076 = vcombine.high %v4058, 0.0
    %v4077 = vcombine.high %v4067, 0.0
    %v4078 = vcombine.high %v4074, 0.0
    %v4079 = vcombine.low %v3983, %v3999
    %v4081 = vunpack.c.l.s4 1983009808
    %v4082 = vunpack.c.0.s8 %v4081
    %v4083 = vlaneseq
    %v4084 = vshrl.u32 %v4083, 7
    %v4085 = vsub.s32 %v4082, %v4084
    %v4086 = vrot.slane %v4079, %v4085
    %v4087 = vcombine.low %v3990, %v4006
    %v4089 = vunpack.c.l.s4 1983009808
    %v4090 = vunpack.c.0.s8 %v4089
    %v4091 = vlaneseq
    %v4092 = vshrl.u32 %v4091, 7
    %v4093 = vsub.s32 %v4090, %v4092
    %v4094 = vrot.slane %v4087, %v4093
    %v4095 = vcombine.low %v4051, %v4067
    %v4097 = vunpack.c.l.s4 1983009808
    %v4098 = vunpack.c.0.s8 %v4097
    %v4099 = vlaneseq
    %v4100 = vshrl.u32 %v4099, 7
    %v4101 = vsub.s32 %v4098, %v4100
    %v4102 = vrot.slane %v4095, %v4101
    %v4103 = vcombine.low %v4058, %v4074
    %v4105 = vunpack.c.l.s4 1983009808
    %v4106 = vunpack.c.0.s8 %v4105
    %v4107 = vlaneseq
    %v4108 = vshrl.u32 %v4107, 7
    %v4109 = vsub.s32 %v4106, %v4108
    %v4110 = vrot.slane %v4103, %v4109
    %v4111 = vcombine.low %v4086, %v4094
    %v4112 = vcombine.high %v4086, %v4094
    %v4114 = vunpack.c.l.s4 1934713408
    %v4115 = vunpack.c.0.s8 %v4114
    %v4116 = vlaneseq
    %v4117 = vshrl.u32 %v4116, 7
    %v4118 = vsub.s32 %v4115, %v4117
    %v4119 = vrot.slane %v4111, %v4118
    %v4121 = vunpack.c.l.s4 1934713408
    %v4122 = vunpack.c.0.s8 %v4121
    %v4123 = vlaneseq
    %v4124 = vshrl.u32 %v4123, 7
    %v4125 = vsub.s32 %v4122, %v4124
    %v4126 = vrot.slane %v4112, %v4125
    %v4127 = vcombine.low %v4102, %v4110
    %v4128 = vcombine.high %v4102, %v4110
    %v4130 = vunpack.c.l.s4 1934713408
    %v4131 = vunpack.c.0.s8 %v4130
    %v4132 = vlaneseq
    %v4133 = vshrl.u32 %v4132, 7
    %v4134 = vsub.s32 %v4131, %v4133
    %v4135 = vrot.slane %v4127, %v4134
    %v4137 = vunpack.c.l.s4 1934713408
    %v4138 = vunpack.c.0.s8 %v4137
    %v4139 = vlaneseq
    %v4140 = vshrl.u32 %v4139, 7
    %v4141 = vsub.s32 %v4138, %v4140
    %v4142 = vrot.slane %v4128, %v4141
    %v4143 = vcombine.low %v4119, %v4135
    %v4144 = vcombine.high %v4119, %v4135
    %v4145 = vcombine.low %v4126, %v4142
    %v4146 = vcombine.high %v4126, %v4142
    %v4147 = vcombine.low %v4007, %v4009
    %v4149 = vunpack.c.l.s4 1983009808
    %v4150 = vunpack.c.0.s8 %v4149
    %v4151 = vlaneseq
    %v4152 = vshrl.u32 %v4151, 7
    %v4153 = vsub.s32 %v4150, %v4152
    %v4154 = vrot.slane %v4147, %v4153
    %v4155 = vcombine.low %v4008, %v4010
    %v4157 = vunpack.c.l.s4 1983009808
    %v4158 = vunpack.c.0.s8 %v4157
    %v4159 = vlaneseq
    %v4160 = vshrl.u32 %v4159, 7
    %v4161 = vsub.s32 %v4158, %v4160
    %v4162 = vrot.slane %v4155, %v4161
    %v4163 = vcombine.low %v4075, %v4077
    %v4165 = vunpack.c.l.s4 1983009808
    %v4166 = vunpack.c.0.s8 %v4165
    %v4167 = vlaneseq
    %v4168 = vshrl.u32 %v4167, 7
    %v4169 = vsub.s32 %v4166, %v4168
    %v4170 = vrot.slane %v4163, %v4169
    %v4171 = vcombine.low %v4076, %v4078
    %v4173 = vunpack.c.l.s4 1983009808
    %v4174 = vunpack.c.0.s8 %v4173
    %v4175 = vlaneseq
    %v4176 = vshrl.u32 %v4175, 7
    %v4177 = vsub.s32 %v4174, %v4176
    %v4178 = vrot.slane %v4171, %v4177
    %v4179 = vcombine.low %v4154, %v4162
    %v4180 = vcombine.high %v4154, %v4162
    %v4182 = vunpack.c.l.s4 1934713408
    %v4183 = vunpack.c.0.s8 %v4182
    %v4184 = vlaneseq
    %v4185 = vshrl.u32 %v4184, 7
    %v4186 = vsub.s32 %v4183, %v4185
    %v4187 = vrot.slane %v4179, %v4186
    %v4189 = vunpack.c.l.s4 1934713408
    %v4190 = vunpack.c.0.s8 %v4189
    %v4191 = vlaneseq
    %v4192 = vshrl.u32 %v4191, 7
    %v4193 = vsub.s32 %v4190, %v4192
    %v4194 = vrot.slane %v4180, %v4193
    %v4195 = vcombine.low %v4170, %v4178
    %v4196 = vcombine.high %v4170, %v4178
    %v4198 = vunpack.c.l.s4 1934713408
    %v4199 = vunpack.c.0.s8 %v4198
    %v4200 = vlaneseq
    %v4201 = vshrl.u32 %v4200, 7
    %v4202 = vsub.s32 %v4199, %v4201
    %v4203 = vrot.slane %v4195, %v4202
    %v4205 = vunpack.c.l.s4 1934713408
    %v4206 = vunpack.c.0.s8 %v4205
    %v4207 = vlaneseq
    %v4208 = vshrl.u32 %v4207, 7
    %v4209 = vsub.s32 %v4206, %v4208
    %v4210 = vrot.slane %v4196, %v4209
    %v4211 = vcombine.low %v4187, %v4203
    %v4212 = vcombine.high %v4187, %v4203
    %v4213 = vcombine.low %v4194, %v4210
    %v4214 = vcombine.high %v4194, %v4210
    %4217 = vrot.lane.b32.xlu0 %v3913, 120
    %v4218 = vpop.permute.xlu0 %4217
    %4219 = vrot.lane.b32.xlu0 %v3918, 120
    %v4220 = vpop.permute.xlu0 %4219
    %4221 = vrot.lane.b32.xlu0 %v3913, 112
    %v4222 = vpop.permute.xlu0 %4221
    %4223 = vrot.lane.b32.xlu0 %v3918, 112
    %v4224 = vpop.permute.xlu0 %4223
    %4225 = vrot.lane.b32.xlu0 %v3913, 104
    %v4226 = vpop.permute.xlu0 %4225
    %4227 = vrot.lane.b32.xlu0 %v3918, 104
    %v4228 = vpop.permute.xlu0 %4227
    %4229 = vrot.lane.b32.xlu0 %v3913, 96
    %v4230 = vpop.permute.xlu0 %4229
    %4231 = vrot.lane.b32.xlu0 %v3918, 96
    %v4232 = vpop.permute.xlu0 %4231
    %4233 = vrot.lane.b32.xlu0 %v4218, 96
    %v4234 = vpop.permute.xlu0 %4233
    %4235 = vrot.lane.b32.xlu0 %v4220, 96
    %v4236 = vpop.permute.xlu0 %4235
    %4237 = vrot.lane.b32.xlu0 %v4222, 96
    %v4238 = vpop.permute.xlu0 %4237
    %4239 = vrot.lane.b32.xlu0 %v4224, 96
    %v4240 = vpop.permute.xlu0 %4239
    %4241 = vrot.lane.b32.xlu0 %v4226, 96
    %v4242 = vpop.permute.xlu0 %4241
    %4243 = vrot.lane.b32.xlu0 %v4228, 96
    %v4244 = vpop.permute.xlu0 %4243
    %v4253 = vcombine.low %v4230, %v4238
    %v4254 = vcombine.high %v4230, %v4238
    %v4256 = vunpack.c.l.s4 1983009808
    %v4257 = vunpack.c.0.s8 %v4256
    %v4258 = vlaneseq
    %v4259 = vshrl.u32 %v4258, 7
    %v4260 = vsub.s32 %v4257, %v4259
    %v4261 = vrot.slane %v4253, %v4260
    %v4263 = vunpack.c.l.s4 1983009808
    %v4264 = vunpack.c.0.s8 %v4263
    %v4265 = vlaneseq
    %v4266 = vshrl.u32 %v4265, 7
    %v4267 = vsub.s32 %v4264, %v4266
    %v4268 = vrot.slane %v4254, %v4267
    %v4269 = vcombine.low %v4234, %v4242
    %v4270 = vcombine.high %v4234, %v4242
    %v4272 = vunpack.c.l.s4 1983009808
    %v4273 = vunpack.c.0.s8 %v4272
    %v4274 = vlaneseq
    %v4275 = vshrl.u32 %v4274, 7
    %v4276 = vsub.s32 %v4273, %v4275
    %v4277 = vrot.slane %v4269, %v4276
    %v4279 = vunpack.c.l.s4 1983009808
    %v4280 = vunpack.c.0.s8 %v4279
    %v4281 = vlaneseq
    %v4282 = vshrl.u32 %v4281, 7
    %v4283 = vsub.s32 %v4280, %v4282
    %v4284 = vrot.slane %v4270, %v4283
    %v4285 = vcombine.low %v4261, %v4277
    %v4286 = vcombine.high %v4261, %v4277
    %v4288 = vunpack.c.l.s4 1934713408
    %v4289 = vunpack.c.0.s8 %v4288
    %v4290 = vlaneseq
    %v4291 = vshrl.u32 %v4290, 7
    %v4292 = vsub.s32 %v4289, %v4291
    %v4293 = vrot.slane %v4285, %v4292
    %v4295 = vunpack.c.l.s4 1934713408
    %v4296 = vunpack.c.0.s8 %v4295
    %v4297 = vlaneseq
    %v4298 = vshrl.u32 %v4297, 7
    %v4299 = vsub.s32 %v4296, %v4298
    %v4300 = vrot.slane %v4286, %v4299
    %v4301 = vcombine.low %v4268, %v4284
    %v4302 = vcombine.high %v4268, %v4284
    %v4304 = vunpack.c.l.s4 1934713408
    %v4305 = vunpack.c.0.s8 %v4304
    %v4306 = vlaneseq
    %v4307 = vshrl.u32 %v4306, 7
    %v4308 = vsub.s32 %v4305, %v4307
    %v4309 = vrot.slane %v4301, %v4308
    %v4311 = vunpack.c.l.s4 1934713408
    %v4312 = vunpack.c.0.s8 %v4311
    %v4313 = vlaneseq
    %v4314 = vshrl.u32 %v4313, 7
    %v4315 = vsub.s32 %v4312, %v4314
    %v4316 = vrot.slane %v4302, %v4315
    %v4317 = vcombine.high %v4293, 0.0
    %v4318 = vcombine.high %v4300, 0.0
    %v4319 = vcombine.high %v4309, 0.0
    %v4320 = vcombine.high %v4316, 0.0
    %v4321 = vcombine.low %v4232, %v4240
    %v4322 = vcombine.high %v4232, %v4240
    %v4324 = vunpack.c.l.s4 1983009808
    %v4325 = vunpack.c.0.s8 %v4324
    %v4326 = vlaneseq
    %v4327 = vshrl.u32 %v4326, 7
    %v4328 = vsub.s32 %v4325, %v4327
    %v4329 = vrot.slane %v4321, %v4328
    %v4331 = vunpack.c.l.s4 1983009808
    %v4332 = vunpack.c.0.s8 %v4331
    %v4333 = vlaneseq
    %v4334 = vshrl.u32 %v4333, 7
    %v4335 = vsub.s32 %v4332, %v4334
    %v4336 = vrot.slane %v4322, %v4335
    %v4337 = vcombine.low %v4236, %v4244
    %v4338 = vcombine.high %v4236, %v4244
    %v4340 = vunpack.c.l.s4 1983009808
    %v4341 = vunpack.c.0.s8 %v4340
    %v4342 = vlaneseq
    %v4343 = vshrl.u32 %v4342, 7
    %v4344 = vsub.s32 %v4341, %v4343
    %v4345 = vrot.slane %v4337, %v4344
    %v4347 = vunpack.c.l.s4 1983009808
    %v4348 = vunpack.c.0.s8 %v4347
    %v4349 = vlaneseq
    %v4350 = vshrl.u32 %v4349, 7
    %v4351 = vsub.s32 %v4348, %v4350
    %v4352 = vrot.slane %v4338, %v4351
    %v4353 = vcombine.low %v4329, %v4345
    %v4354 = vcombine.high %v4329, %v4345
    %v4356 = vunpack.c.l.s4 1934713408
    %v4357 = vunpack.c.0.s8 %v4356
    %v4358 = vlaneseq
    %v4359 = vshrl.u32 %v4358, 7
    %v4360 = vsub.s32 %v4357, %v4359
    %v4361 = vrot.slane %v4353, %v4360
    %v4363 = vunpack.c.l.s4 1934713408
    %v4364 = vunpack.c.0.s8 %v4363
    %v4365 = vlaneseq
    %v4366 = vshrl.u32 %v4365, 7
    %v4367 = vsub.s32 %v4364, %v4366
    %v4368 = vrot.slane %v4354, %v4367
    %v4369 = vcombine.low %v4336, %v4352
    %v4370 = vcombine.high %v4336, %v4352
    %v4372 = vunpack.c.l.s4 1934713408
    %v4373 = vunpack.c.0.s8 %v4372
    %v4374 = vlaneseq
    %v4375 = vshrl.u32 %v4374, 7
    %v4376 = vsub.s32 %v4373, %v4375
    %v4377 = vrot.slane %v4369, %v4376
    %v4379 = vunpack.c.l.s4 1934713408
    %v4380 = vunpack.c.0.s8 %v4379
    %v4381 = vlaneseq
    %v4382 = vshrl.u32 %v4381, 7
    %v4383 = vsub.s32 %v4380, %v4382
    %v4384 = vrot.slane %v4370, %v4383
    %v4385 = vcombine.high %v4361, 0.0
    %v4386 = vcombine.high %v4368, 0.0
    %v4387 = vcombine.high %v4377, 0.0
    %v4388 = vcombine.high %v4384, 0.0
    %v4389 = vcombine.low %v4293, %v4309
    %v4391 = vunpack.c.l.s4 1983009808
    %v4392 = vunpack.c.0.s8 %v4391
    %v4393 = vlaneseq
    %v4394 = vshrl.u32 %v4393, 7
    %v4395 = vsub.s32 %v4392, %v4394
    %v4396 = vrot.slane %v4389, %v4395
    %v4397 = vcombine.low %v4300, %v4316
    %v4399 = vunpack.c.l.s4 1983009808
    %v4400 = vunpack.c.0.s8 %v4399
    %v4401 = vlaneseq
    %v4402 = vshrl.u32 %v4401, 7
    %v4403 = vsub.s32 %v4400, %v4402
    %v4404 = vrot.slane %v4397, %v4403
    %v4405 = vcombine.low %v4361, %v4377
    %v4407 = vunpack.c.l.s4 1983009808
    %v4408 = vunpack.c.0.s8 %v4407
    %v4409 = vlaneseq
    %v4410 = vshrl.u32 %v4409, 7
    %v4411 = vsub.s32 %v4408, %v4410
    %v4412 = vrot.slane %v4405, %v4411
    %v4413 = vcombine.low %v4368, %v4384
    %v4415 = vunpack.c.l.s4 1983009808
    %v4416 = vunpack.c.0.s8 %v4415
    %v4417 = vlaneseq
    %v4418 = vshrl.u32 %v4417, 7
    %v4419 = vsub.s32 %v4416, %v4418
    %v4420 = vrot.slane %v4413, %v4419
    %v4421 = vcombine.low %v4396, %v4404
    %v4422 = vcombine.high %v4396, %v4404
    %v4424 = vunpack.c.l.s4 1934713408
    %v4425 = vunpack.c.0.s8 %v4424
    %v4426 = vlaneseq
    %v4427 = vshrl.u32 %v4426, 7
    %v4428 = vsub.s32 %v4425, %v4427
    %v4429 = vrot.slane %v4421, %v4428
    %v4431 = vunpack.c.l.s4 1934713408
    %v4432 = vunpack.c.0.s8 %v4431
    %v4433 = vlaneseq
    %v4434 = vshrl.u32 %v4433, 7
    %v4435 = vsub.s32 %v4432, %v4434
    %v4436 = vrot.slane %v4422, %v4435
    %v4437 = vcombine.low %v4412, %v4420
    %v4438 = vcombine.high %v4412, %v4420
    %v4440 = vunpack.c.l.s4 1934713408
    %v4441 = vunpack.c.0.s8 %v4440
    %v4442 = vlaneseq
    %v4443 = vshrl.u32 %v4442, 7
    %v4444 = vsub.s32 %v4441, %v4443
    %v4445 = vrot.slane %v4437, %v4444
    %v4447 = vunpack.c.l.s4 1934713408
    %v4448 = vunpack.c.0.s8 %v4447
    %v4449 = vlaneseq
    %v4450 = vshrl.u32 %v4449, 7
    %v4451 = vsub.s32 %v4448, %v4450
    %v4452 = vrot.slane %v4438, %v4451
    %v4453 = vcombine.low %v4429, %v4445
    %v4454 = vcombine.high %v4429, %v4445
    %v4455 = vcombine.low %v4436, %v4452
    %v4456 = vcombine.high %v4436, %v4452
    %v4457 = vcombine.low %v4317, %v4319
    %v4459 = vunpack.c.l.s4 1983009808
    %v4460 = vunpack.c.0.s8 %v4459
    %v4461 = vlaneseq
    %v4462 = vshrl.u32 %v4461, 7
    %v4463 = vsub.s32 %v4460, %v4462
    %v4464 = vrot.slane %v4457, %v4463
    %v4465 = vcombine.low %v4318, %v4320
    %v4467 = vunpack.c.l.s4 1983009808
    %v4468 = vunpack.c.0.s8 %v4467
    %v4469 = vlaneseq
    %v4470 = vshrl.u32 %v4469, 7
    %v4471 = vsub.s32 %v4468, %v4470
    %v4472 = vrot.slane %v4465, %v4471
    %v4473 = vcombine.low %v4385, %v4387
    %v4475 = vunpack.c.l.s4 1983009808
    %v4476 = vunpack.c.0.s8 %v4475
    %v4477 = vlaneseq
    %v4478 = vshrl.u32 %v4477, 7
    %v4479 = vsub.s32 %v4476, %v4478
    %v4480 = vrot.slane %v4473, %v4479
    %v4481 = vcombine.low %v4386, %v4388
    %v4483 = vunpack.c.l.s4 1983009808
    %v4484 = vunpack.c.0.s8 %v4483
    %v4485 = vlaneseq
    %v4486 = vshrl.u32 %v4485, 7
    %v4487 = vsub.s32 %v4484, %v4486
    %v4488 = vrot.slane %v4481, %v4487
    %v4489 = vcombine.low %v4464, %v4472
    %v4490 = vcombine.high %v4464, %v4472
    %v4492 = vunpack.c.l.s4 1934713408
    %v4493 = vunpack.c.0.s8 %v4492
    %v4494 = vlaneseq
    %v4495 = vshrl.u32 %v4494, 7
    %v4496 = vsub.s32 %v4493, %v4495
    %v4497 = vrot.slane %v4489, %v4496
    %v4499 = vunpack.c.l.s4 1934713408
    %v4500 = vunpack.c.0.s8 %v4499
    %v4501 = vlaneseq
    %v4502 = vshrl.u32 %v4501, 7
    %v4503 = vsub.s32 %v4500, %v4502
    %v4504 = vrot.slane %v4490, %v4503
    %v4505 = vcombine.low %v4480, %v4488
    %v4506 = vcombine.high %v4480, %v4488
    %v4508 = vunpack.c.l.s4 1934713408
    %v4509 = vunpack.c.0.s8 %v4508
    %v4510 = vlaneseq
    %v4511 = vshrl.u32 %v4510, 7
    %v4512 = vsub.s32 %v4509, %v4511
    %v4513 = vrot.slane %v4505, %v4512
    %v4515 = vunpack.c.l.s4 1934713408
    %v4516 = vunpack.c.0.s8 %v4515
    %v4517 = vlaneseq
    %v4518 = vshrl.u32 %v4517, 7
    %v4519 = vsub.s32 %v4516, %v4518
    %v4520 = vrot.slane %v4506, %v4519
    %v4521 = vcombine.low %v4497, %v4513
    %v4522 = vcombine.high %v4497, %v4513
    %v4523 = vcombine.low %v4504, %v4520
    %v4524 = vcombine.high %v4504, %v4520
    %4525 = vrot.lane.b32.xlu0 %v3913, 64
    %v4526 = vpop.permute.xlu0 %4525
    %4527 = vrot.lane.b32.xlu0 %v3918, 64
    %v4528 = vpop.permute.xlu0 %4527
    %4529 = vrot.lane.b32.xlu0 %v4218, 64
    %v4530 = vpop.permute.xlu0 %4529
    %4531 = vrot.lane.b32.xlu0 %v4220, 64
    %v4532 = vpop.permute.xlu0 %4531
    %4533 = vrot.lane.b32.xlu0 %v4222, 64
    %v4534 = vpop.permute.xlu0 %4533
    %4535 = vrot.lane.b32.xlu0 %v4224, 64
    %v4536 = vpop.permute.xlu0 %4535
    %4537 = vrot.lane.b32.xlu0 %v4226, 64
    %v4538 = vpop.permute.xlu0 %4537
    %4539 = vrot.lane.b32.xlu0 %v4228, 64
    %v4540 = vpop.permute.xlu0 %4539
    %v4549 = vcombine.low %v4526, %v4534
    %v4550 = vcombine.high %v4526, %v4534
    %v4552 = vunpack.c.l.s4 1983009808
    %v4553 = vunpack.c.0.s8 %v4552
    %v4554 = vlaneseq
    %v4555 = vshrl.u32 %v4554, 7
    %v4556 = vsub.s32 %v4553, %v4555
    %v4557 = vrot.slane %v4549, %v4556
    %v4559 = vunpack.c.l.s4 1983009808
    %v4560 = vunpack.c.0.s8 %v4559
    %v4561 = vlaneseq
    %v4562 = vshrl.u32 %v4561, 7
    %v4563 = vsub.s32 %v4560, %v4562
    %v4564 = vrot.slane %v4550, %v4563
    %v4565 = vcombine.low %v4530, %v4538
    %v4566 = vcombine.high %v4530, %v4538
    %v4568 = vunpack.c.l.s4 1983009808
    %v4569 = vunpack.c.0.s8 %v4568
    %v4570 = vlaneseq
    %v4571 = vshrl.u32 %v4570, 7
    %v4572 = vsub.s32 %v4569, %v4571
    %v4573 = vrot.slane %v4565, %v4572
    %v4575 = vunpack.c.l.s4 1983009808
    %v4576 = vunpack.c.0.s8 %v4575
    %v4577 = vlaneseq
    %v4578 = vshrl.u32 %v4577, 7
    %v4579 = vsub.s32 %v4576, %v4578
    %v4580 = vrot.slane %v4566, %v4579
    %v4581 = vcombine.low %v4557, %v4573
    %v4582 = vcombine.high %v4557, %v4573
    %v4584 = vunpack.c.l.s4 1934713408
    %v4585 = vunpack.c.0.s8 %v4584
    %v4586 = vlaneseq
    %v4587 = vshrl.u32 %v4586, 7
    %v4588 = vsub.s32 %v4585, %v4587
    %v4589 = vrot.slane %v4581, %v4588
    %v4591 = vunpack.c.l.s4 1934713408
    %v4592 = vunpack.c.0.s8 %v4591
    %v4593 = vlaneseq
    %v4594 = vshrl.u32 %v4593, 7
    %v4595 = vsub.s32 %v4592, %v4594
    %v4596 = vrot.slane %v4582, %v4595
    %v4597 = vcombine.low %v4564, %v4580
    %v4598 = vcombine.high %v4564, %v4580
    %v4600 = vunpack.c.l.s4 1934713408
    %v4601 = vunpack.c.0.s8 %v4600
    %v4602 = vlaneseq
    %v4603 = vshrl.u32 %v4602, 7
    %v4604 = vsub.s32 %v4601, %v4603
    %v4605 = vrot.slane %v4597, %v4604
    %v4607 = vunpack.c.l.s4 1934713408
    %v4608 = vunpack.c.0.s8 %v4607
    %v4609 = vlaneseq
    %v4610 = vshrl.u32 %v4609, 7
    %v4611 = vsub.s32 %v4608, %v4610
    %v4612 = vrot.slane %v4598, %v4611
    %v4613 = vcombine.high %v4589, 0.0
    %v4614 = vcombine.high %v4596, 0.0
    %v4615 = vcombine.high %v4605, 0.0
    %v4616 = vcombine.high %v4612, 0.0
    %v4617 = vcombine.low %v4528, %v4536
    %v4618 = vcombine.high %v4528, %v4536
    %v4620 = vunpack.c.l.s4 1983009808
    %v4621 = vunpack.c.0.s8 %v4620
    %v4622 = vlaneseq
    %v4623 = vshrl.u32 %v4622, 7
    %v4624 = vsub.s32 %v4621, %v4623
    %v4625 = vrot.slane %v4617, %v4624
    %v4627 = vunpack.c.l.s4 1983009808
    %v4628 = vunpack.c.0.s8 %v4627
    %v4629 = vlaneseq
    %v4630 = vshrl.u32 %v4629, 7
    %v4631 = vsub.s32 %v4628, %v4630
    %v4632 = vrot.slane %v4618, %v4631
    %v4633 = vcombine.low %v4532, %v4540
    %v4634 = vcombine.high %v4532, %v4540
    %v4636 = vunpack.c.l.s4 1983009808
    %v4637 = vunpack.c.0.s8 %v4636
    %v4638 = vlaneseq
    %v4639 = vshrl.u32 %v4638, 7
    %v4640 = vsub.s32 %v4637, %v4639
    %v4641 = vrot.slane %v4633, %v4640
    %v4643 = vunpack.c.l.s4 1983009808
    %v4644 = vunpack.c.0.s8 %v4643
    %v4645 = vlaneseq
    %v4646 = vshrl.u32 %v4645, 7
    %v4647 = vsub.s32 %v4644, %v4646
    %v4648 = vrot.slane %v4634, %v4647
    %v4649 = vcombine.low %v4625, %v4641
    %v4650 = vcombine.high %v4625, %v4641
    %v4652 = vunpack.c.l.s4 1934713408
    %v4653 = vunpack.c.0.s8 %v4652
    %v4654 = vlaneseq
    %v4655 = vshrl.u32 %v4654, 7
    %v4656 = vsub.s32 %v4653, %v4655
    %v4657 = vrot.slane %v4649, %v4656
    %v4659 = vunpack.c.l.s4 1934713408
    %v4660 = vunpack.c.0.s8 %v4659
    %v4661 = vlaneseq
    %v4662 = vshrl.u32 %v4661, 7
    %v4663 = vsub.s32 %v4660, %v4662
    %v4664 = vrot.slane %v4650, %v4663
    %v4665 = vcombine.low %v4632, %v4648
    %v4666 = vcombine.high %v4632, %v4648
    %v4668 = vunpack.c.l.s4 1934713408
    %v4669 = vunpack.c.0.s8 %v4668
    %v4670 = vlaneseq
    %v4671 = vshrl.u32 %v4670, 7
    %v4672 = vsub.s32 %v4669, %v4671
    %v4673 = vrot.slane %v4665, %v4672
    %v4675 = vunpack.c.l.s4 1934713408
    %v4676 = vunpack.c.0.s8 %v4675
    %v4677 = vlaneseq
    %v4678 = vshrl.u32 %v4677, 7
    %v4679 = vsub.s32 %v4676, %v4678
    %v4680 = vrot.slane %v4666, %v4679
    %v4681 = vcombine.high %v4657, 0.0
    %v4682 = vcombine.high %v4664, 0.0
    %v4683 = vcombine.high %v4673, 0.0
    %v4684 = vcombine.high %v4680, 0.0
    %v4685 = vcombine.low %v4589, %v4605
    %v4687 = vunpack.c.l.s4 1983009808
    %v4688 = vunpack.c.0.s8 %v4687
    %v4689 = vlaneseq
    %v4690 = vshrl.u32 %v4689, 7
    %v4691 = vsub.s32 %v4688, %v4690
    %v4692 = vrot.slane %v4685, %v4691
    %v4693 = vcombine.low %v4596, %v4612
    %v4695 = vunpack.c.l.s4 1983009808
    %v4696 = vunpack.c.0.s8 %v4695
    %v4697 = vlaneseq
    %v4698 = vshrl.u32 %v4697, 7
    %v4699 = vsub.s32 %v4696, %v4698
    %v4700 = vrot.slane %v4693, %v4699
    %v4701 = vcombine.low %v4657, %v4673
    %v4703 = vunpack.c.l.s4 1983009808
    %v4704 = vunpack.c.0.s8 %v4703
    %v4705 = vlaneseq
    %v4706 = vshrl.u32 %v4705, 7
    %v4707 = vsub.s32 %v4704, %v4706
    %v4708 = vrot.slane %v4701, %v4707
    %v4709 = vcombine.low %v4664, %v4680
    %v4711 = vunpack.c.l.s4 1983009808
    %v4712 = vunpack.c.0.s8 %v4711
    %v4713 = vlaneseq
    %v4714 = vshrl.u32 %v4713, 7
    %v4715 = vsub.s32 %v4712, %v4714
    %v4716 = vrot.slane %v4709, %v4715
    %v4717 = vcombine.low %v4692, %v4700
    %v4718 = vcombine.high %v4692, %v4700
    %v4720 = vunpack.c.l.s4 1934713408
    %v4721 = vunpack.c.0.s8 %v4720
    %v4722 = vlaneseq
    %v4723 = vshrl.u32 %v4722, 7
    %v4724 = vsub.s32 %v4721, %v4723
    %v4725 = vrot.slane %v4717, %v4724
    %v4727 = vunpack.c.l.s4 1934713408
    %v4728 = vunpack.c.0.s8 %v4727
    %v4729 = vlaneseq
    %v4730 = vshrl.u32 %v4729, 7
    %v4731 = vsub.s32 %v4728, %v4730
    %v4732 = vrot.slane %v4718, %v4731
    %v4733 = vcombine.low %v4708, %v4716
    %v4734 = vcombine.high %v4708, %v4716
    %v4736 = vunpack.c.l.s4 1934713408
    %v4737 = vunpack.c.0.s8 %v4736
    %v4738 = vlaneseq
    %v4739 = vshrl.u32 %v4738, 7
    %v4740 = vsub.s32 %v4737, %v4739
    %v4741 = vrot.slane %v4733, %v4740
    %v4743 = vunpack.c.l.s4 1934713408
    %v4744 = vunpack.c.0.s8 %v4743
    %v4745 = vlaneseq
    %v4746 = vshrl.u32 %v4745, 7
    %v4747 = vsub.s32 %v4744, %v4746
    %v4748 = vrot.slane %v4734, %v4747
    %v4749 = vcombine.low %v4725, %v4741
    %v4750 = vcombine.high %v4725, %v4741
    %v4751 = vcombine.low %v4732, %v4748
    %v4752 = vcombine.high %v4732, %v4748
    %v4753 = vcombine.low %v4613, %v4615
    %v4755 = vunpack.c.l.s4 1983009808
    %v4756 = vunpack.c.0.s8 %v4755
    %v4757 = vlaneseq
    %v4758 = vshrl.u32 %v4757, 7
    %v4759 = vsub.s32 %v4756, %v4758
    %v4760 = vrot.slane %v4753, %v4759
    %v4761 = vcombine.low %v4614, %v4616
    %v4763 = vunpack.c.l.s4 1983009808
    %v4764 = vunpack.c.0.s8 %v4763
    %v4765 = vlaneseq
    %v4766 = vshrl.u32 %v4765, 7
    %v4767 = vsub.s32 %v4764, %v4766
    %v4768 = vrot.slane %v4761, %v4767
    %v4769 = vcombine.low %v4681, %v4683
    %v4771 = vunpack.c.l.s4 1983009808
    %v4772 = vunpack.c.0.s8 %v4771
    %v4773 = vlaneseq
    %v4774 = vshrl.u32 %v4773, 7
    %v4775 = vsub.s32 %v4772, %v4774
    %v4776 = vrot.slane %v4769, %v4775
    %v4777 = vcombine.low %v4682, %v4684
    %v4779 = vunpack.c.l.s4 1983009808
    %v4780 = vunpack.c.0.s8 %v4779
    %v4781 = vlaneseq
    %v4782 = vshrl.u32 %v4781, 7
    %v4783 = vsub.s32 %v4780, %v4782
    %v4784 = vrot.slane %v4777, %v4783
    %v4785 = vcombine.low %v4760, %v4768
    %v4786 = vcombine.high %v4760, %v4768
    %v4788 = vunpack.c.l.s4 1934713408
    %v4789 = vunpack.c.0.s8 %v4788
    %v4790 = vlaneseq
    %v4791 = vshrl.u32 %v4790, 7
    %v4792 = vsub.s32 %v4789, %v4791
    %v4793 = vrot.slane %v4785, %v4792
    %v4795 = vunpack.c.l.s4 1934713408
    %v4796 = vunpack.c.0.s8 %v4795
    %v4797 = vlaneseq
    %v4798 = vshrl.u32 %v4797, 7
    %v4799 = vsub.s32 %v4796, %v4798
    %v4800 = vrot.slane %v4786, %v4799
    %v4801 = vcombine.low %v4776, %v4784
    %v4802 = vcombine.high %v4776, %v4784
    %v4804 = vunpack.c.l.s4 1934713408
    %v4805 = vunpack.c.0.s8 %v4804
    %v4806 = vlaneseq
    %v4807 = vshrl.u32 %v4806, 7
    %v4808 = vsub.s32 %v4805, %v4807
    %v4809 = vrot.slane %v4801, %v4808
    %v4811 = vunpack.c.l.s4 1934713408
    %v4812 = vunpack.c.0.s8 %v4811
    %v4813 = vlaneseq
    %v4814 = vshrl.u32 %v4813, 7
    %v4815 = vsub.s32 %v4812, %v4814
    %v4816 = vrot.slane %v4802, %v4815
    %v4817 = vcombine.low %v4793, %v4809
    %v4818 = vcombine.high %v4793, %v4809
    %v4819 = vcombine.low %v4800, %v4816
    %v4820 = vcombine.high %v4800, %v4816
    %v4822 = vsel %vm1106, %v4143, 0
    %v4825 = vsel %vm1106, %v4453, 0
    %4827 = vmatprep.subr.mxu0 0.0
    %4828 = vmatpush1.xpose.msra.mxu0 0.0
    %4829 = vmatprep.subr.mxu0 0.0
    %4830 = vmatpush1.xpose.msra.mxu0 0.0
    %4831 = vmatprep.subr.mxu0 0.0
    %4832 = vmatpush1.xpose.msra.mxu0 0.0
    %4833 = vmatprep.subr.mxu0 0.0
    %4834 = vmatpush1.xpose.msra.mxu0 0.0
    %4835 = vmatprep.subr.mxu0 0.0
    %4836 = vmatpush1.xpose.msra.mxu0 0.0
    %4837 = vmatprep.subr.mxu0 0.0
    %4838 = vmatpush1.xpose.msra.mxu0 0.0
    %4839 = vmatprep.subr.mxu0 0.0
    %4840 = vmatpush1.xpose.msra.mxu0 0.0
    %4841 = vmatprep.subr.mxu0 0.0
    %4842 = vmatpush1.xpose.msra.mxu0 0.0
    %4843 = vmatprep.subr.mxu0 0.0
    %4844 = vmatpush1.xpose.msra.mxu0 0.0
    %4845 = vmatprep.subr.mxu0 0.0
    %4846 = vmatpush1.xpose.msra.mxu0 0.0
    %4847 = vmatprep.subr.mxu0 0.0
    %4848 = vmatpush1.xpose.msra.mxu0 0.0
    %4849 = vmatprep.subr.mxu0 0.0
    %4850 = vmatpush1.xpose.msra.mxu0 0.0
    %4851 = vmatprep.subr.mxu0 0.0
    %4852 = vmatpush1.xpose.msra.mxu0 0.0
    %4853 = vmatprep.subr.mxu0 0.0
    %4854 = vmatpush1.xpose.msra.mxu0 0.0
    %4855 = vmatprep.subr.mxu0 0.0
    %4856 = vmatpush1.xpose.msra.mxu0 0.0
    %4857 = vmatprep.subr.mxu0 0.0
    %4858 = vmatpush1.xpose.msra.mxu0 %v4825
    %4859 = vmatprep.subr.mxu0 0.0
    %4860 = vmatpush2.xpose.msra.mxu0 0.0
    %4861 = vmatprep.subr.mxu0 0.0
    %4862 = vmatpush2.xpose.msra.mxu0 0.0
    %4863 = vmatprep.subr.mxu0 0.0
    %4864 = vmatpush2.xpose.msra.mxu0 0.0
    %4865 = vmatprep.subr.mxu0 0.0
    %4866 = vmatpush2.xpose.msra.mxu0 0.0
    %4867 = vmatprep.subr.mxu0 0.0
    %4868 = vmatpush2.xpose.msra.mxu0 0.0
    %4869 = vmatprep.subr.mxu0 0.0
    %4870 = vmatpush2.xpose.msra.mxu0 0.0
    %4871 = vmatprep.subr.mxu0 0.0
    %4872 = vmatpush2.xpose.msra.mxu0 0.0
    %4873 = vmatprep.subr.mxu0 0.0
    %4874 = vmatpush2.xpose.msra.mxu0 0.0
    %4875 = vmatprep.subr.mxu0 0.0
    %4876 = vmatpush2.xpose.msra.mxu0 0.0
    %4877 = vmatprep.subr.mxu0 0.0
    %4878 = vmatpush2.xpose.msra.mxu0 0.0
    %4879 = vmatprep.subr.mxu0 0.0
    %4880 = vmatpush2.xpose.msra.mxu0 0.0
    %4881 = vmatprep.subr.mxu0 0.0
    %4882 = vmatpush2.xpose.msra.mxu0 0.0
    %4883 = vmatprep.subr.mxu0 0.0
    %4884 = vmatpush2.xpose.msra.mxu0 0.0
    %4885 = vmatprep.subr.mxu0 0.0
    %4886 = vmatpush2.xpose.msra.mxu0 0.0
    %4887 = vmatprep.subr.mxu0 0.0
    %4888 = vmatpush2.xpose.msra.mxu0 0.0
    %4889 = vmatprep.subr.mxu0 0.0
    %4890 = vmatpush2.xpose.msra.mxu0 0.0
    %4891 = vmatprep.mubr.f32.mxu0 0.0
    %4892 = vmatmul.mubr.f32.gmra.mxu0 %v4822
    %v4893 = vpop.f32.mrf.mxu0
    %v4894 = vadd.f32 0.0, %v4893
    %v4895 = vpop.f32.mrf.mxu0
    %4896 = vdwg.mxu0
    %v4898 = vsel %vm1106, %v4144, 0
    %v4901 = vsel %vm1106, %v4454, 0
    %4903 = vmatprep.subr.mxu0 0.0
    %4904 = vmatpush1.xpose.msra.mxu0 0.0
    %4905 = vmatprep.subr.mxu0 0.0
    %4906 = vmatpush1.xpose.msra.mxu0 0.0
    %4907 = vmatprep.subr.mxu0 0.0
    %4908 = vmatpush1.xpose.msra.mxu0 0.0
    %4909 = vmatprep.subr.mxu0 0.0
    %4910 = vmatpush1.xpose.msra.mxu0 0.0
    %4911 = vmatprep.subr.mxu0 0.0
    %4912 = vmatpush1.xpose.msra.mxu0 0.0
    %4913 = vmatprep.subr.mxu0 0.0
    %4914 = vmatpush1.xpose.msra.mxu0 0.0
    %4915 = vmatprep.subr.mxu0 0.0
    %4916 = vmatpush1.xpose.msra.mxu0 0.0
    %4917 = vmatprep.subr.mxu0 0.0
    %4918 = vmatpush1.xpose.msra.mxu0 0.0
    %4919 = vmatprep.subr.mxu0 0.0
    %4920 = vmatpush1.xpose.msra.mxu0 0.0
    %4921 = vmatprep.subr.mxu0 0.0
    %4922 = vmatpush1.xpose.msra.mxu0 0.0
    %4923 = vmatprep.subr.mxu0 0.0
    %4924 = vmatpush1.xpose.msra.mxu0 0.0
    %4925 = vmatprep.subr.mxu0 0.0
    %4926 = vmatpush1.xpose.msra.mxu0 0.0
    %4927 = vmatprep.subr.mxu0 0.0
    %4928 = vmatpush1.xpose.msra.mxu0 0.0
    %4929 = vmatprep.subr.mxu0 0.0
    %4930 = vmatpush1.xpose.msra.mxu0 0.0
    %4931 = vmatprep.subr.mxu0 0.0
    %4932 = vmatpush1.xpose.msra.mxu0 0.0
    %4933 = vmatprep.subr.mxu0 0.0
    %4934 = vmatpush1.xpose.msra.mxu0 %v4901
    %4935 = vmatprep.subr.mxu0 0.0
    %4936 = vmatpush2.xpose.msra.mxu0 0.0
    %4937 = vmatprep.subr.mxu0 0.0
    %4938 = vmatpush2.xpose.msra.mxu0 0.0
    %4939 = vmatprep.subr.mxu0 0.0
    %4940 = vmatpush2.xpose.msra.mxu0 0.0
    %4941 = vmatprep.subr.mxu0 0.0
    %4942 = vmatpush2.xpose.msra.mxu0 0.0
    %4943 = vmatprep.subr.mxu0 0.0
    %4944 = vmatpush2.xpose.msra.mxu0 0.0
    %4945 = vmatprep.subr.mxu0 0.0
    %4946 = vmatpush2.xpose.msra.mxu0 0.0
    %4947 = vmatprep.subr.mxu0 0.0
    %4948 = vmatpush2.xpose.msra.mxu0 0.0
    %4949 = vmatprep.subr.mxu0 0.0
    %4950 = vmatpush2.xpose.msra.mxu0 0.0
    %4951 = vmatprep.subr.mxu0 0.0
    %4952 = vmatpush2.xpose.msra.mxu0 0.0
    %4953 = vmatprep.subr.mxu0 0.0
    %4954 = vmatpush2.xpose.msra.mxu0 0.0
    %4955 = vmatprep.subr.mxu0 0.0
    %4956 = vmatpush2.xpose.msra.mxu0 0.0
    %4957 = vmatprep.subr.mxu0 0.0
    %4958 = vmatpush2.xpose.msra.mxu0 0.0
    %4959 = vmatprep.subr.mxu0 0.0
    %4960 = vmatpush2.xpose.msra.mxu0 0.0
    %4961 = vmatprep.subr.mxu0 0.0
    %4962 = vmatpush2.xpose.msra.mxu0 0.0
    %4963 = vmatprep.subr.mxu0 0.0
    %4964 = vmatpush2.xpose.msra.mxu0 0.0
    %4965 = vmatprep.subr.mxu0 0.0
    %4966 = vmatpush2.xpose.msra.mxu0 0.0
    %4967 = vmatprep.mubr.f32.mxu0 0.0
    %4968 = vmatmul.mubr.f32.gmra.mxu0 %v4898
    %v4969 = vpop.f32.mrf.mxu0
    %v4970 = vadd.f32 0.0, %v4969
    %v4971 = vpop.f32.mrf.mxu0
    %4972 = vdwg.mxu0
    %v4974 = vsel %vm1106, %v4145, 0
    %v4977 = vsel %vm1106, %v4455, 0
    %4979 = vmatprep.subr.mxu0 0.0
    %4980 = vmatpush1.xpose.msra.mxu0 0.0
    %4981 = vmatprep.subr.mxu0 0.0
    %4982 = vmatpush1.xpose.msra.mxu0 0.0
    %4983 = vmatprep.subr.mxu0 0.0
    %4984 = vmatpush1.xpose.msra.mxu0 0.0
    %4985 = vmatprep.subr.mxu0 0.0
    %4986 = vmatpush1.xpose.msra.mxu0 0.0
    %4987 = vmatprep.subr.mxu0 0.0
    %4988 = vmatpush1.xpose.msra.mxu0 0.0
    %4989 = vmatprep.subr.mxu0 0.0
    %4990 = vmatpush1.xpose.msra.mxu0 0.0
    %4991 = vmatprep.subr.mxu0 0.0
    %4992 = vmatpush1.xpose.msra.mxu0 0.0
    %4993 = vmatprep.subr.mxu0 0.0
    %4994 = vmatpush1.xpose.msra.mxu0 0.0
    %4995 = vmatprep.subr.mxu0 0.0
    %4996 = vmatpush1.xpose.msra.mxu0 0.0
    %4997 = vmatprep.subr.mxu0 0.0
    %4998 = vmatpush1.xpose.msra.mxu0 0.0
    %4999 = vmatprep.subr.mxu0 0.0
    %5000 = vmatpush1.xpose.msra.mxu0 0.0
    %5001 = vmatprep.subr.mxu0 0.0
    %5002 = vmatpush1.xpose.msra.mxu0 0.0
    %5003 = vmatprep.subr.mxu0 0.0
    %5004 = vmatpush1.xpose.msra.mxu0 0.0
    %5005 = vmatprep.subr.mxu0 0.0
    %5006 = vmatpush1.xpose.msra.mxu0 0.0
    %5007 = vmatprep.subr.mxu0 0.0
    %5008 = vmatpush1.xpose.msra.mxu0 0.0
    %5009 = vmatprep.subr.mxu0 0.0
    %5010 = vmatpush1.xpose.msra.mxu0 %v4977
    %5011 = vmatprep.subr.mxu0 0.0
    %5012 = vmatpush2.xpose.msra.mxu0 0.0
    %5013 = vmatprep.subr.mxu0 0.0
    %5014 = vmatpush2.xpose.msra.mxu0 0.0
    %5015 = vmatprep.subr.mxu0 0.0
    %5016 = vmatpush2.xpose.msra.mxu0 0.0
    %5017 = vmatprep.subr.mxu0 0.0
    %5018 = vmatpush2.xpose.msra.mxu0 0.0
    %5019 = vmatprep.subr.mxu0 0.0
    %5020 = vmatpush2.xpose.msra.mxu0 0.0
    %5021 = vmatprep.subr.mxu0 0.0
    %5022 = vmatpush2.xpose.msra.mxu0 0.0
    %5023 = vmatprep.subr.mxu0 0.0
    %5024 = vmatpush2.xpose.msra.mxu0 0.0
    %5025 = vmatprep.subr.mxu0 0.0
    %5026 = vmatpush2.xpose.msra.mxu0 0.0
    %5027 = vmatprep.subr.mxu0 0.0
    %5028 = vmatpush2.xpose.msra.mxu0 0.0
    %5029 = vmatprep.subr.mxu0 0.0
    %5030 = vmatpush2.xpose.msra.mxu0 0.0
    %5031 = vmatprep.subr.mxu0 0.0
    %5032 = vmatpush2.xpose.msra.mxu0 0.0
    %5033 = vmatprep.subr.mxu0 0.0
    %5034 = vmatpush2.xpose.msra.mxu0 0.0
    %5035 = vmatprep.subr.mxu0 0.0
    %5036 = vmatpush2.xpose.msra.mxu0 0.0
    %5037 = vmatprep.subr.mxu0 0.0
    %5038 = vmatpush2.xpose.msra.mxu0 0.0
    %5039 = vmatprep.subr.mxu0 0.0
    %5040 = vmatpush2.xpose.msra.mxu0 0.0
    %5041 = vmatprep.subr.mxu0 0.0
    %5042 = vmatpush2.xpose.msra.mxu0 0.0
    %5043 = vmatprep.mubr.f32.mxu0 0.0
    %5044 = vmatmul.mubr.f32.gmra.mxu0 %v4974
    %v5045 = vpop.f32.mrf.mxu0
    %v5046 = vadd.f32 0.0, %v5045
    %v5047 = vpop.f32.mrf.mxu0
    %5048 = vdwg.mxu0
    %v5050 = vsel %vm1106, %v4146, 0
    %v5053 = vsel %vm1106, %v4456, 0
    %5055 = vmatprep.subr.mxu0 0.0
    %5056 = vmatpush1.xpose.msra.mxu0 0.0
    %5057 = vmatprep.subr.mxu0 0.0
    %5058 = vmatpush1.xpose.msra.mxu0 0.0
    %5059 = vmatprep.subr.mxu0 0.0
    %5060 = vmatpush1.xpose.msra.mxu0 0.0
    %5061 = vmatprep.subr.mxu0 0.0
    %5062 = vmatpush1.xpose.msra.mxu0 0.0
    %5063 = vmatprep.subr.mxu0 0.0
    %5064 = vmatpush1.xpose.msra.mxu0 0.0
    %5065 = vmatprep.subr.mxu0 0.0
    %5066 = vmatpush1.xpose.msra.mxu0 0.0
    %5067 = vmatprep.subr.mxu0 0.0
    %5068 = vmatpush1.xpose.msra.mxu0 0.0
    %5069 = vmatprep.subr.mxu0 0.0
    %5070 = vmatpush1.xpose.msra.mxu0 0.0
    %5071 = vmatprep.subr.mxu0 0.0
    %5072 = vmatpush1.xpose.msra.mxu0 0.0
    %5073 = vmatprep.subr.mxu0 0.0
    %5074 = vmatpush1.xpose.msra.mxu0 0.0
    %5075 = vmatprep.subr.mxu0 0.0
    %5076 = vmatpush1.xpose.msra.mxu0 0.0
    %5077 = vmatprep.subr.mxu0 0.0
    %5078 = vmatpush1.xpose.msra.mxu0 0.0
    %5079 = vmatprep.subr.mxu0 0.0
    %5080 = vmatpush1.xpose.msra.mxu0 0.0
    %5081 = vmatprep.subr.mxu0 0.0
    %5082 = vmatpush1.xpose.msra.mxu0 0.0
    %5083 = vmatprep.subr.mxu0 0.0
    %5084 = vmatpush1.xpose.msra.mxu0 0.0
    %5085 = vmatprep.subr.mxu0 0.0
    %5086 = vmatpush1.xpose.msra.mxu0 %v5053
    %5087 = vmatprep.subr.mxu0 0.0
    %5088 = vmatpush2.xpose.msra.mxu0 0.0
    %5089 = vmatprep.subr.mxu0 0.0
    %5090 = vmatpush2.xpose.msra.mxu0 0.0
    %5091 = vmatprep.subr.mxu0 0.0
    %5092 = vmatpush2.xpose.msra.mxu0 0.0
    %5093 = vmatprep.subr.mxu0 0.0
    %5094 = vmatpush2.xpose.msra.mxu0 0.0
    %5095 = vmatprep.subr.mxu0 0.0
    %5096 = vmatpush2.xpose.msra.mxu0 0.0
    %5097 = vmatprep.subr.mxu0 0.0
    %5098 = vmatpush2.xpose.msra.mxu0 0.0
    %5099 = vmatprep.subr.mxu0 0.0
    %5100 = vmatpush2.xpose.msra.mxu0 0.0
    %5101 = vmatprep.subr.mxu0 0.0
    %5102 = vmatpush2.xpose.msra.mxu0 0.0
    %5103 = vmatprep.subr.mxu0 0.0
    %5104 = vmatpush2.xpose.msra.mxu0 0.0
    %5105 = vmatprep.subr.mxu0 0.0
    %5106 = vmatpush2.xpose.msra.mxu0 0.0
    %5107 = vmatprep.subr.mxu0 0.0
    %5108 = vmatpush2.xpose.msra.mxu0 0.0
    %5109 = vmatprep.subr.mxu0 0.0
    %5110 = vmatpush2.xpose.msra.mxu0 0.0
    %5111 = vmatprep.subr.mxu0 0.0
    %5112 = vmatpush2.xpose.msra.mxu0 0.0
    %5113 = vmatprep.subr.mxu0 0.0
    %5114 = vmatpush2.xpose.msra.mxu0 0.0
    %5115 = vmatprep.subr.mxu0 0.0
    %5116 = vmatpush2.xpose.msra.mxu0 0.0
    %5117 = vmatprep.subr.mxu0 0.0
    %5118 = vmatpush2.xpose.msra.mxu0 0.0
    %5119 = vmatprep.mubr.f32.mxu0 0.0
    %5120 = vmatmul.mubr.f32.gmra.mxu0 %v5050
    %v5121 = vpop.f32.mrf.mxu0
    %v5122 = vadd.f32 0.0, %v5121
    %v5123 = vpop.f32.mrf.mxu0
    %5124 = vdwg.mxu0
    %v5126 = vsel %vm1106, %v4211, 0
    %v5129 = vsel %vm1106, %v4521, 0
    %5131 = vmatprep.subr.mxu0 0.0
    %5132 = vmatpush1.xpose.msra.mxu0 0.0
    %5133 = vmatprep.subr.mxu0 0.0
    %5134 = vmatpush1.xpose.msra.mxu0 0.0
    %5135 = vmatprep.subr.mxu0 0.0
    %5136 = vmatpush1.xpose.msra.mxu0 0.0
    %5137 = vmatprep.subr.mxu0 0.0
    %5138 = vmatpush1.xpose.msra.mxu0 0.0
    %5139 = vmatprep.subr.mxu0 0.0
    %5140 = vmatpush1.xpose.msra.mxu0 0.0
    %5141 = vmatprep.subr.mxu0 0.0
    %5142 = vmatpush1.xpose.msra.mxu0 0.0
    %5143 = vmatprep.subr.mxu0 0.0
    %5144 = vmatpush1.xpose.msra.mxu0 0.0
    %5145 = vmatprep.subr.mxu0 0.0
    %5146 = vmatpush1.xpose.msra.mxu0 0.0
    %5147 = vmatprep.subr.mxu0 0.0
    %5148 = vmatpush1.xpose.msra.mxu0 0.0
    %5149 = vmatprep.subr.mxu0 0.0
    %5150 = vmatpush1.xpose.msra.mxu0 0.0
    %5151 = vmatprep.subr.mxu0 0.0
    %5152 = vmatpush1.xpose.msra.mxu0 0.0
    %5153 = vmatprep.subr.mxu0 0.0
    %5154 = vmatpush1.xpose.msra.mxu0 0.0
    %5155 = vmatprep.subr.mxu0 0.0
    %5156 = vmatpush1.xpose.msra.mxu0 0.0
    %5157 = vmatprep.subr.mxu0 0.0
    %5158 = vmatpush1.xpose.msra.mxu0 0.0
    %5159 = vmatprep.subr.mxu0 0.0
    %5160 = vmatpush1.xpose.msra.mxu0 0.0
    %5161 = vmatprep.subr.mxu0 0.0
    %5162 = vmatpush1.xpose.msra.mxu0 %v5129
    %5163 = vmatprep.subr.mxu0 0.0
    %5164 = vmatpush2.xpose.msra.mxu0 0.0
    %5165 = vmatprep.subr.mxu0 0.0
    %5166 = vmatpush2.xpose.msra.mxu0 0.0
    %5167 = vmatprep.subr.mxu0 0.0
    %5168 = vmatpush2.xpose.msra.mxu0 0.0
    %5169 = vmatprep.subr.mxu0 0.0
    %5170 = vmatpush2.xpose.msra.mxu0 0.0
    %5171 = vmatprep.subr.mxu0 0.0
    %5172 = vmatpush2.xpose.msra.mxu0 0.0
    %5173 = vmatprep.subr.mxu0 0.0
    %5174 = vmatpush2.xpose.msra.mxu0 0.0
    %5175 = vmatprep.subr.mxu0 0.0
    %5176 = vmatpush2.xpose.msra.mxu0 0.0
    %5177 = vmatprep.subr.mxu0 0.0
    %5178 = vmatpush2.xpose.msra.mxu0 0.0
    %5179 = vmatprep.subr.mxu0 0.0
    %5180 = vmatpush2.xpose.msra.mxu0 0.0
    %5181 = vmatprep.subr.mxu0 0.0
    %5182 = vmatpush2.xpose.msra.mxu0 0.0
    %5183 = vmatprep.subr.mxu0 0.0
    %5184 = vmatpush2.xpose.msra.mxu0 0.0
    %5185 = vmatprep.subr.mxu0 0.0
    %5186 = vmatpush2.xpose.msra.mxu0 0.0
    %5187 = vmatprep.subr.mxu0 0.0
    %5188 = vmatpush2.xpose.msra.mxu0 0.0
    %5189 = vmatprep.subr.mxu0 0.0
    %5190 = vmatpush2.xpose.msra.mxu0 0.0
    %5191 = vmatprep.subr.mxu0 0.0
    %5192 = vmatpush2.xpose.msra.mxu0 0.0
    %5193 = vmatprep.subr.mxu0 0.0
    %5194 = vmatpush2.xpose.msra.mxu0 0.0
    %5195 = vmatprep.mubr.f32.mxu0 0.0
    %5196 = vmatmul.mubr.f32.gmra.mxu0 %v5126
    %v5197 = vpop.f32.mrf.mxu0
    %v5198 = vadd.f32 0.0, %v5197
    %v5199 = vpop.f32.mrf.mxu0
    %5200 = vdwg.mxu0
    %v5202 = vsel %vm1106, %v4212, 0
    %v5205 = vsel %vm1106, %v4522, 0
    %5207 = vmatprep.subr.mxu0 0.0
    %5208 = vmatpush1.xpose.msra.mxu0 0.0
    %5209 = vmatprep.subr.mxu0 0.0
    %5210 = vmatpush1.xpose.msra.mxu0 0.0
    %5211 = vmatprep.subr.mxu0 0.0
    %5212 = vmatpush1.xpose.msra.mxu0 0.0
    %5213 = vmatprep.subr.mxu0 0.0
    %5214 = vmatpush1.xpose.msra.mxu0 0.0
    %5215 = vmatprep.subr.mxu0 0.0
    %5216 = vmatpush1.xpose.msra.mxu0 0.0
    %5217 = vmatprep.subr.mxu0 0.0
    %5218 = vmatpush1.xpose.msra.mxu0 0.0
    %5219 = vmatprep.subr.mxu0 0.0
    %5220 = vmatpush1.xpose.msra.mxu0 0.0
    %5221 = vmatprep.subr.mxu0 0.0
    %5222 = vmatpush1.xpose.msra.mxu0 0.0
    %5223 = vmatprep.subr.mxu0 0.0
    %5224 = vmatpush1.xpose.msra.mxu0 0.0
    %5225 = vmatprep.subr.mxu0 0.0
    %5226 = vmatpush1.xpose.msra.mxu0 0.0
    %5227 = vmatprep.subr.mxu0 0.0
    %5228 = vmatpush1.xpose.msra.mxu0 0.0
    %5229 = vmatprep.subr.mxu0 0.0
    %5230 = vmatpush1.xpose.msra.mxu0 0.0
    %5231 = vmatprep.subr.mxu0 0.0
    %5232 = vmatpush1.xpose.msra.mxu0 0.0
    %5233 = vmatprep.subr.mxu0 0.0
    %5234 = vmatpush1.xpose.msra.mxu0 0.0
    %5235 = vmatprep.subr.mxu0 0.0
    %5236 = vmatpush1.xpose.msra.mxu0 0.0
    %5237 = vmatprep.subr.mxu0 0.0
    %5238 = vmatpush1.xpose.msra.mxu0 %v5205
    %5239 = vmatprep.subr.mxu0 0.0
    %5240 = vmatpush2.xpose.msra.mxu0 0.0
    %5241 = vmatprep.subr.mxu0 0.0
    %5242 = vmatpush2.xpose.msra.mxu0 0.0
    %5243 = vmatprep.subr.mxu0 0.0
    %5244 = vmatpush2.xpose.msra.mxu0 0.0
    %5245 = vmatprep.subr.mxu0 0.0
    %5246 = vmatpush2.xpose.msra.mxu0 0.0
    %5247 = vmatprep.subr.mxu0 0.0
    %5248 = vmatpush2.xpose.msra.mxu0 0.0
    %5249 = vmatprep.subr.mxu0 0.0
    %5250 = vmatpush2.xpose.msra.mxu0 0.0
    %5251 = vmatprep.subr.mxu0 0.0
    %5252 = vmatpush2.xpose.msra.mxu0 0.0
    %5253 = vmatprep.subr.mxu0 0.0
    %5254 = vmatpush2.xpose.msra.mxu0 0.0
    %5255 = vmatprep.subr.mxu0 0.0
    %5256 = vmatpush2.xpose.msra.mxu0 0.0
    %5257 = vmatprep.subr.mxu0 0.0
    %5258 = vmatpush2.xpose.msra.mxu0 0.0
    %5259 = vmatprep.subr.mxu0 0.0
    %5260 = vmatpush2.xpose.msra.mxu0 0.0
    %5261 = vmatprep.subr.mxu0 0.0
    %5262 = vmatpush2.xpose.msra.mxu0 0.0
    %5263 = vmatprep.subr.mxu0 0.0
    %5264 = vmatpush2.xpose.msra.mxu0 0.0
    %5265 = vmatprep.subr.mxu0 0.0
    %5266 = vmatpush2.xpose.msra.mxu0 0.0
    %5267 = vmatprep.subr.mxu0 0.0
    %5268 = vmatpush2.xpose.msra.mxu0 0.0
    %5269 = vmatprep.subr.mxu0 0.0
    %5270 = vmatpush2.xpose.msra.mxu0 0.0
    %5271 = vmatprep.mubr.f32.mxu0 0.0
    %5272 = vmatmul.mubr.f32.gmra.mxu0 %v5202
    %v5273 = vpop.f32.mrf.mxu0
    %v5274 = vadd.f32 0.0, %v5273
    %v5275 = vpop.f32.mrf.mxu0
    %5276 = vdwg.mxu0
    %v5278 = vsel %vm1106, %v4213, 0
    %v5281 = vsel %vm1106, %v4523, 0
    %5283 = vmatprep.subr.mxu0 0.0
    %5284 = vmatpush1.xpose.msra.mxu0 0.0
    %5285 = vmatprep.subr.mxu0 0.0
    %5286 = vmatpush1.xpose.msra.mxu0 0.0
    %5287 = vmatprep.subr.mxu0 0.0
    %5288 = vmatpush1.xpose.msra.mxu0 0.0
    %5289 = vmatprep.subr.mxu0 0.0
    %5290 = vmatpush1.xpose.msra.mxu0 0.0
    %5291 = vmatprep.subr.mxu0 0.0
    %5292 = vmatpush1.xpose.msra.mxu0 0.0
    %5293 = vmatprep.subr.mxu0 0.0
    %5294 = vmatpush1.xpose.msra.mxu0 0.0
    %5295 = vmatprep.subr.mxu0 0.0
    %5296 = vmatpush1.xpose.msra.mxu0 0.0
    %5297 = vmatprep.subr.mxu0 0.0
    %5298 = vmatpush1.xpose.msra.mxu0 0.0
    %5299 = vmatprep.subr.mxu0 0.0
    %5300 = vmatpush1.xpose.msra.mxu0 0.0
    %5301 = vmatprep.subr.mxu0 0.0
    %5302 = vmatpush1.xpose.msra.mxu0 0.0
    %5303 = vmatprep.subr.mxu0 0.0
    %5304 = vmatpush1.xpose.msra.mxu0 0.0
    %5305 = vmatprep.subr.mxu0 0.0
    %5306 = vmatpush1.xpose.msra.mxu0 0.0
    %5307 = vmatprep.subr.mxu0 0.0
    %5308 = vmatpush1.xpose.msra.mxu0 0.0
    %5309 = vmatprep.subr.mxu0 0.0
    %5310 = vmatpush1.xpose.msra.mxu0 0.0
    %5311 = vmatprep.subr.mxu0 0.0
    %5312 = vmatpush1.xpose.msra.mxu0 0.0
    %5313 = vmatprep.subr.mxu0 0.0
    %5314 = vmatpush1.xpose.msra.mxu0 %v5281
    %5315 = vmatprep.subr.mxu0 0.0
    %5316 = vmatpush2.xpose.msra.mxu0 0.0
    %5317 = vmatprep.subr.mxu0 0.0
    %5318 = vmatpush2.xpose.msra.mxu0 0.0
    %5319 = vmatprep.subr.mxu0 0.0
    %5320 = vmatpush2.xpose.msra.mxu0 0.0
    %5321 = vmatprep.subr.mxu0 0.0
    %5322 = vmatpush2.xpose.msra.mxu0 0.0
    %5323 = vmatprep.subr.mxu0 0.0
    %5324 = vmatpush2.xpose.msra.mxu0 0.0
    %5325 = vmatprep.subr.mxu0 0.0
    %5326 = vmatpush2.xpose.msra.mxu0 0.0
    %5327 = vmatprep.subr.mxu0 0.0
    %5328 = vmatpush2.xpose.msra.mxu0 0.0
    %5329 = vmatprep.subr.mxu0 0.0
    %5330 = vmatpush2.xpose.msra.mxu0 0.0
    %5331 = vmatprep.subr.mxu0 0.0
    %5332 = vmatpush2.xpose.msra.mxu0 0.0
    %5333 = vmatprep.subr.mxu0 0.0
    %5334 = vmatpush2.xpose.msra.mxu0 0.0
    %5335 = vmatprep.subr.mxu0 0.0
    %5336 = vmatpush2.xpose.msra.mxu0 0.0
    %5337 = vmatprep.subr.mxu0 0.0
    %5338 = vmatpush2.xpose.msra.mxu0 0.0
    %5339 = vmatprep.subr.mxu0 0.0
    %5340 = vmatpush2.xpose.msra.mxu0 0.0
    %5341 = vmatprep.subr.mxu0 0.0
    %5342 = vmatpush2.xpose.msra.mxu0 0.0
    %5343 = vmatprep.subr.mxu0 0.0
    %5344 = vmatpush2.xpose.msra.mxu0 0.0
    %5345 = vmatprep.subr.mxu0 0.0
    %5346 = vmatpush2.xpose.msra.mxu0 0.0
    %5347 = vmatprep.mubr.f32.mxu0 0.0
    %5348 = vmatmul.mubr.f32.gmra.mxu0 %v5278
    %v5349 = vpop.f32.mrf.mxu0
    %v5350 = vadd.f32 0.0, %v5349
    %v5351 = vpop.f32.mrf.mxu0
    %5352 = vdwg.mxu0
    %v5354 = vsel %vm1106, %v4214, 0
    %v5357 = vsel %vm1106, %v4524, 0
    %5359 = vmatprep.subr.mxu0 0.0
    %5360 = vmatpush1.xpose.msra.mxu0 0.0
    %5361 = vmatprep.subr.mxu0 0.0
    %5362 = vmatpush1.xpose.msra.mxu0 0.0
    %5363 = vmatprep.subr.mxu0 0.0
    %5364 = vmatpush1.xpose.msra.mxu0 0.0
    %5365 = vmatprep.subr.mxu0 0.0
    %5366 = vmatpush1.xpose.msra.mxu0 0.0
    %5367 = vmatprep.subr.mxu0 0.0
    %5368 = vmatpush1.xpose.msra.mxu0 0.0
    %5369 = vmatprep.subr.mxu0 0.0
    %5370 = vmatpush1.xpose.msra.mxu0 0.0
    %5371 = vmatprep.subr.mxu0 0.0
    %5372 = vmatpush1.xpose.msra.mxu0 0.0
    %5373 = vmatprep.subr.mxu0 0.0
    %5374 = vmatpush1.xpose.msra.mxu0 0.0
    %5375 = vmatprep.subr.mxu0 0.0
    %5376 = vmatpush1.xpose.msra.mxu0 0.0
    %5377 = vmatprep.subr.mxu0 0.0
    %5378 = vmatpush1.xpose.msra.mxu0 0.0
    %5379 = vmatprep.subr.mxu0 0.0
    %5380 = vmatpush1.xpose.msra.mxu0 0.0
    %5381 = vmatprep.subr.mxu0 0.0
    %5382 = vmatpush1.xpose.msra.mxu0 0.0
    %5383 = vmatprep.subr.mxu0 0.0
    %5384 = vmatpush1.xpose.msra.mxu0 0.0
    %5385 = vmatprep.subr.mxu0 0.0
    %5386 = vmatpush1.xpose.msra.mxu0 0.0
    %5387 = vmatprep.subr.mxu0 0.0
    %5388 = vmatpush1.xpose.msra.mxu0 0.0
    %5389 = vmatprep.subr.mxu0 0.0
    %5390 = vmatpush1.xpose.msra.mxu0 %v5357
    %5391 = vmatprep.subr.mxu0 0.0
    %5392 = vmatpush2.xpose.msra.mxu0 0.0
    %5393 = vmatprep.subr.mxu0 0.0
    %5394 = vmatpush2.xpose.msra.mxu0 0.0
    %5395 = vmatprep.subr.mxu0 0.0
    %5396 = vmatpush2.xpose.msra.mxu0 0.0
    %5397 = vmatprep.subr.mxu0 0.0
    %5398 = vmatpush2.xpose.msra.mxu0 0.0
    %5399 = vmatprep.subr.mxu0 0.0
    %5400 = vmatpush2.xpose.msra.mxu0 0.0
    %5401 = vmatprep.subr.mxu0 0.0
    %5402 = vmatpush2.xpose.msra.mxu0 0.0
    %5403 = vmatprep.subr.mxu0 0.0
    %5404 = vmatpush2.xpose.msra.mxu0 0.0
    %5405 = vmatprep.subr.mxu0 0.0
    %5406 = vmatpush2.xpose.msra.mxu0 0.0
    %5407 = vmatprep.subr.mxu0 0.0
    %5408 = vmatpush2.xpose.msra.mxu0 0.0
    %5409 = vmatprep.subr.mxu0 0.0
    %5410 = vmatpush2.xpose.msra.mxu0 0.0
    %5411 = vmatprep.subr.mxu0 0.0
    %5412 = vmatpush2.xpose.msra.mxu0 0.0
    %5413 = vmatprep.subr.mxu0 0.0
    %5414 = vmatpush2.xpose.msra.mxu0 0.0
    %5415 = vmatprep.subr.mxu0 0.0
    %5416 = vmatpush2.xpose.msra.mxu0 0.0
    %5417 = vmatprep.subr.mxu0 0.0
    %5418 = vmatpush2.xpose.msra.mxu0 0.0
    %5419 = vmatprep.subr.mxu0 0.0
    %5420 = vmatpush2.xpose.msra.mxu0 0.0
    %5421 = vmatprep.subr.mxu0 0.0
    %5422 = vmatpush2.xpose.msra.mxu0 0.0
    %5423 = vmatprep.mubr.f32.mxu0 0.0
    %5424 = vmatmul.mubr.f32.gmra.mxu0 %v5354
    %v5425 = vpop.f32.mrf.mxu0
    %v5426 = vadd.f32 0.0, %v5425
    %v5427 = vpop.f32.mrf.mxu0
    %5428 = vdwg.mxu0
    %v5429 = vsel %vm1106, %v4894, -inf
    %5430 = vmax.xlane.f32.xlu0 %v5429
    %v5431 = vpop.xlane.xlu0 %5430
    %v5432 = vsel %vm1106, %v4970, -inf
    %5433 = vmax.xlane.f32.xlu0 %v5432
    %v5434 = vpop.xlane.xlu0 %5433
    %v5435 = vsel %vm1106, %v5046, -inf
    %5436 = vmax.xlane.f32.xlu0 %v5435
    %v5437 = vpop.xlane.xlu0 %5436
    %v5438 = vsel %vm1106, %v5122, -inf
    %5439 = vmax.xlane.f32.xlu0 %v5438
    %v5440 = vpop.xlane.xlu0 %5439
    %v5441 = vsel %vm1106, %v5198, -inf
    %5442 = vmax.xlane.f32.xlu0 %v5441
    %v5443 = vpop.xlane.xlu0 %5442
    %v5444 = vsel %vm1106, %v5274, -inf
    %5445 = vmax.xlane.f32.xlu0 %v5444
    %v5446 = vpop.xlane.xlu0 %5445
    %v5447 = vsel %vm1106, %v5350, -inf
    %5448 = vmax.xlane.f32.xlu0 %v5447
    %v5449 = vpop.xlane.xlu0 %5448
    %v5450 = vsel %vm1106, %v5426, -inf
    %5451 = vmax.xlane.f32.xlu0 %v5450
    %v5452 = vpop.xlane.xlu0 %5451
    %v5453 = vsub.f32 %v4894, %v5431
    %v5454 = vsub.f32 %v4970, %v5434
    %v5455 = vsub.f32 %v5046, %v5437
    %v5456 = vsub.f32 %v5122, %v5440
    %v5457 = vsub.f32 %v5198, %v5443
    %v5458 = vsub.f32 %v5274, %v5446
    %v5459 = vsub.f32 %v5350, %v5449
    %v5460 = vsub.f32 %v5426, %v5452
    %v5461 = vmul.f32 %v5453, 1.442695
    %v5462 = vpow.pop %v5461
    %v5463 = vmul.f32 %v5454, 1.442695
    %v5464 = vpow.pop %v5463
    %v5465 = vmul.f32 %v5455, 1.442695
    %v5466 = vpow.pop %v5465
    %v5467 = vmul.f32 %v5456, 1.442695
    %v5468 = vpow.pop %v5467
    %v5469 = vmul.f32 %v5457, 1.442695
    %v5470 = vpow.pop %v5469
    %v5471 = vmul.f32 %v5458, 1.442695
    %v5472 = vpow.pop %v5471
    %v5473 = vmul.f32 %v5459, 1.442695
    %v5474 = vpow.pop %v5473
    %v5475 = vmul.f32 %v5460, 1.442695
    %v5476 = vpow.pop %v5475
    %v5477 = vsel %vm1106, %v5462, 0.0
    %5478 = vadd.xlane.f32.xlu0 %v5477
    %v5479 = vpop.xlane.xlu0 %5478
    %v5480 = vsel %vm1106, %v5464, 0.0
    %5481 = vadd.xlane.f32.xlu0 %v5480
    %v5482 = vpop.xlane.xlu0 %5481
    %v5483 = vsel %vm1106, %v5466, 0.0
    %5484 = vadd.xlane.f32.xlu0 %v5483
    %v5485 = vpop.xlane.xlu0 %5484
    %v5486 = vsel %vm1106, %v5468, 0.0
    %5487 = vadd.xlane.f32.xlu0 %v5486
    %v5488 = vpop.xlane.xlu0 %5487
    %v5489 = vsel %vm1106, %v5470, 0.0
    %5490 = vadd.xlane.f32.xlu0 %v5489
    %v5491 = vpop.xlane.xlu0 %5490
    %v5492 = vsel %vm1106, %v5472, 0.0
    %5493 = vadd.xlane.f32.xlu0 %v5492
    %v5494 = vpop.xlane.xlu0 %5493
    %v5495 = vsel %vm1106, %v5474, 0.0
    %5496 = vadd.xlane.f32.xlu0 %v5495
    %v5497 = vpop.xlane.xlu0 %5496
    %v5498 = vsel %vm1106, %v5476, 0.0
    %5499 = vadd.xlane.f32.xlu0 %v5498
    %v5500 = vpop.xlane.xlu0 %5499
    %v5501 = vrcp.pop %v5479
    %v5502 = vrcp.pop %v5482
    %v5503 = vrcp.pop %v5485
    %v5504 = vrcp.pop %v5488
    %v5505 = vrcp.pop %v5491
    %v5506 = vrcp.pop %v5494
    %v5507 = vrcp.pop %v5497
    %v5508 = vrcp.pop %v5500
    %v5509 = vmul.f32 %v5462, %v5501
    %v5510 = vmul.f32 %v5464, %v5502
    %v5511 = vmul.f32 %v5466, %v5503
    %v5512 = vmul.f32 %v5468, %v5504
    %v5513 = vmul.f32 %v5470, %v5505
    %v5514 = vmul.f32 %v5472, %v5506
    %v5515 = vmul.f32 %v5474, %v5507
    %v5516 = vmul.f32 %v5476, %v5508
    %v5518 = vsel %vm1106, %v5509, 0
    %5520 = vmatprep.subr.mxu0 0.0
    %5521 = vmatpush1.msra.mxu0 0.0
    %5522 = vmatprep.subr.mxu0 0.0
    %5523 = vmatpush1.msra.mxu0 0.0
    %5524 = vmatprep.subr.mxu0 0.0
    %5525 = vmatpush1.msra.mxu0 0.0
    %5526 = vmatprep.subr.mxu0 0.0
    %5527 = vmatpush1.msra.mxu0 0.0
    %5528 = vmatprep.subr.mxu0 0.0
    %5529 = vmatpush1.msra.mxu0 0.0
    %5530 = vmatprep.subr.mxu0 0.0
    %5531 = vmatpush1.msra.mxu0 0.0
    %5532 = vmatprep.subr.mxu0 0.0
    %5533 = vmatpush1.msra.mxu0 0.0
    %5534 = vmatprep.subr.mxu0 0.0
    %5535 = vmatpush1.msra.mxu0 0.0
    %5536 = vmatprep.subr.mxu0 0.0
    %5537 = vmatpush1.msra.mxu0 0.0
    %5538 = vmatprep.subr.mxu0 0.0
    %5539 = vmatpush1.msra.mxu0 0.0
    %5540 = vmatprep.subr.mxu0 0.0
    %5541 = vmatpush1.msra.mxu0 0.0
    %5542 = vmatprep.subr.mxu0 0.0
    %5543 = vmatpush1.msra.mxu0 0.0
    %5544 = vmatprep.subr.mxu0 0.0
    %5545 = vmatpush1.msra.mxu0 0.0
    %5546 = vmatprep.subr.mxu0 0.0
    %5547 = vmatpush1.msra.mxu0 0.0
    %5548 = vmatprep.subr.mxu0 0.0
    %5549 = vmatpush1.msra.mxu0 0.0
    %5550 = vmatprep.subr.mxu0 0.0
    %5551 = vmatpush1.msra.mxu0 %v4749
    %5552 = vmatprep.subr.mxu0 0.0
    %5553 = vmatpush2.msra.mxu0 0.0
    %5554 = vmatprep.subr.mxu0 0.0
    %5555 = vmatpush2.msra.mxu0 0.0
    %5556 = vmatprep.subr.mxu0 0.0
    %5557 = vmatpush2.msra.mxu0 0.0
    %5558 = vmatprep.subr.mxu0 0.0
    %5559 = vmatpush2.msra.mxu0 0.0
    %5560 = vmatprep.subr.mxu0 0.0
    %5561 = vmatpush2.msra.mxu0 0.0
    %5562 = vmatprep.subr.mxu0 0.0
    %5563 = vmatpush2.msra.mxu0 0.0
    %5564 = vmatprep.subr.mxu0 0.0
    %5565 = vmatpush2.msra.mxu0 0.0
    %5566 = vmatprep.subr.mxu0 0.0
    %5567 = vmatpush2.msra.mxu0 0.0
    %5568 = vmatprep.subr.mxu0 0.0
    %5569 = vmatpush2.msra.mxu0 0.0
    %5570 = vmatprep.subr.mxu0 0.0
    %5571 = vmatpush2.msra.mxu0 0.0
    %5572 = vmatprep.subr.mxu0 0.0
    %5573 = vmatpush2.msra.mxu0 0.0
    %5574 = vmatprep.subr.mxu0 0.0
    %5575 = vmatpush2.msra.mxu0 0.0
    %5576 = vmatprep.subr.mxu0 0.0
    %5577 = vmatpush2.msra.mxu0 0.0
    %5578 = vmatprep.subr.mxu0 0.0
    %5579 = vmatpush2.msra.mxu0 0.0
    %5580 = vmatprep.subr.mxu0 0.0
    %5581 = vmatpush2.msra.mxu0 0.0
    %5582 = vmatprep.subr.mxu0 0.0
    %5583 = vmatpush2.msra.mxu0 0.0
    %5584 = vmatprep.mubr.f32.mxu0 0.0
    %5585 = vmatmul.mubr.f32.gmra.mxu0 %v5518
    %v5586 = vpop.f32.mrf.mxu0
    %v5587 = vadd.f32 0.0, %v5586
    %v5588 = vpop.f32.mrf.mxu0
    %5589 = vdwg.mxu0
    %v5591 = vsel %vm1106, %v5510, 0
    %5593 = vmatprep.subr.mxu0 0.0
    %5594 = vmatpush1.msra.mxu0 0.0
    %5595 = vmatprep.subr.mxu0 0.0
    %5596 = vmatpush1.msra.mxu0 0.0
    %5597 = vmatprep.subr.mxu0 0.0
    %5598 = vmatpush1.msra.mxu0 0.0
    %5599 = vmatprep.subr.mxu0 0.0
    %5600 = vmatpush1.msra.mxu0 0.0
    %5601 = vmatprep.subr.mxu0 0.0
    %5602 = vmatpush1.msra.mxu0 0.0
    %5603 = vmatprep.subr.mxu0 0.0
    %5604 = vmatpush1.msra.mxu0 0.0
    %5605 = vmatprep.subr.mxu0 0.0
    %5606 = vmatpush1.msra.mxu0 0.0
    %5607 = vmatprep.subr.mxu0 0.0
    %5608 = vmatpush1.msra.mxu0 0.0
    %5609 = vmatprep.subr.mxu0 0.0
    %5610 = vmatpush1.msra.mxu0 0.0
    %5611 = vmatprep.subr.mxu0 0.0
    %5612 = vmatpush1.msra.mxu0 0.0
    %5613 = vmatprep.subr.mxu0 0.0
    %5614 = vmatpush1.msra.mxu0 0.0
    %5615 = vmatprep.subr.mxu0 0.0
    %5616 = vmatpush1.msra.mxu0 0.0
    %5617 = vmatprep.subr.mxu0 0.0
    %5618 = vmatpush1.msra.mxu0 0.0
    %5619 = vmatprep.subr.mxu0 0.0
    %5620 = vmatpush1.msra.mxu0 0.0
    %5621 = vmatprep.subr.mxu0 0.0
    %5622 = vmatpush1.msra.mxu0 0.0
    %5623 = vmatprep.subr.mxu0 0.0
    %5624 = vmatpush1.msra.mxu0 %v4750
    %5625 = vmatprep.subr.mxu0 0.0
    %5626 = vmatpush2.msra.mxu0 0.0
    %5627 = vmatprep.subr.mxu0 0.0
    %5628 = vmatpush2.msra.mxu0 0.0
    %5629 = vmatprep.subr.mxu0 0.0
    %5630 = vmatpush2.msra.mxu0 0.0
    %5631 = vmatprep.subr.mxu0 0.0
    %5632 = vmatpush2.msra.mxu0 0.0
    %5633 = vmatprep.subr.mxu0 0.0
    %5634 = vmatpush2.msra.mxu0 0.0
    %5635 = vmatprep.subr.mxu0 0.0
    %5636 = vmatpush2.msra.mxu0 0.0
    %5637 = vmatprep.subr.mxu0 0.0
    %5638 = vmatpush2.msra.mxu0 0.0
    %5639 = vmatprep.subr.mxu0 0.0
    %5640 = vmatpush2.msra.mxu0 0.0
    %5641 = vmatprep.subr.mxu0 0.0
    %5642 = vmatpush2.msra.mxu0 0.0
    %5643 = vmatprep.subr.mxu0 0.0
    %5644 = vmatpush2.msra.mxu0 0.0
    %5645 = vmatprep.subr.mxu0 0.0
    %5646 = vmatpush2.msra.mxu0 0.0
    %5647 = vmatprep.subr.mxu0 0.0
    %5648 = vmatpush2.msra.mxu0 0.0
    %5649 = vmatprep.subr.mxu0 0.0
    %5650 = vmatpush2.msra.mxu0 0.0
    %5651 = vmatprep.subr.mxu0 0.0
    %5652 = vmatpush2.msra.mxu0 0.0
    %5653 = vmatprep.subr.mxu0 0.0
    %5654 = vmatpush2.msra.mxu0 0.0
    %5655 = vmatprep.subr.mxu0 0.0
    %5656 = vmatpush2.msra.mxu0 0.0
    %5657 = vmatprep.mubr.f32.mxu0 0.0
    %5658 = vmatmul.mubr.f32.gmra.mxu0 %v5591
    %v5659 = vpop.f32.mrf.mxu0
    %v5660 = vadd.f32 0.0, %v5659
    %v5661 = vpop.f32.mrf.mxu0
    %5662 = vdwg.mxu0
    %v5664 = vsel %vm1106, %v5511, 0
    %5666 = vmatprep.subr.mxu0 0.0
    %5667 = vmatpush1.msra.mxu0 0.0
    %5668 = vmatprep.subr.mxu0 0.0
    %5669 = vmatpush1.msra.mxu0 0.0
    %5670 = vmatprep.subr.mxu0 0.0
    %5671 = vmatpush1.msra.mxu0 0.0
    %5672 = vmatprep.subr.mxu0 0.0
    %5673 = vmatpush1.msra.mxu0 0.0
    %5674 = vmatprep.subr.mxu0 0.0
    %5675 = vmatpush1.msra.mxu0 0.0
    %5676 = vmatprep.subr.mxu0 0.0
    %5677 = vmatpush1.msra.mxu0 0.0
    %5678 = vmatprep.subr.mxu0 0.0
    %5679 = vmatpush1.msra.mxu0 0.0
    %5680 = vmatprep.subr.mxu0 0.0
    %5681 = vmatpush1.msra.mxu0 0.0
    %5682 = vmatprep.subr.mxu0 0.0
    %5683 = vmatpush1.msra.mxu0 0.0
    %5684 = vmatprep.subr.mxu0 0.0
    %5685 = vmatpush1.msra.mxu0 0.0
    %5686 = vmatprep.subr.mxu0 0.0
    %5687 = vmatpush1.msra.mxu0 0.0
    %5688 = vmatprep.subr.mxu0 0.0
    %5689 = vmatpush1.msra.mxu0 0.0
    %5690 = vmatprep.subr.mxu0 0.0
    %5691 = vmatpush1.msra.mxu0 0.0
    %5692 = vmatprep.subr.mxu0 0.0
    %5693 = vmatpush1.msra.mxu0 0.0
    %5694 = vmatprep.subr.mxu0 0.0
    %5695 = vmatpush1.msra.mxu0 0.0
    %5696 = vmatprep.subr.mxu0 0.0
    %5697 = vmatpush1.msra.mxu0 %v4751
    %5698 = vmatprep.subr.mxu0 0.0
    %5699 = vmatpush2.msra.mxu0 0.0
    %5700 = vmatprep.subr.mxu0 0.0
    %5701 = vmatpush2.msra.mxu0 0.0
    %5702 = vmatprep.subr.mxu0 0.0
    %5703 = vmatpush2.msra.mxu0 0.0
    %5704 = vmatprep.subr.mxu0 0.0
    %5705 = vmatpush2.msra.mxu0 0.0
    %5706 = vmatprep.subr.mxu0 0.0
    %5707 = vmatpush2.msra.mxu0 0.0
    %5708 = vmatprep.subr.mxu0 0.0
    %5709 = vmatpush2.msra.mxu0 0.0
    %5710 = vmatprep.subr.mxu0 0.0
    %5711 = vmatpush2.msra.mxu0 0.0
    %5712 = vmatprep.subr.mxu0 0.0
    %5713 = vmatpush2.msra.mxu0 0.0
    %5714 = vmatprep.subr.mxu0 0.0
    %5715 = vmatpush2.msra.mxu0 0.0
    %5716 = vmatprep.subr.mxu0 0.0
    %5717 = vmatpush2.msra.mxu0 0.0
    %5718 = vmatprep.subr.mxu0 0.0
    %5719 = vmatpush2.msra.mxu0 0.0
    %5720 = vmatprep.subr.mxu0 0.0
    %5721 = vmatpush2.msra.mxu0 0.0
    %5722 = vmatprep.subr.mxu0 0.0
    %5723 = vmatpush2.msra.mxu0 0.0
    %5724 = vmatprep.subr.mxu0 0.0
    %5725 = vmatpush2.msra.mxu0 0.0
    %5726 = vmatprep.subr.mxu0 0.0
    %5727 = vmatpush2.msra.mxu0 0.0
    %5728 = vmatprep.subr.mxu0 0.0
    %5729 = vmatpush2.msra.mxu0 0.0
    %5730 = vmatprep.mubr.f32.mxu0 0.0
    %5731 = vmatmul.mubr.f32.gmra.mxu0 %v5664
    %v5732 = vpop.f32.mrf.mxu0
    %v5733 = vadd.f32 0.0, %v5732
    %v5734 = vpop.f32.mrf.mxu0
    %5735 = vdwg.mxu0
    %v5737 = vsel %vm1106, %v5512, 0
    %5739 = vmatprep.subr.mxu0 0.0
    %5740 = vmatpush1.msra.mxu0 0.0
    %5741 = vmatprep.subr.mxu0 0.0
    %5742 = vmatpush1.msra.mxu0 0.0
    %5743 = vmatprep.subr.mxu0 0.0
    %5744 = vmatpush1.msra.mxu0 0.0
    %5745 = vmatprep.subr.mxu0 0.0
    %5746 = vmatpush1.msra.mxu0 0.0
    %5747 = vmatprep.subr.mxu0 0.0
    %5748 = vmatpush1.msra.mxu0 0.0
    %5749 = vmatprep.subr.mxu0 0.0
    %5750 = vmatpush1.msra.mxu0 0.0
    %5751 = vmatprep.subr.mxu0 0.0
    %5752 = vmatpush1.msra.mxu0 0.0
    %5753 = vmatprep.subr.mxu0 0.0
    %5754 = vmatpush1.msra.mxu0 0.0
    %5755 = vmatprep.subr.mxu0 0.0
    %5756 = vmatpush1.msra.mxu0 0.0
    %5757 = vmatprep.subr.mxu0 0.0
    %5758 = vmatpush1.msra.mxu0 0.0
    %5759 = vmatprep.subr.mxu0 0.0
    %5760 = vmatpush1.msra.mxu0 0.0
    %5761 = vmatprep.subr.mxu0 0.0
    %5762 = vmatpush1.msra.mxu0 0.0
    %5763 = vmatprep.subr.mxu0 0.0
    %5764 = vmatpush1.msra.mxu0 0.0
    %5765 = vmatprep.subr.mxu0 0.0
    %5766 = vmatpush1.msra.mxu0 0.0
    %5767 = vmatprep.subr.mxu0 0.0
    %5768 = vmatpush1.msra.mxu0 0.0
    %5769 = vmatprep.subr.mxu0 0.0
    %5770 = vmatpush1.msra.mxu0 %v4752
    %5771 = vmatprep.subr.mxu0 0.0
    %5772 = vmatpush2.msra.mxu0 0.0
    %5773 = vmatprep.subr.mxu0 0.0
    %5774 = vmatpush2.msra.mxu0 0.0
    %5775 = vmatprep.subr.mxu0 0.0
    %5776 = vmatpush2.msra.mxu0 0.0
    %5777 = vmatprep.subr.mxu0 0.0
    %5778 = vmatpush2.msra.mxu0 0.0
    %5779 = vmatprep.subr.mxu0 0.0
    %5780 = vmatpush2.msra.mxu0 0.0
    %5781 = vmatprep.subr.mxu0 0.0
    %5782 = vmatpush2.msra.mxu0 0.0
    %5783 = vmatprep.subr.mxu0 0.0
    %5784 = vmatpush2.msra.mxu0 0.0
    %5785 = vmatprep.subr.mxu0 0.0
    %5786 = vmatpush2.msra.mxu0 0.0
    %5787 = vmatprep.subr.mxu0 0.0
    %5788 = vmatpush2.msra.mxu0 0.0
    %5789 = vmatprep.subr.mxu0 0.0
    %5790 = vmatpush2.msra.mxu0 0.0
    %5791 = vmatprep.subr.mxu0 0.0
    %5792 = vmatpush2.msra.mxu0 0.0
    %5793 = vmatprep.subr.mxu0 0.0
    %5794 = vmatpush2.msra.mxu0 0.0
    %5795 = vmatprep.subr.mxu0 0.0
    %5796 = vmatpush2.msra.mxu0 0.0
    %5797 = vmatprep.subr.mxu0 0.0
    %5798 = vmatpush2.msra.mxu0 0.0
    %5799 = vmatprep.subr.mxu0 0.0
    %5800 = vmatpush2.msra.mxu0 0.0
    %5801 = vmatprep.subr.mxu0 0.0
    %5802 = vmatpush2.msra.mxu0 0.0
    %5803 = vmatprep.mubr.f32.mxu0 0.0
    %5804 = vmatmul.mubr.f32.gmra.mxu0 %v5737
    %v5805 = vpop.f32.mrf.mxu0
    %v5806 = vadd.f32 0.0, %v5805
    %v5807 = vpop.f32.mrf.mxu0
    %5808 = vdwg.mxu0
    %v5810 = vsel %vm1106, %v5513, 0
    %5812 = vmatprep.subr.mxu0 0.0
    %5813 = vmatpush1.msra.mxu0 0.0
    %5814 = vmatprep.subr.mxu0 0.0
    %5815 = vmatpush1.msra.mxu0 0.0
    %5816 = vmatprep.subr.mxu0 0.0
    %5817 = vmatpush1.msra.mxu0 0.0
    %5818 = vmatprep.subr.mxu0 0.0
    %5819 = vmatpush1.msra.mxu0 0.0
    %5820 = vmatprep.subr.mxu0 0.0
    %5821 = vmatpush1.msra.mxu0 0.0
    %5822 = vmatprep.subr.mxu0 0.0
    %5823 = vmatpush1.msra.mxu0 0.0
    %5824 = vmatprep.subr.mxu0 0.0
    %5825 = vmatpush1.msra.mxu0 0.0
    %5826 = vmatprep.subr.mxu0 0.0
    %5827 = vmatpush1.msra.mxu0 0.0
    %5828 = vmatprep.subr.mxu0 0.0
    %5829 = vmatpush1.msra.mxu0 0.0
    %5830 = vmatprep.subr.mxu0 0.0
    %5831 = vmatpush1.msra.mxu0 0.0
    %5832 = vmatprep.subr.mxu0 0.0
    %5833 = vmatpush1.msra.mxu0 0.0
    %5834 = vmatprep.subr.mxu0 0.0
    %5835 = vmatpush1.msra.mxu0 0.0
    %5836 = vmatprep.subr.mxu0 0.0
    %5837 = vmatpush1.msra.mxu0 0.0
    %5838 = vmatprep.subr.mxu0 0.0
    %5839 = vmatpush1.msra.mxu0 0.0
    %5840 = vmatprep.subr.mxu0 0.0
    %5841 = vmatpush1.msra.mxu0 0.0
    %5842 = vmatprep.subr.mxu0 0.0
    %5843 = vmatpush1.msra.mxu0 %v4817
    %5844 = vmatprep.subr.mxu0 0.0
    %5845 = vmatpush2.msra.mxu0 0.0
    %5846 = vmatprep.subr.mxu0 0.0
    %5847 = vmatpush2.msra.mxu0 0.0
    %5848 = vmatprep.subr.mxu0 0.0
    %5849 = vmatpush2.msra.mxu0 0.0
    %5850 = vmatprep.subr.mxu0 0.0
    %5851 = vmatpush2.msra.mxu0 0.0
    %5852 = vmatprep.subr.mxu0 0.0
    %5853 = vmatpush2.msra.mxu0 0.0
    %5854 = vmatprep.subr.mxu0 0.0
    %5855 = vmatpush2.msra.mxu0 0.0
    %5856 = vmatprep.subr.mxu0 0.0
    %5857 = vmatpush2.msra.mxu0 0.0
    %5858 = vmatprep.subr.mxu0 0.0
    %5859 = vmatpush2.msra.mxu0 0.0
    %5860 = vmatprep.subr.mxu0 0.0
    %5861 = vmatpush2.msra.mxu0 0.0
    %5862 = vmatprep.subr.mxu0 0.0
    %5863 = vmatpush2.msra.mxu0 0.0
    %5864 = vmatprep.subr.mxu0 0.0
    %5865 = vmatpush2.msra.mxu0 0.0
    %5866 = vmatprep.subr.mxu0 0.0
    %5867 = vmatpush2.msra.mxu0 0.0
    %5868 = vmatprep.subr.mxu0 0.0
    %5869 = vmatpush2.msra.mxu0 0.0
    %5870 = vmatprep.subr.mxu0 0.0
    %5871 = vmatpush2.msra.mxu0 0.0
    %5872 = vmatprep.subr.mxu0 0.0
    %5873 = vmatpush2.msra.mxu0 0.0
    %5874 = vmatprep.subr.mxu0 0.0
    %5875 = vmatpush2.msra.mxu0 0.0
    %5876 = vmatprep.mubr.f32.mxu0 0.0
    %5877 = vmatmul.mubr.f32.gmra.mxu0 %v5810
    %v5878 = vpop.f32.mrf.mxu0
    %v5879 = vadd.f32 0.0, %v5878
    %v5880 = vpop.f32.mrf.mxu0
    %5881 = vdwg.mxu0
    %v5883 = vsel %vm1106, %v5514, 0
    %5885 = vmatprep.subr.mxu0 0.0
    %5886 = vmatpush1.msra.mxu0 0.0
    %5887 = vmatprep.subr.mxu0 0.0
    %5888 = vmatpush1.msra.mxu0 0.0
    %5889 = vmatprep.subr.mxu0 0.0
    %5890 = vmatpush1.msra.mxu0 0.0
    %5891 = vmatprep.subr.mxu0 0.0
    %5892 = vmatpush1.msra.mxu0 0.0
    %5893 = vmatprep.subr.mxu0 0.0
    %5894 = vmatpush1.msra.mxu0 0.0
    %5895 = vmatprep.subr.mxu0 0.0
    %5896 = vmatpush1.msra.mxu0 0.0
    %5897 = vmatprep.subr.mxu0 0.0
    %5898 = vmatpush1.msra.mxu0 0.0
    %5899 = vmatprep.subr.mxu0 0.0
    %5900 = vmatpush1.msra.mxu0 0.0
    %5901 = vmatprep.subr.mxu0 0.0
    %5902 = vmatpush1.msra.mxu0 0.0
    %5903 = vmatprep.subr.mxu0 0.0
    %5904 = vmatpush1.msra.mxu0 0.0
    %5905 = vmatprep.subr.mxu0 0.0
    %5906 = vmatpush1.msra.mxu0 0.0
    %5907 = vmatprep.subr.mxu0 0.0
    %5908 = vmatpush1.msra.mxu0 0.0
    %5909 = vmatprep.subr.mxu0 0.0
    %5910 = vmatpush1.msra.mxu0 0.0
    %5911 = vmatprep.subr.mxu0 0.0
    %5912 = vmatpush1.msra.mxu0 0.0
    %5913 = vmatprep.subr.mxu0 0.0
    %5914 = vmatpush1.msra.mxu0 0.0
    %5915 = vmatprep.subr.mxu0 0.0
    %5916 = vmatpush1.msra.mxu0 %v4818
    %5917 = vmatprep.subr.mxu0 0.0
    %5918 = vmatpush2.msra.mxu0 0.0
    %5919 = vmatprep.subr.mxu0 0.0
    %5920 = vmatpush2.msra.mxu0 0.0
    %5921 = vmatprep.subr.mxu0 0.0
    %5922 = vmatpush2.msra.mxu0 0.0
    %5923 = vmatprep.subr.mxu0 0.0
    %5924 = vmatpush2.msra.mxu0 0.0
    %5925 = vmatprep.subr.mxu0 0.0
    %5926 = vmatpush2.msra.mxu0 0.0
    %5927 = vmatprep.subr.mxu0 0.0
    %5928 = vmatpush2.msra.mxu0 0.0
    %5929 = vmatprep.subr.mxu0 0.0
    %5930 = vmatpush2.msra.mxu0 0.0
    %5931 = vmatprep.subr.mxu0 0.0
    %5932 = vmatpush2.msra.mxu0 0.0
    %5933 = vmatprep.subr.mxu0 0.0
    %5934 = vmatpush2.msra.mxu0 0.0
    %5935 = vmatprep.subr.mxu0 0.0
    %5936 = vmatpush2.msra.mxu0 0.0
    %5937 = vmatprep.subr.mxu0 0.0
    %5938 = vmatpush2.msra.mxu0 0.0
    %5939 = vmatprep.subr.mxu0 0.0
    %5940 = vmatpush2.msra.mxu0 0.0
    %5941 = vmatprep.subr.mxu0 0.0
    %5942 = vmatpush2.msra.mxu0 0.0
    %5943 = vmatprep.subr.mxu0 0.0
    %5944 = vmatpush2.msra.mxu0 0.0
    %5945 = vmatprep.subr.mxu0 0.0
    %5946 = vmatpush2.msra.mxu0 0.0
    %5947 = vmatprep.subr.mxu0 0.0
    %5948 = vmatpush2.msra.mxu0 0.0
    %5949 = vmatprep.mubr.f32.mxu0 0.0
    %5950 = vmatmul.mubr.f32.gmra.mxu0 %v5883
    %v5951 = vpop.f32.mrf.mxu0
    %v5952 = vadd.f32 0.0, %v5951
    %v5953 = vpop.f32.mrf.mxu0
    %5954 = vdwg.mxu0
    %v5956 = vsel %vm1106, %v5515, 0
    %5958 = vmatprep.subr.mxu0 0.0
    %5959 = vmatpush1.msra.mxu0 0.0
    %5960 = vmatprep.subr.mxu0 0.0
    %5961 = vmatpush1.msra.mxu0 0.0
    %5962 = vmatprep.subr.mxu0 0.0
    %5963 = vmatpush1.msra.mxu0 0.0
    %5964 = vmatprep.subr.mxu0 0.0
    %5965 = vmatpush1.msra.mxu0 0.0
    %5966 = vmatprep.subr.mxu0 0.0
    %5967 = vmatpush1.msra.mxu0 0.0
    %5968 = vmatprep.subr.mxu0 0.0
    %5969 = vmatpush1.msra.mxu0 0.0
    %5970 = vmatprep.subr.mxu0 0.0
    %5971 = vmatpush1.msra.mxu0 0.0
    %5972 = vmatprep.subr.mxu0 0.0
    %5973 = vmatpush1.msra.mxu0 0.0
    %5974 = vmatprep.subr.mxu0 0.0
    %5975 = vmatpush1.msra.mxu0 0.0
    %5976 = vmatprep.subr.mxu0 0.0
    %5977 = vmatpush1.msra.mxu0 0.0
    %5978 = vmatprep.subr.mxu0 0.0
    %5979 = vmatpush1.msra.mxu0 0.0
    %5980 = vmatprep.subr.mxu0 0.0
    %5981 = vmatpush1.msra.mxu0 0.0
    %5982 = vmatprep.subr.mxu0 0.0
    %5983 = vmatpush1.msra.mxu0 0.0
    %5984 = vmatprep.subr.mxu0 0.0
    %5985 = vmatpush1.msra.mxu0 0.0
    %5986 = vmatprep.subr.mxu0 0.0
    %5987 = vmatpush1.msra.mxu0 0.0
    %5988 = vmatprep.subr.mxu0 0.0
    %5989 = vmatpush1.msra.mxu0 %v4819
    %5990 = vmatprep.subr.mxu0 0.0
    %5991 = vmatpush2.msra.mxu0 0.0
    %5992 = vmatprep.subr.mxu0 0.0
    %5993 = vmatpush2.msra.mxu0 0.0
    %5994 = vmatprep.subr.mxu0 0.0
    %5995 = vmatpush2.msra.mxu0 0.0
    %5996 = vmatprep.subr.mxu0 0.0
    %5997 = vmatpush2.msra.mxu0 0.0
    %5998 = vmatprep.subr.mxu0 0.0
    %5999 = vmatpush2.msra.mxu0 0.0
    %6000 = vmatprep.subr.mxu0 0.0
    %6001 = vmatpush2.msra.mxu0 0.0
    %6002 = vmatprep.subr.mxu0 0.0
    %6003 = vmatpush2.msra.mxu0 0.0
    %6004 = vmatprep.subr.mxu0 0.0
    %6005 = vmatpush2.msra.mxu0 0.0
    %6006 = vmatprep.subr.mxu0 0.0
    %6007 = vmatpush2.msra.mxu0 0.0
    %6008 = vmatprep.subr.mxu0 0.0
    %6009 = vmatpush2.msra.mxu0 0.0
    %6010 = vmatprep.subr.mxu0 0.0
    %6011 = vmatpush2.msra.mxu0 0.0
    %6012 = vmatprep.subr.mxu0 0.0
    %6013 = vmatpush2.msra.mxu0 0.0
    %6014 = vmatprep.subr.mxu0 0.0
    %6015 = vmatpush2.msra.mxu0 0.0
    %6016 = vmatprep.subr.mxu0 0.0
    %6017 = vmatpush2.msra.mxu0 0.0
    %6018 = vmatprep.subr.mxu0 0.0
    %6019 = vmatpush2.msra.mxu0 0.0
    %6020 = vmatprep.subr.mxu0 0.0
    %6021 = vmatpush2.msra.mxu0 0.0
    %6022 = vmatprep.mubr.f32.mxu0 0.0
    %6023 = vmatmul.mubr.f32.gmra.mxu0 %v5956
    %v6024 = vpop.f32.mrf.mxu0
    %v6025 = vadd.f32 0.0, %v6024
    %v6026 = vpop.f32.mrf.mxu0
    %6027 = vdwg.mxu0
    %v6029 = vsel %vm1106, %v5516, 0
    %6031 = vmatprep.subr.mxu0 0.0
    %6032 = vmatpush1.msra.mxu0 0.0
    %6033 = vmatprep.subr.mxu0 0.0
    %6034 = vmatpush1.msra.mxu0 0.0
    %6035 = vmatprep.subr.mxu0 0.0
    %6036 = vmatpush1.msra.mxu0 0.0
    %6037 = vmatprep.subr.mxu0 0.0
    %6038 = vmatpush1.msra.mxu0 0.0
    %6039 = vmatprep.subr.mxu0 0.0
    %6040 = vmatpush1.msra.mxu0 0.0
    %6041 = vmatprep.subr.mxu0 0.0
    %6042 = vmatpush1.msra.mxu0 0.0
    %6043 = vmatprep.subr.mxu0 0.0
    %6044 = vmatpush1.msra.mxu0 0.0
    %6045 = vmatprep.subr.mxu0 0.0
    %6046 = vmatpush1.msra.mxu0 0.0
    %6047 = vmatprep.subr.mxu0 0.0
    %6048 = vmatpush1.msra.mxu0 0.0
    %6049 = vmatprep.subr.mxu0 0.0
    %6050 = vmatpush1.msra.mxu0 0.0
    %6051 = vmatprep.subr.mxu0 0.0
    %6052 = vmatpush1.msra.mxu0 0.0
    %6053 = vmatprep.subr.mxu0 0.0
    %6054 = vmatpush1.msra.mxu0 0.0
    %6055 = vmatprep.subr.mxu0 0.0
    %6056 = vmatpush1.msra.mxu0 0.0
    %6057 = vmatprep.subr.mxu0 0.0
    %6058 = vmatpush1.msra.mxu0 0.0
    %6059 = vmatprep.subr.mxu0 0.0
    %6060 = vmatpush1.msra.mxu0 0.0
    %6061 = vmatprep.subr.mxu0 0.0
    %6062 = vmatpush1.msra.mxu0 %v4820
    %6063 = vmatprep.subr.mxu0 0.0
    %6064 = vmatpush2.msra.mxu0 0.0
    %6065 = vmatprep.subr.mxu0 0.0
    %6066 = vmatpush2.msra.mxu0 0.0
    %6067 = vmatprep.subr.mxu0 0.0
    %6068 = vmatpush2.msra.mxu0 0.0
    %6069 = vmatprep.subr.mxu0 0.0
    %6070 = vmatpush2.msra.mxu0 0.0
    %6071 = vmatprep.subr.mxu0 0.0
    %6072 = vmatpush2.msra.mxu0 0.0
    %6073 = vmatprep.subr.mxu0 0.0
    %6074 = vmatpush2.msra.mxu0 0.0
    %6075 = vmatprep.subr.mxu0 0.0
    %6076 = vmatpush2.msra.mxu0 0.0
    %6077 = vmatprep.subr.mxu0 0.0
    %6078 = vmatpush2.msra.mxu0 0.0
    %6079 = vmatprep.subr.mxu0 0.0
    %6080 = vmatpush2.msra.mxu0 0.0
    %6081 = vmatprep.subr.mxu0 0.0
    %6082 = vmatpush2.msra.mxu0 0.0
    %6083 = vmatprep.subr.mxu0 0.0
    %6084 = vmatpush2.msra.mxu0 0.0
    %6085 = vmatprep.subr.mxu0 0.0
    %6086 = vmatpush2.msra.mxu0 0.0
    %6087 = vmatprep.subr.mxu0 0.0
    %6088 = vmatpush2.msra.mxu0 0.0
    %6089 = vmatprep.subr.mxu0 0.0
    %6090 = vmatpush2.msra.mxu0 0.0
    %6091 = vmatprep.subr.mxu0 0.0
    %6092 = vmatpush2.msra.mxu0 0.0
    %6093 = vmatprep.subr.mxu0 0.0
    %6094 = vmatpush2.msra.mxu0 0.0
    %6095 = vmatprep.mubr.f32.mxu0 0.0
    %6096 = vmatmul.mubr.f32.gmra.mxu0 %v6029
    %v6097 = vpop.f32.mrf.mxu0
    %v6098 = vadd.f32 0.0, %v6097
    %v6099 = vpop.f32.mrf.mxu0
    %6100 = vdwg.mxu0
    %v6101 = vcombine.low %v5587, %v5733
    %v6102 = vcombine.high %v5587, %v5733
    %v6104 = vunpack.c.l.s4 1983009808
    %v6105 = vunpack.c.0.s8 %v6104
    %v6106 = vlaneseq
    %v6107 = vshrl.u32 %v6106, 7
    %v6108 = vsub.s32 %v6105, %v6107
    %v6109 = vrot.slane %v6101, %v6108
    %v6111 = vunpack.c.l.s4 1983009808
    %v6112 = vunpack.c.0.s8 %v6111
    %v6113 = vlaneseq
    %v6114 = vshrl.u32 %v6113, 7
    %v6115 = vsub.s32 %v6112, %v6114
    %v6116 = vrot.slane %v6102, %v6115
    %v6117 = vcombine.low %v5660, %v5806
    %v6118 = vcombine.high %v5660, %v5806
    %v6120 = vunpack.c.l.s4 1983009808
    %v6121 = vunpack.c.0.s8 %v6120
    %v6122 = vlaneseq
    %v6123 = vshrl.u32 %v6122, 7
    %v6124 = vsub.s32 %v6121, %v6123
    %v6125 = vrot.slane %v6117, %v6124
    %v6127 = vunpack.c.l.s4 1983009808
    %v6128 = vunpack.c.0.s8 %v6127
    %v6129 = vlaneseq
    %v6130 = vshrl.u32 %v6129, 7
    %v6131 = vsub.s32 %v6128, %v6130
    %v6132 = vrot.slane %v6118, %v6131
    %v6133 = vcombine.low %v6109, %v6125
    %v6134 = vcombine.high %v6109, %v6125
    %v6136 = vunpack.c.l.s4 1934713408
    %v6137 = vunpack.c.0.s8 %v6136
    %v6138 = vlaneseq
    %v6139 = vshrl.u32 %v6138, 7
    %v6140 = vsub.s32 %v6137, %v6139
    %v6141 = vrot.slane %v6133, %v6140
    %v6143 = vunpack.c.l.s4 1934713408
    %v6144 = vunpack.c.0.s8 %v6143
    %v6145 = vlaneseq
    %v6146 = vshrl.u32 %v6145, 7
    %v6147 = vsub.s32 %v6144, %v6146
    %v6148 = vrot.slane %v6134, %v6147
    %v6149 = vcombine.low %v6116, %v6132
    %v6150 = vcombine.high %v6116, %v6132
    %v6152 = vunpack.c.l.s4 1934713408
    %v6153 = vunpack.c.0.s8 %v6152
    %v6154 = vlaneseq
    %v6155 = vshrl.u32 %v6154, 7
    %v6156 = vsub.s32 %v6153, %v6155
    %v6157 = vrot.slane %v6149, %v6156
    %v6159 = vunpack.c.l.s4 1934713408
    %v6160 = vunpack.c.0.s8 %v6159
    %v6161 = vlaneseq
    %v6162 = vshrl.u32 %v6161, 7
    %v6163 = vsub.s32 %v6160, %v6162
    %v6164 = vrot.slane %v6150, %v6163
    %v6165 = vcombine.high %v6141, 0.0
    %v6166 = vcombine.high %v6148, 0.0
    %v6167 = vcombine.high %v6157, 0.0
    %v6168 = vcombine.high %v6164, 0.0
    %v6169 = vcombine.low %v5879, %v6025
    %v6170 = vcombine.high %v5879, %v6025
    %v6172 = vunpack.c.l.s4 1983009808
    %v6173 = vunpack.c.0.s8 %v6172
    %v6174 = vlaneseq
    %v6175 = vshrl.u32 %v6174, 7
    %v6176 = vsub.s32 %v6173, %v6175
    %v6177 = vrot.slane %v6169, %v6176
    %v6179 = vunpack.c.l.s4 1983009808
    %v6180 = vunpack.c.0.s8 %v6179
    %v6181 = vlaneseq
    %v6182 = vshrl.u32 %v6181, 7
    %v6183 = vsub.s32 %v6180, %v6182
    %v6184 = vrot.slane %v6170, %v6183
    %v6185 = vcombine.low %v5952, %v6098
    %v6186 = vcombine.high %v5952, %v6098
    %v6188 = vunpack.c.l.s4 1983009808
    %v6189 = vunpack.c.0.s8 %v6188
    %v6190 = vlaneseq
    %v6191 = vshrl.u32 %v6190, 7
    %v6192 = vsub.s32 %v6189, %v6191
    %v6193 = vrot.slane %v6185, %v6192
    %v6195 = vunpack.c.l.s4 1983009808
    %v6196 = vunpack.c.0.s8 %v6195
    %v6197 = vlaneseq
    %v6198 = vshrl.u32 %v6197, 7
    %v6199 = vsub.s32 %v6196, %v6198
    %v6200 = vrot.slane %v6186, %v6199
    %v6201 = vcombine.low %v6177, %v6193
    %v6202 = vcombine.high %v6177, %v6193
    %v6204 = vunpack.c.l.s4 1934713408
    %v6205 = vunpack.c.0.s8 %v6204
    %v6206 = vlaneseq
    %v6207 = vshrl.u32 %v6206, 7
    %v6208 = vsub.s32 %v6205, %v6207
    %v6209 = vrot.slane %v6201, %v6208
    %v6211 = vunpack.c.l.s4 1934713408
    %v6212 = vunpack.c.0.s8 %v6211
    %v6213 = vlaneseq
    %v6214 = vshrl.u32 %v6213, 7
    %v6215 = vsub.s32 %v6212, %v6214
    %v6216 = vrot.slane %v6202, %v6215
    %v6217 = vcombine.low %v6184, %v6200
    %v6218 = vcombine.high %v6184, %v6200
    %v6220 = vunpack.c.l.s4 1934713408
    %v6221 = vunpack.c.0.s8 %v6220
    %v6222 = vlaneseq
    %v6223 = vshrl.u32 %v6222, 7
    %v6224 = vsub.s32 %v6221, %v6223
    %v6225 = vrot.slane %v6217, %v6224
    %v6227 = vunpack.c.l.s4 1934713408
    %v6228 = vunpack.c.0.s8 %v6227
    %v6229 = vlaneseq
    %v6230 = vshrl.u32 %v6229, 7
    %v6231 = vsub.s32 %v6228, %v6230
    %v6232 = vrot.slane %v6218, %v6231
    %v6233 = vcombine.high %v6209, 0.0
    %v6234 = vcombine.high %v6216, 0.0
    %v6235 = vcombine.high %v6225, 0.0
    %v6236 = vcombine.high %v6232, 0.0
    %v6237 = vcombine.low %v6141, %v6165
    %v6239 = vunpack.c.l.s4 1983009808
    %v6240 = vunpack.c.0.s8 %v6239
    %v6241 = vlaneseq
    %v6242 = vshrl.u32 %v6241, 7
    %v6243 = vsub.s32 %v6240, %v6242
    %v6244 = vrot.slane %v6237, %v6243
    %v6245 = vcombine.low %v6209, %v6233
    %v6247 = vunpack.c.l.s4 1983009808
    %v6248 = vunpack.c.0.s8 %v6247
    %v6249 = vlaneseq
    %v6250 = vshrl.u32 %v6249, 7
    %v6251 = vsub.s32 %v6248, %v6250
    %v6252 = vrot.slane %v6245, %v6251
    %v6253 = vcombine.low %v6148, %v6166
    %v6255 = vunpack.c.l.s4 1983009808
    %v6256 = vunpack.c.0.s8 %v6255
    %v6257 = vlaneseq
    %v6258 = vshrl.u32 %v6257, 7
    %v6259 = vsub.s32 %v6256, %v6258
    %v6260 = vrot.slane %v6253, %v6259
    %v6261 = vcombine.low %v6216, %v6234
    %v6263 = vunpack.c.l.s4 1983009808
    %v6264 = vunpack.c.0.s8 %v6263
    %v6265 = vlaneseq
    %v6266 = vshrl.u32 %v6265, 7
    %v6267 = vsub.s32 %v6264, %v6266
    %v6268 = vrot.slane %v6261, %v6267
    %v6269 = vcombine.low %v6244, %v6252
    %v6270 = vcombine.high %v6244, %v6252
    %v6272 = vunpack.c.l.s4 1934713408
    %v6273 = vunpack.c.0.s8 %v6272
    %v6274 = vlaneseq
    %v6275 = vshrl.u32 %v6274, 7
    %v6276 = vsub.s32 %v6273, %v6275
    %v6277 = vrot.slane %v6269, %v6276
    %v6279 = vunpack.c.l.s4 1934713408
    %v6280 = vunpack.c.0.s8 %v6279
    %v6281 = vlaneseq
    %v6282 = vshrl.u32 %v6281, 7
    %v6283 = vsub.s32 %v6280, %v6282
    %v6284 = vrot.slane %v6270, %v6283
    %v6285 = vcombine.low %v6260, %v6268
    %v6286 = vcombine.high %v6260, %v6268
    %v6288 = vunpack.c.l.s4 1934713408
    %v6289 = vunpack.c.0.s8 %v6288
    %v6290 = vlaneseq
    %v6291 = vshrl.u32 %v6290, 7
    %v6292 = vsub.s32 %v6289, %v6291
    %v6293 = vrot.slane %v6285, %v6292
    %v6295 = vunpack.c.l.s4 1934713408
    %v6296 = vunpack.c.0.s8 %v6295
    %v6297 = vlaneseq
    %v6298 = vshrl.u32 %v6297, 7
    %v6299 = vsub.s32 %v6296, %v6298
    %v6300 = vrot.slane %v6286, %v6299
    %v6301 = vcombine.low %v6277, %v6293
    %v6302 = vcombine.high %v6277, %v6293
    %v6303 = vcombine.low %v6284, %v6300
    %v6304 = vcombine.high %v6284, %v6300
    %v6305 = vcombine.low %v6157, %v6167
    %v6307 = vunpack.c.l.s4 1983009808
    %v6308 = vunpack.c.0.s8 %v6307
    %v6309 = vlaneseq
    %v6310 = vshrl.u32 %v6309, 7
    %v6311 = vsub.s32 %v6308, %v6310
    %v6312 = vrot.slane %v6305, %v6311
    %v6313 = vcombine.low %v6225, %v6235
    %v6315 = vunpack.c.l.s4 1983009808
    %v6316 = vunpack.c.0.s8 %v6315
    %v6317 = vlaneseq
    %v6318 = vshrl.u32 %v6317, 7
    %v6319 = vsub.s32 %v6316, %v6318
    %v6320 = vrot.slane %v6313, %v6319
    %v6321 = vcombine.low %v6164, %v6168
    %v6323 = vunpack.c.l.s4 1983009808
    %v6324 = vunpack.c.0.s8 %v6323
    %v6325 = vlaneseq
    %v6326 = vshrl.u32 %v6325, 7
    %v6327 = vsub.s32 %v6324, %v6326
    %v6328 = vrot.slane %v6321, %v6327
    %v6329 = vcombine.low %v6232, %v6236
    %v6331 = vunpack.c.l.s4 1983009808
    %v6332 = vunpack.c.0.s8 %v6331
    %v6333 = vlaneseq
    %v6334 = vshrl.u32 %v6333, 7
    %v6335 = vsub.s32 %v6332, %v6334
    %v6336 = vrot.slane %v6329, %v6335
    %v6337 = vcombine.low %v6312, %v6320
    %v6338 = vcombine.high %v6312, %v6320
    %v6340 = vunpack.c.l.s4 1934713408
    %v6341 = vunpack.c.0.s8 %v6340
    %v6342 = vlaneseq
    %v6343 = vshrl.u32 %v6342, 7
    %v6344 = vsub.s32 %v6341, %v6343
    %v6345 = vrot.slane %v6337, %v6344
    %v6347 = vunpack.c.l.s4 1934713408
    %v6348 = vunpack.c.0.s8 %v6347
    %v6349 = vlaneseq
    %v6350 = vshrl.u32 %v6349, 7
    %v6351 = vsub.s32 %v6348, %v6350
    %v6352 = vrot.slane %v6338, %v6351
    %v6353 = vcombine.low %v6328, %v6336
    %v6354 = vcombine.high %v6328, %v6336
    %v6356 = vunpack.c.l.s4 1934713408
    %v6357 = vunpack.c.0.s8 %v6356
    %v6358 = vlaneseq
    %v6359 = vshrl.u32 %v6358, 7
    %v6360 = vsub.s32 %v6357, %v6359
    %v6361 = vrot.slane %v6353, %v6360
    %v6363 = vunpack.c.l.s4 1934713408
    %v6364 = vunpack.c.0.s8 %v6363
    %v6365 = vlaneseq
    %v6366 = vshrl.u32 %v6365, 7
    %v6367 = vsub.s32 %v6364, %v6366
    %v6368 = vrot.slane %v6354, %v6367
    %v6369 = vcombine.low %v6345, %v6361
    %v6370 = vcombine.high %v6345, %v6361
    %v6371 = vcombine.low %v6352, %v6368
    %v6372 = vcombine.high %v6352, %v6368
    %6375 = vrot.lane.b32.xlu0 %v6302, 8
    %v6376 = vpop.permute.xlu0 %6375
    %6377 = vrot.lane.b32.xlu0 %v6370, 8
    %v6378 = vpop.permute.xlu0 %6377
    %6383 = vrot.lane.b32.xlu0 %v6303, 16
    %v6384 = vpop.permute.xlu0 %6383
    %6385 = vrot.lane.b32.xlu0 %v6371, 16
    %v6386 = vpop.permute.xlu0 %6385
    %6391 = vrot.lane.b32.xlu0 %v6304, 24
    %v6392 = vpop.permute.xlu0 %6391
    %6393 = vrot.lane.b32.xlu0 %v6372, 24
    %v6394 = vpop.permute.xlu0 %6393
    %v6397 = vsel %vm1106, %v6301, %v6376
    %v6398 = vsel %vm1106, %v6369, %v6378
    %v6399 = vsel %vm2685, %v6397, %v6384
    %v6400 = vsel %vm2685, %v6398, %v6386
    %v6401 = vsel %vm2688, %v6399, %v6392
    %v6402 = vsel %vm2688, %v6400, %v6394
    %s6403 = scalar_lea.vmem %s3, 32
    %v6404 = vld [vmem:[%s6403] sm:$0xff]
    %v6405 = vld [vmem:[%s6403 + $0x8] sm:$0xff]
    %v6406 = vld [vmem:[%s6403 + $0x10] sm:$0xff]
    %v6407 = vld [vmem:[%s6403 + $0x18] sm:$0xff]
    %s6408 = scalar_lea.vmem %s4, 1
    %v6409 = vld [vmem:[%s6408] sm:$0x1]
    %v6411 = vlaneseq
    %v6412 = vshrl.u32 %v6411, 7
    %v6413 = vsub.s32 0, %v6412
    %v6414 = vrot.slane %v6409, %v6413
    %v6417 = vsel %vm126, %v6401, 0
    %v6420 = vsel %vm126, %v6402, 0
    %6422 = vmatprep.subr.mxu0 0.0
    %6423 = vmatpush1.msra.mxu0 0.0
    %6424 = vmatprep.subr.mxu0 0.0
    %6425 = vmatpush1.msra.mxu0 0.0
    %6426 = vmatprep.subr.mxu0 0.0
    %6427 = vmatpush1.msra.mxu0 0.0
    %6428 = vmatprep.subr.mxu0 0.0
    %6429 = vmatpush1.msra.mxu0 0.0
    %6430 = vmatprep.subr.mxu0 0.0
    %6431 = vmatpush1.msra.mxu0 0.0
    %6432 = vmatprep.subr.mxu0 0.0
    %6433 = vmatpush1.msra.mxu0 0.0
    %6434 = vmatprep.subr.mxu0 0.0
    %6435 = vmatpush1.msra.mxu0 0.0
    %6436 = vmatprep.subr.mxu0 0.0
    %6437 = vmatpush1.msra.mxu0 0.0
    %6438 = vmatprep.subr.mxu0 0.0
    %6439 = vmatpush1.msra.mxu0 0.0
    %6440 = vmatprep.subr.mxu0 0.0
    %6441 = vmatpush1.msra.mxu0 0.0
    %6442 = vmatprep.subr.mxu0 0.0
    %6443 = vmatpush1.msra.mxu0 0.0
    %6444 = vmatprep.subr.mxu0 0.0
    %6445 = vmatpush1.msra.mxu0 0.0
    %6446 = vmatprep.subr.mxu0 0.0
    %6447 = vmatpush1.msra.mxu0 %v6407
    %6448 = vmatprep.subr.mxu0 0.0
    %6449 = vmatpush1.msra.mxu0 %v6406
    %6450 = vmatprep.subr.mxu0 0.0
    %6451 = vmatpush1.msra.mxu0 %v6405
    %6452 = vmatprep.subr.mxu0 0.0
    %6453 = vmatpush1.msra.mxu0 %v6404
    %6454 = vmatprep.subr.mxu0 0.0
    %6455 = vmatpush2.msra.mxu0 0.0
    %6456 = vmatprep.subr.mxu0 0.0
    %6457 = vmatpush2.msra.mxu0 0.0
    %6458 = vmatprep.subr.mxu0 0.0
    %6459 = vmatpush2.msra.mxu0 0.0
    %6460 = vmatprep.subr.mxu0 0.0
    %6461 = vmatpush2.msra.mxu0 0.0
    %6462 = vmatprep.subr.mxu0 0.0
    %6463 = vmatpush2.msra.mxu0 0.0
    %6464 = vmatprep.subr.mxu0 0.0
    %6465 = vmatpush2.msra.mxu0 0.0
    %6466 = vmatprep.subr.mxu0 0.0
    %6467 = vmatpush2.msra.mxu0 0.0
    %6468 = vmatprep.subr.mxu0 0.0
    %6469 = vmatpush2.msra.mxu0 0.0
    %6470 = vmatprep.subr.mxu0 0.0
    %6471 = vmatpush2.msra.mxu0 0.0
    %6472 = vmatprep.subr.mxu0 0.0
    %6473 = vmatpush2.msra.mxu0 0.0
    %6474 = vmatprep.subr.mxu0 0.0
    %6475 = vmatpush2.msra.mxu0 0.0
    %6476 = vmatprep.subr.mxu0 0.0
    %6477 = vmatpush2.msra.mxu0 0.0
    %6478 = vmatprep.subr.mxu0 0.0
    %6479 = vmatpush2.msra.mxu0 0.0
    %6480 = vmatprep.subr.mxu0 0.0
    %6481 = vmatpush2.msra.mxu0 0.0
    %6482 = vmatprep.subr.mxu0 0.0
    %6483 = vmatpush2.msra.mxu0 0.0
    %6484 = vmatprep.subr.mxu0 0.0
    %6485 = vmatpush2.msra.mxu0 0.0
    %6486 = vmatprep.mubr.f32.mxu0 0.0
    %6487 = vmatmul.mubr.f32.gmra.mxu0 %v6417
    %v6488 = vpop.f32.mrf.mxu0
    %v6489 = vadd.f32 %v6414, %v6488
    %v6490 = vpop.f32.mrf.mxu0
    %6491 = vmatprep.mubr.f32.mxu0 0.0
    %6492 = vmatmul.mubr.f32.gmra.mxu0 %v6420
    %v6493 = vpop.f32.mrf.mxu0
    %v6494 = vadd.f32 %v6414, %v6493
    %v6495 = vpop.f32.mrf.mxu0
    %6496 = vdwg.mxu0
    %v6499 = vcombine.high %v6489, %v6489
    %v6501 = vunpack.c.l.s4 1983009808
    %v6502 = vunpack.c.0.s8 %v6501
    %v6503 = vlaneseq
    %v6504 = vshrl.u32 %v6503, 7
    %v6505 = vsub.s32 %v6502, %v6504
    %v6506 = vrot.slane %v6489, %v6505
    %v6508 = vunpack.c.l.s4 1983009808
    %v6509 = vunpack.c.0.s8 %v6508
    %v6510 = vlaneseq
    %v6511 = vshrl.u32 %v6510, 7
    %v6512 = vsub.s32 %v6509, %v6511
    %v6513 = vrot.slane %v6499, %v6512
    %v6514 = vcombine.high %v6506, %v6506
    %v6515 = vcombine.high %v6513, %v6513
    %v6516 = vcombine.high %v6494, %v6494
    %v6518 = vunpack.c.l.s4 1983009808
    %v6519 = vunpack.c.0.s8 %v6518
    %v6520 = vlaneseq
    %v6521 = vshrl.u32 %v6520, 7
    %v6522 = vsub.s32 %v6519, %v6521
    %v6523 = vrot.slane %v6494, %v6522
    %v6525 = vunpack.c.l.s4 1983009808
    %v6526 = vunpack.c.0.s8 %v6525
    %v6527 = vlaneseq
    %v6528 = vshrl.u32 %v6527, 7
    %v6529 = vsub.s32 %v6526, %v6528
    %v6530 = vrot.slane %v6516, %v6529
    %v6531 = vcombine.high %v6523, %v6523
    %v6532 = vcombine.high %v6530, %v6530
    %v6541 = vadd.f32 %v3779, %v6506
    %v6542 = vadd.f32 %v3780, %v6514
    %v6543 = vadd.f32 %v3781, %v6513
    %v6544 = vadd.f32 %v3782, %v6515
    %v6545 = vadd.f32 %v3783, %v6523
    %v6546 = vadd.f32 %v3784, %v6531
    %v6547 = vadd.f32 %v3785, %v6530
    %v6548 = vadd.f32 %v3786, %v6532
    %s6549 = scalar_lea.vmem %s5, 1
    %v6550 = vld [vmem:[%s6549] sm:$0x1]
    %s6551 = scalar_lea.vmem %s6, 1
    %v6552 = vld [vmem:[%s6551] sm:$0x1]
    %v6561 = vcombine.low %v6541, %v6542
    %v6562 = vcombine.low %v6543, %v6544
    %v6564 = vunpack.c.l.s4 1983009808
    %v6565 = vunpack.c.0.s8 %v6564
    %v6566 = vlaneseq
    %v6567 = vshrl.u32 %v6566, 7
    %v6568 = vsub.s32 %v6565, %v6567
    %v6569 = vrot.slane %v6561, %v6568
    %v6571 = vunpack.c.l.s4 1983009808
    %v6572 = vunpack.c.0.s8 %v6571
    %v6573 = vlaneseq
    %v6574 = vshrl.u32 %v6573, 7
    %v6575 = vsub.s32 %v6572, %v6574
    %v6576 = vrot.slane %v6562, %v6575
    %v6577 = vcombine.low %v6569, %v6576
    %v6578 = vcombine.low %v6545, %v6546
    %v6579 = vcombine.low %v6547, %v6548
    %v6581 = vunpack.c.l.s4 1983009808
    %v6582 = vunpack.c.0.s8 %v6581
    %v6583 = vlaneseq
    %v6584 = vshrl.u32 %v6583, 7
    %v6585 = vsub.s32 %v6582, %v6584
    %v6586 = vrot.slane %v6578, %v6585
    %v6588 = vunpack.c.l.s4 1983009808
    %v6589 = vunpack.c.0.s8 %v6588
    %v6590 = vlaneseq
    %v6591 = vshrl.u32 %v6590, 7
    %v6592 = vsub.s32 %v6589, %v6591
    %v6593 = vrot.slane %v6579, %v6592
    %v6594 = vcombine.low %v6586, %v6593
    %v6597 = vsel %vm126, %v6577, 0.0
    %6598 = vadd.xlane.f32.xlu0 %v6597
    %v6599 = vpop.xlane.xlu0 %6598
    %v6600 = vsel %vm126, %v6594, 0.0
    %6601 = vadd.xlane.f32.xlu0 %v6600
    %v6602 = vpop.xlane.xlu0 %6601
    %v6603 = vmul.f32 %v6599, %v2887
    %v6604 = vmul.f32 %v6602, %v2887
    %v6608 = vunpack.c.l.s4 269488144
    %v6609 = vunpack.c.0.s8 %v6608
    %v6610 = vlaneseq
    %v6611 = vshrl.u32 %v6610, 7
    %v6612 = vsub.s32 %v6609, %v6611
    %v6613 = vrot.slane %v6603, %v6612
    %v6615 = vunpack.c.l.s4 842150450
    %v6616 = vunpack.c.0.s8 %v6615
    %v6617 = vlaneseq
    %v6618 = vshrl.u32 %v6617, 7
    %v6619 = vsub.s32 %v6616, %v6618
    %v6620 = vrot.slane %v6603, %v6619
    %v6622 = vunpack.c.l.s4 1414812756
    %v6623 = vunpack.c.0.s8 %v6622
    %v6624 = vlaneseq
    %v6625 = vshrl.u32 %v6624, 7
    %v6626 = vsub.s32 %v6623, %v6625
    %v6627 = vrot.slane %v6603, %v6626
    %v6629 = vunpack.c.l.s4 1987475062
    %v6630 = vunpack.c.0.s8 %v6629
    %v6631 = vlaneseq
    %v6632 = vshrl.u32 %v6631, 7
    %v6633 = vsub.s32 %v6630, %v6632
    %v6634 = vrot.slane %v6603, %v6633
    %v6636 = vunpack.c.l.s4 269488144
    %v6637 = vunpack.c.0.s8 %v6636
    %v6638 = vlaneseq
    %v6639 = vshrl.u32 %v6638, 7
    %v6640 = vsub.s32 %v6637, %v6639
    %v6641 = vrot.slane %v6604, %v6640
    %v6643 = vunpack.c.l.s4 842150450
    %v6644 = vunpack.c.0.s8 %v6643
    %v6645 = vlaneseq
    %v6646 = vshrl.u32 %v6645, 7
    %v6647 = vsub.s32 %v6644, %v6646
    %v6648 = vrot.slane %v6604, %v6647
    %v6650 = vunpack.c.l.s4 1414812756
    %v6651 = vunpack.c.0.s8 %v6650
    %v6652 = vlaneseq
    %v6653 = vshrl.u32 %v6652, 7
    %v6654 = vsub.s32 %v6651, %v6653
    %v6655 = vrot.slane %v6604, %v6654
    %v6657 = vunpack.c.l.s4 1987475062
    %v6658 = vunpack.c.0.s8 %v6657
    %v6659 = vlaneseq
    %v6660 = vshrl.u32 %v6659, 7
    %v6661 = vsub.s32 %v6658, %v6660
    %v6662 = vrot.slane %v6604, %v6661
    %v6671 = vsub.f32 %v6541, %v6613
    %v6672 = vsub.f32 %v6542, %v6620
    %v6673 = vsub.f32 %v6543, %v6627
    %v6674 = vsub.f32 %v6544, %v6634
    %v6675 = vsub.f32 %v6545, %v6641
    %v6676 = vsub.f32 %v6546, %v6648
    %v6677 = vsub.f32 %v6547, %v6655
    %v6678 = vsub.f32 %v6548, %v6662
    %v6679 = vmul.f32 %v6671, %v6671
    %v6680 = vmul.f32 %v6672, %v6672
    %v6681 = vmul.f32 %v6673, %v6673
    %v6682 = vmul.f32 %v6674, %v6674
    %v6683 = vmul.f32 %v6675, %v6675
    %v6684 = vmul.f32 %v6676, %v6676
    %v6685 = vmul.f32 %v6677, %v6677
    %v6686 = vmul.f32 %v6678, %v6678
    %v6695 = vcombine.low %v6679, %v6680
    %v6696 = vcombine.low %v6681, %v6682
    %v6698 = vunpack.c.l.s4 1983009808
    %v6699 = vunpack.c.0.s8 %v6698
    %v6700 = vlaneseq
    %v6701 = vshrl.u32 %v6700, 7
    %v6702 = vsub.s32 %v6699, %v6701
    %v6703 = vrot.slane %v6695, %v6702
    %v6705 = vunpack.c.l.s4 1983009808
    %v6706 = vunpack.c.0.s8 %v6705
    %v6707 = vlaneseq
    %v6708 = vshrl.u32 %v6707, 7
    %v6709 = vsub.s32 %v6706, %v6708
    %v6710 = vrot.slane %v6696, %v6709
    %v6711 = vcombine.low %v6703, %v6710
    %v6712 = vcombine.low %v6683, %v6684
    %v6713 = vcombine.low %v6685, %v6686
    %v6715 = vunpack.c.l.s4 1983009808
    %v6716 = vunpack.c.0.s8 %v6715
    %v6717 = vlaneseq
    %v6718 = vshrl.u32 %v6717, 7
    %v6719 = vsub.s32 %v6716, %v6718
    %v6720 = vrot.slane %v6712, %v6719
    %v6722 = vunpack.c.l.s4 1983009808
    %v6723 = vunpack.c.0.s8 %v6722
    %v6724 = vlaneseq
    %v6725 = vshrl.u32 %v6724, 7
    %v6726 = vsub.s32 %v6723, %v6725
    %v6727 = vrot.slane %v6713, %v6726
    %v6728 = vcombine.low %v6720, %v6727
    %v6731 = vsel %vm126, %v6711, 0.0
    %6732 = vadd.xlane.f32.xlu0 %v6731
    %v6733 = vpop.xlane.xlu0 %6732
    %v6734 = vsel %vm126, %v6728, 0.0
    %6735 = vadd.xlane.f32.xlu0 %v6734
    %v6736 = vpop.xlane.xlu0 %6735
    %v6737 = vmul.f32 %v6733, %v2887
    %v6738 = vmul.f32 %v6736, %v2887
    %v6739 = vadd.f32 %v6737, 1e-05
    %v6740 = vadd.f32 %v6738, 1e-05
    %v6741 = vrsqrt.pop %v6739
    %v6742 = vrsqrt.pop %v6740
    %v6746 = vunpack.c.l.s4 269488144
    %v6747 = vunpack.c.0.s8 %v6746
    %v6748 = vlaneseq
    %v6749 = vshrl.u32 %v6748, 7
    %v6750 = vsub.s32 %v6747, %v6749
    %v6751 = vrot.slane %v6741, %v6750
    %v6753 = vunpack.c.l.s4 842150450
    %v6754 = vunpack.c.0.s8 %v6753
    %v6755 = vlaneseq
    %v6756 = vshrl.u32 %v6755, 7
    %v6757 = vsub.s32 %v6754, %v6756
    %v6758 = vrot.slane %v6741, %v6757
    %v6760 = vunpack.c.l.s4 1414812756
    %v6761 = vunpack.c.0.s8 %v6760
    %v6762 = vlaneseq
    %v6763 = vshrl.u32 %v6762, 7
    %v6764 = vsub.s32 %v6761, %v6763
    %v6765 = vrot.slane %v6741, %v6764
    %v6767 = vunpack.c.l.s4 1987475062
    %v6768 = vunpack.c.0.s8 %v6767
    %v6769 = vlaneseq
    %v6770 = vshrl.u32 %v6769, 7
    %v6771 = vsub.s32 %v6768, %v6770
    %v6772 = vrot.slane %v6741, %v6771
    %v6774 = vunpack.c.l.s4 269488144
    %v6775 = vunpack.c.0.s8 %v6774
    %v6776 = vlaneseq
    %v6777 = vshrl.u32 %v6776, 7
    %v6778 = vsub.s32 %v6775, %v6777
    %v6779 = vrot.slane %v6742, %v6778
    %v6781 = vunpack.c.l.s4 842150450
    %v6782 = vunpack.c.0.s8 %v6781
    %v6783 = vlaneseq
    %v6784 = vshrl.u32 %v6783, 7
    %v6785 = vsub.s32 %v6782, %v6784
    %v6786 = vrot.slane %v6742, %v6785
    %v6788 = vunpack.c.l.s4 1414812756
    %v6789 = vunpack.c.0.s8 %v6788
    %v6790 = vlaneseq
    %v6791 = vshrl.u32 %v6790, 7
    %v6792 = vsub.s32 %v6789, %v6791
    %v6793 = vrot.slane %v6742, %v6792
    %v6795 = vunpack.c.l.s4 1987475062
    %v6796 = vunpack.c.0.s8 %v6795
    %v6797 = vlaneseq
    %v6798 = vshrl.u32 %v6797, 7
    %v6799 = vsub.s32 %v6796, %v6798
    %v6800 = vrot.slane %v6742, %v6799
    %v6809 = vmul.f32 %v6671, %v6751
    %v6810 = vmul.f32 %v6672, %v6758
    %v6811 = vmul.f32 %v6673, %v6765
    %v6812 = vmul.f32 %v6674, %v6772
    %v6813 = vmul.f32 %v6675, %v6779
    %v6814 = vmul.f32 %v6676, %v6786
    %v6815 = vmul.f32 %v6677, %v6793
    %v6816 = vmul.f32 %v6678, %v6800
    %v6818 = vlaneseq
    %v6819 = vshrl.u32 %v6818, 7
    %v6820 = vsub.s32 0, %v6819
    %v6821 = vrot.slane %v6550, %v6820
    %v6822 = vcombine.high %v6821, %v6821
    %v6824 = vunpack.c.l.s4 1983009808
    %v6825 = vunpack.c.0.s8 %v6824
    %v6826 = vlaneseq
    %v6827 = vshrl.u32 %v6826, 7
    %v6828 = vsub.s32 %v6825, %v6827
    %v6829 = vrot.slane %v6821, %v6828
    %v6831 = vunpack.c.l.s4 1983009808
    %v6832 = vunpack.c.0.s8 %v6831
    %v6833 = vlaneseq
    %v6834 = vshrl.u32 %v6833, 7
    %v6835 = vsub.s32 %v6832, %v6834
    %v6836 = vrot.slane %v6822, %v6835
    %v6837 = vcombine.high %v6829, %v6829
    %v6838 = vcombine.high %v6836, %v6836
    %v6843 = vmul.f32 %v6809, %v6829
    %v6844 = vmul.f32 %v6810, %v6837
    %v6845 = vmul.f32 %v6811, %v6836
    %v6846 = vmul.f32 %v6812, %v6838
    %v6847 = vmul.f32 %v6813, %v6829
    %v6848 = vmul.f32 %v6814, %v6837
    %v6849 = vmul.f32 %v6815, %v6836
    %v6850 = vmul.f32 %v6816, %v6838
    %v6852 = vlaneseq
    %v6853 = vshrl.u32 %v6852, 7
    %v6854 = vsub.s32 0, %v6853
    %v6855 = vrot.slane %v6552, %v6854
    %v6856 = vcombine.high %v6855, %v6855
    %v6858 = vunpack.c.l.s4 1983009808
    %v6859 = vunpack.c.0.s8 %v6858
    %v6860 = vlaneseq
    %v6861 = vshrl.u32 %v6860, 7
    %v6862 = vsub.s32 %v6859, %v6861
    %v6863 = vrot.slane %v6855, %v6862
    %v6865 = vunpack.c.l.s4 1983009808
    %v6866 = vunpack.c.0.s8 %v6865
    %v6867 = vlaneseq
    %v6868 = vshrl.u32 %v6867, 7
    %v6869 = vsub.s32 %v6866, %v6868
    %v6870 = vrot.slane %v6856, %v6869
    %v6871 = vcombine.high %v6863, %v6863
    %v6872 = vcombine.high %v6870, %v6870
    %v6877 = vadd.f32 %v6843, %v6863
    %v6878 = vadd.f32 %v6844, %v6871
    %v6879 = vadd.f32 %v6845, %v6870
    %v6880 = vadd.f32 %v6846, %v6872
    %v6881 = vadd.f32 %v6847, %v6863
    %v6882 = vadd.f32 %v6848, %v6871
    %v6883 = vadd.f32 %v6849, %v6870
    %v6884 = vadd.f32 %v6850, %v6872
    %s6885 = scalar_lea.vmem %s7, 32
    %v6886 = vld [vmem:[%s6885] sm:$0xff]
    %v6887 = vld [vmem:[%s6885 + $0x8] sm:$0xff]
    %v6888 = vld [vmem:[%s6885 + $0x10] sm:$0xff]
    %v6889 = vld [vmem:[%s6885 + $0x18] sm:$0xff]
    %s6890 = scalar_lea.vmem %s8, 1
    %v6891 = vld [vmem:[%s6890] sm:$0x1]
    %v6893 = vlaneseq
    %v6894 = vshrl.u32 %v6893, 7
    %v6895 = vsub.s32 0, %v6894
    %v6896 = vrot.slane %v6891, %v6895
    %v6906 = vcombine.low %v6877, %v6878
    %v6907 = vcombine.low %v6879, %v6880
    %v6909 = vunpack.c.l.s4 1983009808
    %v6910 = vunpack.c.0.s8 %v6909
    %v6911 = vlaneseq
    %v6912 = vshrl.u32 %v6911, 7
    %v6913 = vsub.s32 %v6910, %v6912
    %v6914 = vrot.slane %v6906, %v6913
    %v6916 = vunpack.c.l.s4 1983009808
    %v6917 = vunpack.c.0.s8 %v6916
    %v6918 = vlaneseq
    %v6919 = vshrl.u32 %v6918, 7
    %v6920 = vsub.s32 %v6917, %v6919
    %v6921 = vrot.slane %v6907, %v6920
    %v6922 = vcombine.low %v6914, %v6921
    %v6923 = vcombine.low %v6881, %v6882
    %v6924 = vcombine.low %v6883, %v6884
    %v6926 = vunpack.c.l.s4 1983009808
    %v6927 = vunpack.c.0.s8 %v6926
    %v6928 = vlaneseq
    %v6929 = vshrl.u32 %v6928, 7
    %v6930 = vsub.s32 %v6927, %v6929
    %v6931 = vrot.slane %v6923, %v6930
    %v6933 = vunpack.c.l.s4 1983009808
    %v6934 = vunpack.c.0.s8 %v6933
    %v6935 = vlaneseq
    %v6936 = vshrl.u32 %v6935, 7
    %v6937 = vsub.s32 %v6934, %v6936
    %v6938 = vrot.slane %v6924, %v6937
    %v6939 = vcombine.low %v6931, %v6938
    %v6940 = vsel %vm126, %v6922, 0
    %v6942 = vsel %vm126, %v6939, 0
    %6944 = vmatprep.subr.mxu0 0.0
    %6945 = vmatpush1.msra.mxu0 0.0
    %6946 = vmatprep.subr.mxu0 0.0
    %6947 = vmatpush1.msra.mxu0 0.0
    %6948 = vmatprep.subr.mxu0 0.0
    %6949 = vmatpush1.msra.mxu0 0.0
    %6950 = vmatprep.subr.mxu0 0.0
    %6951 = vmatpush1.msra.mxu0 0.0
    %6952 = vmatprep.subr.mxu0 0.0
    %6953 = vmatpush1.msra.mxu0 0.0
    %6954 = vmatprep.subr.mxu0 0.0
    %6955 = vmatpush1.msra.mxu0 0.0
    %6956 = vmatprep.subr.mxu0 0.0
    %6957 = vmatpush1.msra.mxu0 0.0
    %6958 = vmatprep.subr.mxu0 0.0
    %6959 = vmatpush1.msra.mxu0 0.0
    %6960 = vmatprep.subr.mxu0 0.0
    %6961 = vmatpush1.msra.mxu0 0.0
    %6962 = vmatprep.subr.mxu0 0.0
    %6963 = vmatpush1.msra.mxu0 0.0
    %6964 = vmatprep.subr.mxu0 0.0
    %6965 = vmatpush1.msra.mxu0 0.0
    %6966 = vmatprep.subr.mxu0 0.0
    %6967 = vmatpush1.msra.mxu0 0.0
    %6968 = vmatprep.subr.mxu0 0.0
    %6969 = vmatpush1.msra.mxu0 %v6889
    %6970 = vmatprep.subr.mxu0 0.0
    %6971 = vmatpush1.msra.mxu0 %v6888
    %6972 = vmatprep.subr.mxu0 0.0
    %6973 = vmatpush1.msra.mxu0 %v6887
    %6974 = vmatprep.subr.mxu0 0.0
    %6975 = vmatpush1.msra.mxu0 %v6886
    %6976 = vmatprep.subr.mxu0 0.0
    %6977 = vmatpush2.msra.mxu0 0.0
    %6978 = vmatprep.subr.mxu0 0.0
    %6979 = vmatpush2.msra.mxu0 0.0
    %6980 = vmatprep.subr.mxu0 0.0
    %6981 = vmatpush2.msra.mxu0 0.0
    %6982 = vmatprep.subr.mxu0 0.0
    %6983 = vmatpush2.msra.mxu0 0.0
    %6984 = vmatprep.subr.mxu0 0.0
    %6985 = vmatpush2.msra.mxu0 0.0
    %6986 = vmatprep.subr.mxu0 0.0
    %6987 = vmatpush2.msra.mxu0 0.0
    %6988 = vmatprep.subr.mxu0 0.0
    %6989 = vmatpush2.msra.mxu0 0.0
    %6990 = vmatprep.subr.mxu0 0.0
    %6991 = vmatpush2.msra.mxu0 0.0
    %6992 = vmatprep.subr.mxu0 0.0
    %6993 = vmatpush2.msra.mxu0 0.0
    %6994 = vmatprep.subr.mxu0 0.0
    %6995 = vmatpush2.msra.mxu0 0.0
    %6996 = vmatprep.subr.mxu0 0.0
    %6997 = vmatpush2.msra.mxu0 0.0
    %6998 = vmatprep.subr.mxu0 0.0
    %6999 = vmatpush2.msra.mxu0 0.0
    %7000 = vmatprep.subr.mxu0 0.0
    %7001 = vmatpush2.msra.mxu0 0.0
    %7002 = vmatprep.subr.mxu0 0.0
    %7003 = vmatpush2.msra.mxu0 0.0
    %7004 = vmatprep.subr.mxu0 0.0
    %7005 = vmatpush2.msra.mxu0 0.0
    %7006 = vmatprep.subr.mxu0 0.0
    %7007 = vmatpush2.msra.mxu0 0.0
    %7008 = vmatprep.mubr.f32.mxu0 0.0
    %7009 = vmatmul.mubr.f32.gmra.mxu0 %v6940
    %v7010 = vpop.f32.mrf.mxu0
    %v7011 = vadd.f32 %v6896, %v7010
    %v7012 = vpop.f32.mrf.mxu0
    %7013 = vmatprep.mubr.f32.mxu0 0.0
    %7014 = vmatmul.mubr.f32.gmra.mxu0 %v6942
    %v7015 = vpop.f32.mrf.mxu0
    %v7016 = vadd.f32 %v6896, %v7015
    %v7017 = vpop.f32.mrf.mxu0
    %7018 = vdwg.mxu0
    %v7019 = vmax.f32 %v7011, 0.0
    %v7020 = vmax.f32 %v7016, 0.0
    %s7021 = scalar_lea.vmem %s9, 64
    %v7022 = vld [vmem:[%s7021] sm:$0xff]
    %v7023 = vld [vmem:[%s7021 + $0x8] sm:$0xff]
    %v7024 = vld [vmem:[%s7021 + $0x10] sm:$0xff]
    %v7025 = vld [vmem:[%s7021 + $0x18] sm:$0xff]
    %v7026 = vld [vmem:[%s7021 + $0x20] sm:$0xff]
    %v7027 = vld [vmem:[%s7021 + $0x28] sm:$0xff]
    %v7028 = vld [vmem:[%s7021 + $0x30] sm:$0xff]
    %v7029 = vld [vmem:[%s7021 + $0x38] sm:$0xff]
    %s7030 = scalar_lea.vmem %s10, 1
    %v7031 = vld [vmem:[%s7030] sm:$0x1]
    %v7033 = vlaneseq
    %v7034 = vshrl.u32 %v7033, 7
    %v7035 = vsub.s32 0, %v7034
    %v7036 = vrot.slane %v7031, %v7035
    %v7039 = vsel %vm3319, %v7019, 0
    %v7042 = vsel %vm3319, %v7020, 0
    %7044 = vmatprep.subr.mxu0 0.0
    %7045 = vmatpush1.msra.mxu0 0.0
    %7046 = vmatprep.subr.mxu0 0.0
    %7047 = vmatpush1.msra.mxu0 0.0
    %7048 = vmatprep.subr.mxu0 0.0
    %7049 = vmatpush1.msra.mxu0 0.0
    %7050 = vmatprep.subr.mxu0 0.0
    %7051 = vmatpush1.msra.mxu0 0.0
    %7052 = vmatprep.subr.mxu0 0.0
    %7053 = vmatpush1.msra.mxu0 0.0
    %7054 = vmatprep.subr.mxu0 0.0
    %7055 = vmatpush1.msra.mxu0 0.0
    %7056 = vmatprep.subr.mxu0 0.0
    %7057 = vmatpush1.msra.mxu0 0.0
    %7058 = vmatprep.subr.mxu0 0.0
    %7059 = vmatpush1.msra.mxu0 0.0
    %7060 = vmatprep.subr.mxu0 0.0
    %7061 = vmatpush1.msra.mxu0 %v7029
    %7062 = vmatprep.subr.mxu0 0.0
    %7063 = vmatpush1.msra.mxu0 %v7028
    %7064 = vmatprep.subr.mxu0 0.0
    %7065 = vmatpush1.msra.mxu0 %v7027
    %7066 = vmatprep.subr.mxu0 0.0
    %7067 = vmatpush1.msra.mxu0 %v7026
    %7068 = vmatprep.subr.mxu0 0.0
    %7069 = vmatpush1.msra.mxu0 %v7025
    %7070 = vmatprep.subr.mxu0 0.0
    %7071 = vmatpush1.msra.mxu0 %v7024
    %7072 = vmatprep.subr.mxu0 0.0
    %7073 = vmatpush1.msra.mxu0 %v7023
    %7074 = vmatprep.subr.mxu0 0.0
    %7075 = vmatpush1.msra.mxu0 %v7022
    %7076 = vmatprep.subr.mxu0 0.0
    %7077 = vmatpush2.msra.mxu0 0.0
    %7078 = vmatprep.subr.mxu0 0.0
    %7079 = vmatpush2.msra.mxu0 0.0
    %7080 = vmatprep.subr.mxu0 0.0
    %7081 = vmatpush2.msra.mxu0 0.0
    %7082 = vmatprep.subr.mxu0 0.0
    %7083 = vmatpush2.msra.mxu0 0.0
    %7084 = vmatprep.subr.mxu0 0.0
    %7085 = vmatpush2.msra.mxu0 0.0
    %7086 = vmatprep.subr.mxu0 0.0
    %7087 = vmatpush2.msra.mxu0 0.0
    %7088 = vmatprep.subr.mxu0 0.0
    %7089 = vmatpush2.msra.mxu0 0.0
    %7090 = vmatprep.subr.mxu0 0.0
    %7091 = vmatpush2.msra.mxu0 0.0
    %7092 = vmatprep.subr.mxu0 0.0
    %7093 = vmatpush2.msra.mxu0 0.0
    %7094 = vmatprep.subr.mxu0 0.0
    %7095 = vmatpush2.msra.mxu0 0.0
    %7096 = vmatprep.subr.mxu0 0.0
    %7097 = vmatpush2.msra.mxu0 0.0
    %7098 = vmatprep.subr.mxu0 0.0
    %7099 = vmatpush2.msra.mxu0 0.0
    %7100 = vmatprep.subr.mxu0 0.0
    %7101 = vmatpush2.msra.mxu0 0.0
    %7102 = vmatprep.subr.mxu0 0.0
    %7103 = vmatpush2.msra.mxu0 0.0
    %7104 = vmatprep.subr.mxu0 0.0
    %7105 = vmatpush2.msra.mxu0 0.0
    %7106 = vmatprep.subr.mxu0 0.0
    %7107 = vmatpush2.msra.mxu0 0.0
    %7108 = vmatprep.mubr.f32.mxu0 0.0
    %7109 = vmatmul.mubr.f32.gmra.mxu0 %v7039
    %v7110 = vpop.f32.mrf.mxu0
    %v7111 = vadd.f32 %v7036, %v7110
    %v7112 = vpop.f32.mrf.mxu0
    %7113 = vmatprep.mubr.f32.mxu0 0.0
    %7114 = vmatmul.mubr.f32.gmra.mxu0 %v7042
    %v7115 = vpop.f32.mrf.mxu0
    %v7116 = vadd.f32 %v7036, %v7115
    %v7117 = vpop.f32.mrf.mxu0
    %7118 = vdwg.mxu0
    %v7121 = vcombine.high %v7111, %v7111
    %v7123 = vunpack.c.l.s4 1983009808
    %v7124 = vunpack.c.0.s8 %v7123
    %v7125 = vlaneseq
    %v7126 = vshrl.u32 %v7125, 7
    %v7127 = vsub.s32 %v7124, %v7126
    %v7128 = vrot.slane %v7111, %v7127
    %v7130 = vunpack.c.l.s4 1983009808
    %v7131 = vunpack.c.0.s8 %v7130
    %v7132 = vlaneseq
    %v7133 = vshrl.u32 %v7132, 7
    %v7134 = vsub.s32 %v7131, %v7133
    %v7135 = vrot.slane %v7121, %v7134
    %v7136 = vcombine.high %v7128, %v7128
    %v7137 = vcombine.high %v7135, %v7135
    %v7138 = vcombine.high %v7116, %v7116
    %v7140 = vunpack.c.l.s4 1983009808
    %v7141 = vunpack.c.0.s8 %v7140
    %v7142 = vlaneseq
    %v7143 = vshrl.u32 %v7142, 7
    %v7144 = vsub.s32 %v7141, %v7143
    %v7145 = vrot.slane %v7116, %v7144
    %v7147 = vunpack.c.l.s4 1983009808
    %v7148 = vunpack.c.0.s8 %v7147
    %v7149 = vlaneseq
    %v7150 = vshrl.u32 %v7149, 7
    %v7151 = vsub.s32 %v7148, %v7150
    %v7152 = vrot.slane %v7138, %v7151
    %v7153 = vcombine.high %v7145, %v7145
    %v7154 = vcombine.high %v7152, %v7152
    %v7163 = vadd.f32 %v6877, %v7128
    %v7164 = vadd.f32 %v6878, %v7136
    %v7165 = vadd.f32 %v6879, %v7135
    %v7166 = vadd.f32 %v6880, %v7137
    %v7167 = vadd.f32 %v6881, %v7145
    %v7168 = vadd.f32 %v6882, %v7153
    %v7169 = vadd.f32 %v6883, %v7152
    %v7170 = vadd.f32 %v6884, %v7154
    %s7171 = scalar_lea.vmem %s11, 1
    %v7172 = vld [vmem:[%s7171] sm:$0x1]
    %s7173 = scalar_lea.vmem %s12, 1
    %v7174 = vld [vmem:[%s7173] sm:$0x1]
    %v7183 = vcombine.low %v7163, %v7164
    %v7184 = vcombine.low %v7165, %v7166
    %v7186 = vunpack.c.l.s4 1983009808
    %v7187 = vunpack.c.0.s8 %v7186
    %v7188 = vlaneseq
    %v7189 = vshrl.u32 %v7188, 7
    %v7190 = vsub.s32 %v7187, %v7189
    %v7191 = vrot.slane %v7183, %v7190
    %v7193 = vunpack.c.l.s4 1983009808
    %v7194 = vunpack.c.0.s8 %v7193
    %v7195 = vlaneseq
    %v7196 = vshrl.u32 %v7195, 7
    %v7197 = vsub.s32 %v7194, %v7196
    %v7198 = vrot.slane %v7184, %v7197
    %v7199 = vcombine.low %v7191, %v7198
    %v7200 = vcombine.low %v7167, %v7168
    %v7201 = vcombine.low %v7169, %v7170
    %v7203 = vunpack.c.l.s4 1983009808
    %v7204 = vunpack.c.0.s8 %v7203
    %v7205 = vlaneseq
    %v7206 = vshrl.u32 %v7205, 7
    %v7207 = vsub.s32 %v7204, %v7206
    %v7208 = vrot.slane %v7200, %v7207
    %v7210 = vunpack.c.l.s4 1983009808
    %v7211 = vunpack.c.0.s8 %v7210
    %v7212 = vlaneseq
    %v7213 = vshrl.u32 %v7212, 7
    %v7214 = vsub.s32 %v7211, %v7213
    %v7215 = vrot.slane %v7201, %v7214
    %v7216 = vcombine.low %v7208, %v7215
    %v7219 = vsel %vm126, %v7199, 0.0
    %7220 = vadd.xlane.f32.xlu0 %v7219
    %v7221 = vpop.xlane.xlu0 %7220
    %v7222 = vsel %vm126, %v7216, 0.0
    %7223 = vadd.xlane.f32.xlu0 %v7222
    %v7224 = vpop.xlane.xlu0 %7223
    %v7225 = vmul.f32 %v7221, %v2887
    %v7226 = vmul.f32 %v7224, %v2887
    %v7230 = vunpack.c.l.s4 269488144
    %v7231 = vunpack.c.0.s8 %v7230
    %v7232 = vlaneseq
    %v7233 = vshrl.u32 %v7232, 7
    %v7234 = vsub.s32 %v7231, %v7233
    %v7235 = vrot.slane %v7225, %v7234
    %v7237 = vunpack.c.l.s4 842150450
    %v7238 = vunpack.c.0.s8 %v7237
    %v7239 = vlaneseq
    %v7240 = vshrl.u32 %v7239, 7
    %v7241 = vsub.s32 %v7238, %v7240
    %v7242 = vrot.slane %v7225, %v7241
    %v7244 = vunpack.c.l.s4 1414812756
    %v7245 = vunpack.c.0.s8 %v7244
    %v7246 = vlaneseq
    %v7247 = vshrl.u32 %v7246, 7
    %v7248 = vsub.s32 %v7245, %v7247
    %v7249 = vrot.slane %v7225, %v7248
    %v7251 = vunpack.c.l.s4 1987475062
    %v7252 = vunpack.c.0.s8 %v7251
    %v7253 = vlaneseq
    %v7254 = vshrl.u32 %v7253, 7
    %v7255 = vsub.s32 %v7252, %v7254
    %v7256 = vrot.slane %v7225, %v7255
    %v7258 = vunpack.c.l.s4 269488144
    %v7259 = vunpack.c.0.s8 %v7258
    %v7260 = vlaneseq
    %v7261 = vshrl.u32 %v7260, 7
    %v7262 = vsub.s32 %v7259, %v7261
    %v7263 = vrot.slane %v7226, %v7262
    %v7265 = vunpack.c.l.s4 842150450
    %v7266 = vunpack.c.0.s8 %v7265
    %v7267 = vlaneseq
    %v7268 = vshrl.u32 %v7267, 7
    %v7269 = vsub.s32 %v7266, %v7268
    %v7270 = vrot.slane %v7226, %v7269
    %v7272 = vunpack.c.l.s4 1414812756
    %v7273 = vunpack.c.0.s8 %v7272
    %v7274 = vlaneseq
    %v7275 = vshrl.u32 %v7274, 7
    %v7276 = vsub.s32 %v7273, %v7275
    %v7277 = vrot.slane %v7226, %v7276
    %v7279 = vunpack.c.l.s4 1987475062
    %v7280 = vunpack.c.0.s8 %v7279
    %v7281 = vlaneseq
    %v7282 = vshrl.u32 %v7281, 7
    %v7283 = vsub.s32 %v7280, %v7282
    %v7284 = vrot.slane %v7226, %v7283
    %v7293 = vsub.f32 %v7163, %v7235
    %v7294 = vsub.f32 %v7164, %v7242
    %v7295 = vsub.f32 %v7165, %v7249
    %v7296 = vsub.f32 %v7166, %v7256
    %v7297 = vsub.f32 %v7167, %v7263
    %v7298 = vsub.f32 %v7168, %v7270
    %v7299 = vsub.f32 %v7169, %v7277
    %v7300 = vsub.f32 %v7170, %v7284
    %v7301 = vmul.f32 %v7293, %v7293
    %v7302 = vmul.f32 %v7294, %v7294
    %v7303 = vmul.f32 %v7295, %v7295
    %v7304 = vmul.f32 %v7296, %v7296
    %v7305 = vmul.f32 %v7297, %v7297
    %v7306 = vmul.f32 %v7298, %v7298
    %v7307 = vmul.f32 %v7299, %v7299
    %v7308 = vmul.f32 %v7300, %v7300
    %v7317 = vcombine.low %v7301, %v7302
    %v7318 = vcombine.low %v7303, %v7304
    %v7320 = vunpack.c.l.s4 1983009808
    %v7321 = vunpack.c.0.s8 %v7320
    %v7322 = vlaneseq
    %v7323 = vshrl.u32 %v7322, 7
    %v7324 = vsub.s32 %v7321, %v7323
    %v7325 = vrot.slane %v7317, %v7324
    %v7327 = vunpack.c.l.s4 1983009808
    %v7328 = vunpack.c.0.s8 %v7327
    %v7329 = vlaneseq
    %v7330 = vshrl.u32 %v7329, 7
    %v7331 = vsub.s32 %v7328, %v7330
    %v7332 = vrot.slane %v7318, %v7331
    %v7333 = vcombine.low %v7325, %v7332
    %v7334 = vcombine.low %v7305, %v7306
    %v7335 = vcombine.low %v7307, %v7308
    %v7337 = vunpack.c.l.s4 1983009808
    %v7338 = vunpack.c.0.s8 %v7337
    %v7339 = vlaneseq
    %v7340 = vshrl.u32 %v7339, 7
    %v7341 = vsub.s32 %v7338, %v7340
    %v7342 = vrot.slane %v7334, %v7341
    %v7344 = vunpack.c.l.s4 1983009808
    %v7345 = vunpack.c.0.s8 %v7344
    %v7346 = vlaneseq
    %v7347 = vshrl.u32 %v7346, 7
    %v7348 = vsub.s32 %v7345, %v7347
    %v7349 = vrot.slane %v7335, %v7348
    %v7350 = vcombine.low %v7342, %v7349
    %v7353 = vsel %vm126, %v7333, 0.0
    %7354 = vadd.xlane.f32.xlu0 %v7353
    %v7355 = vpop.xlane.xlu0 %7354
    %v7356 = vsel %vm126, %v7350, 0.0
    %7357 = vadd.xlane.f32.xlu0 %v7356
    %v7358 = vpop.xlane.xlu0 %7357
    %v7359 = vmul.f32 %v7355, %v2887
    %v7360 = vmul.f32 %v7358, %v2887
    %v7361 = vadd.f32 %v7359, 1e-05
    %v7362 = vadd.f32 %v7360, 1e-05
    %v7363 = vrsqrt.pop %v7361
    %v7364 = vrsqrt.pop %v7362
    %v7368 = vunpack.c.l.s4 269488144
    %v7369 = vunpack.c.0.s8 %v7368
    %v7370 = vlaneseq
    %v7371 = vshrl.u32 %v7370, 7
    %v7372 = vsub.s32 %v7369, %v7371
    %v7373 = vrot.slane %v7363, %v7372
    %v7375 = vunpack.c.l.s4 842150450
    %v7376 = vunpack.c.0.s8 %v7375
    %v7377 = vlaneseq
    %v7378 = vshrl.u32 %v7377, 7
    %v7379 = vsub.s32 %v7376, %v7378
    %v7380 = vrot.slane %v7363, %v7379
    %v7382 = vunpack.c.l.s4 1414812756
    %v7383 = vunpack.c.0.s8 %v7382
    %v7384 = vlaneseq
    %v7385 = vshrl.u32 %v7384, 7
    %v7386 = vsub.s32 %v7383, %v7385
    %v7387 = vrot.slane %v7363, %v7386
    %v7389 = vunpack.c.l.s4 1987475062
    %v7390 = vunpack.c.0.s8 %v7389
    %v7391 = vlaneseq
    %v7392 = vshrl.u32 %v7391, 7
    %v7393 = vsub.s32 %v7390, %v7392
    %v7394 = vrot.slane %v7363, %v7393
    %v7396 = vunpack.c.l.s4 269488144
    %v7397 = vunpack.c.0.s8 %v7396
    %v7398 = vlaneseq
    %v7399 = vshrl.u32 %v7398, 7
    %v7400 = vsub.s32 %v7397, %v7399
    %v7401 = vrot.slane %v7364, %v7400
    %v7403 = vunpack.c.l.s4 842150450
    %v7404 = vunpack.c.0.s8 %v7403
    %v7405 = vlaneseq
    %v7406 = vshrl.u32 %v7405, 7
    %v7407 = vsub.s32 %v7404, %v7406
    %v7408 = vrot.slane %v7364, %v7407
    %v7410 = vunpack.c.l.s4 1414812756
    %v7411 = vunpack.c.0.s8 %v7410
    %v7412 = vlaneseq
    %v7413 = vshrl.u32 %v7412, 7
    %v7414 = vsub.s32 %v7411, %v7413
    %v7415 = vrot.slane %v7364, %v7414
    %v7417 = vunpack.c.l.s4 1987475062
    %v7418 = vunpack.c.0.s8 %v7417
    %v7419 = vlaneseq
    %v7420 = vshrl.u32 %v7419, 7
    %v7421 = vsub.s32 %v7418, %v7420
    %v7422 = vrot.slane %v7364, %v7421
    %v7431 = vmul.f32 %v7293, %v7373
    %v7432 = vmul.f32 %v7294, %v7380
    %v7433 = vmul.f32 %v7295, %v7387
    %v7434 = vmul.f32 %v7296, %v7394
    %v7435 = vmul.f32 %v7297, %v7401
    %v7436 = vmul.f32 %v7298, %v7408
    %v7437 = vmul.f32 %v7299, %v7415
    %v7438 = vmul.f32 %v7300, %v7422
    %v7440 = vlaneseq
    %v7441 = vshrl.u32 %v7440, 7
    %v7442 = vsub.s32 0, %v7441
    %v7443 = vrot.slane %v7172, %v7442
    %v7444 = vcombine.high %v7443, %v7443
    %v7446 = vunpack.c.l.s4 1983009808
    %v7447 = vunpack.c.0.s8 %v7446
    %v7448 = vlaneseq
    %v7449 = vshrl.u32 %v7448, 7
    %v7450 = vsub.s32 %v7447, %v7449
    %v7451 = vrot.slane %v7443, %v7450
    %v7453 = vunpack.c.l.s4 1983009808
    %v7454 = vunpack.c.0.s8 %v7453
    %v7455 = vlaneseq
    %v7456 = vshrl.u32 %v7455, 7
    %v7457 = vsub.s32 %v7454, %v7456
    %v7458 = vrot.slane %v7444, %v7457
    %v7459 = vcombine.high %v7451, %v7451
    %v7460 = vcombine.high %v7458, %v7458
    %v7465 = vmul.f32 %v7431, %v7451
    %v7466 = vmul.f32 %v7432, %v7459
    %v7467 = vmul.f32 %v7433, %v7458
    %v7468 = vmul.f32 %v7434, %v7460
    %v7469 = vmul.f32 %v7435, %v7451
    %v7470 = vmul.f32 %v7436, %v7459
    %v7471 = vmul.f32 %v7437, %v7458
    %v7472 = vmul.f32 %v7438, %v7460
    %v7474 = vlaneseq
    %v7475 = vshrl.u32 %v7474, 7
    %v7476 = vsub.s32 0, %v7475
    %v7477 = vrot.slane %v7174, %v7476
    %v7478 = vcombine.high %v7477, %v7477
    %v7480 = vunpack.c.l.s4 1983009808
    %v7481 = vunpack.c.0.s8 %v7480
    %v7482 = vlaneseq
    %v7483 = vshrl.u32 %v7482, 7
    %v7484 = vsub.s32 %v7481, %v7483
    %v7485 = vrot.slane %v7477, %v7484
    %v7487 = vunpack.c.l.s4 1983009808
    %v7488 = vunpack.c.0.s8 %v7487
    %v7489 = vlaneseq
    %v7490 = vshrl.u32 %v7489, 7
    %v7491 = vsub.s32 %v7488, %v7490
    %v7492 = vrot.slane %v7478, %v7491
    %v7493 = vcombine.high %v7485, %v7485
    %v7494 = vcombine.high %v7492, %v7492
    %v7499 = vadd.f32 %v7465, %v7485
    %v7500 = vadd.f32 %v7466, %v7493
    %v7501 = vadd.f32 %v7467, %v7492
    %v7502 = vadd.f32 %v7468, %v7494
    %v7503 = vadd.f32 %v7469, %v7485
    %v7504 = vadd.f32 %v7470, %v7493
    %v7505 = vadd.f32 %v7471, %v7492
    %v7506 = vadd.f32 %v7472, %v7494
    %v7507 = vld [vmem:[%s13] sm:$0x1]
    %v7508 = vld [vmem:[%s14] sm:$0x1]
    %v7517 = vcombine.low %v7499, %v7500
    %v7518 = vcombine.low %v7501, %v7502
    %v7520 = vunpack.c.l.s4 1983009808
    %v7521 = vunpack.c.0.s8 %v7520
    %v7522 = vlaneseq
    %v7523 = vshrl.u32 %v7522, 7
    %v7524 = vsub.s32 %v7521, %v7523
    %v7525 = vrot.slane %v7517, %v7524
    %v7527 = vunpack.c.l.s4 1983009808
    %v7528 = vunpack.c.0.s8 %v7527
    %v7529 = vlaneseq
    %v7530 = vshrl.u32 %v7529, 7
    %v7531 = vsub.s32 %v7528, %v7530
    %v7532 = vrot.slane %v7518, %v7531
    %v7533 = vcombine.low %v7525, %v7532
    %v7534 = vcombine.low %v7503, %v7504
    %v7535 = vcombine.low %v7505, %v7506
    %v7537 = vunpack.c.l.s4 1983009808
    %v7538 = vunpack.c.0.s8 %v7537
    %v7539 = vlaneseq
    %v7540 = vshrl.u32 %v7539, 7
    %v7541 = vsub.s32 %v7538, %v7540
    %v7542 = vrot.slane %v7534, %v7541
    %v7544 = vunpack.c.l.s4 1983009808
    %v7545 = vunpack.c.0.s8 %v7544
    %v7546 = vlaneseq
    %v7547 = vshrl.u32 %v7546, 7
    %v7548 = vsub.s32 %v7545, %v7547
    %v7549 = vrot.slane %v7535, %v7548
    %v7550 = vcombine.low %v7542, %v7549
    %v7553 = vsel %vm126, %v7533, 0.0
    %7554 = vadd.xlane.f32.xlu0 %v7553
    %v7555 = vpop.xlane.xlu0 %7554
    %v7556 = vsel %vm126, %v7550, 0.0
    %7557 = vadd.xlane.f32.xlu0 %v7556
    %v7558 = vpop.xlane.xlu0 %7557
    %v7559 = vmul.f32 %v7555, %v2887
    %v7560 = vmul.f32 %v7558, %v2887
    %v7564 = vunpack.c.l.s4 269488144
    %v7565 = vunpack.c.0.s8 %v7564
    %v7566 = vlaneseq
    %v7567 = vshrl.u32 %v7566, 7
    %v7568 = vsub.s32 %v7565, %v7567
    %v7569 = vrot.slane %v7559, %v7568
    %v7571 = vunpack.c.l.s4 842150450
    %v7572 = vunpack.c.0.s8 %v7571
    %v7573 = vlaneseq
    %v7574 = vshrl.u32 %v7573, 7
    %v7575 = vsub.s32 %v7572, %v7574
    %v7576 = vrot.slane %v7559, %v7575
    %v7578 = vunpack.c.l.s4 1414812756
    %v7579 = vunpack.c.0.s8 %v7578
    %v7580 = vlaneseq
    %v7581 = vshrl.u32 %v7580, 7
    %v7582 = vsub.s32 %v7579, %v7581
    %v7583 = vrot.slane %v7559, %v7582
    %v7585 = vunpack.c.l.s4 1987475062
    %v7586 = vunpack.c.0.s8 %v7585
    %v7587 = vlaneseq
    %v7588 = vshrl.u32 %v7587, 7
    %v7589 = vsub.s32 %v7586, %v7588
    %v7590 = vrot.slane %v7559, %v7589
    %v7592 = vunpack.c.l.s4 269488144
    %v7593 = vunpack.c.0.s8 %v7592
    %v7594 = vlaneseq
    %v7595 = vshrl.u32 %v7594, 7
    %v7596 = vsub.s32 %v7593, %v7595
    %v7597 = vrot.slane %v7560, %v7596
    %v7599 = vunpack.c.l.s4 842150450
    %v7600 = vunpack.c.0.s8 %v7599
    %v7601 = vlaneseq
    %v7602 = vshrl.u32 %v7601, 7
    %v7603 = vsub.s32 %v7600, %v7602
    %v7604 = vrot.slane %v7560, %v7603
    %v7606 = vunpack.c.l.s4 1414812756
    %v7607 = vunpack.c.0.s8 %v7606
    %v7608 = vlaneseq
    %v7609 = vshrl.u32 %v7608, 7
    %v7610 = vsub.s32 %v7607, %v7609
    %v7611 = vrot.slane %v7560, %v7610
    %v7613 = vunpack.c.l.s4 1987475062
    %v7614 = vunpack.c.0.s8 %v7613
    %v7615 = vlaneseq
    %v7616 = vshrl.u32 %v7615, 7
    %v7617 = vsub.s32 %v7614, %v7616
    %v7618 = vrot.slane %v7560, %v7617
    %v7627 = vsub.f32 %v7499, %v7569
    %v7628 = vsub.f32 %v7500, %v7576
    %v7629 = vsub.f32 %v7501, %v7583
    %v7630 = vsub.f32 %v7502, %v7590
    %v7631 = vsub.f32 %v7503, %v7597
    %v7632 = vsub.f32 %v7504, %v7604
    %v7633 = vsub.f32 %v7505, %v7611
    %v7634 = vsub.f32 %v7506, %v7618
    %v7635 = vmul.f32 %v7627, %v7627
    %v7636 = vmul.f32 %v7628, %v7628
    %v7637 = vmul.f32 %v7629, %v7629
    %v7638 = vmul.f32 %v7630, %v7630
    %v7639 = vmul.f32 %v7631, %v7631
    %v7640 = vmul.f32 %v7632, %v7632
    %v7641 = vmul.f32 %v7633, %v7633
    %v7642 = vmul.f32 %v7634, %v7634
    %v7651 = vcombine.low %v7635, %v7636
    %v7652 = vcombine.low %v7637, %v7638
    %v7654 = vunpack.c.l.s4 1983009808
    %v7655 = vunpack.c.0.s8 %v7654
    %v7656 = vlaneseq
    %v7657 = vshrl.u32 %v7656, 7
    %v7658 = vsub.s32 %v7655, %v7657
    %v7659 = vrot.slane %v7651, %v7658
    %v7661 = vunpack.c.l.s4 1983009808
    %v7662 = vunpack.c.0.s8 %v7661
    %v7663 = vlaneseq
    %v7664 = vshrl.u32 %v7663, 7
    %v7665 = vsub.s32 %v7662, %v7664
    %v7666 = vrot.slane %v7652, %v7665
    %v7667 = vcombine.low %v7659, %v7666
    %v7668 = vcombine.low %v7639, %v7640
    %v7669 = vcombine.low %v7641, %v7642
    %v7671 = vunpack.c.l.s4 1983009808
    %v7672 = vunpack.c.0.s8 %v7671
    %v7673 = vlaneseq
    %v7674 = vshrl.u32 %v7673, 7
    %v7675 = vsub.s32 %v7672, %v7674
    %v7676 = vrot.slane %v7668, %v7675
    %v7678 = vunpack.c.l.s4 1983009808
    %v7679 = vunpack.c.0.s8 %v7678
    %v7680 = vlaneseq
    %v7681 = vshrl.u32 %v7680, 7
    %v7682 = vsub.s32 %v7679, %v7681
    %v7683 = vrot.slane %v7669, %v7682
    %v7684 = vcombine.low %v7676, %v7683
    %v7687 = vsel %vm126, %v7667, 0.0
    %7688 = vadd.xlane.f32.xlu0 %v7687
    %v7689 = vpop.xlane.xlu0 %7688
    %v7690 = vsel %vm126, %v7684, 0.0
    %7691 = vadd.xlane.f32.xlu0 %v7690
    %v7692 = vpop.xlane.xlu0 %7691
    %v7693 = vmul.f32 %v7689, %v2887
    %v7694 = vmul.f32 %v7692, %v2887
    %v7695 = vadd.f32 %v7693, 1e-05
    %v7696 = vadd.f32 %v7694, 1e-05
    %v7697 = vrsqrt.pop %v7695
    %v7698 = vrsqrt.pop %v7696
    %v7702 = vunpack.c.l.s4 269488144
    %v7703 = vunpack.c.0.s8 %v7702
    %v7704 = vlaneseq
    %v7705 = vshrl.u32 %v7704, 7
    %v7706 = vsub.s32 %v7703, %v7705
    %v7707 = vrot.slane %v7697, %v7706
    %v7709 = vunpack.c.l.s4 842150450
    %v7710 = vunpack.c.0.s8 %v7709
    %v7711 = vlaneseq
    %v7712 = vshrl.u32 %v7711, 7
    %v7713 = vsub.s32 %v7710, %v7712
    %v7714 = vrot.slane %v7697, %v7713
    %v7716 = vunpack.c.l.s4 1414812756
    %v7717 = vunpack.c.0.s8 %v7716
    %v7718 = vlaneseq
    %v7719 = vshrl.u32 %v7718, 7
    %v7720 = vsub.s32 %v7717, %v7719
    %v7721 = vrot.slane %v7697, %v7720
    %v7723 = vunpack.c.l.s4 1987475062
    %v7724 = vunpack.c.0.s8 %v7723
    %v7725 = vlaneseq
    %v7726 = vshrl.u32 %v7725, 7
    %v7727 = vsub.s32 %v7724, %v7726
    %v7728 = vrot.slane %v7697, %v7727
    %v7730 = vunpack.c.l.s4 269488144
    %v7731 = vunpack.c.0.s8 %v7730
    %v7732 = vlaneseq
    %v7733 = vshrl.u32 %v7732, 7
    %v7734 = vsub.s32 %v7731, %v7733
    %v7735 = vrot.slane %v7698, %v7734
    %v7737 = vunpack.c.l.s4 842150450
    %v7738 = vunpack.c.0.s8 %v7737
    %v7739 = vlaneseq
    %v7740 = vshrl.u32 %v7739, 7
    %v7741 = vsub.s32 %v7738, %v7740
    %v7742 = vrot.slane %v7698, %v7741
    %v7744 = vunpack.c.l.s4 1414812756
    %v7745 = vunpack.c.0.s8 %v7744
    %v7746 = vlaneseq
    %v7747 = vshrl.u32 %v7746, 7
    %v7748 = vsub.s32 %v7745, %v7747
    %v7749 = vrot.slane %v7698, %v7748
    %v7751 = vunpack.c.l.s4 1987475062
    %v7752 = vunpack.c.0.s8 %v7751
    %v7753 = vlaneseq
    %v7754 = vshrl.u32 %v7753, 7
    %v7755 = vsub.s32 %v7752, %v7754
    %v7756 = vrot.slane %v7698, %v7755
    %v7765 = vmul.f32 %v7627, %v7707
    %v7766 = vmul.f32 %v7628, %v7714
    %v7767 = vmul.f32 %v7629, %v7721
    %v7768 = vmul.f32 %v7630, %v7728
    %v7769 = vmul.f32 %v7631, %v7735
    %v7770 = vmul.f32 %v7632, %v7742
    %v7771 = vmul.f32 %v7633, %v7749
    %v7772 = vmul.f32 %v7634, %v7756
    %v7774 = vlaneseq
    %v7775 = vshrl.u32 %v7774, 7
    %v7776 = vsub.s32 0, %v7775
    %v7777 = vrot.slane %v7507, %v7776
    %v7778 = vcombine.high %v7777, %v7777
    %v7780 = vunpack.c.l.s4 1983009808
    %v7781 = vunpack.c.0.s8 %v7780
    %v7782 = vlaneseq
    %v7783 = vshrl.u32 %v7782, 7
    %v7784 = vsub.s32 %v7781, %v7783
    %v7785 = vrot.slane %v7777, %v7784
    %v7787 = vunpack.c.l.s4 1983009808
    %v7788 = vunpack.c.0.s8 %v7787
    %v7789 = vlaneseq
    %v7790 = vshrl.u32 %v7789, 7
    %v7791 = vsub.s32 %v7788, %v7790
    %v7792 = vrot.slane %v7778, %v7791
    %v7793 = vcombine.high %v7785, %v7785
    %v7794 = vcombine.high %v7792, %v7792
    %v7799 = vmul.f32 %v7765, %v7785
    %v7800 = vmul.f32 %v7766, %v7793
    %v7801 = vmul.f32 %v7767, %v7792
    %v7802 = vmul.f32 %v7768, %v7794
    %v7803 = vmul.f32 %v7769, %v7785
    %v7804 = vmul.f32 %v7770, %v7793
    %v7805 = vmul.f32 %v7771, %v7792
    %v7806 = vmul.f32 %v7772, %v7794
    %v7808 = vlaneseq
    %v7809 = vshrl.u32 %v7808, 7
    %v7810 = vsub.s32 0, %v7809
    %v7811 = vrot.slane %v7508, %v7810
    %v7812 = vcombine.high %v7811, %v7811
    %v7814 = vunpack.c.l.s4 1983009808
    %v7815 = vunpack.c.0.s8 %v7814
    %v7816 = vlaneseq
    %v7817 = vshrl.u32 %v7816, 7
    %v7818 = vsub.s32 %v7815, %v7817
    %v7819 = vrot.slane %v7811, %v7818
    %v7821 = vunpack.c.l.s4 1983009808
    %v7822 = vunpack.c.0.s8 %v7821
    %v7823 = vlaneseq
    %v7824 = vshrl.u32 %v7823, 7
    %v7825 = vsub.s32 %v7822, %v7824
    %v7826 = vrot.slane %v7812, %v7825
    %v7827 = vcombine.high %v7819, %v7819
    %v7828 = vcombine.high %v7826, %v7826
    %v7833 = vadd.f32 %v7799, %v7819
    %v7834 = vadd.f32 %v7800, %v7827
    %v7835 = vadd.f32 %v7801, %v7826
    %v7836 = vadd.f32 %v7802, %v7828
    %v7837 = vadd.f32 %v7803, %v7819
    %v7838 = vadd.f32 %v7804, %v7827
    %v7839 = vadd.f32 %v7805, %v7826
    %v7840 = vadd.f32 %v7806, %v7828
    %vm7841 = vcmask 254976
    %7842 = vst.msk [vmem:[#allocation5] sm:$0x3] %vm7841, %v7833
    %7843 = vst.msk [vmem:[#allocation5 + $0x2] sm:$0x3] %vm7841, %v7834
    %7844 = vst.msk [vmem:[#allocation5 + $0x4] sm:$0x3] %vm7841, %v7835
    %7845 = vst.msk [vmem:[#allocation5 + $0x6] sm:$0x3] %vm7841, %v7836
    %7846 = vst.msk [vmem:[#allocation5 + $0x8] sm:$0x3] %vm7841, %v7837
    %7847 = vst.msk [vmem:[#allocation5 + $0xa] sm:$0x3] %vm7841, %v7838
    %7848 = vst.msk [vmem:[#allocation5 + $0xc] sm:$0x3] %vm7841, %v7839
    %7849 = vst.msk [vmem:[#allocation5 + $0xe] sm:$0x3] %vm7841, %v7840
    // Predicated region
    $region66: #{tpu_custom_call.1} parent=1 // pred_check
      _
    $region67: #{tpu_custom_call.1} parent=1 // pred_check_branch
      %7851 = sbr.rel (0) target = $region69
    $region68: #{tpu_custom_call.1} parent=1 // pred_region
      %s7853 = ssub.s32 256, 256
      %7854 = vsyncadd [#allocation4], %s7853
      %s7855 = sshll.u32 [#allocation5], 4
      %s7856 = int_to_ptr.vmem [resolvable:$true] %s7855
      %7861 = dma.vmem_to_hbm [thread:$0]  %s7856, 256, %s15, [#allocation4], 32, 32, 2
    $region69: #{tpu_custom_call.1} parent=1 // pred_fallthru
      _
    // Predicated region
    $region70: #{tpu_custom_call.1} parent=1 // pred_check
      _
    $region71: #{tpu_custom_call.1} parent=1 // pred_check_branch
      %7863 = sbr.rel (0) target = $region73
    $region72: #{tpu_custom_call.1} parent=1 // pred_region
      %7864 = dma.done [#allocation4], 256
    $region73: #{tpu_custom_call.1} parent=1 // pred_fallthru
      _
    %7865 = vsyncpa [#allocation3], 1
    %7866 = vsyncpa [#allocation4], 1

</llo_original>
